<compile_context>
chip_gen: v7x
topology: tpu7x:2x2x1
jax: 0.10.0
libtpu: 0.0.40
codegen_flags: <defaults>
</compile_context>

<pallas_src>
import jax
import jax.numpy as jnp
from jax.experimental import pallas as pl
from jax.experimental.pallas import tpu as pltpu

EMBED_SIZE = 96
EMBED_PAD = 128                      # lane-dense padded embed dim
NUM_HEADS = 8
HEAD_DIM = EMBED_SIZE // NUM_HEADS   # 12
HIDDEN = 4 * EMBED_SIZE              # 384 (already a multiple of 128)
CONTEXT_SIZE = 128
LN_EPS = 1e-5
NEG_INF = -1e30


def block_kernel(x_ref,        # (M, EP)
                 bias_ref,     # (M, M)  additive mask: 0 where attend, -1e30 else
                 wk_ref,       # (H, EP, HD)
                 wq_ref,       # (H, EP, HD)   (1/sqrt(hd) folded in)
                 wv_ref,       # (H, EP, HD)
                 wp_ref,       # (H, HD, EP)
                 b_proj_ref,   # (1, EP)
                 w_ff1_ref,    # (EP, 4E)
                 w_ff2_ref,    # (4E, EP)
                 ln1_w_ref, ln1_b_ref,   # (1, EP)
                 ln2_w_ref, ln2_b_ref,   # (1, EP)
                 o_ref):       # (M, EP)
    x = x_ref[...]                                  # (M, EP), padded lanes are 0
    M = x.shape[0]

    # lane mask selecting the real 96 features out of the 128 padded lanes
    lane = jax.lax.broadcasted_iota(jnp.int32, (1, EMBED_PAD), 1)
    lane_mask = (lane < EMBED_SIZE).astype(jnp.float32)

    def layernorm(v, w, b):
        # v has zeros in padded lanes, so sums over 128 lanes == sums over 96.
        mu = jnp.sum(v, axis=-1, keepdims=True) * (1.0 / EMBED_SIZE)
        vc = (v - mu) * lane_mask
        var = jnp.sum(vc * vc, axis=-1, keepdims=True) * (1.0 / EMBED_SIZE)
        # w, b are zero in padded lanes -> padded lanes of the result stay 0.
        return vc * jax.lax.rsqrt(var + LN_EPS) * w + b

    # ---------------- LayerNorm (ln_mha) ----------------
    x_ln = layernorm(x, ln1_w_ref[...], ln1_b_ref[...])

    attn_bias = bias_ref[...]                       # block-diag causal mask
    dn = (((1,), (1,)), ((), ()))                   # contract last dims: q @ k^T

    # ---------------- multi-head attention ---------------
    proj = jnp.zeros((M, EMBED_PAD), jnp.float32)
    for h in range(NUM_HEADS):                      # static unrolled head loop
        qh = jnp.dot(x_ln, wq_ref[h], preferred_element_type=jnp.float32)  # (M, hd)
        kh = jnp.dot(x_ln, wk_ref[h], preferred_element_type=jnp.float32)
        vh = jnp.dot(x_ln, wv_ref[h], preferred_element_type=jnp.float32)

        s = jax.lax.dot_general(qh, kh, dn,
                                preferred_element_type=jnp.float32)        # (M, M)
        s = s + attn_bias
        m = jnp.max(s, axis=-1, keepdims=True)
        p = jnp.exp(s - m)
        p = p * pl.reciprocal(jnp.sum(p, axis=-1, keepdims=True), approx=True)

        out_h = jnp.dot(p, vh, preferred_element_type=jnp.float32)         # (M, hd)
        proj = proj + jnp.dot(out_h, wp_ref[h],
                              preferred_element_type=jnp.float32)          # (M, EP)

    y = x + proj + b_proj_ref[...]                  # residual 1 (+ proj bias)

    # ---------------- LayerNorm (ln_ff) + MLP -------------
    y_ln = layernorm(y, ln2_w_ref[...], ln2_b_ref[...])
    h1 = jnp.maximum(jnp.dot(y_ln, w_ff1_ref[...],
                             preferred_element_type=jnp.float32), 0.0)     # (M, 4E)
    h2 = jnp.dot(h1, w_ff2_ref[...], preferred_element_type=jnp.float32)   # (M, EP)

    o_ref[...] = y + h2                             # residual 2 (lane-dense store)


def _pick_b_tile(B, C):
    """Batches folded per grid step: keep >=2 grid steps when B >= 2 (v7x dual
    TensorCore) while pushing the matmul M dim toward ~256 rows."""
    if B <= 1:
        return 1
    bt = min(max(1, B // 2), max(1, 256 // C))
    while B % bt != 0:
        bt -= 1
    return max(bt, 1)


def _prep_params(params):
    E, EP, H, HD = EMBED_SIZE, EMBED_PAD, NUM_HEADS, HEAD_DIM
    pad_e = EP - E

    w_attn = params["w_attn"]                       # (3E, E), rows = [k, q, v]

    def per_head(w_block):                          # (E_out, E_in) -> (H, EP, HD)
        w = w_block.reshape(H, HD, E)               # (H, hd_out, E_in)
        w = jnp.transpose(w, (0, 2, 1))             # (H, E_in, hd_out)
        return jnp.pad(w, ((0, 0), (0, pad_e), (0, 0)))

    wk_h = per_head(w_attn[0 * E:1 * E])
    wq_h = per_head(w_attn[1 * E:2 * E]) * (HD ** -0.5)   # fold attention scale
    wv_h = per_head(w_attn[2 * E:3 * E])

    wp_h = params["w_proj"].T.reshape(H, HD, E)     # (H, hd, E_out)
    wp_h = jnp.pad(wp_h, ((0, 0), (0, 0), (0, pad_e)))

    b_proj = jnp.pad(params["b_proj"], (0, pad_e)).reshape(1, EP)
    w_ff1 = jnp.pad(params["w_ff1"].T, ((0, pad_e), (0, 0)))   # (EP, 4E)
    w_ff2 = jnp.pad(params["w_ff2"].T, ((0, 0), (0, pad_e)))   # (4E, EP)

    ln1_w = jnp.pad(params["ln1_w"], (0, pad_e)).reshape(1, EP)
    ln1_b = jnp.pad(params["ln1_b"], (0, pad_e)).reshape(1, EP)
    ln2_w = jnp.pad(params["ln2_w"], (0, pad_e)).reshape(1, EP)
    ln2_b = jnp.pad(params["ln2_b"], (0, pad_e)).reshape(1, EP)

    return (wk_h, wq_h, wv_h, wp_h, b_proj, w_ff1, w_ff2,
            ln1_w, ln1_b, ln2_w, ln2_b)


def _full_spec(a):
    n = a.ndim
    return pl.BlockSpec(a.shape, lambda i, n=n: (0,) * n)


@jax.jit
def block_forward(x, params):
    B, C, E = x.shape
    assert E == EMBED_SIZE and C <= CONTEXT_SIZE and C % 8 == 0

    b_tile = _pick_b_tile(B, C)
    num_tiles = B // b_tile
    M = b_tile * C

    # lane-dense padded activations, batch folded into rows
    x_pad = jnp.pad(x, ((0, 0), (0, 0), (0, EMBED_PAD - E)))
    x_flat = x_pad.reshape(B * C, EMBED_PAD)

    weights = _prep_params(params)

    # block-diagonal (per-batch) causal additive mask for the folded rows
    row = jnp.arange(M)[:, None]
    col = jnp.arange(M)[None, :]
    attend = ((row // C) == (col // C)) & (col <= row)
    attn_bias = jnp.where(attend, 0.0, NEG_INF).astype(jnp.float32)

    in_specs = [pl.BlockSpec((M, EMBED_PAD), lambda i: (i, 0)),
                _full_spec(attn_bias)] + [_full_spec(w) for w in weights]

    out = pl.pallas_call(
        block_kernel,
        out_shape=jax.ShapeDtypeStruct((B * C, EMBED_PAD), jnp.float32),
        grid=(num_tiles,),
        in_specs=in_specs,
        out_specs=pl.BlockSpec((M, EMBED_PAD), lambda i: (i, 0)),
        compiler_params=pltpu.CompilerParams(
            dimension_semantics=("parallel",)),
    )(x_flat, attn_bias, *weights)

    return out.reshape(B, C, EMBED_PAD)[:, :, :E]


def reference_forward(x, p):
    """Pure-JAX reference mirroring the PyTorch module."""
    B, C, E = x.shape

    def ln(v, w, b):
        mu = jnp.mean(v, -1, keepdims=True)
        var = jnp.mean((v - mu) ** 2, -1, keepdims=True)
        return (v - mu) / jnp.sqrt(var + LN_EPS) * w + b

    x_ln = ln(x, p["ln1_w"], p["ln1_b"])
    qkv = x_ln @ p["w_attn"].T
    k, q, v = jnp.split(qkv, 3, axis=-1)

    def heads(t):
        return t.reshape(B, C, NUM_HEADS, HEAD_DIM).transpose(0, 2, 1, 3)

    k, q, v = heads(k), heads(q), heads(v)
    wei = (q @ jnp.swapaxes(k, -2, -1)) * (HEAD_DIM ** -0.5)
    mask = jnp.tril(jnp.ones((C, C), bool))
    wei = jnp.where(mask, wei, -jnp.inf)
    wei = jax.nn.softmax(wei, axis=-1)
    out = (wei @ v).transpose(0, 2, 1, 3).reshape(B, C, E)
    y = x + (out @ p["w_proj"].T + p["b_proj"])
    y_ln = ln(y, p["ln2_w"], p["ln2_b"])
    h = jnp.maximum(y_ln @ p["w_ff1"], 0.0) if False else jnp.maximum(y_ln @ p["w_ff1"].T, 0.0)
    h = h @ p["w_ff2"].T
    return y + h


def init_params(key):
    E = EMBED_SIZE
    ks = jax.random.split(key, 6)
    s = 0.02
    return {
        "w_attn": jax.random.normal(ks[0], (3 * E, E), jnp.float32) * s,
        "w_proj": jax.random.normal(ks[1], (E, E), jnp.float32) * s,
        "b_proj": jax.random.normal(ks[2], (E,), jnp.float32) * s,
        "w_ff1": jax.random.normal(ks[3], (4 * E, E), jnp.float32) * s,
        "w_ff2": jax.random.normal(ks[4], (E, 4 * E), jnp.float32) * s,
        "ln1_w": jnp.ones((E,), jnp.float32),
        "ln1_b": jnp.zeros((E,), jnp.float32),
        "ln2_w": jnp.ones((E,), jnp.float32),
        "ln2_b": jnp.zeros((E,), jnp.float32),
    }


if __name__ == "__main__":
    key = jax.random.PRNGKey(0)
    k_x, k_p = jax.random.split(key)

    B, C, E = 2, 64, EMBED_SIZE          # small shapes, C <= context_size
    x = jax.random.normal(k_x, (B, C, E), jnp.float32)
    params = init_params(k_p)

    out = block_forward(x, params)
    out = jax.block_until_ready(out)

    ref = reference_forward(x, params)
    assert out.shape == (B, C, E)
    assert jnp.allclose(out, ref, atol=1e-4, rtol=1e-4), "mismatch vs reference"

    print("KERNEL_OK")
</pallas_src>

<mosaic_0001>
module attributes {stable_mosaic.version = 11 : i64} {
  func.func @block_kernel(%arg0: i32, %arg1: memref<64x128xf32, #tpu.memory_space<vmem>>, %arg2: memref<64x64xf32, #tpu.memory_space<vmem>>, %arg3: memref<8x128x12xf32, #tpu.memory_space<vmem>>, %arg4: memref<8x128x12xf32, #tpu.memory_space<vmem>>, %arg5: memref<8x128x12xf32, #tpu.memory_space<vmem>>, %arg6: memref<8x12x128xf32, #tpu.memory_space<vmem>>, %arg7: memref<1x128xf32, #tpu.memory_space<vmem>>, %arg8: memref<128x384xf32, #tpu.memory_space<vmem>>, %arg9: memref<384x128xf32, #tpu.memory_space<vmem>>, %arg10: memref<1x128xf32, #tpu.memory_space<vmem>>, %arg11: memref<1x128xf32, #tpu.memory_space<vmem>>, %arg12: memref<1x128xf32, #tpu.memory_space<vmem>>, %arg13: memref<1x128xf32, #tpu.memory_space<vmem>>, %arg14: memref<64x128xf32, #tpu.memory_space<vmem>>) attributes {dimension_semantics = [#tpu.dimension_semantics<parallel>], iteration_bounds = array<i64: 2>, scalar_prefetch = 0 : i64, scratch_operands = 0 : i64, tpu.core_type = #tpu.core_type<tc>, window_params = [{transform_indices = @transform_0, window_bounds = array<i64: 64, 128>}, {pipeline_mode = #tpu.pipeline_mode<synchronous>, transform_indices = @transform_1, window_bounds = array<i64: 64, 64>}, {pipeline_mode = #tpu.pipeline_mode<synchronous>, transform_indices = @transform_2, window_bounds = array<i64: 8, 128, 12>}, {pipeline_mode = #tpu.pipeline_mode<synchronous>, transform_indices = @transform_3, window_bounds = array<i64: 8, 128, 12>}, {pipeline_mode = #tpu.pipeline_mode<synchronous>, transform_indices = @transform_4, window_bounds = array<i64: 8, 128, 12>}, {pipeline_mode = #tpu.pipeline_mode<synchronous>, transform_indices = @transform_5, window_bounds = array<i64: 8, 12, 128>}, {pipeline_mode = #tpu.pipeline_mode<synchronous>, transform_indices = @transform_6, window_bounds = array<i64: 1, 128>}, {pipeline_mode = #tpu.pipeline_mode<synchronous>, transform_indices = @transform_7, window_bounds = array<i64: 128, 384>}, {pipeline_mode = #tpu.pipeline_mode<synchronous>, transform_indices = @transform_8, window_bounds = array<i64: 384, 128>}, {pipeline_mode = #tpu.pipeline_mode<synchronous>, transform_indices = @transform_9, window_bounds = array<i64: 1, 128>}, {pipeline_mode = #tpu.pipeline_mode<synchronous>, transform_indices = @transform_10, window_bounds = array<i64: 1, 128>}, {pipeline_mode = #tpu.pipeline_mode<synchronous>, transform_indices = @transform_11, window_bounds = array<i64: 1, 128>}, {pipeline_mode = #tpu.pipeline_mode<synchronous>, transform_indices = @transform_12, window_bounds = array<i64: 1, 128>}, {transform_indices = @transform_13, window_bounds = array<i64: 64, 128>}]} {
    %c0 = arith.constant 0 : index
    %c0_0 = arith.constant 0 : index
    %0 = vector.load %arg1[%c0, %c0_0] : memref<64x128xf32, #tpu.memory_space<vmem>>, vector<64x128xf32>
    %1 = tpu.iota {dimensions = array<i32: 1>} : vector<1x128xi32>
    %c96_i32 = arith.constant 96 : i32
    %2 = vector.broadcast %c96_i32 : i32 to vector<1x128xi32>
    %3 = arith.cmpi slt, %1, %2 : vector<1x128xi32>
    %4 = arith.extui %3 : vector<1x128xi1> to vector<1x128xi32>
    %5 = arith.sitofp %4 : vector<1x128xi32> to vector<1x128xf32>
    %c0_1 = arith.constant 0 : index
    %c0_2 = arith.constant 0 : index
    %6 = vector.load %arg10[%c0_1, %c0_2] : memref<1x128xf32, #tpu.memory_space<vmem>>, vector<1x128xf32>
    %c0_3 = arith.constant 0 : index
    %c0_4 = arith.constant 0 : index
    %7 = vector.load %arg11[%c0_3, %c0_4] : memref<1x128xf32, #tpu.memory_space<vmem>>, vector<1x128xf32>
    %cst = arith.constant dense<0.000000e+00> : vector<64xf32>
    %8 = vector.multi_reduction <add>, %0, %cst [1] : vector<64x128xf32> to vector<64xf32>
    %9 = vector.shape_cast %8 : vector<64xf32> to vector<64x1xf32>
    %cst_5 = arith.constant 0.010416667 : f32
    %10 = vector.broadcast %cst_5 : f32 to vector<64x1xf32>
    %11 = arith.mulf %9, %10 : vector<64x1xf32>
    %12 = vector.broadcast %11 : vector<64x1xf32> to vector<64x128xf32>
    %13 = arith.subf %0, %12 : vector<64x128xf32>
    %14 = vector.broadcast %5 : vector<1x128xf32> to vector<64x128xf32>
    %15 = arith.mulf %13, %14 : vector<64x128xf32>
    %16 = arith.mulf %15, %15 : vector<64x128xf32>
    %cst_6 = arith.constant dense<0.000000e+00> : vector<64xf32>
    %17 = vector.multi_reduction <add>, %16, %cst_6 [1] : vector<64x128xf32> to vector<64xf32>
    %18 = vector.shape_cast %17 : vector<64xf32> to vector<64x1xf32>
    %cst_7 = arith.constant 0.010416667 : f32
    %19 = vector.broadcast %cst_7 : f32 to vector<64x1xf32>
    %20 = arith.mulf %18, %19 : vector<64x1xf32>
    %cst_8 = arith.constant 9.99999974E-6 : f32
    %21 = vector.broadcast %cst_8 : f32 to vector<64x1xf32>
    %22 = arith.addf %20, %21 : vector<64x1xf32>
    %23 = math.rsqrt %22 : vector<64x1xf32>
    %24 = vector.broadcast %23 : vector<64x1xf32> to vector<64x128xf32>
    %25 = arith.mulf %15, %24 : vector<64x128xf32>
    %26 = vector.broadcast %6 : vector<1x128xf32> to vector<64x128xf32>
    %27 = arith.mulf %25, %26 : vector<64x128xf32>
    %28 = vector.broadcast %7 : vector<1x128xf32> to vector<64x128xf32>
    %29 = arith.addf %27, %28 : vector<64x128xf32>
    %c0_9 = arith.constant 0 : index
    %c0_10 = arith.constant 0 : index
    %30 = vector.load %arg2[%c0_9, %c0_10] : memref<64x64xf32, #tpu.memory_space<vmem>>, vector<64x64xf32>
    %cst_11 = arith.constant 0.000000e+00 : f32
    %31 = vector.broadcast %cst_11 : f32 to vector<64x128xf32>
    %c0_12 = arith.constant 0 : index
    %c0_13 = arith.constant 0 : index
    %c0_14 = arith.constant 0 : index
    %32 = vector.load %arg4[%c0_12, %c0_13, %c0_14] : memref<8x128x12xf32, #tpu.memory_space<vmem>>, vector<1x128x12xf32>
    %33 = vector.shape_cast %32 : vector<1x128x12xf32> to vector<128x12xf32>
    %cst_15 = arith.constant dense<0.000000e+00> : vector<64x12xf32>
    %34 = tpu.matmul %29, %33, %cst_15 {dimension_numbers = #tpu.dot_dimension_numbers<[1], [0], [0], [1], [0, 0, 1, 1], [], []>} : vector<64x128xf32>, vector<128x12xf32>, vector<64x12xf32> -> vector<64x12xf32>
    %c0_16 = arith.constant 0 : index
    %c0_17 = arith.constant 0 : index
    %c0_18 = arith.constant 0 : index
    %35 = vector.load %arg3[%c0_16, %c0_17, %c0_18] : memref<8x128x12xf32, #tpu.memory_space<vmem>>, vector<1x128x12xf32>
    %36 = vector.shape_cast %35 : vector<1x128x12xf32> to vector<128x12xf32>
    %cst_19 = arith.constant dense<0.000000e+00> : vector<64x12xf32>
    %37 = tpu.matmul %29, %36, %cst_19 {dimension_numbers = #tpu.dot_dimension_numbers<[1], [0], [0], [1], [0, 0, 1, 1], [], []>} : vector<64x128xf32>, vector<128x12xf32>, vector<64x12xf32> -> vector<64x12xf32>
    %c0_20 = arith.constant 0 : index
    %c0_21 = arith.constant 0 : index
    %c0_22 = arith.constant 0 : index
    %38 = vector.load %arg5[%c0_20, %c0_21, %c0_22] : memref<8x128x12xf32, #tpu.memory_space<vmem>>, vector<1x128x12xf32>
    %39 = vector.shape_cast %38 : vector<1x128x12xf32> to vector<128x12xf32>
    %cst_23 = arith.constant dense<0.000000e+00> : vector<64x12xf32>
    %40 = tpu.matmul %29, %39, %cst_23 {dimension_numbers = #tpu.dot_dimension_numbers<[1], [0], [0], [1], [0, 0, 1, 1], [], []>} : vector<64x128xf32>, vector<128x12xf32>, vector<64x12xf32> -> vector<64x12xf32>
    %cst_24 = arith.constant dense<0.000000e+00> : vector<64x64xf32>
    %41 = tpu.matmul %34, %37, %cst_24 {dimension_numbers = #tpu.dot_dimension_numbers<[1], [1], [0], [0], [0, 0, 1, 0], [], []>} : vector<64x12xf32>, vector<64x12xf32>, vector<64x64xf32> -> vector<64x64xf32>
    %42 = arith.addf %41, %30 : vector<64x64xf32>
    %cst_25 = arith.constant dense<0xFF800000> : vector<64xf32>
    %43 = vector.multi_reduction <maximumf>, %42, %cst_25 [1] : vector<64x64xf32> to vector<64xf32>
    %44 = vector.shape_cast %43 : vector<64xf32> to vector<64x1xf32>
    %45 = vector.broadcast %44 : vector<64x1xf32> to vector<64x64xf32>
    %46 = arith.subf %42, %45 : vector<64x64xf32>
    %47 = math.exp %46 : vector<64x64xf32>
    %cst_26 = arith.constant dense<0.000000e+00> : vector<64xf32>
    %48 = vector.multi_reduction <add>, %47, %cst_26 [1] : vector<64x64xf32> to vector<64xf32>
    %49 = vector.shape_cast %48 : vector<64xf32> to vector<64x1xf32>
    %50 = tpu.reciprocal %49 {approx = true} : vector<64x1xf32> -> vector<64x1xf32>
    %51 = vector.broadcast %50 : vector<64x1xf32> to vector<64x64xf32>
    %52 = arith.mulf %47, %51 : vector<64x64xf32>
    %cst_27 = arith.constant dense<0.000000e+00> : vector<64x12xf32>
    %53 = tpu.matmul %52, %40, %cst_27 {dimension_numbers = #tpu.dot_dimension_numbers<[1], [0], [0], [1], [0, 0, 1, 1], [], []>} : vector<64x64xf32>, vector<64x12xf32>, vector<64x12xf32> -> vector<64x12xf32>
    %c0_28 = arith.constant 0 : index
    %c0_29 = arith.constant 0 : index
    %c0_30 = arith.constant 0 : index
    %54 = vector.load %arg6[%c0_28, %c0_29, %c0_30] : memref<8x12x128xf32, #tpu.memory_space<vmem>>, vector<1x12x128xf32>
    %55 = vector.shape_cast %54 : vector<1x12x128xf32> to vector<12x128xf32>
    %cst_31 = arith.constant dense<0.000000e+00> : vector<64x128xf32>
    %56 = tpu.matmul %53, %55, %cst_31 {dimension_numbers = #tpu.dot_dimension_numbers<[1], [0], [0], [1], [0, 0, 1, 1], [], []>} : vector<64x12xf32>, vector<12x128xf32>, vector<64x128xf32> -> vector<64x128xf32>
    %57 = arith.addf %31, %56 : vector<64x128xf32>
    %c1 = arith.constant 1 : index
    %c0_32 = arith.constant 0 : index
    %c0_33 = arith.constant 0 : index
    %58 = vector.load %arg4[%c1, %c0_32, %c0_33] : memref<8x128x12xf32, #tpu.memory_space<vmem>>, vector<1x128x12xf32>
    %59 = vector.shape_cast %58 : vector<1x128x12xf32> to vector<128x12xf32>
    %cst_34 = arith.constant dense<0.000000e+00> : vector<64x12xf32>
    %60 = tpu.matmul %29, %59, %cst_34 {dimension_numbers = #tpu.dot_dimension_numbers<[1], [0], [0], [1], [0, 0, 1, 1], [], []>} : vector<64x128xf32>, vector<128x12xf32>, vector<64x12xf32> -> vector<64x12xf32>
    %c1_35 = arith.constant 1 : index
    %c0_36 = arith.constant 0 : index
    %c0_37 = arith.constant 0 : index
    %61 = vector.load %arg3[%c1_35, %c0_36, %c0_37] : memref<8x128x12xf32, #tpu.memory_space<vmem>>, vector<1x128x12xf32>
    %62 = vector.shape_cast %61 : vector<1x128x12xf32> to vector<128x12xf32>
    %cst_38 = arith.constant dense<0.000000e+00> : vector<64x12xf32>
    %63 = tpu.matmul %29, %62, %cst_38 {dimension_numbers = #tpu.dot_dimension_numbers<[1], [0], [0], [1], [0, 0, 1, 1], [], []>} : vector<64x128xf32>, vector<128x12xf32>, vector<64x12xf32> -> vector<64x12xf32>
    %c1_39 = arith.constant 1 : index
    %c0_40 = arith.constant 0 : index
    %c0_41 = arith.constant 0 : index
    %64 = vector.load %arg5[%c1_39, %c0_40, %c0_41] : memref<8x128x12xf32, #tpu.memory_space<vmem>>, vector<1x128x12xf32>
    %65 = vector.shape_cast %64 : vector<1x128x12xf32> to vector<128x12xf32>
    %cst_42 = arith.constant dense<0.000000e+00> : vector<64x12xf32>
    %66 = tpu.matmul %29, %65, %cst_42 {dimension_numbers = #tpu.dot_dimension_numbers<[1], [0], [0], [1], [0, 0, 1, 1], [], []>} : vector<64x128xf32>, vector<128x12xf32>, vector<64x12xf32> -> vector<64x12xf32>
    %cst_43 = arith.constant dense<0.000000e+00> : vector<64x64xf32>
    %67 = tpu.matmul %60, %63, %cst_43 {dimension_numbers = #tpu.dot_dimension_numbers<[1], [1], [0], [0], [0, 0, 1, 0], [], []>} : vector<64x12xf32>, vector<64x12xf32>, vector<64x64xf32> -> vector<64x64xf32>
    %68 = arith.addf %67, %30 : vector<64x64xf32>
    %cst_44 = arith.constant dense<0xFF800000> : vector<64xf32>
    %69 = vector.multi_reduction <maximumf>, %68, %cst_44 [1] : vector<64x64xf32> to vector<64xf32>
    %70 = vector.shape_cast %69 : vector<64xf32> to vector<64x1xf32>
    %71 = vector.broadcast %70 : vector<64x1xf32> to vector<64x64xf32>
    %72 = arith.subf %68, %71 : vector<64x64xf32>
    %73 = math.exp %72 : vector<64x64xf32>
    %cst_45 = arith.constant dense<0.000000e+00> : vector<64xf32>
    %74 = vector.multi_reduction <add>, %73, %cst_45 [1] : vector<64x64xf32> to vector<64xf32>
    %75 = vector.shape_cast %74 : vector<64xf32> to vector<64x1xf32>
    %76 = tpu.reciprocal %75 {approx = true} : vector<64x1xf32> -> vector<64x1xf32>
    %77 = vector.broadcast %76 : vector<64x1xf32> to vector<64x64xf32>
    %78 = arith.mulf %73, %77 : vector<64x64xf32>
    %cst_46 = arith.constant dense<0.000000e+00> : vector<64x12xf32>
    %79 = tpu.matmul %78, %66, %cst_46 {dimension_numbers = #tpu.dot_dimension_numbers<[1], [0], [0], [1], [0, 0, 1, 1], [], []>} : vector<64x64xf32>, vector<64x12xf32>, vector<64x12xf32> -> vector<64x12xf32>
    %c1_47 = arith.constant 1 : index
    %c0_48 = arith.constant 0 : index
    %c0_49 = arith.constant 0 : index
    %80 = vector.load %arg6[%c1_47, %c0_48, %c0_49] : memref<8x12x128xf32, #tpu.memory_space<vmem>>, vector<1x12x128xf32>
    %81 = vector.shape_cast %80 : vector<1x12x128xf32> to vector<12x128xf32>
    %cst_50 = arith.constant dense<0.000000e+00> : vector<64x128xf32>
    %82 = tpu.matmul %79, %81, %cst_50 {dimension_numbers = #tpu.dot_dimension_numbers<[1], [0], [0], [1], [0, 0, 1, 1], [], []>} : vector<64x12xf32>, vector<12x128xf32>, vector<64x128xf32> -> vector<64x128xf32>
    %83 = arith.addf %57, %82 : vector<64x128xf32>
    %c2 = arith.constant 2 : index
    %c0_51 = arith.constant 0 : index
    %c0_52 = arith.constant 0 : index
    %84 = vector.load %arg4[%c2, %c0_51, %c0_52] : memref<8x128x12xf32, #tpu.memory_space<vmem>>, vector<1x128x12xf32>
    %85 = vector.shape_cast %84 : vector<1x128x12xf32> to vector<128x12xf32>
    %cst_53 = arith.constant dense<0.000000e+00> : vector<64x12xf32>
    %86 = tpu.matmul %29, %85, %cst_53 {dimension_numbers = #tpu.dot_dimension_numbers<[1], [0], [0], [1], [0, 0, 1, 1], [], []>} : vector<64x128xf32>, vector<128x12xf32>, vector<64x12xf32> -> vector<64x12xf32>
    %c2_54 = arith.constant 2 : index
    %c0_55 = arith.constant 0 : index
    %c0_56 = arith.constant 0 : index
    %87 = vector.load %arg3[%c2_54, %c0_55, %c0_56] : memref<8x128x12xf32, #tpu.memory_space<vmem>>, vector<1x128x12xf32>
    %88 = vector.shape_cast %87 : vector<1x128x12xf32> to vector<128x12xf32>
    %cst_57 = arith.constant dense<0.000000e+00> : vector<64x12xf32>
    %89 = tpu.matmul %29, %88, %cst_57 {dimension_numbers = #tpu.dot_dimension_numbers<[1], [0], [0], [1], [0, 0, 1, 1], [], []>} : vector<64x128xf32>, vector<128x12xf32>, vector<64x12xf32> -> vector<64x12xf32>
    %c2_58 = arith.constant 2 : index
    %c0_59 = arith.constant 0 : index
    %c0_60 = arith.constant 0 : index
    %90 = vector.load %arg5[%c2_58, %c0_59, %c0_60] : memref<8x128x12xf32, #tpu.memory_space<vmem>>, vector<1x128x12xf32>
    %91 = vector.shape_cast %90 : vector<1x128x12xf32> to vector<128x12xf32>
    %cst_61 = arith.constant dense<0.000000e+00> : vector<64x12xf32>
    %92 = tpu.matmul %29, %91, %cst_61 {dimension_numbers = #tpu.dot_dimension_numbers<[1], [0], [0], [1], [0, 0, 1, 1], [], []>} : vector<64x128xf32>, vector<128x12xf32>, vector<64x12xf32> -> vector<64x12xf32>
    %cst_62 = arith.constant dense<0.000000e+00> : vector<64x64xf32>
    %93 = tpu.matmul %86, %89, %cst_62 {dimension_numbers = #tpu.dot_dimension_numbers<[1], [1], [0], [0], [0, 0, 1, 0], [], []>} : vector<64x12xf32>, vector<64x12xf32>, vector<64x64xf32> -> vector<64x64xf32>
    %94 = arith.addf %93, %30 : vector<64x64xf32>
    %cst_63 = arith.constant dense<0xFF800000> : vector<64xf32>
    %95 = vector.multi_reduction <maximumf>, %94, %cst_63 [1] : vector<64x64xf32> to vector<64xf32>
    %96 = vector.shape_cast %95 : vector<64xf32> to vector<64x1xf32>
    %97 = vector.broadcast %96 : vector<64x1xf32> to vector<64x64xf32>
    %98 = arith.subf %94, %97 : vector<64x64xf32>
    %99 = math.exp %98 : vector<64x64xf32>
    %cst_64 = arith.constant dense<0.000000e+00> : vector<64xf32>
    %100 = vector.multi_reduction <add>, %99, %cst_64 [1] : vector<64x64xf32> to vector<64xf32>
    %101 = vector.shape_cast %100 : vector<64xf32> to vector<64x1xf32>
    %102 = tpu.reciprocal %101 {approx = true} : vector<64x1xf32> -> vector<64x1xf32>
    %103 = vector.broadcast %102 : vector<64x1xf32> to vector<64x64xf32>
    %104 = arith.mulf %99, %103 : vector<64x64xf32>
    %cst_65 = arith.constant dense<0.000000e+00> : vector<64x12xf32>
    %105 = tpu.matmul %104, %92, %cst_65 {dimension_numbers = #tpu.dot_dimension_numbers<[1], [0], [0], [1], [0, 0, 1, 1], [], []>} : vector<64x64xf32>, vector<64x12xf32>, vector<64x12xf32> -> vector<64x12xf32>
    %c2_66 = arith.constant 2 : index
    %c0_67 = arith.constant 0 : index
    %c0_68 = arith.constant 0 : index
    %106 = vector.load %arg6[%c2_66, %c0_67, %c0_68] : memref<8x12x128xf32, #tpu.memory_space<vmem>>, vector<1x12x128xf32>
    %107 = vector.shape_cast %106 : vector<1x12x128xf32> to vector<12x128xf32>
    %cst_69 = arith.constant dense<0.000000e+00> : vector<64x128xf32>
    %108 = tpu.matmul %105, %107, %cst_69 {dimension_numbers = #tpu.dot_dimension_numbers<[1], [0], [0], [1], [0, 0, 1, 1], [], []>} : vector<64x12xf32>, vector<12x128xf32>, vector<64x128xf32> -> vector<64x128xf32>
    %109 = arith.addf %83, %108 : vector<64x128xf32>
    %c3 = arith.constant 3 : index
    %c0_70 = arith.constant 0 : index
    %c0_71 = arith.constant 0 : index
    %110 = vector.load %arg4[%c3, %c0_70, %c0_71] : memref<8x128x12xf32, #tpu.memory_space<vmem>>, vector<1x128x12xf32>
    %111 = vector.shape_cast %110 : vector<1x128x12xf32> to vector<128x12xf32>
    %cst_72 = arith.constant dense<0.000000e+00> : vector<64x12xf32>
    %112 = tpu.matmul %29, %111, %cst_72 {dimension_numbers = #tpu.dot_dimension_numbers<[1], [0], [0], [1], [0, 0, 1, 1], [], []>} : vector<64x128xf32>, vector<128x12xf32>, vector<64x12xf32> -> vector<64x12xf32>
    %c3_73 = arith.constant 3 : index
    %c0_74 = arith.constant 0 : index
    %c0_75 = arith.constant 0 : index
    %113 = vector.load %arg3[%c3_73, %c0_74, %c0_75] : memref<8x128x12xf32, #tpu.memory_space<vmem>>, vector<1x128x12xf32>
    %114 = vector.shape_cast %113 : vector<1x128x12xf32> to vector<128x12xf32>
    %cst_76 = arith.constant dense<0.000000e+00> : vector<64x12xf32>
    %115 = tpu.matmul %29, %114, %cst_76 {dimension_numbers = #tpu.dot_dimension_numbers<[1], [0], [0], [1], [0, 0, 1, 1], [], []>} : vector<64x128xf32>, vector<128x12xf32>, vector<64x12xf32> -> vector<64x12xf32>
    %c3_77 = arith.constant 3 : index
    %c0_78 = arith.constant 0 : index
    %c0_79 = arith.constant 0 : index
    %116 = vector.load %arg5[%c3_77, %c0_78, %c0_79] : memref<8x128x12xf32, #tpu.memory_space<vmem>>, vector<1x128x12xf32>
    %117 = vector.shape_cast %116 : vector<1x128x12xf32> to vector<128x12xf32>
    %cst_80 = arith.constant dense<0.000000e+00> : vector<64x12xf32>
    %118 = tpu.matmul %29, %117, %cst_80 {dimension_numbers = #tpu.dot_dimension_numbers<[1], [0], [0], [1], [0, 0, 1, 1], [], []>} : vector<64x128xf32>, vector<128x12xf32>, vector<64x12xf32> -> vector<64x12xf32>
    %cst_81 = arith.constant dense<0.000000e+00> : vector<64x64xf32>
    %119 = tpu.matmul %112, %115, %cst_81 {dimension_numbers = #tpu.dot_dimension_numbers<[1], [1], [0], [0], [0, 0, 1, 0], [], []>} : vector<64x12xf32>, vector<64x12xf32>, vector<64x64xf32> -> vector<64x64xf32>
    %120 = arith.addf %119, %30 : vector<64x64xf32>
    %cst_82 = arith.constant dense<0xFF800000> : vector<64xf32>
    %121 = vector.multi_reduction <maximumf>, %120, %cst_82 [1] : vector<64x64xf32> to vector<64xf32>
    %122 = vector.shape_cast %121 : vector<64xf32> to vector<64x1xf32>
    %123 = vector.broadcast %122 : vector<64x1xf32> to vector<64x64xf32>
    %124 = arith.subf %120, %123 : vector<64x64xf32>
    %125 = math.exp %124 : vector<64x64xf32>
    %cst_83 = arith.constant dense<0.000000e+00> : vector<64xf32>
    %126 = vector.multi_reduction <add>, %125, %cst_83 [1] : vector<64x64xf32> to vector<64xf32>
    %127 = vector.shape_cast %126 : vector<64xf32> to vector<64x1xf32>
    %128 = tpu.reciprocal %127 {approx = true} : vector<64x1xf32> -> vector<64x1xf32>
    %129 = vector.broadcast %128 : vector<64x1xf32> to vector<64x64xf32>
    %130 = arith.mulf %125, %129 : vector<64x64xf32>
    %cst_84 = arith.constant dense<0.000000e+00> : vector<64x12xf32>
    %131 = tpu.matmul %130, %118, %cst_84 {dimension_numbers = #tpu.dot_dimension_numbers<[1], [0], [0], [1], [0, 0, 1, 1], [], []>} : vector<64x64xf32>, vector<64x12xf32>, vector<64x12xf32> -> vector<64x12xf32>
    %c3_85 = arith.constant 3 : index
    %c0_86 = arith.constant 0 : index
    %c0_87 = arith.constant 0 : index
    %132 = vector.load %arg6[%c3_85, %c0_86, %c0_87] : memref<8x12x128xf32, #tpu.memory_space<vmem>>, vector<1x12x128xf32>
    %133 = vector.shape_cast %132 : vector<1x12x128xf32> to vector<12x128xf32>
    %cst_88 = arith.constant dense<0.000000e+00> : vector<64x128xf32>
    %134 = tpu.matmul %131, %133, %cst_88 {dimension_numbers = #tpu.dot_dimension_numbers<[1], [0], [0], [1], [0, 0, 1, 1], [], []>} : vector<64x12xf32>, vector<12x128xf32>, vector<64x128xf32> -> vector<64x128xf32>
    %135 = arith.addf %109, %134 : vector<64x128xf32>
    %c4 = arith.constant 4 : index
    %c0_89 = arith.constant 0 : index
    %c0_90 = arith.constant 0 : index
    %136 = vector.load %arg4[%c4, %c0_89, %c0_90] : memref<8x128x12xf32, #tpu.memory_space<vmem>>, vector<1x128x12xf32>
    %137 = vector.shape_cast %136 : vector<1x128x12xf32> to vector<128x12xf32>
    %cst_91 = arith.constant dense<0.000000e+00> : vector<64x12xf32>
    %138 = tpu.matmul %29, %137, %cst_91 {dimension_numbers = #tpu.dot_dimension_numbers<[1], [0], [0], [1], [0, 0, 1, 1], [], []>} : vector<64x128xf32>, vector<128x12xf32>, vector<64x12xf32> -> vector<64x12xf32>
    %c4_92 = arith.constant 4 : index
    %c0_93 = arith.constant 0 : index
    %c0_94 = arith.constant 0 : index
    %139 = vector.load %arg3[%c4_92, %c0_93, %c0_94] : memref<8x128x12xf32, #tpu.memory_space<vmem>>, vector<1x128x12xf32>
    %140 = vector.shape_cast %139 : vector<1x128x12xf32> to vector<128x12xf32>
    %cst_95 = arith.constant dense<0.000000e+00> : vector<64x12xf32>
    %141 = tpu.matmul %29, %140, %cst_95 {dimension_numbers = #tpu.dot_dimension_numbers<[1], [0], [0], [1], [0, 0, 1, 1], [], []>} : vector<64x128xf32>, vector<128x12xf32>, vector<64x12xf32> -> vector<64x12xf32>
    %c4_96 = arith.constant 4 : index
    %c0_97 = arith.constant 0 : index
    %c0_98 = arith.constant 0 : index
    %142 = vector.load %arg5[%c4_96, %c0_97, %c0_98] : memref<8x128x12xf32, #tpu.memory_space<vmem>>, vector<1x128x12xf32>
    %143 = vector.shape_cast %142 : vector<1x128x12xf32> to vector<128x12xf32>
    %cst_99 = arith.constant dense<0.000000e+00> : vector<64x12xf32>
    %144 = tpu.matmul %29, %143, %cst_99 {dimension_numbers = #tpu.dot_dimension_numbers<[1], [0], [0], [1], [0, 0, 1, 1], [], []>} : vector<64x128xf32>, vector<128x12xf32>, vector<64x12xf32> -> vector<64x12xf32>
    %cst_100 = arith.constant dense<0.000000e+00> : vector<64x64xf32>
    %145 = tpu.matmul %138, %141, %cst_100 {dimension_numbers = #tpu.dot_dimension_numbers<[1], [1], [0], [0], [0, 0, 1, 0], [], []>} : vector<64x12xf32>, vector<64x12xf32>, vector<64x64xf32> -> vector<64x64xf32>
    %146 = arith.addf %145, %30 : vector<64x64xf32>
    %cst_101 = arith.constant dense<0xFF800000> : vector<64xf32>
    %147 = vector.multi_reduction <maximumf>, %146, %cst_101 [1] : vector<64x64xf32> to vector<64xf32>
    %148 = vector.shape_cast %147 : vector<64xf32> to vector<64x1xf32>
    %149 = vector.broadcast %148 : vector<64x1xf32> to vector<64x64xf32>
    %150 = arith.subf %146, %149 : vector<64x64xf32>
    %151 = math.exp %150 : vector<64x64xf32>
    %cst_102 = arith.constant dense<0.000000e+00> : vector<64xf32>
    %152 = vector.multi_reduction <add>, %151, %cst_102 [1] : vector<64x64xf32> to vector<64xf32>
    %153 = vector.shape_cast %152 : vector<64xf32> to vector<64x1xf32>
    %154 = tpu.reciprocal %153 {approx = true} : vector<64x1xf32> -> vector<64x1xf32>
    %155 = vector.broadcast %154 : vector<64x1xf32> to vector<64x64xf32>
    %156 = arith.mulf %151, %155 : vector<64x64xf32>
    %cst_103 = arith.constant dense<0.000000e+00> : vector<64x12xf32>
    %157 = tpu.matmul %156, %144, %cst_103 {dimension_numbers = #tpu.dot_dimension_numbers<[1], [0], [0], [1], [0, 0, 1, 1], [], []>} : vector<64x64xf32>, vector<64x12xf32>, vector<64x12xf32> -> vector<64x12xf32>
    %c4_104 = arith.constant 4 : index
    %c0_105 = arith.constant 0 : index
    %c0_106 = arith.constant 0 : index
    %158 = vector.load %arg6[%c4_104, %c0_105, %c0_106] : memref<8x12x128xf32, #tpu.memory_space<vmem>>, vector<1x12x128xf32>
    %159 = vector.shape_cast %158 : vector<1x12x128xf32> to vector<12x128xf32>
    %cst_107 = arith.constant dense<0.000000e+00> : vector<64x128xf32>
    %160 = tpu.matmul %157, %159, %cst_107 {dimension_numbers = #tpu.dot_dimension_numbers<[1], [0], [0], [1], [0, 0, 1, 1], [], []>} : vector<64x12xf32>, vector<12x128xf32>, vector<64x128xf32> -> vector<64x128xf32>
    %161 = arith.addf %135, %160 : vector<64x128xf32>
    %c5 = arith.constant 5 : index
    %c0_108 = arith.constant 0 : index
    %c0_109 = arith.constant 0 : index
    %162 = vector.load %arg4[%c5, %c0_108, %c0_109] : memref<8x128x12xf32, #tpu.memory_space<vmem>>, vector<1x128x12xf32>
    %163 = vector.shape_cast %162 : vector<1x128x12xf32> to vector<128x12xf32>
    %cst_110 = arith.constant dense<0.000000e+00> : vector<64x12xf32>
    %164 = tpu.matmul %29, %163, %cst_110 {dimension_numbers = #tpu.dot_dimension_numbers<[1], [0], [0], [1], [0, 0, 1, 1], [], []>} : vector<64x128xf32>, vector<128x12xf32>, vector<64x12xf32> -> vector<64x12xf32>
    %c5_111 = arith.constant 5 : index
    %c0_112 = arith.constant 0 : index
    %c0_113 = arith.constant 0 : index
    %165 = vector.load %arg3[%c5_111, %c0_112, %c0_113] : memref<8x128x12xf32, #tpu.memory_space<vmem>>, vector<1x128x12xf32>
    %166 = vector.shape_cast %165 : vector<1x128x12xf32> to vector<128x12xf32>
    %cst_114 = arith.constant dense<0.000000e+00> : vector<64x12xf32>
    %167 = tpu.matmul %29, %166, %cst_114 {dimension_numbers = #tpu.dot_dimension_numbers<[1], [0], [0], [1], [0, 0, 1, 1], [], []>} : vector<64x128xf32>, vector<128x12xf32>, vector<64x12xf32> -> vector<64x12xf32>
    %c5_115 = arith.constant 5 : index
    %c0_116 = arith.constant 0 : index
    %c0_117 = arith.constant 0 : index
    %168 = vector.load %arg5[%c5_115, %c0_116, %c0_117] : memref<8x128x12xf32, #tpu.memory_space<vmem>>, vector<1x128x12xf32>
    %169 = vector.shape_cast %168 : vector<1x128x12xf32> to vector<128x12xf32>
    %cst_118 = arith.constant dense<0.000000e+00> : vector<64x12xf32>
    %170 = tpu.matmul %29, %169, %cst_118 {dimension_numbers = #tpu.dot_dimension_numbers<[1], [0], [0], [1], [0, 0, 1, 1], [], []>} : vector<64x128xf32>, vector<128x12xf32>, vector<64x12xf32> -> vector<64x12xf32>
    %cst_119 = arith.constant dense<0.000000e+00> : vector<64x64xf32>
    %171 = tpu.matmul %164, %167, %cst_119 {dimension_numbers = #tpu.dot_dimension_numbers<[1], [1], [0], [0], [0, 0, 1, 0], [], []>} : vector<64x12xf32>, vector<64x12xf32>, vector<64x64xf32> -> vector<64x64xf32>
    %172 = arith.addf %171, %30 : vector<64x64xf32>
    %cst_120 = arith.constant dense<0xFF800000> : vector<64xf32>
    %173 = vector.multi_reduction <maximumf>, %172, %cst_120 [1] : vector<64x64xf32> to vector<64xf32>
    %174 = vector.shape_cast %173 : vector<64xf32> to vector<64x1xf32>
    %175 = vector.broadcast %174 : vector<64x1xf32> to vector<64x64xf32>
    %176 = arith.subf %172, %175 : vector<64x64xf32>
    %177 = math.exp %176 : vector<64x64xf32>
    %cst_121 = arith.constant dense<0.000000e+00> : vector<64xf32>
    %178 = vector.multi_reduction <add>, %177, %cst_121 [1] : vector<64x64xf32> to vector<64xf32>
    %179 = vector.shape_cast %178 : vector<64xf32> to vector<64x1xf32>
    %180 = tpu.reciprocal %179 {approx = true} : vector<64x1xf32> -> vector<64x1xf32>
    %181 = vector.broadcast %180 : vector<64x1xf32> to vector<64x64xf32>
    %182 = arith.mulf %177, %181 : vector<64x64xf32>
    %cst_122 = arith.constant dense<0.000000e+00> : vector<64x12xf32>
    %183 = tpu.matmul %182, %170, %cst_122 {dimension_numbers = #tpu.dot_dimension_numbers<[1], [0], [0], [1], [0, 0, 1, 1], [], []>} : vector<64x64xf32>, vector<64x12xf32>, vector<64x12xf32> -> vector<64x12xf32>
    %c5_123 = arith.constant 5 : index
    %c0_124 = arith.constant 0 : index
    %c0_125 = arith.constant 0 : index
    %184 = vector.load %arg6[%c5_123, %c0_124, %c0_125] : memref<8x12x128xf32, #tpu.memory_space<vmem>>, vector<1x12x128xf32>
    %185 = vector.shape_cast %184 : vector<1x12x128xf32> to vector<12x128xf32>
    %cst_126 = arith.constant dense<0.000000e+00> : vector<64x128xf32>
    %186 = tpu.matmul %183, %185, %cst_126 {dimension_numbers = #tpu.dot_dimension_numbers<[1], [0], [0], [1], [0, 0, 1, 1], [], []>} : vector<64x12xf32>, vector<12x128xf32>, vector<64x128xf32> -> vector<64x128xf32>
    %187 = arith.addf %161, %186 : vector<64x128xf32>
    %c6 = arith.constant 6 : index
    %c0_127 = arith.constant 0 : index
    %c0_128 = arith.constant 0 : index
    %188 = vector.load %arg4[%c6, %c0_127, %c0_128] : memref<8x128x12xf32, #tpu.memory_space<vmem>>, vector<1x128x12xf32>
    %189 = vector.shape_cast %188 : vector<1x128x12xf32> to vector<128x12xf32>
    %cst_129 = arith.constant dense<0.000000e+00> : vector<64x12xf32>
    %190 = tpu.matmul %29, %189, %cst_129 {dimension_numbers = #tpu.dot_dimension_numbers<[1], [0], [0], [1], [0, 0, 1, 1], [], []>} : vector<64x128xf32>, vector<128x12xf32>, vector<64x12xf32> -> vector<64x12xf32>
    %c6_130 = arith.constant 6 : index
    %c0_131 = arith.constant 0 : index
    %c0_132 = arith.constant 0 : index
    %191 = vector.load %arg3[%c6_130, %c0_131, %c0_132] : memref<8x128x12xf32, #tpu.memory_space<vmem>>, vector<1x128x12xf32>
    %192 = vector.shape_cast %191 : vector<1x128x12xf32> to vector<128x12xf32>
    %cst_133 = arith.constant dense<0.000000e+00> : vector<64x12xf32>
    %193 = tpu.matmul %29, %192, %cst_133 {dimension_numbers = #tpu.dot_dimension_numbers<[1], [0], [0], [1], [0, 0, 1, 1], [], []>} : vector<64x128xf32>, vector<128x12xf32>, vector<64x12xf32> -> vector<64x12xf32>
    %c6_134 = arith.constant 6 : index
    %c0_135 = arith.constant 0 : index
    %c0_136 = arith.constant 0 : index
    %194 = vector.load %arg5[%c6_134, %c0_135, %c0_136] : memref<8x128x12xf32, #tpu.memory_space<vmem>>, vector<1x128x12xf32>
    %195 = vector.shape_cast %194 : vector<1x128x12xf32> to vector<128x12xf32>
    %cst_137 = arith.constant dense<0.000000e+00> : vector<64x12xf32>
    %196 = tpu.matmul %29, %195, %cst_137 {dimension_numbers = #tpu.dot_dimension_numbers<[1], [0], [0], [1], [0, 0, 1, 1], [], []>} : vector<64x128xf32>, vector<128x12xf32>, vector<64x12xf32> -> vector<64x12xf32>
    %cst_138 = arith.constant dense<0.000000e+00> : vector<64x64xf32>
    %197 = tpu.matmul %190, %193, %cst_138 {dimension_numbers = #tpu.dot_dimension_numbers<[1], [1], [0], [0], [0, 0, 1, 0], [], []>} : vector<64x12xf32>, vector<64x12xf32>, vector<64x64xf32> -> vector<64x64xf32>
    %198 = arith.addf %197, %30 : vector<64x64xf32>
    %cst_139 = arith.constant dense<0xFF800000> : vector<64xf32>
    %199 = vector.multi_reduction <maximumf>, %198, %cst_139 [1] : vector<64x64xf32> to vector<64xf32>
    %200 = vector.shape_cast %199 : vector<64xf32> to vector<64x1xf32>
    %201 = vector.broadcast %200 : vector<64x1xf32> to vector<64x64xf32>
    %202 = arith.subf %198, %201 : vector<64x64xf32>
    %203 = math.exp %202 : vector<64x64xf32>
    %cst_140 = arith.constant dense<0.000000e+00> : vector<64xf32>
    %204 = vector.multi_reduction <add>, %203, %cst_140 [1] : vector<64x64xf32> to vector<64xf32>
    %205 = vector.shape_cast %204 : vector<64xf32> to vector<64x1xf32>
    %206 = tpu.reciprocal %205 {approx = true} : vector<64x1xf32> -> vector<64x1xf32>
    %207 = vector.broadcast %206 : vector<64x1xf32> to vector<64x64xf32>
    %208 = arith.mulf %203, %207 : vector<64x64xf32>
    %cst_141 = arith.constant dense<0.000000e+00> : vector<64x12xf32>
    %209 = tpu.matmul %208, %196, %cst_141 {dimension_numbers = #tpu.dot_dimension_numbers<[1], [0], [0], [1], [0, 0, 1, 1], [], []>} : vector<64x64xf32>, vector<64x12xf32>, vector<64x12xf32> -> vector<64x12xf32>
    %c6_142 = arith.constant 6 : index
    %c0_143 = arith.constant 0 : index
    %c0_144 = arith.constant 0 : index
    %210 = vector.load %arg6[%c6_142, %c0_143, %c0_144] : memref<8x12x128xf32, #tpu.memory_space<vmem>>, vector<1x12x128xf32>
    %211 = vector.shape_cast %210 : vector<1x12x128xf32> to vector<12x128xf32>
    %cst_145 = arith.constant dense<0.000000e+00> : vector<64x128xf32>
    %212 = tpu.matmul %209, %211, %cst_145 {dimension_numbers = #tpu.dot_dimension_numbers<[1], [0], [0], [1], [0, 0, 1, 1], [], []>} : vector<64x12xf32>, vector<12x128xf32>, vector<64x128xf32> -> vector<64x128xf32>
    %213 = arith.addf %187, %212 : vector<64x128xf32>
    %c7 = arith.constant 7 : index
    %c0_146 = arith.constant 0 : index
    %c0_147 = arith.constant 0 : index
    %214 = vector.load %arg4[%c7, %c0_146, %c0_147] : memref<8x128x12xf32, #tpu.memory_space<vmem>>, vector<1x128x12xf32>
    %215 = vector.shape_cast %214 : vector<1x128x12xf32> to vector<128x12xf32>
    %cst_148 = arith.constant dense<0.000000e+00> : vector<64x12xf32>
    %216 = tpu.matmul %29, %215, %cst_148 {dimension_numbers = #tpu.dot_dimension_numbers<[1], [0], [0], [1], [0, 0, 1, 1], [], []>} : vector<64x128xf32>, vector<128x12xf32>, vector<64x12xf32> -> vector<64x12xf32>
    %c7_149 = arith.constant 7 : index
    %c0_150 = arith.constant 0 : index
    %c0_151 = arith.constant 0 : index
    %217 = vector.load %arg3[%c7_149, %c0_150, %c0_151] : memref<8x128x12xf32, #tpu.memory_space<vmem>>, vector<1x128x12xf32>
    %218 = vector.shape_cast %217 : vector<1x128x12xf32> to vector<128x12xf32>
    %cst_152 = arith.constant dense<0.000000e+00> : vector<64x12xf32>
    %219 = tpu.matmul %29, %218, %cst_152 {dimension_numbers = #tpu.dot_dimension_numbers<[1], [0], [0], [1], [0, 0, 1, 1], [], []>} : vector<64x128xf32>, vector<128x12xf32>, vector<64x12xf32> -> vector<64x12xf32>
    %c7_153 = arith.constant 7 : index
    %c0_154 = arith.constant 0 : index
    %c0_155 = arith.constant 0 : index
    %220 = vector.load %arg5[%c7_153, %c0_154, %c0_155] : memref<8x128x12xf32, #tpu.memory_space<vmem>>, vector<1x128x12xf32>
    %221 = vector.shape_cast %220 : vector<1x128x12xf32> to vector<128x12xf32>
    %cst_156 = arith.constant dense<0.000000e+00> : vector<64x12xf32>
    %222 = tpu.matmul %29, %221, %cst_156 {dimension_numbers = #tpu.dot_dimension_numbers<[1], [0], [0], [1], [0, 0, 1, 1], [], []>} : vector<64x128xf32>, vector<128x12xf32>, vector<64x12xf32> -> vector<64x12xf32>
    %cst_157 = arith.constant dense<0.000000e+00> : vector<64x64xf32>
    %223 = tpu.matmul %216, %219, %cst_157 {dimension_numbers = #tpu.dot_dimension_numbers<[1], [1], [0], [0], [0, 0, 1, 0], [], []>} : vector<64x12xf32>, vector<64x12xf32>, vector<64x64xf32> -> vector<64x64xf32>
    %224 = arith.addf %223, %30 : vector<64x64xf32>
    %cst_158 = arith.constant dense<0xFF800000> : vector<64xf32>
    %225 = vector.multi_reduction <maximumf>, %224, %cst_158 [1] : vector<64x64xf32> to vector<64xf32>
    %226 = vector.shape_cast %225 : vector<64xf32> to vector<64x1xf32>
    %227 = vector.broadcast %226 : vector<64x1xf32> to vector<64x64xf32>
    %228 = arith.subf %224, %227 : vector<64x64xf32>
    %229 = math.exp %228 : vector<64x64xf32>
    %cst_159 = arith.constant dense<0.000000e+00> : vector<64xf32>
    %230 = vector.multi_reduction <add>, %229, %cst_159 [1] : vector<64x64xf32> to vector<64xf32>
    %231 = vector.shape_cast %230 : vector<64xf32> to vector<64x1xf32>
    %232 = tpu.reciprocal %231 {approx = true} : vector<64x1xf32> -> vector<64x1xf32>
    %233 = vector.broadcast %232 : vector<64x1xf32> to vector<64x64xf32>
    %234 = arith.mulf %229, %233 : vector<64x64xf32>
    %cst_160 = arith.constant dense<0.000000e+00> : vector<64x12xf32>
    %235 = tpu.matmul %234, %222, %cst_160 {dimension_numbers = #tpu.dot_dimension_numbers<[1], [0], [0], [1], [0, 0, 1, 1], [], []>} : vector<64x64xf32>, vector<64x12xf32>, vector<64x12xf32> -> vector<64x12xf32>
    %c7_161 = arith.constant 7 : index
    %c0_162 = arith.constant 0 : index
    %c0_163 = arith.constant 0 : index
    %236 = vector.load %arg6[%c7_161, %c0_162, %c0_163] : memref<8x12x128xf32, #tpu.memory_space<vmem>>, vector<1x12x128xf32>
    %237 = vector.shape_cast %236 : vector<1x12x128xf32> to vector<12x128xf32>
    %cst_164 = arith.constant dense<0.000000e+00> : vector<64x128xf32>
    %238 = tpu.matmul %235, %237, %cst_164 {dimension_numbers = #tpu.dot_dimension_numbers<[1], [0], [0], [1], [0, 0, 1, 1], [], []>} : vector<64x12xf32>, vector<12x128xf32>, vector<64x128xf32> -> vector<64x128xf32>
    %239 = arith.addf %213, %238 : vector<64x128xf32>
    %240 = arith.addf %0, %239 : vector<64x128xf32>
    %c0_165 = arith.constant 0 : index
    %c0_166 = arith.constant 0 : index
    %241 = vector.load %arg7[%c0_165, %c0_166] : memref<1x128xf32, #tpu.memory_space<vmem>>, vector<1x128xf32>
    %242 = vector.broadcast %241 : vector<1x128xf32> to vector<64x128xf32>
    %243 = arith.addf %240, %242 : vector<64x128xf32>
    %c0_167 = arith.constant 0 : index
    %c0_168 = arith.constant 0 : index
    %244 = vector.load %arg12[%c0_167, %c0_168] : memref<1x128xf32, #tpu.memory_space<vmem>>, vector<1x128xf32>
    %c0_169 = arith.constant 0 : index
    %c0_170 = arith.constant 0 : index
    %245 = vector.load %arg13[%c0_169, %c0_170] : memref<1x128xf32, #tpu.memory_space<vmem>>, vector<1x128xf32>
    %cst_171 = arith.constant dense<0.000000e+00> : vector<64xf32>
    %246 = vector.multi_reduction <add>, %243, %cst_171 [1] : vector<64x128xf32> to vector<64xf32>
    %247 = vector.shape_cast %246 : vector<64xf32> to vector<64x1xf32>
    %cst_172 = arith.constant 0.010416667 : f32
    %248 = vector.broadcast %cst_172 : f32 to vector<64x1xf32>
    %249 = arith.mulf %247, %248 : vector<64x1xf32>
    %250 = vector.broadcast %249 : vector<64x1xf32> to vector<64x128xf32>
    %251 = arith.subf %243, %250 : vector<64x128xf32>
    %252 = vector.broadcast %5 : vector<1x128xf32> to vector<64x128xf32>
    %253 = arith.mulf %251, %252 : vector<64x128xf32>
    %254 = arith.mulf %253, %253 : vector<64x128xf32>
    %cst_173 = arith.constant dense<0.000000e+00> : vector<64xf32>
    %255 = vector.multi_reduction <add>, %254, %cst_173 [1] : vector<64x128xf32> to vector<64xf32>
    %256 = vector.shape_cast %255 : vector<64xf32> to vector<64x1xf32>
    %cst_174 = arith.constant 0.010416667 : f32
    %257 = vector.broadcast %cst_174 : f32 to vector<64x1xf32>
    %258 = arith.mulf %256, %257 : vector<64x1xf32>
    %cst_175 = arith.constant 9.99999974E-6 : f32
    %259 = vector.broadcast %cst_175 : f32 to vector<64x1xf32>
    %260 = arith.addf %258, %259 : vector<64x1xf32>
    %261 = math.rsqrt %260 : vector<64x1xf32>
    %262 = vector.broadcast %261 : vector<64x1xf32> to vector<64x128xf32>
    %263 = arith.mulf %253, %262 : vector<64x128xf32>
    %264 = vector.broadcast %244 : vector<1x128xf32> to vector<64x128xf32>
    %265 = arith.mulf %263, %264 : vector<64x128xf32>
    %266 = vector.broadcast %245 : vector<1x128xf32> to vector<64x128xf32>
    %267 = arith.addf %265, %266 : vector<64x128xf32>
    %c0_176 = arith.constant 0 : index
    %c0_177 = arith.constant 0 : index
    %268 = vector.load %arg8[%c0_176, %c0_177] : memref<128x384xf32, #tpu.memory_space<vmem>>, vector<128x384xf32>
    %cst_178 = arith.constant dense<0.000000e+00> : vector<64x384xf32>
    %269 = tpu.matmul %267, %268, %cst_178 {dimension_numbers = #tpu.dot_dimension_numbers<[1], [0], [0], [1], [0, 0, 1, 1], [], []>} : vector<64x128xf32>, vector<128x384xf32>, vector<64x384xf32> -> vector<64x384xf32>
    %cst_179 = arith.constant 0.000000e+00 : f32
    %270 = vector.broadcast %cst_179 : f32 to vector<64x384xf32>
    %271 = arith.maximumf %269, %270 : vector<64x384xf32>
    %c0_180 = arith.constant 0 : index
    %c0_181 = arith.constant 0 : index
    %272 = vector.load %arg9[%c0_180, %c0_181] : memref<384x128xf32, #tpu.memory_space<vmem>>, vector<384x128xf32>
    %cst_182 = arith.constant dense<0.000000e+00> : vector<64x128xf32>
    %273 = tpu.matmul %271, %272, %cst_182 {dimension_numbers = #tpu.dot_dimension_numbers<[1], [0], [0], [1], [0, 0, 1, 1], [], []>} : vector<64x384xf32>, vector<384x128xf32>, vector<64x128xf32> -> vector<64x128xf32>
    %274 = arith.addf %243, %273 : vector<64x128xf32>
    %c0_183 = arith.constant 0 : index
    %c0_184 = arith.constant 0 : index
    %275 = vector.load %arg14[%c0_183, %c0_184] : memref<64x128xf32, #tpu.memory_space<vmem>>, vector<64x128xf32>
    tpu.vector_store %arg14[%c0_183, %c0_184], %274 {strides = array<i32>} : memref<64x128xf32, #tpu.memory_space<vmem>>, vector<64x128xf32>,
    return
  }
  func.func @transform_0(%arg0: i32) -> (i32, i32) {
    %c0_i32 = arith.constant 0 : i32
    %c0_i32_0 = arith.constant 0 : i32
    return %arg0, %c0_i32 : i32, i32
  }
  func.func @transform_1(%arg0: i32) -> (i32, i32) {
    %c0_i32 = arith.constant 0 : i32
    %c0_i32_0 = arith.constant 0 : i32
    %c0_i32_1 = arith.constant 0 : i32
    return %c0_i32, %c0_i32_0 : i32, i32
  }
  func.func @transform_2(%arg0: i32) -> (i32, i32, i32) {
    %c0_i32 = arith.constant 0 : i32
    %c0_i32_0 = arith.constant 0 : i32
    %c0_i32_1 = arith.constant 0 : i32
    %c0_i32_2 = arith.constant 0 : i32
    return %c0_i32, %c0_i32_0, %c0_i32_1 : i32, i32, i32
  }
  func.func @transform_3(%arg0: i32) -> (i32, i32, i32) {
    %c0_i32 = arith.constant 0 : i32
    %c0_i32_0 = arith.constant 0 : i32
    %c0_i32_1 = arith.constant 0 : i32
    %c0_i32_2 = arith.constant 0 : i32
    return %c0_i32, %c0_i32_0, %c0_i32_1 : i32, i32, i32
  }
  func.func @transform_4(%arg0: i32) -> (i32, i32, i32) {
    %c0_i32 = arith.constant 0 : i32
    %c0_i32_0 = arith.constant 0 : i32
    %c0_i32_1 = arith.constant 0 : i32
    %c0_i32_2 = arith.constant 0 : i32
    return %c0_i32, %c0_i32_0, %c0_i32_1 : i32, i32, i32
  }
  func.func @transform_5(%arg0: i32) -> (i32, i32, i32) {
    %c0_i32 = arith.constant 0 : i32
    %c0_i32_0 = arith.constant 0 : i32
    %c0_i32_1 = arith.constant 0 : i32
    %c0_i32_2 = arith.constant 0 : i32
    return %c0_i32, %c0_i32_0, %c0_i32_1 : i32, i32, i32
  }
  func.func @transform_6(%arg0: i32) -> (i32, i32) {
    %c0_i32 = arith.constant 0 : i32
    %c0_i32_0 = arith.constant 0 : i32
    %c0_i32_1 = arith.constant 0 : i32
    return %c0_i32, %c0_i32_0 : i32, i32
  }
  func.func @transform_7(%arg0: i32) -> (i32, i32) {
    %c0_i32 = arith.constant 0 : i32
    %c0_i32_0 = arith.constant 0 : i32
    %c0_i32_1 = arith.constant 0 : i32
    return %c0_i32, %c0_i32_0 : i32, i32
  }
  func.func @transform_8(%arg0: i32) -> (i32, i32) {
    %c0_i32 = arith.constant 0 : i32
    %c0_i32_0 = arith.constant 0 : i32
    %c0_i32_1 = arith.constant 0 : i32
    return %c0_i32, %c0_i32_0 : i32, i32
  }
  func.func @transform_9(%arg0: i32) -> (i32, i32) {
    %c0_i32 = arith.constant 0 : i32
    %c0_i32_0 = arith.constant 0 : i32
    %c0_i32_1 = arith.constant 0 : i32
    return %c0_i32, %c0_i32_0 : i32, i32
  }
  func.func @transform_10(%arg0: i32) -> (i32, i32) {
    %c0_i32 = arith.constant 0 : i32
    %c0_i32_0 = arith.constant 0 : i32
    %c0_i32_1 = arith.constant 0 : i32
    return %c0_i32, %c0_i32_0 : i32, i32
  }
  func.func @transform_11(%arg0: i32) -> (i32, i32) {
    %c0_i32 = arith.constant 0 : i32
    %c0_i32_0 = arith.constant 0 : i32
    %c0_i32_1 = arith.constant 0 : i32
    return %c0_i32, %c0_i32_0 : i32, i32
  }
  func.func @transform_12(%arg0: i32) -> (i32, i32) {
    %c0_i32 = arith.constant 0 : i32
    %c0_i32_0 = arith.constant 0 : i32
    %c0_i32_1 = arith.constant 0 : i32
    return %c0_i32, %c0_i32_0 : i32, i32
  }
  func.func @transform_13(%arg0: i32) -> (i32, i32) {
    %c0_i32 = arith.constant 0 : i32
    %c0_i32_0 = arith.constant 0 : i32
    return %arg0, %c0_i32 : i32, i32
  }
}

</mosaic_0001>

<llo_original>
// kernel: block_forward.1
$region0: #{block_forward.1}
  #allocation0 [shape = 'u32[]', space=smem, size = 0x4, offset = 0x4, fixed_abs, tag = 'smem constant byte address 0x4 - core index']
  #allocation1 [shape = 'u32[144,128]{1,0:T(1,128)}', space=vmem, size = 0x12000, scoped, tag = 'internal scratch']
  %s0 = inlined_call_operand.vmem [shape: f32[128,128], index: 0, kind: input, shape index: {}]
  %s1 = inlined_call_operand.vmem [shape: f32[64,64], index: 1, kind: input, shape index: {}]
  %s2 = inlined_call_operand.vmem [shape: f32[8,128,12], index: 2, kind: input, shape index: {}]
  %s3 = inlined_call_operand.vmem [shape: f32[8,128,12], index: 3, kind: input, shape index: {}]
  %s4 = inlined_call_operand.vmem [shape: f32[8,128,12], index: 4, kind: input, shape index: {}]
  %s5 = inlined_call_operand.vmem [shape: f32[8,12,128], index: 5, kind: input, shape index: {}]
  %s6 = inlined_call_operand.vmem [shape: f32[1,128], index: 6, kind: input, shape index: {}]
  %s7 = inlined_call_operand.vmem [shape: f32[128,384], index: 7, kind: input, shape index: {}]
  %s8 = inlined_call_operand.vmem [shape: f32[384,128], index: 8, kind: input, shape index: {}]
  %s9 = inlined_call_operand.vmem [shape: f32[1,128], index: 9, kind: input, shape index: {}]
  %s10 = inlined_call_operand.vmem [shape: f32[1,128], index: 10, kind: input, shape index: {}]
  %s11 = inlined_call_operand.vmem [shape: f32[1,128], index: 11, kind: input, shape index: {}]
  %s12 = inlined_call_operand.vmem [shape: f32[1,128], index: 12, kind: input, shape index: {}]
  %s13 = inlined_call_operand.hbm [shape: f32[128,128], index: 13, kind: output, shape index: {}]
  %s14 = sld [smem:[#allocation0]]
  $region85: #{block_forward.1} parent=0
    _
  %s16 = ssub.s32 1, %s14
  %s17 = scalar_select 0, %s16, %s14
  $region1: #{block_forward.1} parent=0
    #allocation2 [shape = 'u8[65536]{0}', space=vmem, size = 0x10000, scoped, tag = 'output window, operand 0']
    #allocation3 [shape = 's32[2]{0}', space=sflag, size = 0x8, scoped, tag = 'scoped memory for block_forward.1']
    %18 = vsyncpa [#allocation3], 0
    %s19 = scalar_lea.sflag [#allocation3], 1
    %20 = vsyncpa %s19, 0
    loop: start=0, step=1, limit=4
    $region2: #{block_forward.1} parent=1 // loop_pre_header
      _
    $region3: #{block_forward.1} parent=1 // loop_header
      %s22 = sphi 0, %s26
      %p23 = scmp.ge.s32.totalorder %s22, 4
      %s32 = sphi 0, %s34
      %s35 = sphi 0, %s32
      %s36 = sphi 0, %s35
      %s52 = sphi 0, %s36
      %s56 = sphi 0, %s56
      %s58 = sphi 0, %s56
      %s59 = sphi 0, %s58
      %s73 = sphi 0, %s59
      %s77 = sphi 0, %s77
      %s79 = sphi 0, %s77
      %s80 = sphi 0, %s79
      %s94 = sphi 0, %s80
      %s98 = sphi 0, %s98
      %s100 = sphi 0, %s98
      %s101 = sphi 0, %s100
      %s115 = sphi 0, %s101
      %s119 = sphi 0, %s119
      %s121 = sphi 0, %s119
      %s122 = sphi 0, %s121
      %s136 = sphi 0, %s122
      %s140 = sphi 0, %s140
      %s142 = sphi 0, %s140
      %s143 = sphi 0, %s142
      %s157 = sphi 0, %s143
      %s161 = sphi 0, %s161
      %s163 = sphi 0, %s161
      %s164 = sphi 0, %s163
      %s178 = sphi 0, %s164
      %s182 = sphi 0, %s182
      %s184 = sphi 0, %s182
      %s185 = sphi 0, %s184
      %s199 = sphi 0, %s185
      %s203 = sphi 0, %s203
      %s205 = sphi 0, %s203
      %s206 = sphi 0, %s205
      %s220 = sphi 0, %s206
      %s224 = sphi 0, %s224
      %s226 = sphi 0, %s224
      %s227 = sphi 0, %s226
      %s241 = sphi 0, %s227
      %s245 = sphi 0, %s245
      %s247 = sphi 0, %s245
      %s248 = sphi 0, %s247
      %s262 = sphi 0, %s248
      %s266 = sphi 0, %s266
      %s268 = sphi 0, %s266
      %s269 = sphi 0, %s268
      %s283 = sphi 0, %s269
      %s287 = sphi 0, %s287
      %s289 = sphi 0, %s287
      %s290 = sphi 0, %s289
      %s304 = sphi 0, %s290
      %s310 = sphi 0, %s312
      %s313 = sphi 0, %s310
      %s314 = sphi 0, %s313
      %s330 = sphi 0, %s314
    $region4: #{block_forward.1} parent=1 // loop_header_branch
      %25 = sbr.rel (%p23) target = $region8
    $region5: #{block_forward.1} parent=1 // loop_body
      %s27 = ssub.s32 %s22, 1
      %s28 = ssub.s32 %s22, 2
      %s29 = sadd.s32 %s22, 1
      %s30 = ssub.s32 %s22, %s29
      %p31 = scmp.eq.s32.totalorder %s30, 0
      %s33 = sadd.s32 %s32, 1
      %s34 = scalar_select %p31, %s32, %s33
      %p37 = pneg %p31
      %p38 = scmp.eq.s32.totalorder %s22, 1
      %p39 = por %p37, %p38
      %p40 = scmp.ne.s32.totalorder %s32, %s35
      %p41 = scmp.eq.s32.totalorder %s22, 0
      %p42 = por %p40, %p41
      %p43 = scmp.ne.s32.totalorder %s32, %s35
      %p44 = scmp.eq.s32.totalorder %s27, 1
      %p45 = por %p43, %p44
      %p46 = scmp.ne.s32.totalorder %s35, %s36
      %p47 = scmp.eq.s32.totalorder %s27, 0
      %p48 = por %p46, %p47
      %p49 = scmp.ne.s32.totalorder %s35, %s36
      %p50 = scmp.eq.s32.totalorder %s28, 1
      %p51 = por %p49, %p50
      %p53 = scmp.ne.s32.totalorder %s36, %s52
      %p54 = scmp.eq.s32.totalorder %s28, 0
      %p55 = por %p53, %p54
      %s57 = sadd.s32 %s56, 1
      %p60 = scmp.eq.s32.totalorder %s22, 1
      %p61 = scmp.ne.s32.totalorder %s56, %s58
      %p62 = scmp.eq.s32.totalorder %s22, 0
      %p63 = por %p61, %p62
      %p64 = scmp.ne.s32.totalorder %s56, %s58
      %p65 = scmp.eq.s32.totalorder %s27, 1
      %p66 = por %p64, %p65
      %p67 = scmp.ne.s32.totalorder %s58, %s59
      %p68 = scmp.eq.s32.totalorder %s27, 0
      %p69 = por %p67, %p68
      %p70 = scmp.ne.s32.totalorder %s58, %s59
      %p71 = scmp.eq.s32.totalorder %s28, 1
      %p72 = por %p70, %p71
      %p74 = scmp.ne.s32.totalorder %s59, %s73
      %p75 = scmp.eq.s32.totalorder %s28, 0
      %p76 = por %p74, %p75
      %s78 = sadd.s32 %s77, 1
      %p81 = scmp.eq.s32.totalorder %s22, 1
      %p82 = scmp.ne.s32.totalorder %s77, %s79
      %p83 = scmp.eq.s32.totalorder %s22, 0
      %p84 = por %p82, %p83
      %p85 = scmp.ne.s32.totalorder %s77, %s79
      %p86 = scmp.eq.s32.totalorder %s27, 1
      %p87 = por %p85, %p86
      %p88 = scmp.ne.s32.totalorder %s79, %s80
      %p89 = scmp.eq.s32.totalorder %s27, 0
      %p90 = por %p88, %p89
      %p91 = scmp.ne.s32.totalorder %s79, %s80
      %p92 = scmp.eq.s32.totalorder %s28, 1
      %p93 = por %p91, %p92
      %p95 = scmp.ne.s32.totalorder %s80, %s94
      %p96 = scmp.eq.s32.totalorder %s28, 0
      %p97 = por %p95, %p96
      %s99 = sadd.s32 %s98, 1
      %p102 = scmp.eq.s32.totalorder %s22, 1
      %p103 = scmp.ne.s32.totalorder %s98, %s100
      %p104 = scmp.eq.s32.totalorder %s22, 0
      %p105 = por %p103, %p104
      %p106 = scmp.ne.s32.totalorder %s98, %s100
      %p107 = scmp.eq.s32.totalorder %s27, 1
      %p108 = por %p106, %p107
      %p109 = scmp.ne.s32.totalorder %s100, %s101
      %p110 = scmp.eq.s32.totalorder %s27, 0
      %p111 = por %p109, %p110
      %p112 = scmp.ne.s32.totalorder %s100, %s101
      %p113 = scmp.eq.s32.totalorder %s28, 1
      %p114 = por %p112, %p113
      %p116 = scmp.ne.s32.totalorder %s101, %s115
      %p117 = scmp.eq.s32.totalorder %s28, 0
      %p118 = por %p116, %p117
      %s120 = sadd.s32 %s119, 1
      %p123 = scmp.eq.s32.totalorder %s22, 1
      %p124 = scmp.ne.s32.totalorder %s119, %s121
      %p125 = scmp.eq.s32.totalorder %s22, 0
      %p126 = por %p124, %p125
      %p127 = scmp.ne.s32.totalorder %s119, %s121
      %p128 = scmp.eq.s32.totalorder %s27, 1
      %p129 = por %p127, %p128
      %p130 = scmp.ne.s32.totalorder %s121, %s122
      %p131 = scmp.eq.s32.totalorder %s27, 0
      %p132 = por %p130, %p131
      %p133 = scmp.ne.s32.totalorder %s121, %s122
      %p134 = scmp.eq.s32.totalorder %s28, 1
      %p135 = por %p133, %p134
      %p137 = scmp.ne.s32.totalorder %s122, %s136
      %p138 = scmp.eq.s32.totalorder %s28, 0
      %p139 = por %p137, %p138
      %s141 = sadd.s32 %s140, 1
      %p144 = scmp.eq.s32.totalorder %s22, 1
      %p145 = scmp.ne.s32.totalorder %s140, %s142
      %p146 = scmp.eq.s32.totalorder %s22, 0
      %p147 = por %p145, %p146
      %p148 = scmp.ne.s32.totalorder %s140, %s142
      %p149 = scmp.eq.s32.totalorder %s27, 1
      %p150 = por %p148, %p149
      %p151 = scmp.ne.s32.totalorder %s142, %s143
      %p152 = scmp.eq.s32.totalorder %s27, 0
      %p153 = por %p151, %p152
      %p154 = scmp.ne.s32.totalorder %s142, %s143
      %p155 = scmp.eq.s32.totalorder %s28, 1
      %p156 = por %p154, %p155
      %p158 = scmp.ne.s32.totalorder %s143, %s157
      %p159 = scmp.eq.s32.totalorder %s28, 0
      %p160 = por %p158, %p159
      %s162 = sadd.s32 %s161, 1
      %p165 = scmp.eq.s32.totalorder %s22, 1
      %p166 = scmp.ne.s32.totalorder %s161, %s163
      %p167 = scmp.eq.s32.totalorder %s22, 0
      %p168 = por %p166, %p167
      %p169 = scmp.ne.s32.totalorder %s161, %s163
      %p170 = scmp.eq.s32.totalorder %s27, 1
      %p171 = por %p169, %p170
      %p172 = scmp.ne.s32.totalorder %s163, %s164
      %p173 = scmp.eq.s32.totalorder %s27, 0
      %p174 = por %p172, %p173
      %p175 = scmp.ne.s32.totalorder %s163, %s164
      %p176 = scmp.eq.s32.totalorder %s28, 1
      %p177 = por %p175, %p176
      %p179 = scmp.ne.s32.totalorder %s164, %s178
      %p180 = scmp.eq.s32.totalorder %s28, 0
      %p181 = por %p179, %p180
      %s183 = sadd.s32 %s182, 1
      %p186 = scmp.eq.s32.totalorder %s22, 1
      %p187 = scmp.ne.s32.totalorder %s182, %s184
      %p188 = scmp.eq.s32.totalorder %s22, 0
      %p189 = por %p187, %p188
      %p190 = scmp.ne.s32.totalorder %s182, %s184
      %p191 = scmp.eq.s32.totalorder %s27, 1
      %p192 = por %p190, %p191
      %p193 = scmp.ne.s32.totalorder %s184, %s185
      %p194 = scmp.eq.s32.totalorder %s27, 0
      %p195 = por %p193, %p194
      %p196 = scmp.ne.s32.totalorder %s184, %s185
      %p197 = scmp.eq.s32.totalorder %s28, 1
      %p198 = por %p196, %p197
      %p200 = scmp.ne.s32.totalorder %s185, %s199
      %p201 = scmp.eq.s32.totalorder %s28, 0
      %p202 = por %p200, %p201
      %s204 = sadd.s32 %s203, 1
      %p207 = scmp.eq.s32.totalorder %s22, 1
      %p208 = scmp.ne.s32.totalorder %s203, %s205
      %p209 = scmp.eq.s32.totalorder %s22, 0
      %p210 = por %p208, %p209
      %p211 = scmp.ne.s32.totalorder %s203, %s205
      %p212 = scmp.eq.s32.totalorder %s27, 1
      %p213 = por %p211, %p212
      %p214 = scmp.ne.s32.totalorder %s205, %s206
      %p215 = scmp.eq.s32.totalorder %s27, 0
      %p216 = por %p214, %p215
      %p217 = scmp.ne.s32.totalorder %s205, %s206
      %p218 = scmp.eq.s32.totalorder %s28, 1
      %p219 = por %p217, %p218
      %p221 = scmp.ne.s32.totalorder %s206, %s220
      %p222 = scmp.eq.s32.totalorder %s28, 0
      %p223 = por %p221, %p222
      %s225 = sadd.s32 %s224, 1
      %p228 = scmp.eq.s32.totalorder %s22, 1
      %p229 = scmp.ne.s32.totalorder %s224, %s226
      %p230 = scmp.eq.s32.totalorder %s22, 0
      %p231 = por %p229, %p230
      %p232 = scmp.ne.s32.totalorder %s224, %s226
      %p233 = scmp.eq.s32.totalorder %s27, 1
      %p234 = por %p232, %p233
      %p235 = scmp.ne.s32.totalorder %s226, %s227
      %p236 = scmp.eq.s32.totalorder %s27, 0
      %p237 = por %p235, %p236
      %p238 = scmp.ne.s32.totalorder %s226, %s227
      %p239 = scmp.eq.s32.totalorder %s28, 1
      %p240 = por %p238, %p239
      %p242 = scmp.ne.s32.totalorder %s227, %s241
      %p243 = scmp.eq.s32.totalorder %s28, 0
      %p244 = por %p242, %p243
      %s246 = sadd.s32 %s245, 1
      %p249 = scmp.eq.s32.totalorder %s22, 1
      %p250 = scmp.ne.s32.totalorder %s245, %s247
      %p251 = scmp.eq.s32.totalorder %s22, 0
      %p252 = por %p250, %p251
      %p253 = scmp.ne.s32.totalorder %s245, %s247
      %p254 = scmp.eq.s32.totalorder %s27, 1
      %p255 = por %p253, %p254
      %p256 = scmp.ne.s32.totalorder %s247, %s248
      %p257 = scmp.eq.s32.totalorder %s27, 0
      %p258 = por %p256, %p257
      %p259 = scmp.ne.s32.totalorder %s247, %s248
      %p260 = scmp.eq.s32.totalorder %s28, 1
      %p261 = por %p259, %p260
      %p263 = scmp.ne.s32.totalorder %s248, %s262
      %p264 = scmp.eq.s32.totalorder %s28, 0
      %p265 = por %p263, %p264
      %s267 = sadd.s32 %s266, 1
      %p270 = scmp.eq.s32.totalorder %s22, 1
      %p271 = scmp.ne.s32.totalorder %s266, %s268
      %p272 = scmp.eq.s32.totalorder %s22, 0
      %p273 = por %p271, %p272
      %p274 = scmp.ne.s32.totalorder %s266, %s268
      %p275 = scmp.eq.s32.totalorder %s27, 1
      %p276 = por %p274, %p275
      %p277 = scmp.ne.s32.totalorder %s268, %s269
      %p278 = scmp.eq.s32.totalorder %s27, 0
      %p279 = por %p277, %p278
      %p280 = scmp.ne.s32.totalorder %s268, %s269
      %p281 = scmp.eq.s32.totalorder %s28, 1
      %p282 = por %p280, %p281
      %p284 = scmp.ne.s32.totalorder %s269, %s283
      %p285 = scmp.eq.s32.totalorder %s28, 0
      %p286 = por %p284, %p285
      %s288 = sadd.s32 %s287, 1
      %p291 = scmp.eq.s32.totalorder %s22, 1
      %p292 = scmp.ne.s32.totalorder %s287, %s289
      %p293 = scmp.eq.s32.totalorder %s22, 0
      %p294 = por %p292, %p293
      %p295 = scmp.ne.s32.totalorder %s287, %s289
      %p296 = scmp.eq.s32.totalorder %s27, 1
      %p297 = por %p295, %p296
      %p298 = scmp.ne.s32.totalorder %s289, %s290
      %p299 = scmp.eq.s32.totalorder %s27, 0
      %p300 = por %p298, %p299
      %p301 = scmp.ne.s32.totalorder %s289, %s290
      %p302 = scmp.eq.s32.totalorder %s28, 1
      %p303 = por %p301, %p302
      %p305 = scmp.ne.s32.totalorder %s290, %s304
      %p306 = scmp.eq.s32.totalorder %s28, 0
      %p307 = por %p305, %p306
      %s308 = ssub.s32 %s22, %s29
      %p309 = scmp.eq.s32.totalorder %s308, 0
      %s311 = sadd.s32 %s310, 1
      %s312 = scalar_select %p309, %s310, %s311
      %p315 = pneg %p309
      %p316 = scmp.eq.s32.totalorder %s22, 1
      %p317 = por %p315, %p316
      %p318 = scmp.ne.s32.totalorder %s310, %s313
      %p319 = scmp.eq.s32.totalorder %s22, 0
      %p320 = por %p318, %p319
      %p321 = scmp.ne.s32.totalorder %s310, %s313
      %p322 = scmp.eq.s32.totalorder %s27, 1
      %p323 = por %p321, %p322
      %p324 = scmp.ne.s32.totalorder %s313, %s314
      %p325 = scmp.eq.s32.totalorder %s27, 0
      %p326 = por %p324, %p325
      %p327 = scmp.ne.s32.totalorder %s313, %s314
      %p328 = scmp.eq.s32.totalorder %s28, 1
      %p329 = por %p327, %p328
      %p331 = scmp.ne.s32.totalorder %s314, %s330
      %p332 = scmp.eq.s32.totalorder %s28, 0
      %p333 = por %p331, %p332
      %p334 = scmp.le.s32.totalorder 1, %s22
      %p335 = scmp.lt.s32.totalorder %s22, 3
      %p336 = pnand %p334, %p335
      %p337 = pneg %p336
      // Predicated region
      $region9: #{block_forward.1} parent=5 // pred_check
        _
      $region10: #{block_forward.1} parent=5 // pred_check_branch
        %339 = sbr.rel (%p336) target = $region12
      $region11: #{block_forward.1} parent=5 // pred_region
        %s340 = ssub.s32 %s22, 1
        // Predicated region
        $region13: #{block_forward.1} parent=11 // pred_check
          %p341 = pneg %p69
        $region14: #{block_forward.1} parent=11 // pred_check_branch
          %343 = sbr.rel (%p341) target = $region16
        $region15: #{block_forward.1} parent=11 // pred_region
          _
        $region16: #{block_forward.1} parent=11 // pred_fallthru
          _
        // Predicated region
        $region17: #{block_forward.1} parent=11 // pred_check
          %p344 = pneg %p90
        $region18: #{block_forward.1} parent=11 // pred_check_branch
          %346 = sbr.rel (%p344) target = $region20
        $region19: #{block_forward.1} parent=11 // pred_region
          _
        $region20: #{block_forward.1} parent=11 // pred_fallthru
          _
        // Predicated region
        $region21: #{block_forward.1} parent=11 // pred_check
          %p347 = pneg %p111
        $region22: #{block_forward.1} parent=11 // pred_check_branch
          %349 = sbr.rel (%p347) target = $region24
        $region23: #{block_forward.1} parent=11 // pred_region
          _
        $region24: #{block_forward.1} parent=11 // pred_fallthru
          _
        // Predicated region
        $region25: #{block_forward.1} parent=11 // pred_check
          %p350 = pneg %p132
        $region26: #{block_forward.1} parent=11 // pred_check_branch
          %352 = sbr.rel (%p350) target = $region28
        $region27: #{block_forward.1} parent=11 // pred_region
          _
        $region28: #{block_forward.1} parent=11 // pred_fallthru
          _
        // Predicated region
        $region29: #{block_forward.1} parent=11 // pred_check
          %p353 = pneg %p153
        $region30: #{block_forward.1} parent=11 // pred_check_branch
          %355 = sbr.rel (%p353) target = $region32
        $region31: #{block_forward.1} parent=11 // pred_region
          _
        $region32: #{block_forward.1} parent=11 // pred_fallthru
          _
        // Predicated region
        $region33: #{block_forward.1} parent=11 // pred_check
          %p356 = pneg %p174
        $region34: #{block_forward.1} parent=11 // pred_check_branch
          %358 = sbr.rel (%p356) target = $region36
        $region35: #{block_forward.1} parent=11 // pred_region
          _
        $region36: #{block_forward.1} parent=11 // pred_fallthru
          _
        // Predicated region
        $region37: #{block_forward.1} parent=11 // pred_check
          %p359 = pneg %p195
        $region38: #{block_forward.1} parent=11 // pred_check_branch
          %361 = sbr.rel (%p359) target = $region40
        $region39: #{block_forward.1} parent=11 // pred_region
          _
        $region40: #{block_forward.1} parent=11 // pred_fallthru
          _
        // Predicated region
        $region41: #{block_forward.1} parent=11 // pred_check
          %p362 = pneg %p216
        $region42: #{block_forward.1} parent=11 // pred_check_branch
          %364 = sbr.rel (%p362) target = $region44
        $region43: #{block_forward.1} parent=11 // pred_region
          _
        $region44: #{block_forward.1} parent=11 // pred_fallthru
          _
        // Predicated region
        $region45: #{block_forward.1} parent=11 // pred_check
          %p365 = pneg %p237
        $region46: #{block_forward.1} parent=11 // pred_check_branch
          %367 = sbr.rel (%p365) target = $region48
        $region47: #{block_forward.1} parent=11 // pred_region
          _
        $region48: #{block_forward.1} parent=11 // pred_fallthru
          _
        // Predicated region
        $region49: #{block_forward.1} parent=11 // pred_check
          %p368 = pneg %p258
        $region50: #{block_forward.1} parent=11 // pred_check_branch
          %370 = sbr.rel (%p368) target = $region52
        $region51: #{block_forward.1} parent=11 // pred_region
          _
        $region52: #{block_forward.1} parent=11 // pred_fallthru
          _
        // Predicated region
        $region53: #{block_forward.1} parent=11 // pred_check
          %p371 = pneg %p279
        $region54: #{block_forward.1} parent=11 // pred_check_branch
          %373 = sbr.rel (%p371) target = $region56
        $region55: #{block_forward.1} parent=11 // pred_region
          _
        $region56: #{block_forward.1} parent=11 // pred_fallthru
          _
        // Predicated region
        $region57: #{block_forward.1} parent=11 // pred_check
          %p374 = pneg %p300
        $region58: #{block_forward.1} parent=11 // pred_check_branch
          %376 = sbr.rel (%p374) target = $region60
        $region59: #{block_forward.1} parent=11 // pred_region
          _
        $region60: #{block_forward.1} parent=11 // pred_fallthru
          _
      $region12: #{block_forward.1} parent=5 // pred_fallthru
        _
      %p377 = scmp.lt.s32.totalorder %s22, 2
      // Predicated region
      $region61: #{block_forward.1} parent=5 // pred_check
        %p378 = pneg %p377
      $region62: #{block_forward.1} parent=5 // pred_check_branch
        %380 = sbr.rel (%p378) target = $region64
      $region63: #{block_forward.1} parent=5 // pred_region
        // Predicated region
        $region65: #{block_forward.1} parent=63 // pred_check
          %p381 = pneg %p42
        $region66: #{block_forward.1} parent=63 // pred_check_branch
          %383 = sbr.rel (%p381) target = $region68
        $region67: #{block_forward.1} parent=63 // pred_region
          %s384 = smul.u32 8, %s22
          %p385 = scmp.lt.s32.totalorder %s384, 15
          %s386 = scalar_select %p385, %s384, 15
          %s387 = smul.addr %s386, 8
          %s388 = scalar_lea.vmem %s0, %s387
          %s389 = smul.u32 8, %s22
        $region68: #{block_forward.1} parent=63 // pred_fallthru
          _
      $region64: #{block_forward.1} parent=5 // pred_fallthru
        _
      %p390 = scmp.le.s32.totalorder 1, %s22
      %p391 = scmp.lt.s32.totalorder %s22, 3
      %p392 = pnand %p390, %p391
      %p393 = pneg %p392
      // Predicated region
      $region69: #{block_forward.1} parent=5 // pred_check
        _
      $region70: #{block_forward.1} parent=5 // pred_check_branch
        %395 = sbr.rel (%p392) target = $region72
      $region71: #{block_forward.1} parent=5 // pred_region
        %s396 = ssub.s32 %s22, 1
        %s397 = smul.u32 8, %s27
        %p398 = scmp.lt.s32.totalorder %s397, 15
        %s399 = scalar_select %p398, %s397, 15
        %s400 = smul.addr %s399, 8
        %s401 = scalar_lea.vmem %s0, %s400
        %p402 = pneg %p48
        %p403 = pneg %p45
        %p404 = pneg %p69
        %p405 = pneg %p66
        %p406 = pneg %p90
        %p407 = pneg %p87
        %p408 = pneg %p111
        %p409 = pneg %p108
        %p410 = pneg %p132
        %p411 = pneg %p129
        %p412 = pneg %p153
        %p413 = pneg %p150
        %p414 = pneg %p174
        %p415 = pneg %p171
        %p416 = pneg %p195
        %p417 = pneg %p192
        %p418 = pneg %p216
        %p419 = pneg %p213
        %p420 = pneg %p237
        %p421 = pneg %p234
        %p422 = pneg %p258
        %p423 = pneg %p255
        %p424 = pneg %p279
        %p425 = pneg %p276
        %p426 = pneg %p300
        %p427 = pneg %p297
        %p428 = pneg %p326
        %p429 = pneg %p323
        %s430 = sand.u32 %s313, 1
        %s431 = scalar_lea.sflag [#allocation3], %s430
        %s432 = sand.u32 %s313, 1
        %s433 = smul.addr %s432, 64
        %s434 = scalar_lea.vmem [#allocation2], %s433
        %s435 = smul.u32 8, %s27
        %p436 = scmp.lt.s32.totalorder %s435, 15
        %s437 = scalar_select %p436, %s435, 15
        %s438 = smul.addr %s437, 8
        %s439 = scalar_lea.vmem %s0, %s438
        %s440 = smul.u32 8, %s27
        %s441 = smul.u32 8, %s27
        %v442 = vld [vmem:[%s439] sm:$0xff]
        %v443 = vld [vmem:[%s439 + $0x8] sm:$0xff]
        %v444 = vld [vmem:[%s439 + $0x10] sm:$0xff]
        %v445 = vld [vmem:[%s439 + $0x18] sm:$0xff]
        %v446 = vld [vmem:[%s439 + $0x20] sm:$0xff]
        %v447 = vld [vmem:[%s439 + $0x28] sm:$0xff]
        %v448 = vld [vmem:[%s439 + $0x30] sm:$0xff]
        %v449 = vld [vmem:[%s439 + $0x38] sm:$0xff]
        %v450 = vlaneseq
        %v451 = vand.u32 %v450, 127
        %vm452 = vcmp.lt.s32.totalorder %v451, 96
        %v453 = vsel %vm452, 1, 0
        %v454 = vcvt.s32.f32 %v453
        %v455 = vld [vmem:[%s9] sm:$0x1]
        %v456 = vld [vmem:[%s10] sm:$0x1]
        %457 = vadd.xlane.f32.xlu0 %v442
        %v458 = vpop.xlane.xlu0 %457
        %459 = vadd.xlane.f32.xlu0 %v443
        %v460 = vpop.xlane.xlu0 %459
        %461 = vadd.xlane.f32.xlu0 %v444
        %v462 = vpop.xlane.xlu0 %461
        %463 = vadd.xlane.f32.xlu0 %v445
        %v464 = vpop.xlane.xlu0 %463
        %465 = vadd.xlane.f32.xlu0 %v446
        %v466 = vpop.xlane.xlu0 %465
        %467 = vadd.xlane.f32.xlu0 %v447
        %v468 = vpop.xlane.xlu0 %467
        %469 = vadd.xlane.f32.xlu0 %v448
        %v470 = vpop.xlane.xlu0 %469
        %471 = vadd.xlane.f32.xlu0 %v449
        %v472 = vpop.xlane.xlu0 %471
        %v473 = vmul.f32 %v458, 0.010416667
        %v474 = vmul.f32 %v460, 0.010416667
        %v475 = vmul.f32 %v462, 0.010416667
        %v476 = vmul.f32 %v464, 0.010416667
        %v477 = vmul.f32 %v466, 0.010416667
        %v478 = vmul.f32 %v468, 0.010416667
        %v479 = vmul.f32 %v470, 0.010416667
        %v480 = vmul.f32 %v472, 0.010416667
        %v481 = vsub.f32 %v442, %v473
        %v482 = vsub.f32 %v443, %v474
        %v483 = vsub.f32 %v444, %v475
        %v484 = vsub.f32 %v445, %v476
        %v485 = vsub.f32 %v446, %v477
        %v486 = vsub.f32 %v447, %v478
        %v487 = vsub.f32 %v448, %v479
        %v488 = vsub.f32 %v449, %v480
        %v489 = vmul.f32 %v481, %v454
        %v490 = vmul.f32 %v482, %v454
        %v491 = vmul.f32 %v483, %v454
        %v492 = vmul.f32 %v484, %v454
        %v493 = vmul.f32 %v485, %v454
        %v494 = vmul.f32 %v486, %v454
        %v495 = vmul.f32 %v487, %v454
        %v496 = vmul.f32 %v488, %v454
        %v497 = vmul.f32 %v489, %v489
        %v498 = vmul.f32 %v490, %v490
        %v499 = vmul.f32 %v491, %v491
        %v500 = vmul.f32 %v492, %v492
        %v501 = vmul.f32 %v493, %v493
        %v502 = vmul.f32 %v494, %v494
        %v503 = vmul.f32 %v495, %v495
        %v504 = vmul.f32 %v496, %v496
        %505 = vadd.xlane.f32.xlu0 %v497
        %v506 = vpop.xlane.xlu0 %505
        %507 = vadd.xlane.f32.xlu0 %v498
        %v508 = vpop.xlane.xlu0 %507
        %509 = vadd.xlane.f32.xlu0 %v499
        %v510 = vpop.xlane.xlu0 %509
        %511 = vadd.xlane.f32.xlu0 %v500
        %v512 = vpop.xlane.xlu0 %511
        %513 = vadd.xlane.f32.xlu0 %v501
        %v514 = vpop.xlane.xlu0 %513
        %515 = vadd.xlane.f32.xlu0 %v502
        %v516 = vpop.xlane.xlu0 %515
        %517 = vadd.xlane.f32.xlu0 %v503
        %v518 = vpop.xlane.xlu0 %517
        %519 = vadd.xlane.f32.xlu0 %v504
        %v520 = vpop.xlane.xlu0 %519
        %v521 = vmul.f32 %v506, 0.010416667
        %v522 = vmul.f32 %v508, 0.010416667
        %v523 = vmul.f32 %v510, 0.010416667
        %v524 = vmul.f32 %v512, 0.010416667
        %v525 = vmul.f32 %v514, 0.010416667
        %v526 = vmul.f32 %v516, 0.010416667
        %v527 = vmul.f32 %v518, 0.010416667
        %v528 = vmul.f32 %v520, 0.010416667
        %v529 = vadd.f32 %v521, 1e-05
        %v530 = vadd.f32 %v522, 1e-05
        %v531 = vadd.f32 %v523, 1e-05
        %v532 = vadd.f32 %v524, 1e-05
        %v533 = vadd.f32 %v525, 1e-05
        %v534 = vadd.f32 %v526, 1e-05
        %v535 = vadd.f32 %v527, 1e-05
        %v536 = vadd.f32 %v528, 1e-05
        %v537 = vrsqrt.pop %v529
        %v538 = vrsqrt.pop %v530
        %v539 = vrsqrt.pop %v531
        %v540 = vrsqrt.pop %v532
        %v541 = vrsqrt.pop %v533
        %v542 = vrsqrt.pop %v534
        %v543 = vrsqrt.pop %v535
        %v544 = vrsqrt.pop %v536
        %v545 = vmul.f32 %v489, %v537
        %v546 = vmul.f32 %v490, %v538
        %v547 = vmul.f32 %v491, %v539
        %v548 = vmul.f32 %v492, %v540
        %v549 = vmul.f32 %v493, %v541
        %v550 = vmul.f32 %v494, %v542
        %v551 = vmul.f32 %v495, %v543
        %v552 = vmul.f32 %v496, %v544
        %v554 = vlaneseq
        %v555 = vshrl.u32 %v554, 7
        %v556 = vsub.s32 0, %v555
        %v557 = vrot.slane %v455, %v556
        %v559 = vmul.f32 %v545, %v557
        %v560 = vmul.f32 %v546, %v557
        %v561 = vmul.f32 %v547, %v557
        %v562 = vmul.f32 %v548, %v557
        %v563 = vmul.f32 %v549, %v557
        %v564 = vmul.f32 %v550, %v557
        %v565 = vmul.f32 %v551, %v557
        %v566 = vmul.f32 %v552, %v557
        %v568 = vlaneseq
        %v569 = vshrl.u32 %v568, 7
        %v570 = vsub.s32 0, %v569
        %v571 = vrot.slane %v456, %v570
        %v573 = vadd.f32 %v559, %v571
        %v574 = vadd.f32 %v560, %v571
        %v575 = vadd.f32 %v561, %v571
        %v576 = vadd.f32 %v562, %v571
        %v577 = vadd.f32 %v563, %v571
        %v578 = vadd.f32 %v564, %v571
        %v579 = vadd.f32 %v565, %v571
        %v580 = vadd.f32 %v566, %v571
        %v581 = vld [vmem:[%s1] sm:$0xff]
        %v582 = vld [vmem:[%s1 + $0x8] sm:$0xff]
        %v583 = vld [vmem:[%s1 + $0x10] sm:$0xff]
        %v584 = vld [vmem:[%s1 + $0x18] sm:$0xff]
        %v585 = vld [vmem:[%s1 + $0x20] sm:$0xff]
        %v586 = vld [vmem:[%s1 + $0x28] sm:$0xff]
        %v587 = vld [vmem:[%s1 + $0x30] sm:$0xff]
        %v588 = vld [vmem:[%s1 + $0x38] sm:$0xff]
        %v589 = vld [vmem:[%s3] sm:$0xff]
        %v590 = vld [vmem:[%s3 + $0x8] sm:$0xff]
        %v591 = vld [vmem:[%s3 + $0x10] sm:$0xff]
        %v592 = vld [vmem:[%s3 + $0x18] sm:$0xff]
        %v593 = vld [vmem:[%s3 + $0x20] sm:$0xff]
        %v594 = vld [vmem:[%s3 + $0x28] sm:$0xff]
        %v595 = vld [vmem:[%s3 + $0x30] sm:$0xff]
        %v596 = vld [vmem:[%s3 + $0x38] sm:$0xff]
        %v597 = vld [vmem:[%s3 + $0x40] sm:$0xff]
        %v598 = vld [vmem:[%s3 + $0x48] sm:$0xff]
        %v599 = vld [vmem:[%s3 + $0x50] sm:$0xff]
        %v600 = vld [vmem:[%s3 + $0x58] sm:$0xff]
        %v601 = vld [vmem:[%s3 + $0x60] sm:$0xff]
        %v602 = vld [vmem:[%s3 + $0x68] sm:$0xff]
        %v603 = vld [vmem:[%s3 + $0x70] sm:$0xff]
        %v604 = vld [vmem:[%s3 + $0x78] sm:$0xff]
        %605 = vmatprep.subr.mxu0 0.0
        %606 = vmatpush1.msra.mxu0 %v589
        %607 = vmatprep.subr.mxu0 0.0
        %608 = vmatpush1.msra.mxu0 %v590
        %609 = vmatprep.subr.mxu0 0.0
        %610 = vmatpush1.msra.mxu0 %v591
        %611 = vmatprep.subr.mxu0 0.0
        %612 = vmatpush1.msra.mxu0 %v592
        %613 = vmatprep.subr.mxu0 0.0
        %614 = vmatpush1.msra.mxu0 %v593
        %615 = vmatprep.subr.mxu0 0.0
        %616 = vmatpush1.msra.mxu0 %v594
        %617 = vmatprep.subr.mxu0 0.0
        %618 = vmatpush1.msra.mxu0 %v595
        %619 = vmatprep.subr.mxu0 0.0
        %620 = vmatpush1.msra.mxu0 %v596
        %621 = vmatprep.subr.mxu0 0.0
        %622 = vmatpush1.msra.mxu0 %v597
        %623 = vmatprep.subr.mxu0 0.0
        %624 = vmatpush1.msra.mxu0 %v598
        %625 = vmatprep.subr.mxu0 0.0
        %626 = vmatpush1.msra.mxu0 %v599
        %627 = vmatprep.subr.mxu0 0.0
        %628 = vmatpush1.msra.mxu0 %v600
        %629 = vmatprep.subr.mxu0 0.0
        %630 = vmatpush1.msra.mxu0 %v601
        %631 = vmatprep.subr.mxu0 0.0
        %632 = vmatpush1.msra.mxu0 %v602
        %633 = vmatprep.subr.mxu0 0.0
        %634 = vmatpush1.msra.mxu0 %v603
        %635 = vmatprep.subr.mxu0 0.0
        %636 = vmatpush1.msra.mxu0 %v604
        %637 = vmatprep.subr.mxu0 0.0
        %638 = vmatpush1.msra.mxu0 0.0
        %639 = vmatprep.subr.mxu0 0.0
        %640 = vmatpush1.msra.mxu0 0.0
        %641 = vmatprep.subr.mxu0 0.0
        %642 = vmatpush1.msra.mxu0 0.0
        %643 = vmatprep.subr.mxu0 0.0
        %644 = vmatpush1.msra.mxu0 0.0
        %645 = vmatprep.subr.mxu0 0.0
        %646 = vmatpush1.msra.mxu0 0.0
        %647 = vmatprep.subr.mxu0 0.0
        %648 = vmatpush1.msra.mxu0 0.0
        %649 = vmatprep.subr.mxu0 0.0
        %650 = vmatpush1.msra.mxu0 0.0
        %651 = vmatprep.subr.mxu0 0.0
        %652 = vmatpush1.msra.mxu0 0.0
        %653 = vmatprep.subr.mxu0 0.0
        %654 = vmatpush1.msra.mxu0 0.0
        %655 = vmatprep.subr.mxu0 0.0
        %656 = vmatpush1.msra.mxu0 0.0
        %657 = vmatprep.subr.mxu0 0.0
        %658 = vmatpush1.msra.mxu0 0.0
        %659 = vmatprep.subr.mxu0 0.0
        %660 = vmatpush1.msra.mxu0 0.0
        %661 = vmatprep.subr.mxu0 0.0
        %662 = vmatpush1.msra.mxu0 0.0
        %663 = vmatprep.subr.mxu0 0.0
        %664 = vmatpush1.msra.mxu0 0.0
        %665 = vmatprep.subr.mxu0 0.0
        %666 = vmatpush1.msra.mxu0 0.0
        %667 = vmatprep.subr.mxu0 0.0
        %668 = vmatpush1.msra.mxu0 0.0
        %669 = vmatprep.mubr.f32.mxu0 0.0
        %670 = vmatmul.mubr.f32.gmra.mrb[0].mxu0 %v573
        %v671 = vpop.f32.mrb[0].mxu0
        %v672 = vadd.f32 0.0, %v671
        %v673 = vpop.f32.mrb[0].mxu0
        %674 = vmatprep.mubr.f32.mxu0 0.0
        %675 = vmatmul.mubr.f32.gmra.mrb[0].mxu0 %v574
        %v676 = vpop.f32.mrb[0].mxu0
        %v677 = vadd.f32 0.0, %v676
        %v678 = vpop.f32.mrb[0].mxu0
        %679 = vmatprep.mubr.f32.mxu0 0.0
        %680 = vmatmul.mubr.f32.gmra.mrb[0].mxu0 %v575
        %v681 = vpop.f32.mrb[0].mxu0
        %v682 = vadd.f32 0.0, %v681
        %v683 = vpop.f32.mrb[0].mxu0
        %684 = vmatprep.mubr.f32.mxu0 0.0
        %685 = vmatmul.mubr.f32.gmra.mrb[0].mxu0 %v576
        %v686 = vpop.f32.mrb[0].mxu0
        %v687 = vadd.f32 0.0, %v686
        %v688 = vpop.f32.mrb[0].mxu0
        %689 = vmatprep.mubr.f32.mxu0 0.0
        %690 = vmatmul.mubr.f32.gmra.mrb[0].mxu0 %v577
        %v691 = vpop.f32.mrb[0].mxu0
        %v692 = vadd.f32 0.0, %v691
        %v693 = vpop.f32.mrb[0].mxu0
        %694 = vmatprep.mubr.f32.mxu0 0.0
        %695 = vmatmul.mubr.f32.gmra.mrb[0].mxu0 %v578
        %v696 = vpop.f32.mrb[0].mxu0
        %v697 = vadd.f32 0.0, %v696
        %v698 = vpop.f32.mrb[0].mxu0
        %699 = vmatprep.mubr.f32.mxu0 0.0
        %700 = vmatmul.mubr.f32.gmra.mrb[0].mxu0 %v579
        %v701 = vpop.f32.mrb[0].mxu0
        %v702 = vadd.f32 0.0, %v701
        %v703 = vpop.f32.mrb[0].mxu0
        %704 = vmatprep.mubr.f32.mxu0 0.0
        %705 = vmatmul.mubr.f32.gmra.mrb[0].mxu0 %v580
        %v706 = vpop.f32.mrb[0].mxu0
        %v707 = vadd.f32 0.0, %v706
        %v708 = vpop.f32.mrb[0].mxu0
        %709 = vdwg.mxu0
        %v710 = vld [vmem:[%s2] sm:$0xff]
        %v711 = vld [vmem:[%s2 + $0x8] sm:$0xff]
        %v712 = vld [vmem:[%s2 + $0x10] sm:$0xff]
        %v713 = vld [vmem:[%s2 + $0x18] sm:$0xff]
        %v714 = vld [vmem:[%s2 + $0x20] sm:$0xff]
        %v715 = vld [vmem:[%s2 + $0x28] sm:$0xff]
        %v716 = vld [vmem:[%s2 + $0x30] sm:$0xff]
        %v717 = vld [vmem:[%s2 + $0x38] sm:$0xff]
        %v718 = vld [vmem:[%s2 + $0x40] sm:$0xff]
        %v719 = vld [vmem:[%s2 + $0x48] sm:$0xff]
        %v720 = vld [vmem:[%s2 + $0x50] sm:$0xff]
        %v721 = vld [vmem:[%s2 + $0x58] sm:$0xff]
        %v722 = vld [vmem:[%s2 + $0x60] sm:$0xff]
        %v723 = vld [vmem:[%s2 + $0x68] sm:$0xff]
        %v724 = vld [vmem:[%s2 + $0x70] sm:$0xff]
        %v725 = vld [vmem:[%s2 + $0x78] sm:$0xff]
        %726 = vmatprep.subr.mxu0 0.0
        %727 = vmatpush1.msra.mxu0 %v710
        %728 = vmatprep.subr.mxu0 0.0
        %729 = vmatpush1.msra.mxu0 %v711
        %730 = vmatprep.subr.mxu0 0.0
        %731 = vmatpush1.msra.mxu0 %v712
        %732 = vmatprep.subr.mxu0 0.0
        %733 = vmatpush1.msra.mxu0 %v713
        %734 = vmatprep.subr.mxu0 0.0
        %735 = vmatpush1.msra.mxu0 %v714
        %736 = vmatprep.subr.mxu0 0.0
        %737 = vmatpush1.msra.mxu0 %v715
        %738 = vmatprep.subr.mxu0 0.0
        %739 = vmatpush1.msra.mxu0 %v716
        %740 = vmatprep.subr.mxu0 0.0
        %741 = vmatpush1.msra.mxu0 %v717
        %742 = vmatprep.subr.mxu0 0.0
        %743 = vmatpush1.msra.mxu0 %v718
        %744 = vmatprep.subr.mxu0 0.0
        %745 = vmatpush1.msra.mxu0 %v719
        %746 = vmatprep.subr.mxu0 0.0
        %747 = vmatpush1.msra.mxu0 %v720
        %748 = vmatprep.subr.mxu0 0.0
        %749 = vmatpush1.msra.mxu0 %v721
        %750 = vmatprep.subr.mxu0 0.0
        %751 = vmatpush1.msra.mxu0 %v722
        %752 = vmatprep.subr.mxu0 0.0
        %753 = vmatpush1.msra.mxu0 %v723
        %754 = vmatprep.subr.mxu0 0.0
        %755 = vmatpush1.msra.mxu0 %v724
        %756 = vmatprep.subr.mxu0 0.0
        %757 = vmatpush1.msra.mxu0 %v725
        %758 = vmatprep.subr.mxu0 0.0
        %759 = vmatpush1.msra.mxu0 0.0
        %760 = vmatprep.subr.mxu0 0.0
        %761 = vmatpush1.msra.mxu0 0.0
        %762 = vmatprep.subr.mxu0 0.0
        %763 = vmatpush1.msra.mxu0 0.0
        %764 = vmatprep.subr.mxu0 0.0
        %765 = vmatpush1.msra.mxu0 0.0
        %766 = vmatprep.subr.mxu0 0.0
        %767 = vmatpush1.msra.mxu0 0.0
        %768 = vmatprep.subr.mxu0 0.0
        %769 = vmatpush1.msra.mxu0 0.0
        %770 = vmatprep.subr.mxu0 0.0
        %771 = vmatpush1.msra.mxu0 0.0
        %772 = vmatprep.subr.mxu0 0.0
        %773 = vmatpush1.msra.mxu0 0.0
        %774 = vmatprep.subr.mxu0 0.0
        %775 = vmatpush1.msra.mxu0 0.0
        %776 = vmatprep.subr.mxu0 0.0
        %777 = vmatpush1.msra.mxu0 0.0
        %778 = vmatprep.subr.mxu0 0.0
        %779 = vmatpush1.msra.mxu0 0.0
        %780 = vmatprep.subr.mxu0 0.0
        %781 = vmatpush1.msra.mxu0 0.0
        %782 = vmatprep.subr.mxu0 0.0
        %783 = vmatpush1.msra.mxu0 0.0
        %784 = vmatprep.subr.mxu0 0.0
        %785 = vmatpush1.msra.mxu0 0.0
        %786 = vmatprep.subr.mxu0 0.0
        %787 = vmatpush1.msra.mxu0 0.0
        %788 = vmatprep.subr.mxu0 0.0
        %789 = vmatpush1.msra.mxu0 0.0
        %790 = vmatprep.mubr.f32.mxu0 0.0
        %791 = vmatmul.mubr.f32.gmra.mrb[0].mxu0 %v573
        %v792 = vpop.f32.mrb[0].mxu0
        %v793 = vadd.f32 0.0, %v792
        %v794 = vpop.f32.mrb[0].mxu0
        %795 = vmatprep.mubr.f32.mxu0 0.0
        %796 = vmatmul.mubr.f32.gmra.mrb[0].mxu0 %v574
        %v797 = vpop.f32.mrb[0].mxu0
        %v798 = vadd.f32 0.0, %v797
        %v799 = vpop.f32.mrb[0].mxu0
        %800 = vmatprep.mubr.f32.mxu0 0.0
        %801 = vmatmul.mubr.f32.gmra.mrb[0].mxu0 %v575
        %v802 = vpop.f32.mrb[0].mxu0
        %v803 = vadd.f32 0.0, %v802
        %v804 = vpop.f32.mrb[0].mxu0
        %805 = vmatprep.mubr.f32.mxu0 0.0
        %806 = vmatmul.mubr.f32.gmra.mrb[0].mxu0 %v576
        %v807 = vpop.f32.mrb[0].mxu0
        %v808 = vadd.f32 0.0, %v807
        %v809 = vpop.f32.mrb[0].mxu0
        %810 = vmatprep.mubr.f32.mxu0 0.0
        %811 = vmatmul.mubr.f32.gmra.mrb[0].mxu0 %v577
        %v812 = vpop.f32.mrb[0].mxu0
        %v813 = vadd.f32 0.0, %v812
        %v814 = vpop.f32.mrb[0].mxu0
        %815 = vmatprep.mubr.f32.mxu0 0.0
        %816 = vmatmul.mubr.f32.gmra.mrb[0].mxu0 %v578
        %v817 = vpop.f32.mrb[0].mxu0
        %v818 = vadd.f32 0.0, %v817
        %v819 = vpop.f32.mrb[0].mxu0
        %820 = vmatprep.mubr.f32.mxu0 0.0
        %821 = vmatmul.mubr.f32.gmra.mrb[0].mxu0 %v579
        %v822 = vpop.f32.mrb[0].mxu0
        %v823 = vadd.f32 0.0, %v822
        %v824 = vpop.f32.mrb[0].mxu0
        %825 = vmatprep.mubr.f32.mxu0 0.0
        %826 = vmatmul.mubr.f32.gmra.mrb[0].mxu0 %v580
        %v827 = vpop.f32.mrb[0].mxu0
        %v828 = vadd.f32 0.0, %v827
        %v829 = vpop.f32.mrb[0].mxu0
        %830 = vdwg.mxu0
        %v831 = vld [vmem:[%s4] sm:$0xff]
        %v832 = vld [vmem:[%s4 + $0x8] sm:$0xff]
        %v833 = vld [vmem:[%s4 + $0x10] sm:$0xff]
        %v834 = vld [vmem:[%s4 + $0x18] sm:$0xff]
        %v835 = vld [vmem:[%s4 + $0x20] sm:$0xff]
        %v836 = vld [vmem:[%s4 + $0x28] sm:$0xff]
        %v837 = vld [vmem:[%s4 + $0x30] sm:$0xff]
        %v838 = vld [vmem:[%s4 + $0x38] sm:$0xff]
        %v839 = vld [vmem:[%s4 + $0x40] sm:$0xff]
        %v840 = vld [vmem:[%s4 + $0x48] sm:$0xff]
        %v841 = vld [vmem:[%s4 + $0x50] sm:$0xff]
        %v842 = vld [vmem:[%s4 + $0x58] sm:$0xff]
        %v843 = vld [vmem:[%s4 + $0x60] sm:$0xff]
        %v844 = vld [vmem:[%s4 + $0x68] sm:$0xff]
        %v845 = vld [vmem:[%s4 + $0x70] sm:$0xff]
        %v846 = vld [vmem:[%s4 + $0x78] sm:$0xff]
        %847 = vmatprep.subr.mxu0 0.0
        %848 = vmatpush1.msra.mxu0 %v831
        %849 = vmatprep.subr.mxu0 0.0
        %850 = vmatpush1.msra.mxu0 %v832
        %851 = vmatprep.subr.mxu0 0.0
        %852 = vmatpush1.msra.mxu0 %v833
        %853 = vmatprep.subr.mxu0 0.0
        %854 = vmatpush1.msra.mxu0 %v834
        %855 = vmatprep.subr.mxu0 0.0
        %856 = vmatpush1.msra.mxu0 %v835
        %857 = vmatprep.subr.mxu0 0.0
        %858 = vmatpush1.msra.mxu0 %v836
        %859 = vmatprep.subr.mxu0 0.0
        %860 = vmatpush1.msra.mxu0 %v837
        %861 = vmatprep.subr.mxu0 0.0
        %862 = vmatpush1.msra.mxu0 %v838
        %863 = vmatprep.subr.mxu0 0.0
        %864 = vmatpush1.msra.mxu0 %v839
        %865 = vmatprep.subr.mxu0 0.0
        %866 = vmatpush1.msra.mxu0 %v840
        %867 = vmatprep.subr.mxu0 0.0
        %868 = vmatpush1.msra.mxu0 %v841
        %869 = vmatprep.subr.mxu0 0.0
        %870 = vmatpush1.msra.mxu0 %v842
        %871 = vmatprep.subr.mxu0 0.0
        %872 = vmatpush1.msra.mxu0 %v843
        %873 = vmatprep.subr.mxu0 0.0
        %874 = vmatpush1.msra.mxu0 %v844
        %875 = vmatprep.subr.mxu0 0.0
        %876 = vmatpush1.msra.mxu0 %v845
        %877 = vmatprep.subr.mxu0 0.0
        %878 = vmatpush1.msra.mxu0 %v846
        %879 = vmatprep.subr.mxu0 0.0
        %880 = vmatpush1.msra.mxu0 0.0
        %881 = vmatprep.subr.mxu0 0.0
        %882 = vmatpush1.msra.mxu0 0.0
        %883 = vmatprep.subr.mxu0 0.0
        %884 = vmatpush1.msra.mxu0 0.0
        %885 = vmatprep.subr.mxu0 0.0
        %886 = vmatpush1.msra.mxu0 0.0
        %887 = vmatprep.subr.mxu0 0.0
        %888 = vmatpush1.msra.mxu0 0.0
        %889 = vmatprep.subr.mxu0 0.0
        %890 = vmatpush1.msra.mxu0 0.0
        %891 = vmatprep.subr.mxu0 0.0
        %892 = vmatpush1.msra.mxu0 0.0
        %893 = vmatprep.subr.mxu0 0.0
        %894 = vmatpush1.msra.mxu0 0.0
        %895 = vmatprep.subr.mxu0 0.0
        %896 = vmatpush1.msra.mxu0 0.0
        %897 = vmatprep.subr.mxu0 0.0
        %898 = vmatpush1.msra.mxu0 0.0
        %899 = vmatprep.subr.mxu0 0.0
        %900 = vmatpush1.msra.mxu0 0.0
        %901 = vmatprep.subr.mxu0 0.0
        %902 = vmatpush1.msra.mxu0 0.0
        %903 = vmatprep.subr.mxu0 0.0
        %904 = vmatpush1.msra.mxu0 0.0
        %905 = vmatprep.subr.mxu0 0.0
        %906 = vmatpush1.msra.mxu0 0.0
        %907 = vmatprep.subr.mxu0 0.0
        %908 = vmatpush1.msra.mxu0 0.0
        %909 = vmatprep.subr.mxu0 0.0
        %910 = vmatpush1.msra.mxu0 0.0
        %911 = vmatprep.mubr.f32.mxu0 0.0
        %912 = vmatmul.mubr.f32.gmra.mrb[0].mxu0 %v573
        %v913 = vpop.f32.mrb[0].mxu0
        %v914 = vadd.f32 0.0, %v913
        %v915 = vpop.f32.mrb[0].mxu0
        %916 = vmatprep.mubr.f32.mxu0 0.0
        %917 = vmatmul.mubr.f32.gmra.mrb[0].mxu0 %v574
        %v918 = vpop.f32.mrb[0].mxu0
        %v919 = vadd.f32 0.0, %v918
        %v920 = vpop.f32.mrb[0].mxu0
        %921 = vmatprep.mubr.f32.mxu0 0.0
        %922 = vmatmul.mubr.f32.gmra.mrb[0].mxu0 %v575
        %v923 = vpop.f32.mrb[0].mxu0
        %v924 = vadd.f32 0.0, %v923
        %v925 = vpop.f32.mrb[0].mxu0
        %926 = vmatprep.mubr.f32.mxu0 0.0
        %927 = vmatmul.mubr.f32.gmra.mrb[0].mxu0 %v576
        %v928 = vpop.f32.mrb[0].mxu0
        %v929 = vadd.f32 0.0, %v928
        %v930 = vpop.f32.mrb[0].mxu0
        %931 = vmatprep.mubr.f32.mxu0 0.0
        %932 = vmatmul.mubr.f32.gmra.mrb[0].mxu0 %v577
        %v933 = vpop.f32.mrb[0].mxu0
        %v934 = vadd.f32 0.0, %v933
        %v935 = vpop.f32.mrb[0].mxu0
        %936 = vmatprep.mubr.f32.mxu0 0.0
        %937 = vmatmul.mubr.f32.gmra.mrb[0].mxu0 %v578
        %v938 = vpop.f32.mrb[0].mxu0
        %v939 = vadd.f32 0.0, %v938
        %v940 = vpop.f32.mrb[0].mxu0
        %941 = vmatprep.mubr.f32.mxu0 0.0
        %942 = vmatmul.mubr.f32.gmra.mrb[0].mxu0 %v579
        %v943 = vpop.f32.mrb[0].mxu0
        %v944 = vadd.f32 0.0, %v943
        %v945 = vpop.f32.mrb[0].mxu0
        %946 = vmatprep.mubr.f32.mxu0 0.0
        %947 = vmatmul.mubr.f32.gmra.mrb[0].mxu0 %v580
        %v948 = vpop.f32.mrb[0].mxu0
        %v949 = vadd.f32 0.0, %v948
        %v950 = vpop.f32.mrb[0].mxu0
        %951 = vdwg.mxu0
        %vm952 = vcmask 97280
        %v954 = vsel %vm952, %v672, 0
        %v957 = vsel %vm952, %v677, 0
        %v960 = vsel %vm952, %v682, 0
        %v963 = vsel %vm952, %v687, 0
        %v966 = vsel %vm952, %v692, 0
        %v969 = vsel %vm952, %v697, 0
        %v972 = vsel %vm952, %v702, 0
        %v975 = vsel %vm952, %v707, 0
        %v978 = vsel %vm952, %v793, 0
        %v981 = vsel %vm952, %v798, 0
        %v984 = vsel %vm952, %v803, 0
        %v987 = vsel %vm952, %v808, 0
        %v990 = vsel %vm952, %v813, 0
        %v993 = vsel %vm952, %v818, 0
        %v996 = vsel %vm952, %v823, 0
        %v999 = vsel %vm952, %v828, 0
        %1001 = vmatprep.subr.mxu0 0.0
        %1002 = vmatpush1.xpose.msra.mxu0 %v978
        %1003 = vmatprep.subr.mxu0 0.0
        %1004 = vmatpush1.xpose.msra.mxu0 %v981
        %1005 = vmatprep.subr.mxu0 0.0
        %1006 = vmatpush1.xpose.msra.mxu0 %v984
        %1007 = vmatprep.subr.mxu0 0.0
        %1008 = vmatpush1.xpose.msra.mxu0 %v987
        %1009 = vmatprep.subr.mxu0 0.0
        %1010 = vmatpush1.xpose.msra.mxu0 %v990
        %1011 = vmatprep.subr.mxu0 0.0
        %1012 = vmatpush1.xpose.msra.mxu0 %v993
        %1013 = vmatprep.subr.mxu0 0.0
        %1014 = vmatpush1.xpose.msra.mxu0 %v996
        %1015 = vmatprep.subr.mxu0 0.0
        %1016 = vmatpush1.xpose.msra.mxu0 %v999
        %1017 = vmatprep.subr.mxu0 0.0
        %1018 = vmatpush1.xpose.msra.mxu0 0.0
        %1019 = vmatprep.subr.mxu0 0.0
        %1020 = vmatpush1.xpose.msra.mxu0 0.0
        %1021 = vmatprep.subr.mxu0 0.0
        %1022 = vmatpush1.xpose.msra.mxu0 0.0
        %1023 = vmatprep.subr.mxu0 0.0
        %1024 = vmatpush1.xpose.msra.mxu0 0.0
        %1025 = vmatprep.subr.mxu0 0.0
        %1026 = vmatpush1.xpose.msra.mxu0 0.0
        %1027 = vmatprep.subr.mxu0 0.0
        %1028 = vmatpush1.xpose.msra.mxu0 0.0
        %1029 = vmatprep.subr.mxu0 0.0
        %1030 = vmatpush1.xpose.msra.mxu0 0.0
        %1031 = vmatprep.subr.mxu0 0.0
        %1032 = vmatpush1.xpose.msra.mxu0 0.0
        %1033 = vmatprep.subr.mxu0 0.0
        %1034 = vmatpush1.xpose.msra.mxu0 0.0
        %1035 = vmatprep.subr.mxu0 0.0
        %1036 = vmatpush1.xpose.msra.mxu0 0.0
        %1037 = vmatprep.subr.mxu0 0.0
        %1038 = vmatpush1.xpose.msra.mxu0 0.0
        %1039 = vmatprep.subr.mxu0 0.0
        %1040 = vmatpush1.xpose.msra.mxu0 0.0
        %1041 = vmatprep.subr.mxu0 0.0
        %1042 = vmatpush1.xpose.msra.mxu0 0.0
        %1043 = vmatprep.subr.mxu0 0.0
        %1044 = vmatpush1.xpose.msra.mxu0 0.0
        %1045 = vmatprep.subr.mxu0 0.0
        %1046 = vmatpush1.xpose.msra.mxu0 0.0
        %1047 = vmatprep.subr.mxu0 0.0
        %1048 = vmatpush1.xpose.msra.mxu0 0.0
        %1049 = vmatprep.subr.mxu0 0.0
        %1050 = vmatpush1.xpose.msra.mxu0 0.0
        %1051 = vmatprep.subr.mxu0 0.0
        %1052 = vmatpush1.xpose.msra.mxu0 0.0
        %1053 = vmatprep.subr.mxu0 0.0
        %1054 = vmatpush1.xpose.msra.mxu0 0.0
        %1055 = vmatprep.subr.mxu0 0.0
        %1056 = vmatpush1.xpose.msra.mxu0 0.0
        %1057 = vmatprep.subr.mxu0 0.0
        %1058 = vmatpush1.xpose.msra.mxu0 0.0
        %1059 = vmatprep.subr.mxu0 0.0
        %1060 = vmatpush1.xpose.msra.mxu0 0.0
        %1061 = vmatprep.subr.mxu0 0.0
        %1062 = vmatpush1.xpose.msra.mxu0 0.0
        %1063 = vmatprep.subr.mxu0 0.0
        %1064 = vmatpush1.xpose.msra.mxu0 0.0
        %1065 = vmatprep.mubr.f32.mxu0 0.0
        %1066 = vmatmul.mubr.f32.gmra.mrb[0].mxu0 %v954
        %v1067 = vpop.f32.mrb[0].mxu0
        %v1068 = vadd.f32 %v581, %v1067
        %v1069 = vpop.f32.mrb[0].mxu0
        %1070 = vmatprep.mubr.f32.mxu0 0.0
        %1071 = vmatmul.mubr.f32.gmra.mrb[0].mxu0 %v957
        %v1072 = vpop.f32.mrb[0].mxu0
        %v1073 = vadd.f32 %v582, %v1072
        %v1074 = vpop.f32.mrb[0].mxu0
        %1075 = vmatprep.mubr.f32.mxu0 0.0
        %1076 = vmatmul.mubr.f32.gmra.mrb[0].mxu0 %v960
        %v1077 = vpop.f32.mrb[0].mxu0
        %v1078 = vadd.f32 %v583, %v1077
        %v1079 = vpop.f32.mrb[0].mxu0
        %1080 = vmatprep.mubr.f32.mxu0 0.0
        %1081 = vmatmul.mubr.f32.gmra.mrb[0].mxu0 %v963
        %v1082 = vpop.f32.mrb[0].mxu0
        %v1083 = vadd.f32 %v584, %v1082
        %v1084 = vpop.f32.mrb[0].mxu0
        %1085 = vmatprep.mubr.f32.mxu0 0.0
        %1086 = vmatmul.mubr.f32.gmra.mrb[0].mxu0 %v966
        %v1087 = vpop.f32.mrb[0].mxu0
        %v1088 = vadd.f32 %v585, %v1087
        %v1089 = vpop.f32.mrb[0].mxu0
        %1090 = vmatprep.mubr.f32.mxu0 0.0
        %1091 = vmatmul.mubr.f32.gmra.mrb[0].mxu0 %v969
        %v1092 = vpop.f32.mrb[0].mxu0
        %v1093 = vadd.f32 %v586, %v1092
        %v1094 = vpop.f32.mrb[0].mxu0
        %1095 = vmatprep.mubr.f32.mxu0 0.0
        %1096 = vmatmul.mubr.f32.gmra.mrb[0].mxu0 %v972
        %v1097 = vpop.f32.mrb[0].mxu0
        %v1098 = vadd.f32 %v587, %v1097
        %v1099 = vpop.f32.mrb[0].mxu0
        %1100 = vmatprep.mubr.f32.mxu0 0.0
        %1101 = vmatmul.mubr.f32.gmra.mrb[0].mxu0 %v975
        %v1102 = vpop.f32.mrb[0].mxu0
        %v1103 = vadd.f32 %v588, %v1102
        %v1104 = vpop.f32.mrb[0].mxu0
        %1105 = vdwg.mxu0
        %vm1106 = vcmask 523264
        %v1107 = vsel %vm1106, %v1068, -inf
        %1108 = vmax.xlane.f32.xlu0 %v1107
        %v1109 = vpop.xlane.xlu0 %1108
        %v1110 = vsel %vm1106, %v1073, -inf
        %1111 = vmax.xlane.f32.xlu0 %v1110
        %v1112 = vpop.xlane.xlu0 %1111
        %v1113 = vsel %vm1106, %v1078, -inf
        %1114 = vmax.xlane.f32.xlu0 %v1113
        %v1115 = vpop.xlane.xlu0 %1114
        %v1116 = vsel %vm1106, %v1083, -inf
        %1117 = vmax.xlane.f32.xlu0 %v1116
        %v1118 = vpop.xlane.xlu0 %1117
        %v1119 = vsel %vm1106, %v1088, -inf
        %1120 = vmax.xlane.f32.xlu0 %v1119
        %v1121 = vpop.xlane.xlu0 %1120
        %v1122 = vsel %vm1106, %v1093, -inf
        %1123 = vmax.xlane.f32.xlu0 %v1122
        %v1124 = vpop.xlane.xlu0 %1123
        %v1125 = vsel %vm1106, %v1098, -inf
        %1126 = vmax.xlane.f32.xlu0 %v1125
        %v1127 = vpop.xlane.xlu0 %1126
        %v1128 = vsel %vm1106, %v1103, -inf
        %1129 = vmax.xlane.f32.xlu0 %v1128
        %v1130 = vpop.xlane.xlu0 %1129
        %v1131 = vsub.f32 %v1068, %v1109
        %v1132 = vsub.f32 %v1073, %v1112
        %v1133 = vsub.f32 %v1078, %v1115
        %v1134 = vsub.f32 %v1083, %v1118
        %v1135 = vsub.f32 %v1088, %v1121
        %v1136 = vsub.f32 %v1093, %v1124
        %v1137 = vsub.f32 %v1098, %v1127
        %v1138 = vsub.f32 %v1103, %v1130
        %v1139 = vmul.f32 %v1131, 1.442695
        %v1140 = vpow.pop %v1139
        %v1141 = vmul.f32 %v1132, 1.442695
        %v1142 = vpow.pop %v1141
        %v1143 = vmul.f32 %v1133, 1.442695
        %v1144 = vpow.pop %v1143
        %v1145 = vmul.f32 %v1134, 1.442695
        %v1146 = vpow.pop %v1145
        %v1147 = vmul.f32 %v1135, 1.442695
        %v1148 = vpow.pop %v1147
        %v1149 = vmul.f32 %v1136, 1.442695
        %v1150 = vpow.pop %v1149
        %v1151 = vmul.f32 %v1137, 1.442695
        %v1152 = vpow.pop %v1151
        %v1153 = vmul.f32 %v1138, 1.442695
        %v1154 = vpow.pop %v1153
        %v1155 = vsel %vm1106, %v1140, 0.0
        %1156 = vadd.xlane.f32.xlu0 %v1155
        %v1157 = vpop.xlane.xlu0 %1156
        %v1158 = vsel %vm1106, %v1142, 0.0
        %1159 = vadd.xlane.f32.xlu0 %v1158
        %v1160 = vpop.xlane.xlu0 %1159
        %v1161 = vsel %vm1106, %v1144, 0.0
        %1162 = vadd.xlane.f32.xlu0 %v1161
        %v1163 = vpop.xlane.xlu0 %1162
        %v1164 = vsel %vm1106, %v1146, 0.0
        %1165 = vadd.xlane.f32.xlu0 %v1164
        %v1166 = vpop.xlane.xlu0 %1165
        %v1167 = vsel %vm1106, %v1148, 0.0
        %1168 = vadd.xlane.f32.xlu0 %v1167
        %v1169 = vpop.xlane.xlu0 %1168
        %v1170 = vsel %vm1106, %v1150, 0.0
        %1171 = vadd.xlane.f32.xlu0 %v1170
        %v1172 = vpop.xlane.xlu0 %1171
        %v1173 = vsel %vm1106, %v1152, 0.0
        %1174 = vadd.xlane.f32.xlu0 %v1173
        %v1175 = vpop.xlane.xlu0 %1174
        %v1176 = vsel %vm1106, %v1154, 0.0
        %1177 = vadd.xlane.f32.xlu0 %v1176
        %v1178 = vpop.xlane.xlu0 %1177
        %v1179 = vrcp.pop %v1157
        %v1180 = vrcp.pop %v1160
        %v1181 = vrcp.pop %v1163
        %v1182 = vrcp.pop %v1166
        %v1183 = vrcp.pop %v1169
        %v1184 = vrcp.pop %v1172
        %v1185 = vrcp.pop %v1175
        %v1186 = vrcp.pop %v1178
        %v1187 = vmul.f32 %v1140, %v1179
        %v1188 = vmul.f32 %v1142, %v1180
        %v1189 = vmul.f32 %v1144, %v1181
        %v1190 = vmul.f32 %v1146, %v1182
        %v1191 = vmul.f32 %v1148, %v1183
        %v1192 = vmul.f32 %v1150, %v1184
        %v1193 = vmul.f32 %v1152, %v1185
        %v1194 = vmul.f32 %v1154, %v1186
        %v1196 = vsel %vm1106, %v1187, 0
        %v1199 = vsel %vm1106, %v1188, 0
        %v1202 = vsel %vm1106, %v1189, 0
        %v1205 = vsel %vm1106, %v1190, 0
        %v1208 = vsel %vm1106, %v1191, 0
        %v1211 = vsel %vm1106, %v1192, 0
        %v1214 = vsel %vm1106, %v1193, 0
        %v1217 = vsel %vm1106, %v1194, 0
        %1219 = vmatprep.subr.mxu0 0.0
        %1220 = vmatpush1.msra.mxu0 %v914
        %1221 = vmatprep.subr.mxu0 0.0
        %1222 = vmatpush1.msra.mxu0 %v919
        %1223 = vmatprep.subr.mxu0 0.0
        %1224 = vmatpush1.msra.mxu0 %v924
        %1225 = vmatprep.subr.mxu0 0.0
        %1226 = vmatpush1.msra.mxu0 %v929
        %1227 = vmatprep.subr.mxu0 0.0
        %1228 = vmatpush1.msra.mxu0 %v934
        %1229 = vmatprep.subr.mxu0 0.0
        %1230 = vmatpush1.msra.mxu0 %v939
        %1231 = vmatprep.subr.mxu0 0.0
        %1232 = vmatpush1.msra.mxu0 %v944
        %1233 = vmatprep.subr.mxu0 0.0
        %1234 = vmatpush1.msra.mxu0 %v949
        %1235 = vmatprep.subr.mxu0 0.0
        %1236 = vmatpush1.msra.mxu0 0.0
        %1237 = vmatprep.subr.mxu0 0.0
        %1238 = vmatpush1.msra.mxu0 0.0
        %1239 = vmatprep.subr.mxu0 0.0
        %1240 = vmatpush1.msra.mxu0 0.0
        %1241 = vmatprep.subr.mxu0 0.0
        %1242 = vmatpush1.msra.mxu0 0.0
        %1243 = vmatprep.subr.mxu0 0.0
        %1244 = vmatpush1.msra.mxu0 0.0
        %1245 = vmatprep.subr.mxu0 0.0
        %1246 = vmatpush1.msra.mxu0 0.0
        %1247 = vmatprep.subr.mxu0 0.0
        %1248 = vmatpush1.msra.mxu0 0.0
        %1249 = vmatprep.subr.mxu0 0.0
        %1250 = vmatpush1.msra.mxu0 0.0
        %1251 = vmatprep.subr.mxu0 0.0
        %1252 = vmatpush1.msra.mxu0 0.0
        %1253 = vmatprep.subr.mxu0 0.0
        %1254 = vmatpush1.msra.mxu0 0.0
        %1255 = vmatprep.subr.mxu0 0.0
        %1256 = vmatpush1.msra.mxu0 0.0
        %1257 = vmatprep.subr.mxu0 0.0
        %1258 = vmatpush1.msra.mxu0 0.0
        %1259 = vmatprep.subr.mxu0 0.0
        %1260 = vmatpush1.msra.mxu0 0.0
        %1261 = vmatprep.subr.mxu0 0.0
        %1262 = vmatpush1.msra.mxu0 0.0
        %1263 = vmatprep.subr.mxu0 0.0
        %1264 = vmatpush1.msra.mxu0 0.0
        %1265 = vmatprep.subr.mxu0 0.0
        %1266 = vmatpush1.msra.mxu0 0.0
        %1267 = vmatprep.subr.mxu0 0.0
        %1268 = vmatpush1.msra.mxu0 0.0
        %1269 = vmatprep.subr.mxu0 0.0
        %1270 = vmatpush1.msra.mxu0 0.0
        %1271 = vmatprep.subr.mxu0 0.0
        %1272 = vmatpush1.msra.mxu0 0.0
        %1273 = vmatprep.subr.mxu0 0.0
        %1274 = vmatpush1.msra.mxu0 0.0
        %1275 = vmatprep.subr.mxu0 0.0
        %1276 = vmatpush1.msra.mxu0 0.0
        %1277 = vmatprep.subr.mxu0 0.0
        %1278 = vmatpush1.msra.mxu0 0.0
        %1279 = vmatprep.subr.mxu0 0.0
        %1280 = vmatpush1.msra.mxu0 0.0
        %1281 = vmatprep.subr.mxu0 0.0
        %1282 = vmatpush1.msra.mxu0 0.0
        %1283 = vmatprep.mubr.f32.mxu0 0.0
        %1284 = vmatmul.mubr.f32.gmra.mrb[0].mxu0 %v1196
        %v1285 = vpop.f32.mrb[0].mxu0
        %v1286 = vadd.f32 0.0, %v1285
        %v1287 = vpop.f32.mrb[0].mxu0
        %1288 = vmatprep.mubr.f32.mxu0 0.0
        %1289 = vmatmul.mubr.f32.gmra.mrb[0].mxu0 %v1199
        %v1290 = vpop.f32.mrb[0].mxu0
        %v1291 = vadd.f32 0.0, %v1290
        %v1292 = vpop.f32.mrb[0].mxu0
        %1293 = vmatprep.mubr.f32.mxu0 0.0
        %1294 = vmatmul.mubr.f32.gmra.mrb[0].mxu0 %v1202
        %v1295 = vpop.f32.mrb[0].mxu0
        %v1296 = vadd.f32 0.0, %v1295
        %v1297 = vpop.f32.mrb[0].mxu0
        %1298 = vmatprep.mubr.f32.mxu0 0.0
        %1299 = vmatmul.mubr.f32.gmra.mrb[0].mxu0 %v1205
        %v1300 = vpop.f32.mrb[0].mxu0
        %v1301 = vadd.f32 0.0, %v1300
        %v1302 = vpop.f32.mrb[0].mxu0
        %1303 = vmatprep.mubr.f32.mxu0 0.0
        %1304 = vmatmul.mubr.f32.gmra.mrb[0].mxu0 %v1208
        %v1305 = vpop.f32.mrb[0].mxu0
        %v1306 = vadd.f32 0.0, %v1305
        %v1307 = vpop.f32.mrb[0].mxu0
        %1308 = vmatprep.mubr.f32.mxu0 0.0
        %1309 = vmatmul.mubr.f32.gmra.mrb[0].mxu0 %v1211
        %v1310 = vpop.f32.mrb[0].mxu0
        %v1311 = vadd.f32 0.0, %v1310
        %v1312 = vpop.f32.mrb[0].mxu0
        %1313 = vmatprep.mubr.f32.mxu0 0.0
        %1314 = vmatmul.mubr.f32.gmra.mrb[0].mxu0 %v1214
        %v1315 = vpop.f32.mrb[0].mxu0
        %v1316 = vadd.f32 0.0, %v1315
        %v1317 = vpop.f32.mrb[0].mxu0
        %1318 = vmatprep.mubr.f32.mxu0 0.0
        %1319 = vmatmul.mubr.f32.gmra.mrb[0].mxu0 %v1217
        %v1320 = vpop.f32.mrb[0].mxu0
        %v1321 = vadd.f32 0.0, %v1320
        %v1322 = vpop.f32.mrb[0].mxu0
        %1323 = vdwg.mxu0
        %v1324 = vld [vmem:[%s5] sm:$0xff]
        %v1325 = vld [vmem:[%s5 + $0x8] sm:$0xf]
        %s1326 = scalar_lea.vmem %s3, 128
        %v1327 = vld [vmem:[%s1326] sm:$0xff]
        %v1328 = vld [vmem:[%s1326 + $0x8] sm:$0xff]
        %v1329 = vld [vmem:[%s1326 + $0x10] sm:$0xff]
        %v1330 = vld [vmem:[%s1326 + $0x18] sm:$0xff]
        %v1331 = vld [vmem:[%s1326 + $0x20] sm:$0xff]
        %v1332 = vld [vmem:[%s1326 + $0x28] sm:$0xff]
        %v1333 = vld [vmem:[%s1326 + $0x30] sm:$0xff]
        %v1334 = vld [vmem:[%s1326 + $0x38] sm:$0xff]
        %v1335 = vld [vmem:[%s1326 + $0x40] sm:$0xff]
        %v1336 = vld [vmem:[%s1326 + $0x48] sm:$0xff]
        %v1337 = vld [vmem:[%s1326 + $0x50] sm:$0xff]
        %v1338 = vld [vmem:[%s1326 + $0x58] sm:$0xff]
        %v1339 = vld [vmem:[%s1326 + $0x60] sm:$0xff]
        %v1340 = vld [vmem:[%s1326 + $0x68] sm:$0xff]
        %v1341 = vld [vmem:[%s1326 + $0x70] sm:$0xff]
        %v1342 = vld [vmem:[%s1326 + $0x78] sm:$0xff]
        %1343 = vmatprep.subr.mxu0 0.0
        %1344 = vmatpush1.msra.mxu0 %v1327
        %1345 = vmatprep.subr.mxu0 0.0
        %1346 = vmatpush1.msra.mxu0 %v1328
        %1347 = vmatprep.subr.mxu0 0.0
        %1348 = vmatpush1.msra.mxu0 %v1329
        %1349 = vmatprep.subr.mxu0 0.0
        %1350 = vmatpush1.msra.mxu0 %v1330
        %1351 = vmatprep.subr.mxu0 0.0
        %1352 = vmatpush1.msra.mxu0 %v1331
        %1353 = vmatprep.subr.mxu0 0.0
        %1354 = vmatpush1.msra.mxu0 %v1332
        %1355 = vmatprep.subr.mxu0 0.0
        %1356 = vmatpush1.msra.mxu0 %v1333
        %1357 = vmatprep.subr.mxu0 0.0
        %1358 = vmatpush1.msra.mxu0 %v1334
        %1359 = vmatprep.subr.mxu0 0.0
        %1360 = vmatpush1.msra.mxu0 %v1335
        %1361 = vmatprep.subr.mxu0 0.0
        %1362 = vmatpush1.msra.mxu0 %v1336
        %1363 = vmatprep.subr.mxu0 0.0
        %1364 = vmatpush1.msra.mxu0 %v1337
        %1365 = vmatprep.subr.mxu0 0.0
        %1366 = vmatpush1.msra.mxu0 %v1338
        %1367 = vmatprep.subr.mxu0 0.0
        %1368 = vmatpush1.msra.mxu0 %v1339
        %1369 = vmatprep.subr.mxu0 0.0
        %1370 = vmatpush1.msra.mxu0 %v1340
        %1371 = vmatprep.subr.mxu0 0.0
        %1372 = vmatpush1.msra.mxu0 %v1341
        %1373 = vmatprep.subr.mxu0 0.0
        %1374 = vmatpush1.msra.mxu0 %v1342
        %1375 = vmatprep.subr.mxu0 0.0
        %1376 = vmatpush1.msra.mxu0 0.0
        %1377 = vmatprep.subr.mxu0 0.0
        %1378 = vmatpush1.msra.mxu0 0.0
        %1379 = vmatprep.subr.mxu0 0.0
        %1380 = vmatpush1.msra.mxu0 0.0
        %1381 = vmatprep.subr.mxu0 0.0
        %1382 = vmatpush1.msra.mxu0 0.0
        %1383 = vmatprep.subr.mxu0 0.0
        %1384 = vmatpush1.msra.mxu0 0.0
        %1385 = vmatprep.subr.mxu0 0.0
        %1386 = vmatpush1.msra.mxu0 0.0
        %1387 = vmatprep.subr.mxu0 0.0
        %1388 = vmatpush1.msra.mxu0 0.0
        %1389 = vmatprep.subr.mxu0 0.0
        %1390 = vmatpush1.msra.mxu0 0.0
        %1391 = vmatprep.subr.mxu0 0.0
        %1392 = vmatpush1.msra.mxu0 0.0
        %1393 = vmatprep.subr.mxu0 0.0
        %1394 = vmatpush1.msra.mxu0 0.0
        %1395 = vmatprep.subr.mxu0 0.0
        %1396 = vmatpush1.msra.mxu0 0.0
        %1397 = vmatprep.subr.mxu0 0.0
        %1398 = vmatpush1.msra.mxu0 0.0
        %1399 = vmatprep.subr.mxu0 0.0
        %1400 = vmatpush1.msra.mxu0 0.0
        %1401 = vmatprep.subr.mxu0 0.0
        %1402 = vmatpush1.msra.mxu0 0.0
        %1403 = vmatprep.subr.mxu0 0.0
        %1404 = vmatpush1.msra.mxu0 0.0
        %1405 = vmatprep.subr.mxu0 0.0
        %1406 = vmatpush1.msra.mxu0 0.0
        %1407 = vmatprep.mubr.f32.mxu0 0.0
        %1408 = vmatmul.mubr.f32.gmra.mrb[0].mxu0 %v573
        %v1409 = vpop.f32.mrb[0].mxu0
        %v1410 = vadd.f32 0.0, %v1409
        %v1411 = vpop.f32.mrb[0].mxu0
        %1412 = vmatprep.mubr.f32.mxu0 0.0
        %1413 = vmatmul.mubr.f32.gmra.mrb[0].mxu0 %v574
        %v1414 = vpop.f32.mrb[0].mxu0
        %v1415 = vadd.f32 0.0, %v1414
        %v1416 = vpop.f32.mrb[0].mxu0
        %1417 = vmatprep.mubr.f32.mxu0 0.0
        %1418 = vmatmul.mubr.f32.gmra.mrb[0].mxu0 %v575
        %v1419 = vpop.f32.mrb[0].mxu0
        %v1420 = vadd.f32 0.0, %v1419
        %v1421 = vpop.f32.mrb[0].mxu0
        %1422 = vmatprep.mubr.f32.mxu0 0.0
        %1423 = vmatmul.mubr.f32.gmra.mrb[0].mxu0 %v576
        %v1424 = vpop.f32.mrb[0].mxu0
        %v1425 = vadd.f32 0.0, %v1424
        %v1426 = vpop.f32.mrb[0].mxu0
        %1427 = vmatprep.mubr.f32.mxu0 0.0
        %1428 = vmatmul.mubr.f32.gmra.mrb[0].mxu0 %v577
        %v1429 = vpop.f32.mrb[0].mxu0
        %v1430 = vadd.f32 0.0, %v1429
        %v1431 = vpop.f32.mrb[0].mxu0
        %1432 = vmatprep.mubr.f32.mxu0 0.0
        %1433 = vmatmul.mubr.f32.gmra.mrb[0].mxu0 %v578
        %v1434 = vpop.f32.mrb[0].mxu0
        %v1435 = vadd.f32 0.0, %v1434
        %v1436 = vpop.f32.mrb[0].mxu0
        %1437 = vmatprep.mubr.f32.mxu0 0.0
        %1438 = vmatmul.mubr.f32.gmra.mrb[0].mxu0 %v579
        %v1439 = vpop.f32.mrb[0].mxu0
        %v1440 = vadd.f32 0.0, %v1439
        %v1441 = vpop.f32.mrb[0].mxu0
        %1442 = vmatprep.mubr.f32.mxu0 0.0
        %1443 = vmatmul.mubr.f32.gmra.mrb[0].mxu0 %v580
        %v1444 = vpop.f32.mrb[0].mxu0
        %v1445 = vadd.f32 0.0, %v1444
        %v1446 = vpop.f32.mrb[0].mxu0
        %1447 = vdwg.mxu0
        %s1448 = scalar_lea.vmem %s2, 128
        %v1449 = vld [vmem:[%s1448] sm:$0xff]
        %v1450 = vld [vmem:[%s1448 + $0x8] sm:$0xff]
        %v1451 = vld [vmem:[%s1448 + $0x10] sm:$0xff]
        %v1452 = vld [vmem:[%s1448 + $0x18] sm:$0xff]
        %v1453 = vld [vmem:[%s1448 + $0x20] sm:$0xff]
        %v1454 = vld [vmem:[%s1448 + $0x28] sm:$0xff]
        %v1455 = vld [vmem:[%s1448 + $0x30] sm:$0xff]
        %v1456 = vld [vmem:[%s1448 + $0x38] sm:$0xff]
        %v1457 = vld [vmem:[%s1448 + $0x40] sm:$0xff]
        %v1458 = vld [vmem:[%s1448 + $0x48] sm:$0xff]
        %v1459 = vld [vmem:[%s1448 + $0x50] sm:$0xff]
        %v1460 = vld [vmem:[%s1448 + $0x58] sm:$0xff]
        %v1461 = vld [vmem:[%s1448 + $0x60] sm:$0xff]
        %v1462 = vld [vmem:[%s1448 + $0x68] sm:$0xff]
        %v1463 = vld [vmem:[%s1448 + $0x70] sm:$0xff]
        %v1464 = vld [vmem:[%s1448 + $0x78] sm:$0xff]
        %1465 = vmatprep.subr.mxu0 0.0
        %1466 = vmatpush1.msra.mxu0 %v1449
        %1467 = vmatprep.subr.mxu0 0.0
        %1468 = vmatpush1.msra.mxu0 %v1450
        %1469 = vmatprep.subr.mxu0 0.0
        %1470 = vmatpush1.msra.mxu0 %v1451
        %1471 = vmatprep.subr.mxu0 0.0
        %1472 = vmatpush1.msra.mxu0 %v1452
        %1473 = vmatprep.subr.mxu0 0.0
        %1474 = vmatpush1.msra.mxu0 %v1453
        %1475 = vmatprep.subr.mxu0 0.0
        %1476 = vmatpush1.msra.mxu0 %v1454
        %1477 = vmatprep.subr.mxu0 0.0
        %1478 = vmatpush1.msra.mxu0 %v1455
        %1479 = vmatprep.subr.mxu0 0.0
        %1480 = vmatpush1.msra.mxu0 %v1456
        %1481 = vmatprep.subr.mxu0 0.0
        %1482 = vmatpush1.msra.mxu0 %v1457
        %1483 = vmatprep.subr.mxu0 0.0
        %1484 = vmatpush1.msra.mxu0 %v1458
        %1485 = vmatprep.subr.mxu0 0.0
        %1486 = vmatpush1.msra.mxu0 %v1459
        %1487 = vmatprep.subr.mxu0 0.0
        %1488 = vmatpush1.msra.mxu0 %v1460
        %1489 = vmatprep.subr.mxu0 0.0
        %1490 = vmatpush1.msra.mxu0 %v1461
        %1491 = vmatprep.subr.mxu0 0.0
        %1492 = vmatpush1.msra.mxu0 %v1462
        %1493 = vmatprep.subr.mxu0 0.0
        %1494 = vmatpush1.msra.mxu0 %v1463
        %1495 = vmatprep.subr.mxu0 0.0
        %1496 = vmatpush1.msra.mxu0 %v1464
        %1497 = vmatprep.subr.mxu0 0.0
        %1498 = vmatpush1.msra.mxu0 0.0
        %1499 = vmatprep.subr.mxu0 0.0
        %1500 = vmatpush1.msra.mxu0 0.0
        %1501 = vmatprep.subr.mxu0 0.0
        %1502 = vmatpush1.msra.mxu0 0.0
        %1503 = vmatprep.subr.mxu0 0.0
        %1504 = vmatpush1.msra.mxu0 0.0
        %1505 = vmatprep.subr.mxu0 0.0
        %1506 = vmatpush1.msra.mxu0 0.0
        %1507 = vmatprep.subr.mxu0 0.0
        %1508 = vmatpush1.msra.mxu0 0.0
        %1509 = vmatprep.subr.mxu0 0.0
        %1510 = vmatpush1.msra.mxu0 0.0
        %1511 = vmatprep.subr.mxu0 0.0
        %1512 = vmatpush1.msra.mxu0 0.0
        %1513 = vmatprep.subr.mxu0 0.0
        %1514 = vmatpush1.msra.mxu0 0.0
        %1515 = vmatprep.subr.mxu0 0.0
        %1516 = vmatpush1.msra.mxu0 0.0
        %1517 = vmatprep.subr.mxu0 0.0
        %1518 = vmatpush1.msra.mxu0 0.0
        %1519 = vmatprep.subr.mxu0 0.0
        %1520 = vmatpush1.msra.mxu0 0.0
        %1521 = vmatprep.subr.mxu0 0.0
        %1522 = vmatpush1.msra.mxu0 0.0
        %1523 = vmatprep.subr.mxu0 0.0
        %1524 = vmatpush1.msra.mxu0 0.0
        %1525 = vmatprep.subr.mxu0 0.0
        %1526 = vmatpush1.msra.mxu0 0.0
        %1527 = vmatprep.subr.mxu0 0.0
        %1528 = vmatpush1.msra.mxu0 0.0
        %1529 = vmatprep.mubr.f32.mxu0 0.0
        %1530 = vmatmul.mubr.f32.gmra.mrb[0].mxu0 %v573
        %v1531 = vpop.f32.mrb[0].mxu0
        %v1532 = vadd.f32 0.0, %v1531
        %v1533 = vpop.f32.mrb[0].mxu0
        %1534 = vmatprep.mubr.f32.mxu0 0.0
        %1535 = vmatmul.mubr.f32.gmra.mrb[0].mxu0 %v574
        %v1536 = vpop.f32.mrb[0].mxu0
        %v1537 = vadd.f32 0.0, %v1536
        %v1538 = vpop.f32.mrb[0].mxu0
        %1539 = vmatprep.mubr.f32.mxu0 0.0
        %1540 = vmatmul.mubr.f32.gmra.mrb[0].mxu0 %v575
        %v1541 = vpop.f32.mrb[0].mxu0
        %v1542 = vadd.f32 0.0, %v1541
        %v1543 = vpop.f32.mrb[0].mxu0
        %1544 = vmatprep.mubr.f32.mxu0 0.0
        %1545 = vmatmul.mubr.f32.gmra.mrb[0].mxu0 %v576
        %v1546 = vpop.f32.mrb[0].mxu0
        %v1547 = vadd.f32 0.0, %v1546
        %v1548 = vpop.f32.mrb[0].mxu0
        %1549 = vmatprep.mubr.f32.mxu0 0.0
        %1550 = vmatmul.mubr.f32.gmra.mrb[0].mxu0 %v577
        %v1551 = vpop.f32.mrb[0].mxu0
        %v1552 = vadd.f32 0.0, %v1551
        %v1553 = vpop.f32.mrb[0].mxu0
        %1554 = vmatprep.mubr.f32.mxu0 0.0
        %1555 = vmatmul.mubr.f32.gmra.mrb[0].mxu0 %v578
        %v1556 = vpop.f32.mrb[0].mxu0
        %v1557 = vadd.f32 0.0, %v1556
        %v1558 = vpop.f32.mrb[0].mxu0
        %1559 = vmatprep.mubr.f32.mxu0 0.0
        %1560 = vmatmul.mubr.f32.gmra.mrb[0].mxu0 %v579
        %v1561 = vpop.f32.mrb[0].mxu0
        %v1562 = vadd.f32 0.0, %v1561
        %v1563 = vpop.f32.mrb[0].mxu0
        %1564 = vmatprep.mubr.f32.mxu0 0.0
        %1565 = vmatmul.mubr.f32.gmra.mrb[0].mxu0 %v580
        %v1566 = vpop.f32.mrb[0].mxu0
        %v1567 = vadd.f32 0.0, %v1566
        %v1568 = vpop.f32.mrb[0].mxu0
        %1569 = vdwg.mxu0
        %s1570 = scalar_lea.vmem %s4, 128
        %v1571 = vld [vmem:[%s1570] sm:$0xff]
        %v1572 = vld [vmem:[%s1570 + $0x8] sm:$0xff]
        %v1573 = vld [vmem:[%s1570 + $0x10] sm:$0xff]
        %v1574 = vld [vmem:[%s1570 + $0x18] sm:$0xff]
        %v1575 = vld [vmem:[%s1570 + $0x20] sm:$0xff]
        %v1576 = vld [vmem:[%s1570 + $0x28] sm:$0xff]
        %v1577 = vld [vmem:[%s1570 + $0x30] sm:$0xff]
        %v1578 = vld [vmem:[%s1570 + $0x38] sm:$0xff]
        %v1579 = vld [vmem:[%s1570 + $0x40] sm:$0xff]
        %v1580 = vld [vmem:[%s1570 + $0x48] sm:$0xff]
        %v1581 = vld [vmem:[%s1570 + $0x50] sm:$0xff]
        %v1582 = vld [vmem:[%s1570 + $0x58] sm:$0xff]
        %v1583 = vld [vmem:[%s1570 + $0x60] sm:$0xff]
        %v1584 = vld [vmem:[%s1570 + $0x68] sm:$0xff]
        %v1585 = vld [vmem:[%s1570 + $0x70] sm:$0xff]
        %v1586 = vld [vmem:[%s1570 + $0x78] sm:$0xff]
        %1587 = vmatprep.subr.mxu0 0.0
        %1588 = vmatpush1.msra.mxu0 %v1571
        %1589 = vmatprep.subr.mxu0 0.0
        %1590 = vmatpush1.msra.mxu0 %v1572
        %1591 = vmatprep.subr.mxu0 0.0
        %1592 = vmatpush1.msra.mxu0 %v1573
        %1593 = vmatprep.subr.mxu0 0.0
        %1594 = vmatpush1.msra.mxu0 %v1574
        %1595 = vmatprep.subr.mxu0 0.0
        %1596 = vmatpush1.msra.mxu0 %v1575
        %1597 = vmatprep.subr.mxu0 0.0
        %1598 = vmatpush1.msra.mxu0 %v1576
        %1599 = vmatprep.subr.mxu0 0.0
        %1600 = vmatpush1.msra.mxu0 %v1577
        %1601 = vmatprep.subr.mxu0 0.0
        %1602 = vmatpush1.msra.mxu0 %v1578
        %1603 = vmatprep.subr.mxu0 0.0
        %1604 = vmatpush1.msra.mxu0 %v1579
        %1605 = vmatprep.subr.mxu0 0.0
        %1606 = vmatpush1.msra.mxu0 %v1580
        %1607 = vmatprep.subr.mxu0 0.0
        %1608 = vmatpush1.msra.mxu0 %v1581
        %1609 = vmatprep.subr.mxu0 0.0
        %1610 = vmatpush1.msra.mxu0 %v1582
        %1611 = vmatprep.subr.mxu0 0.0
        %1612 = vmatpush1.msra.mxu0 %v1583
        %1613 = vmatprep.subr.mxu0 0.0
        %1614 = vmatpush1.msra.mxu0 %v1584
        %1615 = vmatprep.subr.mxu0 0.0
        %1616 = vmatpush1.msra.mxu0 %v1585
        %1617 = vmatprep.subr.mxu0 0.0
        %1618 = vmatpush1.msra.mxu0 %v1586
        %1619 = vmatprep.subr.mxu0 0.0
        %1620 = vmatpush1.msra.mxu0 0.0
        %1621 = vmatprep.subr.mxu0 0.0
        %1622 = vmatpush1.msra.mxu0 0.0
        %1623 = vmatprep.subr.mxu0 0.0
        %1624 = vmatpush1.msra.mxu0 0.0
        %1625 = vmatprep.subr.mxu0 0.0
        %1626 = vmatpush1.msra.mxu0 0.0
        %1627 = vmatprep.subr.mxu0 0.0
        %1628 = vmatpush1.msra.mxu0 0.0
        %1629 = vmatprep.subr.mxu0 0.0
        %1630 = vmatpush1.msra.mxu0 0.0
        %1631 = vmatprep.subr.mxu0 0.0
        %1632 = vmatpush1.msra.mxu0 0.0
        %1633 = vmatprep.subr.mxu0 0.0
        %1634 = vmatpush1.msra.mxu0 0.0
        %1635 = vmatprep.subr.mxu0 0.0
        %1636 = vmatpush1.msra.mxu0 0.0
        %1637 = vmatprep.subr.mxu0 0.0
        %1638 = vmatpush1.msra.mxu0 0.0
        %1639 = vmatprep.subr.mxu0 0.0
        %1640 = vmatpush1.msra.mxu0 0.0
        %1641 = vmatprep.subr.mxu0 0.0
        %1642 = vmatpush1.msra.mxu0 0.0
        %1643 = vmatprep.subr.mxu0 0.0
        %1644 = vmatpush1.msra.mxu0 0.0
        %1645 = vmatprep.subr.mxu0 0.0
        %1646 = vmatpush1.msra.mxu0 0.0
        %1647 = vmatprep.subr.mxu0 0.0
        %1648 = vmatpush1.msra.mxu0 0.0
        %1649 = vmatprep.subr.mxu0 0.0
        %1650 = vmatpush1.msra.mxu0 0.0
        %1651 = vmatprep.mubr.f32.mxu0 0.0
        %1652 = vmatmul.mubr.f32.gmra.mrb[0].mxu0 %v573
        %v1653 = vpop.f32.mrb[0].mxu0
        %v1654 = vadd.f32 0.0, %v1653
        %v1655 = vpop.f32.mrb[0].mxu0
        %1656 = vmatprep.mubr.f32.mxu0 0.0
        %1657 = vmatmul.mubr.f32.gmra.mrb[0].mxu0 %v574
        %v1658 = vpop.f32.mrb[0].mxu0
        %v1659 = vadd.f32 0.0, %v1658
        %v1660 = vpop.f32.mrb[0].mxu0
        %1661 = vmatprep.mubr.f32.mxu0 0.0
        %1662 = vmatmul.mubr.f32.gmra.mrb[0].mxu0 %v575
        %v1663 = vpop.f32.mrb[0].mxu0
        %v1664 = vadd.f32 0.0, %v1663
        %v1665 = vpop.f32.mrb[0].mxu0
        %1666 = vmatprep.mubr.f32.mxu0 0.0
        %1667 = vmatmul.mubr.f32.gmra.mrb[0].mxu0 %v576
        %v1668 = vpop.f32.mrb[0].mxu0
        %v1669 = vadd.f32 0.0, %v1668
        %v1670 = vpop.f32.mrb[0].mxu0
        %1671 = vmatprep.mubr.f32.mxu0 0.0
        %1672 = vmatmul.mubr.f32.gmra.mrb[0].mxu0 %v577
        %v1673 = vpop.f32.mrb[0].mxu0
        %v1674 = vadd.f32 0.0, %v1673
        %v1675 = vpop.f32.mrb[0].mxu0
        %1676 = vmatprep.mubr.f32.mxu0 0.0
        %1677 = vmatmul.mubr.f32.gmra.mrb[0].mxu0 %v578
        %v1678 = vpop.f32.mrb[0].mxu0
        %v1679 = vadd.f32 0.0, %v1678
        %v1680 = vpop.f32.mrb[0].mxu0
        %1681 = vmatprep.mubr.f32.mxu0 0.0
        %1682 = vmatmul.mubr.f32.gmra.mrb[0].mxu0 %v579
        %v1683 = vpop.f32.mrb[0].mxu0
        %v1684 = vadd.f32 0.0, %v1683
        %v1685 = vpop.f32.mrb[0].mxu0
        %1686 = vmatprep.mubr.f32.mxu0 0.0
        %1687 = vmatmul.mubr.f32.gmra.mrb[0].mxu0 %v580
        %v1688 = vpop.f32.mrb[0].mxu0
        %v1689 = vadd.f32 0.0, %v1688
        %v1690 = vpop.f32.mrb[0].mxu0
        %1691 = vdwg.mxu0
        %v1693 = vsel %vm952, %v1410, 0
        %v1696 = vsel %vm952, %v1415, 0
        %v1699 = vsel %vm952, %v1420, 0
        %v1702 = vsel %vm952, %v1425, 0
        %v1705 = vsel %vm952, %v1430, 0
        %v1708 = vsel %vm952, %v1435, 0
        %v1711 = vsel %vm952, %v1440, 0
        %v1714 = vsel %vm952, %v1445, 0
        %v1717 = vsel %vm952, %v1532, 0
        %v1720 = vsel %vm952, %v1537, 0
        %v1723 = vsel %vm952, %v1542, 0
        %v1726 = vsel %vm952, %v1547, 0
        %v1729 = vsel %vm952, %v1552, 0
        %v1732 = vsel %vm952, %v1557, 0
        %v1735 = vsel %vm952, %v1562, 0
        %v1738 = vsel %vm952, %v1567, 0
        %1740 = vmatprep.subr.mxu0 0.0
        %1741 = vmatpush1.xpose.msra.mxu0 %v1717
        %1742 = vmatprep.subr.mxu0 0.0
        %1743 = vmatpush1.xpose.msra.mxu0 %v1720
        %1744 = vmatprep.subr.mxu0 0.0
        %1745 = vmatpush1.xpose.msra.mxu0 %v1723
        %1746 = vmatprep.subr.mxu0 0.0
        %1747 = vmatpush1.xpose.msra.mxu0 %v1726
        %1748 = vmatprep.subr.mxu0 0.0
        %1749 = vmatpush1.xpose.msra.mxu0 %v1729
        %1750 = vmatprep.subr.mxu0 0.0
        %1751 = vmatpush1.xpose.msra.mxu0 %v1732
        %1752 = vmatprep.subr.mxu0 0.0
        %1753 = vmatpush1.xpose.msra.mxu0 %v1735
        %1754 = vmatprep.subr.mxu0 0.0
        %1755 = vmatpush1.xpose.msra.mxu0 %v1738
        %1756 = vmatprep.subr.mxu0 0.0
        %1757 = vmatpush1.xpose.msra.mxu0 0.0
        %1758 = vmatprep.subr.mxu0 0.0
        %1759 = vmatpush1.xpose.msra.mxu0 0.0
        %1760 = vmatprep.subr.mxu0 0.0
        %1761 = vmatpush1.xpose.msra.mxu0 0.0
        %1762 = vmatprep.subr.mxu0 0.0
        %1763 = vmatpush1.xpose.msra.mxu0 0.0
        %1764 = vmatprep.subr.mxu0 0.0
        %1765 = vmatpush1.xpose.msra.mxu0 0.0
        %1766 = vmatprep.subr.mxu0 0.0
        %1767 = vmatpush1.xpose.msra.mxu0 0.0
        %1768 = vmatprep.subr.mxu0 0.0
        %1769 = vmatpush1.xpose.msra.mxu0 0.0
        %1770 = vmatprep.subr.mxu0 0.0
        %1771 = vmatpush1.xpose.msra.mxu0 0.0
        %1772 = vmatprep.subr.mxu0 0.0
        %1773 = vmatpush1.xpose.msra.mxu0 0.0
        %1774 = vmatprep.subr.mxu0 0.0
        %1775 = vmatpush1.xpose.msra.mxu0 0.0
        %1776 = vmatprep.subr.mxu0 0.0
        %1777 = vmatpush1.xpose.msra.mxu0 0.0
        %1778 = vmatprep.subr.mxu0 0.0
        %1779 = vmatpush1.xpose.msra.mxu0 0.0
        %1780 = vmatprep.subr.mxu0 0.0
        %1781 = vmatpush1.xpose.msra.mxu0 0.0
        %1782 = vmatprep.subr.mxu0 0.0
        %1783 = vmatpush1.xpose.msra.mxu0 0.0
        %1784 = vmatprep.subr.mxu0 0.0
        %1785 = vmatpush1.xpose.msra.mxu0 0.0
        %1786 = vmatprep.subr.mxu0 0.0
        %1787 = vmatpush1.xpose.msra.mxu0 0.0
        %1788 = vmatprep.subr.mxu0 0.0
        %1789 = vmatpush1.xpose.msra.mxu0 0.0
        %1790 = vmatprep.subr.mxu0 0.0
        %1791 = vmatpush1.xpose.msra.mxu0 0.0
        %1792 = vmatprep.subr.mxu0 0.0
        %1793 = vmatpush1.xpose.msra.mxu0 0.0
        %1794 = vmatprep.subr.mxu0 0.0
        %1795 = vmatpush1.xpose.msra.mxu0 0.0
        %1796 = vmatprep.subr.mxu0 0.0
        %1797 = vmatpush1.xpose.msra.mxu0 0.0
        %1798 = vmatprep.subr.mxu0 0.0
        %1799 = vmatpush1.xpose.msra.mxu0 0.0
        %1800 = vmatprep.subr.mxu0 0.0
        %1801 = vmatpush1.xpose.msra.mxu0 0.0
        %1802 = vmatprep.subr.mxu0 0.0
        %1803 = vmatpush1.xpose.msra.mxu0 0.0
        %1804 = vmatprep.mubr.f32.mxu0 0.0
        %1805 = vmatmul.mubr.f32.gmra.mrb[0].mxu0 %v1693
        %v1806 = vpop.f32.mrb[0].mxu0
        %v1807 = vadd.f32 %v581, %v1806
        %v1808 = vpop.f32.mrb[0].mxu0
        %1809 = vmatprep.mubr.f32.mxu0 0.0
        %1810 = vmatmul.mubr.f32.gmra.mrb[0].mxu0 %v1696
        %v1811 = vpop.f32.mrb[0].mxu0
        %v1812 = vadd.f32 %v582, %v1811
        %v1813 = vpop.f32.mrb[0].mxu0
        %1814 = vmatprep.mubr.f32.mxu0 0.0
        %1815 = vmatmul.mubr.f32.gmra.mrb[0].mxu0 %v1699
        %v1816 = vpop.f32.mrb[0].mxu0
        %v1817 = vadd.f32 %v583, %v1816
        %v1818 = vpop.f32.mrb[0].mxu0
        %1819 = vmatprep.mubr.f32.mxu0 0.0
        %1820 = vmatmul.mubr.f32.gmra.mrb[0].mxu0 %v1702
        %v1821 = vpop.f32.mrb[0].mxu0
        %v1822 = vadd.f32 %v584, %v1821
        %v1823 = vpop.f32.mrb[0].mxu0
        %1824 = vmatprep.mubr.f32.mxu0 0.0
        %1825 = vmatmul.mubr.f32.gmra.mrb[0].mxu0 %v1705
        %v1826 = vpop.f32.mrb[0].mxu0
        %v1827 = vadd.f32 %v585, %v1826
        %v1828 = vpop.f32.mrb[0].mxu0
        %1829 = vmatprep.mubr.f32.mxu0 0.0
        %1830 = vmatmul.mubr.f32.gmra.mrb[0].mxu0 %v1708
        %v1831 = vpop.f32.mrb[0].mxu0
        %v1832 = vadd.f32 %v586, %v1831
        %v1833 = vpop.f32.mrb[0].mxu0
        %1834 = vmatprep.mubr.f32.mxu0 0.0
        %1835 = vmatmul.mubr.f32.gmra.mrb[0].mxu0 %v1711
        %v1836 = vpop.f32.mrb[0].mxu0
        %v1837 = vadd.f32 %v587, %v1836
        %v1838 = vpop.f32.mrb[0].mxu0
        %1839 = vmatprep.mubr.f32.mxu0 0.0
        %1840 = vmatmul.mubr.f32.gmra.mrb[0].mxu0 %v1714
        %v1841 = vpop.f32.mrb[0].mxu0
        %v1842 = vadd.f32 %v588, %v1841
        %v1843 = vpop.f32.mrb[0].mxu0
        %1844 = vdwg.mxu0
        %v1845 = vsel %vm1106, %v1807, -inf
        %1846 = vmax.xlane.f32.xlu0 %v1845
        %v1847 = vpop.xlane.xlu0 %1846
        %v1848 = vsel %vm1106, %v1812, -inf
        %1849 = vmax.xlane.f32.xlu0 %v1848
        %v1850 = vpop.xlane.xlu0 %1849
        %v1851 = vsel %vm1106, %v1817, -inf
        %1852 = vmax.xlane.f32.xlu0 %v1851
        %v1853 = vpop.xlane.xlu0 %1852
        %v1854 = vsel %vm1106, %v1822, -inf
        %1855 = vmax.xlane.f32.xlu0 %v1854
        %v1856 = vpop.xlane.xlu0 %1855
        %v1857 = vsel %vm1106, %v1827, -inf
        %1858 = vmax.xlane.f32.xlu0 %v1857
        %v1859 = vpop.xlane.xlu0 %1858
        %v1860 = vsel %vm1106, %v1832, -inf
        %1861 = vmax.xlane.f32.xlu0 %v1860
        %v1862 = vpop.xlane.xlu0 %1861
        %v1863 = vsel %vm1106, %v1837, -inf
        %1864 = vmax.xlane.f32.xlu0 %v1863
        %v1865 = vpop.xlane.xlu0 %1864
        %v1866 = vsel %vm1106, %v1842, -inf
        %1867 = vmax.xlane.f32.xlu0 %v1866
        %v1868 = vpop.xlane.xlu0 %1867
        %v1869 = vsub.f32 %v1807, %v1847
        %v1870 = vsub.f32 %v1812, %v1850
        %v1871 = vsub.f32 %v1817, %v1853
        %v1872 = vsub.f32 %v1822, %v1856
        %v1873 = vsub.f32 %v1827, %v1859
        %v1874 = vsub.f32 %v1832, %v1862
        %v1875 = vsub.f32 %v1837, %v1865
        %v1876 = vsub.f32 %v1842, %v1868
        %v1877 = vmul.f32 %v1869, 1.442695
        %v1878 = vpow.pop %v1877
        %v1879 = vmul.f32 %v1870, 1.442695
        %v1880 = vpow.pop %v1879
        %v1881 = vmul.f32 %v1871, 1.442695
        %v1882 = vpow.pop %v1881
        %v1883 = vmul.f32 %v1872, 1.442695
        %v1884 = vpow.pop %v1883
        %v1885 = vmul.f32 %v1873, 1.442695
        %v1886 = vpow.pop %v1885
        %v1887 = vmul.f32 %v1874, 1.442695
        %v1888 = vpow.pop %v1887
        %v1889 = vmul.f32 %v1875, 1.442695
        %v1890 = vpow.pop %v1889
        %v1891 = vmul.f32 %v1876, 1.442695
        %v1892 = vpow.pop %v1891
        %v1893 = vsel %vm1106, %v1878, 0.0
        %1894 = vadd.xlane.f32.xlu0 %v1893
        %v1895 = vpop.xlane.xlu0 %1894
        %v1896 = vsel %vm1106, %v1880, 0.0
        %1897 = vadd.xlane.f32.xlu0 %v1896
        %v1898 = vpop.xlane.xlu0 %1897
        %v1899 = vsel %vm1106, %v1882, 0.0
        %1900 = vadd.xlane.f32.xlu0 %v1899
        %v1901 = vpop.xlane.xlu0 %1900
        %v1902 = vsel %vm1106, %v1884, 0.0
        %1903 = vadd.xlane.f32.xlu0 %v1902
        %v1904 = vpop.xlane.xlu0 %1903
        %v1905 = vsel %vm1106, %v1886, 0.0
        %1906 = vadd.xlane.f32.xlu0 %v1905
        %v1907 = vpop.xlane.xlu0 %1906
        %v1908 = vsel %vm1106, %v1888, 0.0
        %1909 = vadd.xlane.f32.xlu0 %v1908
        %v1910 = vpop.xlane.xlu0 %1909
        %v1911 = vsel %vm1106, %v1890, 0.0
        %1912 = vadd.xlane.f32.xlu0 %v1911
        %v1913 = vpop.xlane.xlu0 %1912
        %v1914 = vsel %vm1106, %v1892, 0.0
        %1915 = vadd.xlane.f32.xlu0 %v1914
        %v1916 = vpop.xlane.xlu0 %1915
        %v1917 = vrcp.pop %v1895
        %v1918 = vrcp.pop %v1898
        %v1919 = vrcp.pop %v1901
        %v1920 = vrcp.pop %v1904
        %v1921 = vrcp.pop %v1907
        %v1922 = vrcp.pop %v1910
        %v1923 = vrcp.pop %v1913
        %v1924 = vrcp.pop %v1916
        %v1925 = vmul.f32 %v1878, %v1917
        %v1926 = vmul.f32 %v1880, %v1918
        %v1927 = vmul.f32 %v1882, %v1919
        %v1928 = vmul.f32 %v1884, %v1920
        %v1929 = vmul.f32 %v1886, %v1921
        %v1930 = vmul.f32 %v1888, %v1922
        %v1931 = vmul.f32 %v1890, %v1923
        %v1932 = vmul.f32 %v1892, %v1924
        %v1934 = vsel %vm1106, %v1925, 0
        %v1937 = vsel %vm1106, %v1926, 0
        %v1940 = vsel %vm1106, %v1927, 0
        %v1943 = vsel %vm1106, %v1928, 0
        %v1946 = vsel %vm1106, %v1929, 0
        %v1949 = vsel %vm1106, %v1930, 0
        %v1952 = vsel %vm1106, %v1931, 0
        %v1955 = vsel %vm1106, %v1932, 0
        %1957 = vmatprep.subr.mxu0 0.0
        %1958 = vmatpush1.msra.mxu0 %v1654
        %1959 = vmatprep.subr.mxu0 0.0
        %1960 = vmatpush1.msra.mxu0 %v1659
        %1961 = vmatprep.subr.mxu0 0.0
        %1962 = vmatpush1.msra.mxu0 %v1664
        %1963 = vmatprep.subr.mxu0 0.0
        %1964 = vmatpush1.msra.mxu0 %v1669
        %1965 = vmatprep.subr.mxu0 0.0
        %1966 = vmatpush1.msra.mxu0 %v1674
        %1967 = vmatprep.subr.mxu0 0.0
        %1968 = vmatpush1.msra.mxu0 %v1679
        %1969 = vmatprep.subr.mxu0 0.0
        %1970 = vmatpush1.msra.mxu0 %v1684
        %1971 = vmatprep.subr.mxu0 0.0
        %1972 = vmatpush1.msra.mxu0 %v1689
        %1973 = vmatprep.subr.mxu0 0.0
        %1974 = vmatpush1.msra.mxu0 0.0
        %1975 = vmatprep.subr.mxu0 0.0
        %1976 = vmatpush1.msra.mxu0 0.0
        %1977 = vmatprep.subr.mxu0 0.0
        %1978 = vmatpush1.msra.mxu0 0.0
        %1979 = vmatprep.subr.mxu0 0.0
        %1980 = vmatpush1.msra.mxu0 0.0
        %1981 = vmatprep.subr.mxu0 0.0
        %1982 = vmatpush1.msra.mxu0 0.0
        %1983 = vmatprep.subr.mxu0 0.0
        %1984 = vmatpush1.msra.mxu0 0.0
        %1985 = vmatprep.subr.mxu0 0.0
        %1986 = vmatpush1.msra.mxu0 0.0
        %1987 = vmatprep.subr.mxu0 0.0
        %1988 = vmatpush1.msra.mxu0 0.0
        %1989 = vmatprep.subr.mxu0 0.0
        %1990 = vmatpush1.msra.mxu0 0.0
        %1991 = vmatprep.subr.mxu0 0.0
        %1992 = vmatpush1.msra.mxu0 0.0
        %1993 = vmatprep.subr.mxu0 0.0
        %1994 = vmatpush1.msra.mxu0 0.0
        %1995 = vmatprep.subr.mxu0 0.0
        %1996 = vmatpush1.msra.mxu0 0.0
        %1997 = vmatprep.subr.mxu0 0.0
        %1998 = vmatpush1.msra.mxu0 0.0
        %1999 = vmatprep.subr.mxu0 0.0
        %2000 = vmatpush1.msra.mxu0 0.0
        %2001 = vmatprep.subr.mxu0 0.0
        %2002 = vmatpush1.msra.mxu0 0.0
        %2003 = vmatprep.subr.mxu0 0.0
        %2004 = vmatpush1.msra.mxu0 0.0
        %2005 = vmatprep.subr.mxu0 0.0
        %2006 = vmatpush1.msra.mxu0 0.0
        %2007 = vmatprep.subr.mxu0 0.0
        %2008 = vmatpush1.msra.mxu0 0.0
        %2009 = vmatprep.subr.mxu0 0.0
        %2010 = vmatpush1.msra.mxu0 0.0
        %2011 = vmatprep.subr.mxu0 0.0
        %2012 = vmatpush1.msra.mxu0 0.0
        %2013 = vmatprep.subr.mxu0 0.0
        %2014 = vmatpush1.msra.mxu0 0.0
        %2015 = vmatprep.subr.mxu0 0.0
        %2016 = vmatpush1.msra.mxu0 0.0
        %2017 = vmatprep.subr.mxu0 0.0
        %2018 = vmatpush1.msra.mxu0 0.0
        %2019 = vmatprep.subr.mxu0 0.0
        %2020 = vmatpush1.msra.mxu0 0.0
        %2021 = vmatprep.mubr.f32.mxu0 0.0
        %2022 = vmatmul.mubr.f32.gmra.mrb[0].mxu0 %v1934
        %v2023 = vpop.f32.mrb[0].mxu0
        %v2024 = vadd.f32 0.0, %v2023
        %v2025 = vpop.f32.mrb[0].mxu0
        %2026 = vmatprep.mubr.f32.mxu0 0.0
        %2027 = vmatmul.mubr.f32.gmra.mrb[0].mxu0 %v1937
        %v2028 = vpop.f32.mrb[0].mxu0
        %v2029 = vadd.f32 0.0, %v2028
        %v2030 = vpop.f32.mrb[0].mxu0
        %2031 = vmatprep.mubr.f32.mxu0 0.0
        %2032 = vmatmul.mubr.f32.gmra.mrb[0].mxu0 %v1940
        %v2033 = vpop.f32.mrb[0].mxu0
        %v2034 = vadd.f32 0.0, %v2033
        %v2035 = vpop.f32.mrb[0].mxu0
        %2036 = vmatprep.mubr.f32.mxu0 0.0
        %2037 = vmatmul.mubr.f32.gmra.mrb[0].mxu0 %v1943
        %v2038 = vpop.f32.mrb[0].mxu0
        %v2039 = vadd.f32 0.0, %v2038
        %v2040 = vpop.f32.mrb[0].mxu0
        %2041 = vmatprep.mubr.f32.mxu0 0.0
        %2042 = vmatmul.mubr.f32.gmra.mrb[0].mxu0 %v1946
        %v2043 = vpop.f32.mrb[0].mxu0
        %v2044 = vadd.f32 0.0, %v2043
        %v2045 = vpop.f32.mrb[0].mxu0
        %2046 = vmatprep.mubr.f32.mxu0 0.0
        %2047 = vmatmul.mubr.f32.gmra.mrb[0].mxu0 %v1949
        %v2048 = vpop.f32.mrb[0].mxu0
        %v2049 = vadd.f32 0.0, %v2048
        %v2050 = vpop.f32.mrb[0].mxu0
        %2051 = vmatprep.mubr.f32.mxu0 0.0
        %2052 = vmatmul.mubr.f32.gmra.mrb[0].mxu0 %v1952
        %v2053 = vpop.f32.mrb[0].mxu0
        %v2054 = vadd.f32 0.0, %v2053
        %v2055 = vpop.f32.mrb[0].mxu0
        %2056 = vmatprep.mubr.f32.mxu0 0.0
        %2057 = vmatmul.mubr.f32.gmra.mrb[0].mxu0 %v1955
        %v2058 = vpop.f32.mrb[0].mxu0
        %v2059 = vadd.f32 0.0, %v2058
        %v2060 = vpop.f32.mrb[0].mxu0
        %2061 = vdwg.mxu0
        %s2062 = scalar_lea.vmem %s5, 16
        %v2063 = vld [vmem:[%s2062] sm:$0xff]
        %v2064 = vld [vmem:[%s2062 + $0x8] sm:$0xf]
        %v2066 = vsel %vm952, %v2024, 0
        %v2069 = vsel %vm952, %v2029, 0
        %v2072 = vsel %vm952, %v2034, 0
        %v2075 = vsel %vm952, %v2039, 0
        %v2078 = vsel %vm952, %v2044, 0
        %v2081 = vsel %vm952, %v2049, 0
        %v2084 = vsel %vm952, %v2054, 0
        %v2087 = vsel %vm952, %v2059, 0
        %vm2089 = vcmask 1043456
        %v2091 = vsel %vm2089, %v2064, 0
        %2093 = vmatprep.subr.mxu0 0.0
        %2094 = vmatpush1.msra.mxu0 %v2063
        %2095 = vmatprep.subr.mxu0 0.0
        %2096 = vmatpush1.msra.mxu0 %v2091
        %2097 = vmatprep.subr.mxu0 0.0
        %2098 = vmatpush1.msra.mxu0 0.0
        %2099 = vmatprep.subr.mxu0 0.0
        %2100 = vmatpush1.msra.mxu0 0.0
        %2101 = vmatprep.subr.mxu0 0.0
        %2102 = vmatpush1.msra.mxu0 0.0
        %2103 = vmatprep.subr.mxu0 0.0
        %2104 = vmatpush1.msra.mxu0 0.0
        %2105 = vmatprep.subr.mxu0 0.0
        %2106 = vmatpush1.msra.mxu0 0.0
        %2107 = vmatprep.subr.mxu0 0.0
        %2108 = vmatpush1.msra.mxu0 0.0
        %2109 = vmatprep.subr.mxu0 0.0
        %2110 = vmatpush1.msra.mxu0 0.0
        %2111 = vmatprep.subr.mxu0 0.0
        %2112 = vmatpush1.msra.mxu0 0.0
        %2113 = vmatprep.subr.mxu0 0.0
        %2114 = vmatpush1.msra.mxu0 0.0
        %2115 = vmatprep.subr.mxu0 0.0
        %2116 = vmatpush1.msra.mxu0 0.0
        %2117 = vmatprep.subr.mxu0 0.0
        %2118 = vmatpush1.msra.mxu0 0.0
        %2119 = vmatprep.subr.mxu0 0.0
        %2120 = vmatpush1.msra.mxu0 0.0
        %2121 = vmatprep.subr.mxu0 0.0
        %2122 = vmatpush1.msra.mxu0 0.0
        %2123 = vmatprep.subr.mxu0 0.0
        %2124 = vmatpush1.msra.mxu0 0.0
        %2125 = vmatprep.subr.mxu0 0.0
        %2126 = vmatpush1.msra.mxu0 0.0
        %2127 = vmatprep.subr.mxu0 0.0
        %2128 = vmatpush1.msra.mxu0 0.0
        %2129 = vmatprep.subr.mxu0 0.0
        %2130 = vmatpush1.msra.mxu0 0.0
        %2131 = vmatprep.subr.mxu0 0.0
        %2132 = vmatpush1.msra.mxu0 0.0
        %2133 = vmatprep.subr.mxu0 0.0
        %2134 = vmatpush1.msra.mxu0 0.0
        %2135 = vmatprep.subr.mxu0 0.0
        %2136 = vmatpush1.msra.mxu0 0.0
        %2137 = vmatprep.subr.mxu0 0.0
        %2138 = vmatpush1.msra.mxu0 0.0
        %2139 = vmatprep.subr.mxu0 0.0
        %2140 = vmatpush1.msra.mxu0 0.0
        %2141 = vmatprep.subr.mxu0 0.0
        %2142 = vmatpush1.msra.mxu0 0.0
        %2143 = vmatprep.subr.mxu0 0.0
        %2144 = vmatpush1.msra.mxu0 0.0
        %2145 = vmatprep.subr.mxu0 0.0
        %2146 = vmatpush1.msra.mxu0 0.0
        %2147 = vmatprep.subr.mxu0 0.0
        %2148 = vmatpush1.msra.mxu0 0.0
        %2149 = vmatprep.subr.mxu0 0.0
        %2150 = vmatpush1.msra.mxu0 0.0
        %2151 = vmatprep.subr.mxu0 0.0
        %2152 = vmatpush1.msra.mxu0 0.0
        %2153 = vmatprep.subr.mxu0 0.0
        %2154 = vmatpush1.msra.mxu0 0.0
        %2155 = vmatprep.subr.mxu0 0.0
        %2156 = vmatpush1.msra.mxu0 0.0
        %2157 = vmatprep.mubr.f32.mxu0 0.0
        %2158 = vmatmul.mubr.f32.gmra.mrb[0].mxu0 %v2066
        %v2159 = vpop.f32.mrb[0].mxu0
        %v2160 = vadd.f32 0.0, %v2159
        %v2161 = vpop.f32.mrb[0].mxu0
        %2162 = vmatprep.mubr.f32.mxu0 0.0
        %2163 = vmatmul.mubr.f32.gmra.mrb[0].mxu0 %v2069
        %v2164 = vpop.f32.mrb[0].mxu0
        %v2165 = vadd.f32 0.0, %v2164
        %v2166 = vpop.f32.mrb[0].mxu0
        %2167 = vmatprep.mubr.f32.mxu0 0.0
        %2168 = vmatmul.mubr.f32.gmra.mrb[0].mxu0 %v2072
        %v2169 = vpop.f32.mrb[0].mxu0
        %v2170 = vadd.f32 0.0, %v2169
        %v2171 = vpop.f32.mrb[0].mxu0
        %2172 = vmatprep.mubr.f32.mxu0 0.0
        %2173 = vmatmul.mubr.f32.gmra.mrb[0].mxu0 %v2075
        %v2174 = vpop.f32.mrb[0].mxu0
        %v2175 = vadd.f32 0.0, %v2174
        %v2176 = vpop.f32.mrb[0].mxu0
        %2177 = vmatprep.mubr.f32.mxu0 0.0
        %2178 = vmatmul.mubr.f32.gmra.mrb[0].mxu0 %v2078
        %v2179 = vpop.f32.mrb[0].mxu0
        %v2180 = vadd.f32 0.0, %v2179
        %v2181 = vpop.f32.mrb[0].mxu0
        %2182 = vmatprep.mubr.f32.mxu0 0.0
        %2183 = vmatmul.mubr.f32.gmra.mrb[0].mxu0 %v2081
        %v2184 = vpop.f32.mrb[0].mxu0
        %v2185 = vadd.f32 0.0, %v2184
        %v2186 = vpop.f32.mrb[0].mxu0
        %2187 = vmatprep.mubr.f32.mxu0 0.0
        %2188 = vmatmul.mubr.f32.gmra.mrb[0].mxu0 %v2084
        %v2189 = vpop.f32.mrb[0].mxu0
        %v2190 = vadd.f32 0.0, %v2189
        %v2191 = vpop.f32.mrb[0].mxu0
        %2192 = vmatprep.mubr.f32.mxu0 0.0
        %2193 = vmatmul.mubr.f32.gmra.mrb[0].mxu0 %v2087
        %v2194 = vpop.f32.mrb[0].mxu0
        %v2195 = vadd.f32 0.0, %v2194
        %v2196 = vpop.f32.mrb[0].mxu0
        %2197 = vdwg.mxu0
        %v2199 = vsel %vm952, %v1286, 0
        %v2202 = vsel %vm952, %v1291, 0
        %v2205 = vsel %vm952, %v1296, 0
        %v2208 = vsel %vm952, %v1301, 0
        %v2211 = vsel %vm952, %v1306, 0
        %v2214 = vsel %vm952, %v1311, 0
        %v2217 = vsel %vm952, %v1316, 0
        %v2220 = vsel %vm952, %v1321, 0
        %v2223 = vsel %vm2089, %v1325, 0
        %2225 = vmatprep.subr.mxu0 0.0
        %2226 = vmatpush1.msra.mxu0 %v1324
        %2227 = vmatprep.subr.mxu0 0.0
        %2228 = vmatpush1.msra.mxu0 %v2223
        %2229 = vmatprep.subr.mxu0 0.0
        %2230 = vmatpush1.msra.mxu0 0.0
        %2231 = vmatprep.subr.mxu0 0.0
        %2232 = vmatpush1.msra.mxu0 0.0
        %2233 = vmatprep.subr.mxu0 0.0
        %2234 = vmatpush1.msra.mxu0 0.0
        %2235 = vmatprep.subr.mxu0 0.0
        %2236 = vmatpush1.msra.mxu0 0.0
        %2237 = vmatprep.subr.mxu0 0.0
        %2238 = vmatpush1.msra.mxu0 0.0
        %2239 = vmatprep.subr.mxu0 0.0
        %2240 = vmatpush1.msra.mxu0 0.0
        %2241 = vmatprep.subr.mxu0 0.0
        %2242 = vmatpush1.msra.mxu0 0.0
        %2243 = vmatprep.subr.mxu0 0.0
        %2244 = vmatpush1.msra.mxu0 0.0
        %2245 = vmatprep.subr.mxu0 0.0
        %2246 = vmatpush1.msra.mxu0 0.0
        %2247 = vmatprep.subr.mxu0 0.0
        %2248 = vmatpush1.msra.mxu0 0.0
        %2249 = vmatprep.subr.mxu0 0.0
        %2250 = vmatpush1.msra.mxu0 0.0
        %2251 = vmatprep.subr.mxu0 0.0
        %2252 = vmatpush1.msra.mxu0 0.0
        %2253 = vmatprep.subr.mxu0 0.0
        %2254 = vmatpush1.msra.mxu0 0.0
        %2255 = vmatprep.subr.mxu0 0.0
        %2256 = vmatpush1.msra.mxu0 0.0
        %2257 = vmatprep.subr.mxu0 0.0
        %2258 = vmatpush1.msra.mxu0 0.0
        %2259 = vmatprep.subr.mxu0 0.0
        %2260 = vmatpush1.msra.mxu0 0.0
        %2261 = vmatprep.subr.mxu0 0.0
        %2262 = vmatpush1.msra.mxu0 0.0
        %2263 = vmatprep.subr.mxu0 0.0
        %2264 = vmatpush1.msra.mxu0 0.0
        %2265 = vmatprep.subr.mxu0 0.0
        %2266 = vmatpush1.msra.mxu0 0.0
        %2267 = vmatprep.subr.mxu0 0.0
        %2268 = vmatpush1.msra.mxu0 0.0
        %2269 = vmatprep.subr.mxu0 0.0
        %2270 = vmatpush1.msra.mxu0 0.0
        %2271 = vmatprep.subr.mxu0 0.0
        %2272 = vmatpush1.msra.mxu0 0.0
        %2273 = vmatprep.subr.mxu0 0.0
        %2274 = vmatpush1.msra.mxu0 0.0
        %2275 = vmatprep.subr.mxu0 0.0
        %2276 = vmatpush1.msra.mxu0 0.0
        %2277 = vmatprep.subr.mxu0 0.0
        %2278 = vmatpush1.msra.mxu0 0.0
        %2279 = vmatprep.subr.mxu0 0.0
        %2280 = vmatpush1.msra.mxu0 0.0
        %2281 = vmatprep.subr.mxu0 0.0
        %2282 = vmatpush1.msra.mxu0 0.0
        %2283 = vmatprep.subr.mxu0 0.0
        %2284 = vmatpush1.msra.mxu0 0.0
        %2285 = vmatprep.subr.mxu0 0.0
        %2286 = vmatpush1.msra.mxu0 0.0
        %2287 = vmatprep.subr.mxu0 0.0
        %2288 = vmatpush1.msra.mxu0 0.0
        %2289 = vmatprep.mubr.f32.mxu0 0.0
        %2290 = vmatmul.mubr.f32.gmra.mrb[0].mxu0 %v2199
        %v2291 = vpop.f32.mrb[0].mxu0
        %v2292 = vadd.f32 %v2160, %v2291
        %v2293 = vpop.f32.mrb[0].mxu0
        %2294 = vmatprep.mubr.f32.mxu0 0.0
        %2295 = vmatmul.mubr.f32.gmra.mrb[0].mxu0 %v2202
        %v2296 = vpop.f32.mrb[0].mxu0
        %v2297 = vadd.f32 %v2165, %v2296
        %v2298 = vpop.f32.mrb[0].mxu0
        %2299 = vmatprep.mubr.f32.mxu0 0.0
        %2300 = vmatmul.mubr.f32.gmra.mrb[0].mxu0 %v2205
        %v2301 = vpop.f32.mrb[0].mxu0
        %v2302 = vadd.f32 %v2170, %v2301
        %v2303 = vpop.f32.mrb[0].mxu0
        %2304 = vmatprep.mubr.f32.mxu0 0.0
        %2305 = vmatmul.mubr.f32.gmra.mrb[0].mxu0 %v2208
        %v2306 = vpop.f32.mrb[0].mxu0
        %v2307 = vadd.f32 %v2175, %v2306
        %v2308 = vpop.f32.mrb[0].mxu0
        %2309 = vmatprep.mubr.f32.mxu0 0.0
        %2310 = vmatmul.mubr.f32.gmra.mrb[0].mxu0 %v2211
        %v2311 = vpop.f32.mrb[0].mxu0
        %v2312 = vadd.f32 %v2180, %v2311
        %v2313 = vpop.f32.mrb[0].mxu0
        %2314 = vmatprep.mubr.f32.mxu0 0.0
        %2315 = vmatmul.mubr.f32.gmra.mrb[0].mxu0 %v2214
        %v2316 = vpop.f32.mrb[0].mxu0
        %v2317 = vadd.f32 %v2185, %v2316
        %v2318 = vpop.f32.mrb[0].mxu0
        %2319 = vmatprep.mubr.f32.mxu0 0.0
        %2320 = vmatmul.mubr.f32.gmra.mrb[0].mxu0 %v2217
        %v2321 = vpop.f32.mrb[0].mxu0
        %v2322 = vadd.f32 %v2190, %v2321
        %v2323 = vpop.f32.mrb[0].mxu0
        %2324 = vmatprep.mubr.f32.mxu0 0.0
        %2325 = vmatmul.mubr.f32.gmra.mrb[0].mxu0 %v2220
        %v2326 = vpop.f32.mrb[0].mxu0
        %v2327 = vadd.f32 %v2195, %v2326
        %v2328 = vpop.f32.mrb[0].mxu0
        %2329 = vdwg.mxu0
        %s2330 = scalar_lea.vmem %s3, 256
        %v2331 = vld [vmem:[%s2330] sm:$0xff]
        %v2332 = vld [vmem:[%s2330 + $0x8] sm:$0xff]
        %v2333 = vld [vmem:[%s2330 + $0x10] sm:$0xff]
        %v2334 = vld [vmem:[%s2330 + $0x18] sm:$0xff]
        %v2335 = vld [vmem:[%s2330 + $0x20] sm:$0xff]
        %v2336 = vld [vmem:[%s2330 + $0x28] sm:$0xff]
        %v2337 = vld [vmem:[%s2330 + $0x30] sm:$0xff]
        %v2338 = vld [vmem:[%s2330 + $0x38] sm:$0xff]
        %v2339 = vld [vmem:[%s2330 + $0x40] sm:$0xff]
        %v2340 = vld [vmem:[%s2330 + $0x48] sm:$0xff]
        %v2341 = vld [vmem:[%s2330 + $0x50] sm:$0xff]
        %v2342 = vld [vmem:[%s2330 + $0x58] sm:$0xff]
        %v2343 = vld [vmem:[%s2330 + $0x60] sm:$0xff]
        %v2344 = vld [vmem:[%s2330 + $0x68] sm:$0xff]
        %v2345 = vld [vmem:[%s2330 + $0x70] sm:$0xff]
        %v2346 = vld [vmem:[%s2330 + $0x78] sm:$0xff]
        %2347 = vmatprep.subr.mxu0 0.0
        %2348 = vmatpush1.msra.mxu0 %v2331
        %2349 = vmatprep.subr.mxu0 0.0
        %2350 = vmatpush1.msra.mxu0 %v2332
        %2351 = vmatprep.subr.mxu0 0.0
        %2352 = vmatpush1.msra.mxu0 %v2333
        %2353 = vmatprep.subr.mxu0 0.0
        %2354 = vmatpush1.msra.mxu0 %v2334
        %2355 = vmatprep.subr.mxu0 0.0
        %2356 = vmatpush1.msra.mxu0 %v2335
        %2357 = vmatprep.subr.mxu0 0.0
        %2358 = vmatpush1.msra.mxu0 %v2336
        %2359 = vmatprep.subr.mxu0 0.0
        %2360 = vmatpush1.msra.mxu0 %v2337
        %2361 = vmatprep.subr.mxu0 0.0
        %2362 = vmatpush1.msra.mxu0 %v2338
        %2363 = vmatprep.subr.mxu0 0.0
        %2364 = vmatpush1.msra.mxu0 %v2339
        %2365 = vmatprep.subr.mxu0 0.0
        %2366 = vmatpush1.msra.mxu0 %v2340
        %2367 = vmatprep.subr.mxu0 0.0
        %2368 = vmatpush1.msra.mxu0 %v2341
        %2369 = vmatprep.subr.mxu0 0.0
        %2370 = vmatpush1.msra.mxu0 %v2342
        %2371 = vmatprep.subr.mxu0 0.0
        %2372 = vmatpush1.msra.mxu0 %v2343
        %2373 = vmatprep.subr.mxu0 0.0
        %2374 = vmatpush1.msra.mxu0 %v2344
        %2375 = vmatprep.subr.mxu0 0.0
        %2376 = vmatpush1.msra.mxu0 %v2345
        %2377 = vmatprep.subr.mxu0 0.0
        %2378 = vmatpush1.msra.mxu0 %v2346
        %2379 = vmatprep.subr.mxu0 0.0
        %2380 = vmatpush1.msra.mxu0 0.0
        %2381 = vmatprep.subr.mxu0 0.0
        %2382 = vmatpush1.msra.mxu0 0.0
        %2383 = vmatprep.subr.mxu0 0.0
        %2384 = vmatpush1.msra.mxu0 0.0
        %2385 = vmatprep.subr.mxu0 0.0
        %2386 = vmatpush1.msra.mxu0 0.0
        %2387 = vmatprep.subr.mxu0 0.0
        %2388 = vmatpush1.msra.mxu0 0.0
        %2389 = vmatprep.subr.mxu0 0.0
        %2390 = vmatpush1.msra.mxu0 0.0
        %2391 = vmatprep.subr.mxu0 0.0
        %2392 = vmatpush1.msra.mxu0 0.0
        %2393 = vmatprep.subr.mxu0 0.0
        %2394 = vmatpush1.msra.mxu0 0.0
        %2395 = vmatprep.subr.mxu0 0.0
        %2396 = vmatpush1.msra.mxu0 0.0
        %2397 = vmatprep.subr.mxu0 0.0
        %2398 = vmatpush1.msra.mxu0 0.0
        %2399 = vmatprep.subr.mxu0 0.0
        %2400 = vmatpush1.msra.mxu0 0.0
        %2401 = vmatprep.subr.mxu0 0.0
        %2402 = vmatpush1.msra.mxu0 0.0
        %2403 = vmatprep.subr.mxu0 0.0
        %2404 = vmatpush1.msra.mxu0 0.0
        %2405 = vmatprep.subr.mxu0 0.0
        %2406 = vmatpush1.msra.mxu0 0.0
        %2407 = vmatprep.subr.mxu0 0.0
        %2408 = vmatpush1.msra.mxu0 0.0
        %2409 = vmatprep.subr.mxu0 0.0
        %2410 = vmatpush1.msra.mxu0 0.0
        %2411 = vmatprep.mubr.f32.mxu0 0.0
        %2412 = vmatmul.mubr.f32.gmra.mrb[0].mxu0 %v573
        %v2413 = vpop.f32.mrb[0].mxu0
        %v2414 = vadd.f32 0.0, %v2413
        %v2415 = vpop.f32.mrb[0].mxu0
        %2416 = vmatprep.mubr.f32.mxu0 0.0
        %2417 = vmatmul.mubr.f32.gmra.mrb[0].mxu0 %v574
        %v2418 = vpop.f32.mrb[0].mxu0
        %v2419 = vadd.f32 0.0, %v2418
        %v2420 = vpop.f32.mrb[0].mxu0
        %2421 = vmatprep.mubr.f32.mxu0 0.0
        %2422 = vmatmul.mubr.f32.gmra.mrb[0].mxu0 %v575
        %v2423 = vpop.f32.mrb[0].mxu0
        %v2424 = vadd.f32 0.0, %v2423
        %v2425 = vpop.f32.mrb[0].mxu0
        %2426 = vmatprep.mubr.f32.mxu0 0.0
        %2427 = vmatmul.mubr.f32.gmra.mrb[0].mxu0 %v576
        %v2428 = vpop.f32.mrb[0].mxu0
        %v2429 = vadd.f32 0.0, %v2428
        %v2430 = vpop.f32.mrb[0].mxu0
        %2431 = vmatprep.mubr.f32.mxu0 0.0
        %2432 = vmatmul.mubr.f32.gmra.mrb[0].mxu0 %v577
        %v2433 = vpop.f32.mrb[0].mxu0
        %v2434 = vadd.f32 0.0, %v2433
        %v2435 = vpop.f32.mrb[0].mxu0
        %2436 = vmatprep.mubr.f32.mxu0 0.0
        %2437 = vmatmul.mubr.f32.gmra.mrb[0].mxu0 %v578
        %v2438 = vpop.f32.mrb[0].mxu0
        %v2439 = vadd.f32 0.0, %v2438
        %v2440 = vpop.f32.mrb[0].mxu0
        %2441 = vmatprep.mubr.f32.mxu0 0.0
        %2442 = vmatmul.mubr.f32.gmra.mrb[0].mxu0 %v579
        %v2443 = vpop.f32.mrb[0].mxu0
        %v2444 = vadd.f32 0.0, %v2443
        %v2445 = vpop.f32.mrb[0].mxu0
        %2446 = vmatprep.mubr.f32.mxu0 0.0
        %2447 = vmatmul.mubr.f32.gmra.mrb[0].mxu0 %v580
        %v2448 = vpop.f32.mrb[0].mxu0
        %v2449 = vadd.f32 0.0, %v2448
        %v2450 = vpop.f32.mrb[0].mxu0
        %2451 = vdwg.mxu0
        %s2452 = scalar_lea.vmem %s2, 256
        %v2453 = vld [vmem:[%s2452] sm:$0xff]
        %v2454 = vld [vmem:[%s2452 + $0x8] sm:$0xff]
        %v2455 = vld [vmem:[%s2452 + $0x10] sm:$0xff]
        %v2456 = vld [vmem:[%s2452 + $0x18] sm:$0xff]
        %v2457 = vld [vmem:[%s2452 + $0x20] sm:$0xff]
        %v2458 = vld [vmem:[%s2452 + $0x28] sm:$0xff]
        %v2459 = vld [vmem:[%s2452 + $0x30] sm:$0xff]
        %v2460 = vld [vmem:[%s2452 + $0x38] sm:$0xff]
        %v2461 = vld [vmem:[%s2452 + $0x40] sm:$0xff]
        %v2462 = vld [vmem:[%s2452 + $0x48] sm:$0xff]
        %v2463 = vld [vmem:[%s2452 + $0x50] sm:$0xff]
        %v2464 = vld [vmem:[%s2452 + $0x58] sm:$0xff]
        %v2465 = vld [vmem:[%s2452 + $0x60] sm:$0xff]
        %v2466 = vld [vmem:[%s2452 + $0x68] sm:$0xff]
        %v2467 = vld [vmem:[%s2452 + $0x70] sm:$0xff]
        %v2468 = vld [vmem:[%s2452 + $0x78] sm:$0xff]
        %2469 = vmatprep.subr.mxu0 0.0
        %2470 = vmatpush1.msra.mxu0 %v2453
        %2471 = vmatprep.subr.mxu0 0.0
        %2472 = vmatpush1.msra.mxu0 %v2454
        %2473 = vmatprep.subr.mxu0 0.0
        %2474 = vmatpush1.msra.mxu0 %v2455
        %2475 = vmatprep.subr.mxu0 0.0
        %2476 = vmatpush1.msra.mxu0 %v2456
        %2477 = vmatprep.subr.mxu0 0.0
        %2478 = vmatpush1.msra.mxu0 %v2457
        %2479 = vmatprep.subr.mxu0 0.0
        %2480 = vmatpush1.msra.mxu0 %v2458
        %2481 = vmatprep.subr.mxu0 0.0
        %2482 = vmatpush1.msra.mxu0 %v2459
        %2483 = vmatprep.subr.mxu0 0.0
        %2484 = vmatpush1.msra.mxu0 %v2460
        %2485 = vmatprep.subr.mxu0 0.0
        %2486 = vmatpush1.msra.mxu0 %v2461
        %2487 = vmatprep.subr.mxu0 0.0
        %2488 = vmatpush1.msra.mxu0 %v2462
        %2489 = vmatprep.subr.mxu0 0.0
        %2490 = vmatpush1.msra.mxu0 %v2463
        %2491 = vmatprep.subr.mxu0 0.0
        %2492 = vmatpush1.msra.mxu0 %v2464
        %2493 = vmatprep.subr.mxu0 0.0
        %2494 = vmatpush1.msra.mxu0 %v2465
        %2495 = vmatprep.subr.mxu0 0.0
        %2496 = vmatpush1.msra.mxu0 %v2466
        %2497 = vmatprep.subr.mxu0 0.0
        %2498 = vmatpush1.msra.mxu0 %v2467
        %2499 = vmatprep.subr.mxu0 0.0
        %2500 = vmatpush1.msra.mxu0 %v2468
        %2501 = vmatprep.subr.mxu0 0.0
        %2502 = vmatpush1.msra.mxu0 0.0
        %2503 = vmatprep.subr.mxu0 0.0
        %2504 = vmatpush1.msra.mxu0 0.0
        %2505 = vmatprep.subr.mxu0 0.0
        %2506 = vmatpush1.msra.mxu0 0.0
        %2507 = vmatprep.subr.mxu0 0.0
        %2508 = vmatpush1.msra.mxu0 0.0
        %2509 = vmatprep.subr.mxu0 0.0
        %2510 = vmatpush1.msra.mxu0 0.0
        %2511 = vmatprep.subr.mxu0 0.0
        %2512 = vmatpush1.msra.mxu0 0.0
        %2513 = vmatprep.subr.mxu0 0.0
        %2514 = vmatpush1.msra.mxu0 0.0
        %2515 = vmatprep.subr.mxu0 0.0
        %2516 = vmatpush1.msra.mxu0 0.0
        %2517 = vmatprep.subr.mxu0 0.0
        %2518 = vmatpush1.msra.mxu0 0.0
        %2519 = vmatprep.subr.mxu0 0.0
        %2520 = vmatpush1.msra.mxu0 0.0
        %2521 = vmatprep.subr.mxu0 0.0
        %2522 = vmatpush1.msra.mxu0 0.0
        %2523 = vmatprep.subr.mxu0 0.0
        %2524 = vmatpush1.msra.mxu0 0.0
        %2525 = vmatprep.subr.mxu0 0.0
        %2526 = vmatpush1.msra.mxu0 0.0
        %2527 = vmatprep.subr.mxu0 0.0
        %2528 = vmatpush1.msra.mxu0 0.0
        %2529 = vmatprep.subr.mxu0 0.0
        %2530 = vmatpush1.msra.mxu0 0.0
        %2531 = vmatprep.subr.mxu0 0.0
        %2532 = vmatpush1.msra.mxu0 0.0
        %2533 = vmatprep.mubr.f32.mxu0 0.0
        %2534 = vmatmul.mubr.f32.gmra.mrb[0].mxu0 %v573
        %v2535 = vpop.f32.mrb[0].mxu0
        %v2536 = vadd.f32 0.0, %v2535
        %v2537 = vpop.f32.mrb[0].mxu0
        %2538 = vmatprep.mubr.f32.mxu0 0.0
        %2539 = vmatmul.mubr.f32.gmra.mrb[0].mxu0 %v574
        %v2540 = vpop.f32.mrb[0].mxu0
        %v2541 = vadd.f32 0.0, %v2540
        %v2542 = vpop.f32.mrb[0].mxu0
        %2543 = vmatprep.mubr.f32.mxu0 0.0
        %2544 = vmatmul.mubr.f32.gmra.mrb[0].mxu0 %v575
        %v2545 = vpop.f32.mrb[0].mxu0
        %v2546 = vadd.f32 0.0, %v2545
        %v2547 = vpop.f32.mrb[0].mxu0
        %2548 = vmatprep.mubr.f32.mxu0 0.0
        %2549 = vmatmul.mubr.f32.gmra.mrb[0].mxu0 %v576
        %v2550 = vpop.f32.mrb[0].mxu0
        %v2551 = vadd.f32 0.0, %v2550
        %v2552 = vpop.f32.mrb[0].mxu0
        %2553 = vmatprep.mubr.f32.mxu0 0.0
        %2554 = vmatmul.mubr.f32.gmra.mrb[0].mxu0 %v577
        %v2555 = vpop.f32.mrb[0].mxu0
        %v2556 = vadd.f32 0.0, %v2555
        %v2557 = vpop.f32.mrb[0].mxu0
        %2558 = vmatprep.mubr.f32.mxu0 0.0
        %2559 = vmatmul.mubr.f32.gmra.mrb[0].mxu0 %v578
        %v2560 = vpop.f32.mrb[0].mxu0
        %v2561 = vadd.f32 0.0, %v2560
        %v2562 = vpop.f32.mrb[0].mxu0
        %2563 = vmatprep.mubr.f32.mxu0 0.0
        %2564 = vmatmul.mubr.f32.gmra.mrb[0].mxu0 %v579
        %v2565 = vpop.f32.mrb[0].mxu0
        %v2566 = vadd.f32 0.0, %v2565
        %v2567 = vpop.f32.mrb[0].mxu0
        %2568 = vmatprep.mubr.f32.mxu0 0.0
        %2569 = vmatmul.mubr.f32.gmra.mrb[0].mxu0 %v580
        %v2570 = vpop.f32.mrb[0].mxu0
        %v2571 = vadd.f32 0.0, %v2570
        %v2572 = vpop.f32.mrb[0].mxu0
        %2573 = vdwg.mxu0
        %s2574 = scalar_lea.vmem %s4, 256
        %v2575 = vld [vmem:[%s2574] sm:$0xff]
        %v2576 = vld [vmem:[%s2574 + $0x8] sm:$0xff]
        %v2577 = vld [vmem:[%s2574 + $0x10] sm:$0xff]
        %v2578 = vld [vmem:[%s2574 + $0x18] sm:$0xff]
        %v2579 = vld [vmem:[%s2574 + $0x20] sm:$0xff]
        %v2580 = vld [vmem:[%s2574 + $0x28] sm:$0xff]
        %v2581 = vld [vmem:[%s2574 + $0x30] sm:$0xff]
        %v2582 = vld [vmem:[%s2574 + $0x38] sm:$0xff]
        %v2583 = vld [vmem:[%s2574 + $0x40] sm:$0xff]
        %v2584 = vld [vmem:[%s2574 + $0x48] sm:$0xff]
        %v2585 = vld [vmem:[%s2574 + $0x50] sm:$0xff]
        %v2586 = vld [vmem:[%s2574 + $0x58] sm:$0xff]
        %v2587 = vld [vmem:[%s2574 + $0x60] sm:$0xff]
        %v2588 = vld [vmem:[%s2574 + $0x68] sm:$0xff]
        %v2589 = vld [vmem:[%s2574 + $0x70] sm:$0xff]
        %v2590 = vld [vmem:[%s2574 + $0x78] sm:$0xff]
        %2591 = vmatprep.subr.mxu0 0.0
        %2592 = vmatpush1.msra.mxu0 %v2575
        %2593 = vmatprep.subr.mxu0 0.0
        %2594 = vmatpush1.msra.mxu0 %v2576
        %2595 = vmatprep.subr.mxu0 0.0
        %2596 = vmatpush1.msra.mxu0 %v2577
        %2597 = vmatprep.subr.mxu0 0.0
        %2598 = vmatpush1.msra.mxu0 %v2578
        %2599 = vmatprep.subr.mxu0 0.0
        %2600 = vmatpush1.msra.mxu0 %v2579
        %2601 = vmatprep.subr.mxu0 0.0
        %2602 = vmatpush1.msra.mxu0 %v2580
        %2603 = vmatprep.subr.mxu0 0.0
        %2604 = vmatpush1.msra.mxu0 %v2581
        %2605 = vmatprep.subr.mxu0 0.0
        %2606 = vmatpush1.msra.mxu0 %v2582
        %2607 = vmatprep.subr.mxu0 0.0
        %2608 = vmatpush1.msra.mxu0 %v2583
        %2609 = vmatprep.subr.mxu0 0.0
        %2610 = vmatpush1.msra.mxu0 %v2584
        %2611 = vmatprep.subr.mxu0 0.0
        %2612 = vmatpush1.msra.mxu0 %v2585
        %2613 = vmatprep.subr.mxu0 0.0
        %2614 = vmatpush1.msra.mxu0 %v2586
        %2615 = vmatprep.subr.mxu0 0.0
        %2616 = vmatpush1.msra.mxu0 %v2587
        %2617 = vmatprep.subr.mxu0 0.0
        %2618 = vmatpush1.msra.mxu0 %v2588
        %2619 = vmatprep.subr.mxu0 0.0
        %2620 = vmatpush1.msra.mxu0 %v2589
        %2621 = vmatprep.subr.mxu0 0.0
        %2622 = vmatpush1.msra.mxu0 %v2590
        %2623 = vmatprep.subr.mxu0 0.0
        %2624 = vmatpush1.msra.mxu0 0.0
        %2625 = vmatprep.subr.mxu0 0.0
        %2626 = vmatpush1.msra.mxu0 0.0
        %2627 = vmatprep.subr.mxu0 0.0
        %2628 = vmatpush1.msra.mxu0 0.0
        %2629 = vmatprep.subr.mxu0 0.0
        %2630 = vmatpush1.msra.mxu0 0.0
        %2631 = vmatprep.subr.mxu0 0.0
        %2632 = vmatpush1.msra.mxu0 0.0
        %2633 = vmatprep.subr.mxu0 0.0
        %2634 = vmatpush1.msra.mxu0 0.0
        %2635 = vmatprep.subr.mxu0 0.0
        %2636 = vmatpush1.msra.mxu0 0.0
        %2637 = vmatprep.subr.mxu0 0.0
        %2638 = vmatpush1.msra.mxu0 0.0
        %2639 = vmatprep.subr.mxu0 0.0
        %2640 = vmatpush1.msra.mxu0 0.0
        %2641 = vmatprep.subr.mxu0 0.0
        %2642 = vmatpush1.msra.mxu0 0.0
        %2643 = vmatprep.subr.mxu0 0.0
        %2644 = vmatpush1.msra.mxu0 0.0
        %2645 = vmatprep.subr.mxu0 0.0
        %2646 = vmatpush1.msra.mxu0 0.0
        %2647 = vmatprep.subr.mxu0 0.0
        %2648 = vmatpush1.msra.mxu0 0.0
        %2649 = vmatprep.subr.mxu0 0.0
        %2650 = vmatpush1.msra.mxu0 0.0
        %2651 = vmatprep.subr.mxu0 0.0
        %2652 = vmatpush1.msra.mxu0 0.0
        %2653 = vmatprep.subr.mxu0 0.0
        %2654 = vmatpush1.msra.mxu0 0.0
        %2655 = vmatprep.mubr.f32.mxu0 0.0
        %2656 = vmatmul.mubr.f32.gmra.mrb[0].mxu0 %v573
        %v2657 = vpop.f32.mrb[0].mxu0
        %v2658 = vadd.f32 0.0, %v2657
        %v2659 = vpop.f32.mrb[0].mxu0
        %2660 = vmatprep.mubr.f32.mxu0 0.0
        %2661 = vmatmul.mubr.f32.gmra.mrb[0].mxu0 %v574
        %v2662 = vpop.f32.mrb[0].mxu0
        %v2663 = vadd.f32 0.0, %v2662
        %v2664 = vpop.f32.mrb[0].mxu0
        %2665 = vmatprep.mubr.f32.mxu0 0.0
        %2666 = vmatmul.mubr.f32.gmra.mrb[0].mxu0 %v575
        %v2667 = vpop.f32.mrb[0].mxu0
        %v2668 = vadd.f32 0.0, %v2667
        %v2669 = vpop.f32.mrb[0].mxu0
        %2670 = vmatprep.mubr.f32.mxu0 0.0
        %2671 = vmatmul.mubr.f32.gmra.mrb[0].mxu0 %v576
        %v2672 = vpop.f32.mrb[0].mxu0
        %v2673 = vadd.f32 0.0, %v2672
        %v2674 = vpop.f32.mrb[0].mxu0
        %2675 = vmatprep.mubr.f32.mxu0 0.0
        %2676 = vmatmul.mubr.f32.gmra.mrb[0].mxu0 %v577
        %v2677 = vpop.f32.mrb[0].mxu0
        %v2678 = vadd.f32 0.0, %v2677
        %v2679 = vpop.f32.mrb[0].mxu0
        %2680 = vmatprep.mubr.f32.mxu0 0.0
        %2681 = vmatmul.mubr.f32.gmra.mrb[0].mxu0 %v578
        %v2682 = vpop.f32.mrb[0].mxu0
        %v2683 = vadd.f32 0.0, %v2682
        %v2684 = vpop.f32.mrb[0].mxu0
        %2685 = vmatprep.mubr.f32.mxu0 0.0
        %2686 = vmatmul.mubr.f32.gmra.mrb[0].mxu0 %v579
        %v2687 = vpop.f32.mrb[0].mxu0
        %v2688 = vadd.f32 0.0, %v2687
        %v2689 = vpop.f32.mrb[0].mxu0
        %2690 = vmatprep.mubr.f32.mxu0 0.0
        %2691 = vmatmul.mubr.f32.gmra.mrb[0].mxu0 %v580
        %v2692 = vpop.f32.mrb[0].mxu0
        %v2693 = vadd.f32 0.0, %v2692
        %v2694 = vpop.f32.mrb[0].mxu0
        %2695 = vdwg.mxu0
        %v2697 = vsel %vm952, %v2414, 0
        %v2700 = vsel %vm952, %v2419, 0
        %v2703 = vsel %vm952, %v2424, 0
        %v2706 = vsel %vm952, %v2429, 0
        %v2709 = vsel %vm952, %v2434, 0
        %v2712 = vsel %vm952, %v2439, 0
        %v2715 = vsel %vm952, %v2444, 0
        %v2718 = vsel %vm952, %v2449, 0
        %v2721 = vsel %vm952, %v2536, 0
        %v2724 = vsel %vm952, %v2541, 0
        %v2727 = vsel %vm952, %v2546, 0
        %v2730 = vsel %vm952, %v2551, 0
        %v2733 = vsel %vm952, %v2556, 0
        %v2736 = vsel %vm952, %v2561, 0
        %v2739 = vsel %vm952, %v2566, 0
        %v2742 = vsel %vm952, %v2571, 0
        %2744 = vmatprep.subr.mxu0 0.0
        %2745 = vmatpush1.xpose.msra.mxu0 %v2721
        %2746 = vmatprep.subr.mxu0 0.0
        %2747 = vmatpush1.xpose.msra.mxu0 %v2724
        %2748 = vmatprep.subr.mxu0 0.0
        %2749 = vmatpush1.xpose.msra.mxu0 %v2727
        %2750 = vmatprep.subr.mxu0 0.0
        %2751 = vmatpush1.xpose.msra.mxu0 %v2730
        %2752 = vmatprep.subr.mxu0 0.0
        %2753 = vmatpush1.xpose.msra.mxu0 %v2733
        %2754 = vmatprep.subr.mxu0 0.0
        %2755 = vmatpush1.xpose.msra.mxu0 %v2736
        %2756 = vmatprep.subr.mxu0 0.0
        %2757 = vmatpush1.xpose.msra.mxu0 %v2739
        %2758 = vmatprep.subr.mxu0 0.0
        %2759 = vmatpush1.xpose.msra.mxu0 %v2742
        %2760 = vmatprep.subr.mxu0 0.0
        %2761 = vmatpush1.xpose.msra.mxu0 0.0
        %2762 = vmatprep.subr.mxu0 0.0
        %2763 = vmatpush1.xpose.msra.mxu0 0.0
        %2764 = vmatprep.subr.mxu0 0.0
        %2765 = vmatpush1.xpose.msra.mxu0 0.0
        %2766 = vmatprep.subr.mxu0 0.0
        %2767 = vmatpush1.xpose.msra.mxu0 0.0
        %2768 = vmatprep.subr.mxu0 0.0
        %2769 = vmatpush1.xpose.msra.mxu0 0.0
        %2770 = vmatprep.subr.mxu0 0.0
        %2771 = vmatpush1.xpose.msra.mxu0 0.0
        %2772 = vmatprep.subr.mxu0 0.0
        %2773 = vmatpush1.xpose.msra.mxu0 0.0
        %2774 = vmatprep.subr.mxu0 0.0
        %2775 = vmatpush1.xpose.msra.mxu0 0.0
        %2776 = vmatprep.subr.mxu0 0.0
        %2777 = vmatpush1.xpose.msra.mxu0 0.0
        %2778 = vmatprep.subr.mxu0 0.0
        %2779 = vmatpush1.xpose.msra.mxu0 0.0
        %2780 = vmatprep.subr.mxu0 0.0
        %2781 = vmatpush1.xpose.msra.mxu0 0.0
        %2782 = vmatprep.subr.mxu0 0.0
        %2783 = vmatpush1.xpose.msra.mxu0 0.0
        %2784 = vmatprep.subr.mxu0 0.0
        %2785 = vmatpush1.xpose.msra.mxu0 0.0
        %2786 = vmatprep.subr.mxu0 0.0
        %2787 = vmatpush1.xpose.msra.mxu0 0.0
        %2788 = vmatprep.subr.mxu0 0.0
        %2789 = vmatpush1.xpose.msra.mxu0 0.0
        %2790 = vmatprep.subr.mxu0 0.0
        %2791 = vmatpush1.xpose.msra.mxu0 0.0
        %2792 = vmatprep.subr.mxu0 0.0
        %2793 = vmatpush1.xpose.msra.mxu0 0.0
        %2794 = vmatprep.subr.mxu0 0.0
        %2795 = vmatpush1.xpose.msra.mxu0 0.0
        %2796 = vmatprep.subr.mxu0 0.0
        %2797 = vmatpush1.xpose.msra.mxu0 0.0
        %2798 = vmatprep.subr.mxu0 0.0
        %2799 = vmatpush1.xpose.msra.mxu0 0.0
        %2800 = vmatprep.subr.mxu0 0.0
        %2801 = vmatpush1.xpose.msra.mxu0 0.0
        %2802 = vmatprep.subr.mxu0 0.0
        %2803 = vmatpush1.xpose.msra.mxu0 0.0
        %2804 = vmatprep.subr.mxu0 0.0
        %2805 = vmatpush1.xpose.msra.mxu0 0.0
        %2806 = vmatprep.subr.mxu0 0.0
        %2807 = vmatpush1.xpose.msra.mxu0 0.0
        %2808 = vmatprep.mubr.f32.mxu0 0.0
        %2809 = vmatmul.mubr.f32.gmra.mrb[0].mxu0 %v2697
        %v2810 = vpop.f32.mrb[0].mxu0
        %v2811 = vadd.f32 %v581, %v2810
        %v2812 = vpop.f32.mrb[0].mxu0
        %2813 = vmatprep.mubr.f32.mxu0 0.0
        %2814 = vmatmul.mubr.f32.gmra.mrb[0].mxu0 %v2700
        %v2815 = vpop.f32.mrb[0].mxu0
        %v2816 = vadd.f32 %v582, %v2815
        %v2817 = vpop.f32.mrb[0].mxu0
        %2818 = vmatprep.mubr.f32.mxu0 0.0
        %2819 = vmatmul.mubr.f32.gmra.mrb[0].mxu0 %v2703
        %v2820 = vpop.f32.mrb[0].mxu0
        %v2821 = vadd.f32 %v583, %v2820
        %v2822 = vpop.f32.mrb[0].mxu0
        %2823 = vmatprep.mubr.f32.mxu0 0.0
        %2824 = vmatmul.mubr.f32.gmra.mrb[0].mxu0 %v2706
        %v2825 = vpop.f32.mrb[0].mxu0
        %v2826 = vadd.f32 %v584, %v2825
        %v2827 = vpop.f32.mrb[0].mxu0
        %2828 = vmatprep.mubr.f32.mxu0 0.0
        %2829 = vmatmul.mubr.f32.gmra.mrb[0].mxu0 %v2709
        %v2830 = vpop.f32.mrb[0].mxu0
        %v2831 = vadd.f32 %v585, %v2830
        %v2832 = vpop.f32.mrb[0].mxu0
        %2833 = vmatprep.mubr.f32.mxu0 0.0
        %2834 = vmatmul.mubr.f32.gmra.mrb[0].mxu0 %v2712
        %v2835 = vpop.f32.mrb[0].mxu0
        %v2836 = vadd.f32 %v586, %v2835
        %v2837 = vpop.f32.mrb[0].mxu0
        %2838 = vmatprep.mubr.f32.mxu0 0.0
        %2839 = vmatmul.mubr.f32.gmra.mrb[0].mxu0 %v2715
        %v2840 = vpop.f32.mrb[0].mxu0
        %v2841 = vadd.f32 %v587, %v2840
        %v2842 = vpop.f32.mrb[0].mxu0
        %2843 = vmatprep.mubr.f32.mxu0 0.0
        %2844 = vmatmul.mubr.f32.gmra.mrb[0].mxu0 %v2718
        %v2845 = vpop.f32.mrb[0].mxu0
        %v2846 = vadd.f32 %v588, %v2845
        %v2847 = vpop.f32.mrb[0].mxu0
        %2848 = vdwg.mxu0
        %v2849 = vsel %vm1106, %v2811, -inf
        %2850 = vmax.xlane.f32.xlu0 %v2849
        %v2851 = vpop.xlane.xlu0 %2850
        %v2852 = vsel %vm1106, %v2816, -inf
        %2853 = vmax.xlane.f32.xlu0 %v2852
        %v2854 = vpop.xlane.xlu0 %2853
        %v2855 = vsel %vm1106, %v2821, -inf
        %2856 = vmax.xlane.f32.xlu0 %v2855
        %v2857 = vpop.xlane.xlu0 %2856
        %v2858 = vsel %vm1106, %v2826, -inf
        %2859 = vmax.xlane.f32.xlu0 %v2858
        %v2860 = vpop.xlane.xlu0 %2859
        %v2861 = vsel %vm1106, %v2831, -inf
        %2862 = vmax.xlane.f32.xlu0 %v2861
        %v2863 = vpop.xlane.xlu0 %2862
        %v2864 = vsel %vm1106, %v2836, -inf
        %2865 = vmax.xlane.f32.xlu0 %v2864
        %v2866 = vpop.xlane.xlu0 %2865
        %v2867 = vsel %vm1106, %v2841, -inf
        %2868 = vmax.xlane.f32.xlu0 %v2867
        %v2869 = vpop.xlane.xlu0 %2868
        %v2870 = vsel %vm1106, %v2846, -inf
        %2871 = vmax.xlane.f32.xlu0 %v2870
        %v2872 = vpop.xlane.xlu0 %2871
        %v2873 = vsub.f32 %v2811, %v2851
        %v2874 = vsub.f32 %v2816, %v2854
        %v2875 = vsub.f32 %v2821, %v2857
        %v2876 = vsub.f32 %v2826, %v2860
        %v2877 = vsub.f32 %v2831, %v2863
        %v2878 = vsub.f32 %v2836, %v2866
        %v2879 = vsub.f32 %v2841, %v2869
        %v2880 = vsub.f32 %v2846, %v2872
        %v2881 = vmul.f32 %v2873, 1.442695
        %v2882 = vpow.pop %v2881
        %v2883 = vmul.f32 %v2874, 1.442695
        %v2884 = vpow.pop %v2883
        %v2885 = vmul.f32 %v2875, 1.442695
        %v2886 = vpow.pop %v2885
        %v2887 = vmul.f32 %v2876, 1.442695
        %v2888 = vpow.pop %v2887
        %v2889 = vmul.f32 %v2877, 1.442695
        %v2890 = vpow.pop %v2889
        %v2891 = vmul.f32 %v2878, 1.442695
        %v2892 = vpow.pop %v2891
        %v2893 = vmul.f32 %v2879, 1.442695
        %v2894 = vpow.pop %v2893
        %v2895 = vmul.f32 %v2880, 1.442695
        %v2896 = vpow.pop %v2895
        %v2897 = vsel %vm1106, %v2882, 0.0
        %2898 = vadd.xlane.f32.xlu0 %v2897
        %v2899 = vpop.xlane.xlu0 %2898
        %v2900 = vsel %vm1106, %v2884, 0.0
        %2901 = vadd.xlane.f32.xlu0 %v2900
        %v2902 = vpop.xlane.xlu0 %2901
        %v2903 = vsel %vm1106, %v2886, 0.0
        %2904 = vadd.xlane.f32.xlu0 %v2903
        %v2905 = vpop.xlane.xlu0 %2904
        %v2906 = vsel %vm1106, %v2888, 0.0
        %2907 = vadd.xlane.f32.xlu0 %v2906
        %v2908 = vpop.xlane.xlu0 %2907
        %v2909 = vsel %vm1106, %v2890, 0.0
        %2910 = vadd.xlane.f32.xlu0 %v2909
        %v2911 = vpop.xlane.xlu0 %2910
        %v2912 = vsel %vm1106, %v2892, 0.0
        %2913 = vadd.xlane.f32.xlu0 %v2912
        %v2914 = vpop.xlane.xlu0 %2913
        %v2915 = vsel %vm1106, %v2894, 0.0
        %2916 = vadd.xlane.f32.xlu0 %v2915
        %v2917 = vpop.xlane.xlu0 %2916
        %v2918 = vsel %vm1106, %v2896, 0.0
        %2919 = vadd.xlane.f32.xlu0 %v2918
        %v2920 = vpop.xlane.xlu0 %2919
        %v2921 = vrcp.pop %v2899
        %v2922 = vrcp.pop %v2902
        %v2923 = vrcp.pop %v2905
        %v2924 = vrcp.pop %v2908
        %v2925 = vrcp.pop %v2911
        %v2926 = vrcp.pop %v2914
        %v2927 = vrcp.pop %v2917
        %v2928 = vrcp.pop %v2920
        %v2929 = vmul.f32 %v2882, %v2921
        %v2930 = vmul.f32 %v2884, %v2922
        %v2931 = vmul.f32 %v2886, %v2923
        %v2932 = vmul.f32 %v2888, %v2924
        %v2933 = vmul.f32 %v2890, %v2925
        %v2934 = vmul.f32 %v2892, %v2926
        %v2935 = vmul.f32 %v2894, %v2927
        %v2936 = vmul.f32 %v2896, %v2928
        %v2938 = vsel %vm1106, %v2929, 0
        %v2941 = vsel %vm1106, %v2930, 0
        %v2944 = vsel %vm1106, %v2931, 0
        %v2947 = vsel %vm1106, %v2932, 0
        %v2950 = vsel %vm1106, %v2933, 0
        %v2953 = vsel %vm1106, %v2934, 0
        %v2956 = vsel %vm1106, %v2935, 0
        %v2959 = vsel %vm1106, %v2936, 0
        %2961 = vmatprep.subr.mxu0 0.0
        %2962 = vmatpush1.msra.mxu0 %v2658
        %2963 = vmatprep.subr.mxu0 0.0
        %2964 = vmatpush1.msra.mxu0 %v2663
        %2965 = vmatprep.subr.mxu0 0.0
        %2966 = vmatpush1.msra.mxu0 %v2668
        %2967 = vmatprep.subr.mxu0 0.0
        %2968 = vmatpush1.msra.mxu0 %v2673
        %2969 = vmatprep.subr.mxu0 0.0
        %2970 = vmatpush1.msra.mxu0 %v2678
        %2971 = vmatprep.subr.mxu0 0.0
        %2972 = vmatpush1.msra.mxu0 %v2683
        %2973 = vmatprep.subr.mxu0 0.0
        %2974 = vmatpush1.msra.mxu0 %v2688
        %2975 = vmatprep.subr.mxu0 0.0
        %2976 = vmatpush1.msra.mxu0 %v2693
        %2977 = vmatprep.subr.mxu0 0.0
        %2978 = vmatpush1.msra.mxu0 0.0
        %2979 = vmatprep.subr.mxu0 0.0
        %2980 = vmatpush1.msra.mxu0 0.0
        %2981 = vmatprep.subr.mxu0 0.0
        %2982 = vmatpush1.msra.mxu0 0.0
        %2983 = vmatprep.subr.mxu0 0.0
        %2984 = vmatpush1.msra.mxu0 0.0
        %2985 = vmatprep.subr.mxu0 0.0
        %2986 = vmatpush1.msra.mxu0 0.0
        %2987 = vmatprep.subr.mxu0 0.0
        %2988 = vmatpush1.msra.mxu0 0.0
        %2989 = vmatprep.subr.mxu0 0.0
        %2990 = vmatpush1.msra.mxu0 0.0
        %2991 = vmatprep.subr.mxu0 0.0
        %2992 = vmatpush1.msra.mxu0 0.0
        %2993 = vmatprep.subr.mxu0 0.0
        %2994 = vmatpush1.msra.mxu0 0.0
        %2995 = vmatprep.subr.mxu0 0.0
        %2996 = vmatpush1.msra.mxu0 0.0
        %2997 = vmatprep.subr.mxu0 0.0
        %2998 = vmatpush1.msra.mxu0 0.0
        %2999 = vmatprep.subr.mxu0 0.0
        %3000 = vmatpush1.msra.mxu0 0.0
        %3001 = vmatprep.subr.mxu0 0.0
        %3002 = vmatpush1.msra.mxu0 0.0
        %3003 = vmatprep.subr.mxu0 0.0
        %3004 = vmatpush1.msra.mxu0 0.0
        %3005 = vmatprep.subr.mxu0 0.0
        %3006 = vmatpush1.msra.mxu0 0.0
        %3007 = vmatprep.subr.mxu0 0.0
        %3008 = vmatpush1.msra.mxu0 0.0
        %3009 = vmatprep.subr.mxu0 0.0
        %3010 = vmatpush1.msra.mxu0 0.0
        %3011 = vmatprep.subr.mxu0 0.0
        %3012 = vmatpush1.msra.mxu0 0.0
        %3013 = vmatprep.subr.mxu0 0.0
        %3014 = vmatpush1.msra.mxu0 0.0
        %3015 = vmatprep.subr.mxu0 0.0
        %3016 = vmatpush1.msra.mxu0 0.0
        %3017 = vmatprep.subr.mxu0 0.0
        %3018 = vmatpush1.msra.mxu0 0.0
        %3019 = vmatprep.subr.mxu0 0.0
        %3020 = vmatpush1.msra.mxu0 0.0
        %3021 = vmatprep.subr.mxu0 0.0
        %3022 = vmatpush1.msra.mxu0 0.0
        %3023 = vmatprep.subr.mxu0 0.0
        %3024 = vmatpush1.msra.mxu0 0.0
        %3025 = vmatprep.mubr.f32.mxu0 0.0
        %3026 = vmatmul.mubr.f32.gmra.mrb[0].mxu0 %v2938
        %v3027 = vpop.f32.mrb[0].mxu0
        %v3028 = vadd.f32 0.0, %v3027
        %v3029 = vpop.f32.mrb[0].mxu0
        %3030 = vmatprep.mubr.f32.mxu0 0.0
        %3031 = vmatmul.mubr.f32.gmra.mrb[0].mxu0 %v2941
        %v3032 = vpop.f32.mrb[0].mxu0
        %v3033 = vadd.f32 0.0, %v3032
        %v3034 = vpop.f32.mrb[0].mxu0
        %3035 = vmatprep.mubr.f32.mxu0 0.0
        %3036 = vmatmul.mubr.f32.gmra.mrb[0].mxu0 %v2944
        %v3037 = vpop.f32.mrb[0].mxu0
        %v3038 = vadd.f32 0.0, %v3037
        %v3039 = vpop.f32.mrb[0].mxu0
        %3040 = vmatprep.mubr.f32.mxu0 0.0
        %3041 = vmatmul.mubr.f32.gmra.mrb[0].mxu0 %v2947
        %v3042 = vpop.f32.mrb[0].mxu0
        %v3043 = vadd.f32 0.0, %v3042
        %v3044 = vpop.f32.mrb[0].mxu0
        %3045 = vmatprep.mubr.f32.mxu0 0.0
        %3046 = vmatmul.mubr.f32.gmra.mrb[0].mxu0 %v2950
        %v3047 = vpop.f32.mrb[0].mxu0
        %v3048 = vadd.f32 0.0, %v3047
        %v3049 = vpop.f32.mrb[0].mxu0
        %3050 = vmatprep.mubr.f32.mxu0 0.0
        %3051 = vmatmul.mubr.f32.gmra.mrb[0].mxu0 %v2953
        %v3052 = vpop.f32.mrb[0].mxu0
        %v3053 = vadd.f32 0.0, %v3052
        %v3054 = vpop.f32.mrb[0].mxu0
        %3055 = vmatprep.mubr.f32.mxu0 0.0
        %3056 = vmatmul.mubr.f32.gmra.mrb[0].mxu0 %v2956
        %v3057 = vpop.f32.mrb[0].mxu0
        %v3058 = vadd.f32 0.0, %v3057
        %v3059 = vpop.f32.mrb[0].mxu0
        %3060 = vmatprep.mubr.f32.mxu0 0.0
        %3061 = vmatmul.mubr.f32.gmra.mrb[0].mxu0 %v2959
        %v3062 = vpop.f32.mrb[0].mxu0
        %v3063 = vadd.f32 0.0, %v3062
        %v3064 = vpop.f32.mrb[0].mxu0
        %3065 = vdwg.mxu0
        %s3066 = scalar_lea.vmem %s5, 32
        %v3067 = vld [vmem:[%s3066] sm:$0xff]
        %v3068 = vld [vmem:[%s3066 + $0x8] sm:$0xf]
        %v3070 = vsel %vm952, %v3028, 0
        %v3073 = vsel %vm952, %v3033, 0
        %v3076 = vsel %vm952, %v3038, 0
        %v3079 = vsel %vm952, %v3043, 0
        %v3082 = vsel %vm952, %v3048, 0
        %v3085 = vsel %vm952, %v3053, 0
        %v3088 = vsel %vm952, %v3058, 0
        %v3091 = vsel %vm952, %v3063, 0
        %v3094 = vsel %vm2089, %v3068, 0
        %3096 = vmatprep.subr.mxu0 0.0
        %3097 = vmatpush1.msra.mxu0 %v3067
        %3098 = vmatprep.subr.mxu0 0.0
        %3099 = vmatpush1.msra.mxu0 %v3094
        %3100 = vmatprep.subr.mxu0 0.0
        %3101 = vmatpush1.msra.mxu0 0.0
        %3102 = vmatprep.subr.mxu0 0.0
        %3103 = vmatpush1.msra.mxu0 0.0
        %3104 = vmatprep.subr.mxu0 0.0
        %3105 = vmatpush1.msra.mxu0 0.0
        %3106 = vmatprep.subr.mxu0 0.0
        %3107 = vmatpush1.msra.mxu0 0.0
        %3108 = vmatprep.subr.mxu0 0.0
        %3109 = vmatpush1.msra.mxu0 0.0
        %3110 = vmatprep.subr.mxu0 0.0
        %3111 = vmatpush1.msra.mxu0 0.0
        %3112 = vmatprep.subr.mxu0 0.0
        %3113 = vmatpush1.msra.mxu0 0.0
        %3114 = vmatprep.subr.mxu0 0.0
        %3115 = vmatpush1.msra.mxu0 0.0
        %3116 = vmatprep.subr.mxu0 0.0
        %3117 = vmatpush1.msra.mxu0 0.0
        %3118 = vmatprep.subr.mxu0 0.0
        %3119 = vmatpush1.msra.mxu0 0.0
        %3120 = vmatprep.subr.mxu0 0.0
        %3121 = vmatpush1.msra.mxu0 0.0
        %3122 = vmatprep.subr.mxu0 0.0
        %3123 = vmatpush1.msra.mxu0 0.0
        %3124 = vmatprep.subr.mxu0 0.0
        %3125 = vmatpush1.msra.mxu0 0.0
        %3126 = vmatprep.subr.mxu0 0.0
        %3127 = vmatpush1.msra.mxu0 0.0
        %3128 = vmatprep.subr.mxu0 0.0
        %3129 = vmatpush1.msra.mxu0 0.0
        %3130 = vmatprep.subr.mxu0 0.0
        %3131 = vmatpush1.msra.mxu0 0.0
        %3132 = vmatprep.subr.mxu0 0.0
        %3133 = vmatpush1.msra.mxu0 0.0
        %3134 = vmatprep.subr.mxu0 0.0
        %3135 = vmatpush1.msra.mxu0 0.0
        %3136 = vmatprep.subr.mxu0 0.0
        %3137 = vmatpush1.msra.mxu0 0.0
        %3138 = vmatprep.subr.mxu0 0.0
        %3139 = vmatpush1.msra.mxu0 0.0
        %3140 = vmatprep.subr.mxu0 0.0
        %3141 = vmatpush1.msra.mxu0 0.0
        %3142 = vmatprep.subr.mxu0 0.0
        %3143 = vmatpush1.msra.mxu0 0.0
        %3144 = vmatprep.subr.mxu0 0.0
        %3145 = vmatpush1.msra.mxu0 0.0
        %3146 = vmatprep.subr.mxu0 0.0
        %3147 = vmatpush1.msra.mxu0 0.0
        %3148 = vmatprep.subr.mxu0 0.0
        %3149 = vmatpush1.msra.mxu0 0.0
        %3150 = vmatprep.subr.mxu0 0.0
        %3151 = vmatpush1.msra.mxu0 0.0
        %3152 = vmatprep.subr.mxu0 0.0
        %3153 = vmatpush1.msra.mxu0 0.0
        %3154 = vmatprep.subr.mxu0 0.0
        %3155 = vmatpush1.msra.mxu0 0.0
        %3156 = vmatprep.subr.mxu0 0.0
        %3157 = vmatpush1.msra.mxu0 0.0
        %3158 = vmatprep.subr.mxu0 0.0
        %3159 = vmatpush1.msra.mxu0 0.0
        %3160 = vmatprep.mubr.f32.mxu0 0.0
        %3161 = vmatmul.mubr.f32.gmra.mrb[0].mxu0 %v3070
        %v3162 = vpop.f32.mrb[0].mxu0
        %v3163 = vadd.f32 0.0, %v3162
        %v3164 = vpop.f32.mrb[0].mxu0
        %3165 = vmatprep.mubr.f32.mxu0 0.0
        %3166 = vmatmul.mubr.f32.gmra.mrb[0].mxu0 %v3073
        %v3167 = vpop.f32.mrb[0].mxu0
        %v3168 = vadd.f32 0.0, %v3167
        %v3169 = vpop.f32.mrb[0].mxu0
        %3170 = vmatprep.mubr.f32.mxu0 0.0
        %3171 = vmatmul.mubr.f32.gmra.mrb[0].mxu0 %v3076
        %v3172 = vpop.f32.mrb[0].mxu0
        %v3173 = vadd.f32 0.0, %v3172
        %v3174 = vpop.f32.mrb[0].mxu0
        %3175 = vmatprep.mubr.f32.mxu0 0.0
        %3176 = vmatmul.mubr.f32.gmra.mrb[0].mxu0 %v3079
        %v3177 = vpop.f32.mrb[0].mxu0
        %v3178 = vadd.f32 0.0, %v3177
        %v3179 = vpop.f32.mrb[0].mxu0
        %3180 = vmatprep.mubr.f32.mxu0 0.0
        %3181 = vmatmul.mubr.f32.gmra.mrb[0].mxu0 %v3082
        %v3182 = vpop.f32.mrb[0].mxu0
        %v3183 = vadd.f32 0.0, %v3182
        %v3184 = vpop.f32.mrb[0].mxu0
        %3185 = vmatprep.mubr.f32.mxu0 0.0
        %3186 = vmatmul.mubr.f32.gmra.mrb[0].mxu0 %v3085
        %v3187 = vpop.f32.mrb[0].mxu0
        %v3188 = vadd.f32 0.0, %v3187
        %v3189 = vpop.f32.mrb[0].mxu0
        %3190 = vmatprep.mubr.f32.mxu0 0.0
        %3191 = vmatmul.mubr.f32.gmra.mrb[0].mxu0 %v3088
        %v3192 = vpop.f32.mrb[0].mxu0
        %v3193 = vadd.f32 0.0, %v3192
        %v3194 = vpop.f32.mrb[0].mxu0
        %3195 = vmatprep.mubr.f32.mxu0 0.0
        %3196 = vmatmul.mubr.f32.gmra.mrb[0].mxu0 %v3091
        %v3197 = vpop.f32.mrb[0].mxu0
        %v3198 = vadd.f32 0.0, %v3197
        %v3199 = vpop.f32.mrb[0].mxu0
        %3200 = vdwg.mxu0
        %v3201 = vadd.f32 %v2292, %v3163
        %v3202 = vadd.f32 %v2297, %v3168
        %v3203 = vadd.f32 %v2302, %v3173
        %v3204 = vadd.f32 %v2307, %v3178
        %v3205 = vadd.f32 %v2312, %v3183
        %v3206 = vadd.f32 %v2317, %v3188
        %v3207 = vadd.f32 %v2322, %v3193
        %v3208 = vadd.f32 %v2327, %v3198
        %s3209 = scalar_lea.vmem %s3, 384
        %v3210 = vld [vmem:[%s3209] sm:$0xff]
        %v3211 = vld [vmem:[%s3209 + $0x8] sm:$0xff]
        %v3212 = vld [vmem:[%s3209 + $0x10] sm:$0xff]
        %v3213 = vld [vmem:[%s3209 + $0x18] sm:$0xff]
        %v3214 = vld [vmem:[%s3209 + $0x20] sm:$0xff]
        %v3215 = vld [vmem:[%s3209 + $0x28] sm:$0xff]
        %v3216 = vld [vmem:[%s3209 + $0x30] sm:$0xff]
        %v3217 = vld [vmem:[%s3209 + $0x38] sm:$0xff]
        %v3218 = vld [vmem:[%s3209 + $0x40] sm:$0xff]
        %v3219 = vld [vmem:[%s3209 + $0x48] sm:$0xff]
        %v3220 = vld [vmem:[%s3209 + $0x50] sm:$0xff]
        %v3221 = vld [vmem:[%s3209 + $0x58] sm:$0xff]
        %v3222 = vld [vmem:[%s3209 + $0x60] sm:$0xff]
        %v3223 = vld [vmem:[%s3209 + $0x68] sm:$0xff]
        %v3224 = vld [vmem:[%s3209 + $0x70] sm:$0xff]
        %v3225 = vld [vmem:[%s3209 + $0x78] sm:$0xff]
        %3226 = vmatprep.subr.mxu0 0.0
        %3227 = vmatpush1.msra.mxu0 %v3210
        %3228 = vmatprep.subr.mxu0 0.0
        %3229 = vmatpush1.msra.mxu0 %v3211
        %3230 = vmatprep.subr.mxu0 0.0
        %3231 = vmatpush1.msra.mxu0 %v3212
        %3232 = vmatprep.subr.mxu0 0.0
        %3233 = vmatpush1.msra.mxu0 %v3213
        %3234 = vmatprep.subr.mxu0 0.0
        %3235 = vmatpush1.msra.mxu0 %v3214
        %3236 = vmatprep.subr.mxu0 0.0
        %3237 = vmatpush1.msra.mxu0 %v3215
        %3238 = vmatprep.subr.mxu0 0.0
        %3239 = vmatpush1.msra.mxu0 %v3216
        %3240 = vmatprep.subr.mxu0 0.0
        %3241 = vmatpush1.msra.mxu0 %v3217
        %3242 = vmatprep.subr.mxu0 0.0
        %3243 = vmatpush1.msra.mxu0 %v3218
        %3244 = vmatprep.subr.mxu0 0.0
        %3245 = vmatpush1.msra.mxu0 %v3219
        %3246 = vmatprep.subr.mxu0 0.0
        %3247 = vmatpush1.msra.mxu0 %v3220
        %3248 = vmatprep.subr.mxu0 0.0
        %3249 = vmatpush1.msra.mxu0 %v3221
        %3250 = vmatprep.subr.mxu0 0.0
        %3251 = vmatpush1.msra.mxu0 %v3222
        %3252 = vmatprep.subr.mxu0 0.0
        %3253 = vmatpush1.msra.mxu0 %v3223
        %3254 = vmatprep.subr.mxu0 0.0
        %3255 = vmatpush1.msra.mxu0 %v3224
        %3256 = vmatprep.subr.mxu0 0.0
        %3257 = vmatpush1.msra.mxu0 %v3225
        %3258 = vmatprep.subr.mxu0 0.0
        %3259 = vmatpush1.msra.mxu0 0.0
        %3260 = vmatprep.subr.mxu0 0.0
        %3261 = vmatpush1.msra.mxu0 0.0
        %3262 = vmatprep.subr.mxu0 0.0
        %3263 = vmatpush1.msra.mxu0 0.0
        %3264 = vmatprep.subr.mxu0 0.0
        %3265 = vmatpush1.msra.mxu0 0.0
        %3266 = vmatprep.subr.mxu0 0.0
        %3267 = vmatpush1.msra.mxu0 0.0
        %3268 = vmatprep.subr.mxu0 0.0
        %3269 = vmatpush1.msra.mxu0 0.0
        %3270 = vmatprep.subr.mxu0 0.0
        %3271 = vmatpush1.msra.mxu0 0.0
        %3272 = vmatprep.subr.mxu0 0.0
        %3273 = vmatpush1.msra.mxu0 0.0
        %3274 = vmatprep.subr.mxu0 0.0
        %3275 = vmatpush1.msra.mxu0 0.0
        %3276 = vmatprep.subr.mxu0 0.0
        %3277 = vmatpush1.msra.mxu0 0.0
        %3278 = vmatprep.subr.mxu0 0.0
        %3279 = vmatpush1.msra.mxu0 0.0
        %3280 = vmatprep.subr.mxu0 0.0
        %3281 = vmatpush1.msra.mxu0 0.0
        %3282 = vmatprep.subr.mxu0 0.0
        %3283 = vmatpush1.msra.mxu0 0.0
        %3284 = vmatprep.subr.mxu0 0.0
        %3285 = vmatpush1.msra.mxu0 0.0
        %3286 = vmatprep.subr.mxu0 0.0
        %3287 = vmatpush1.msra.mxu0 0.0
        %3288 = vmatprep.subr.mxu0 0.0
        %3289 = vmatpush1.msra.mxu0 0.0
        %3290 = vmatprep.mubr.f32.mxu0 0.0
        %3291 = vmatmul.mubr.f32.gmra.mrb[0].mxu0 %v573
        %v3292 = vpop.f32.mrb[0].mxu0
        %v3293 = vadd.f32 0.0, %v3292
        %v3294 = vpop.f32.mrb[0].mxu0
        %3295 = vmatprep.mubr.f32.mxu0 0.0
        %3296 = vmatmul.mubr.f32.gmra.mrb[0].mxu0 %v574
        %v3297 = vpop.f32.mrb[0].mxu0
        %v3298 = vadd.f32 0.0, %v3297
        %v3299 = vpop.f32.mrb[0].mxu0
        %3300 = vmatprep.mubr.f32.mxu0 0.0
        %3301 = vmatmul.mubr.f32.gmra.mrb[0].mxu0 %v575
        %v3302 = vpop.f32.mrb[0].mxu0
        %v3303 = vadd.f32 0.0, %v3302
        %v3304 = vpop.f32.mrb[0].mxu0
        %3305 = vmatprep.mubr.f32.mxu0 0.0
        %3306 = vmatmul.mubr.f32.gmra.mrb[0].mxu0 %v576
        %v3307 = vpop.f32.mrb[0].mxu0
        %v3308 = vadd.f32 0.0, %v3307
        %v3309 = vpop.f32.mrb[0].mxu0
        %3310 = vmatprep.mubr.f32.mxu0 0.0
        %3311 = vmatmul.mubr.f32.gmra.mrb[0].mxu0 %v577
        %v3312 = vpop.f32.mrb[0].mxu0
        %v3313 = vadd.f32 0.0, %v3312
        %v3314 = vpop.f32.mrb[0].mxu0
        %3315 = vmatprep.mubr.f32.mxu0 0.0
        %3316 = vmatmul.mubr.f32.gmra.mrb[0].mxu0 %v578
        %v3317 = vpop.f32.mrb[0].mxu0
        %v3318 = vadd.f32 0.0, %v3317
        %v3319 = vpop.f32.mrb[0].mxu0
        %3320 = vmatprep.mubr.f32.mxu0 0.0
        %3321 = vmatmul.mubr.f32.gmra.mrb[0].mxu0 %v579
        %v3322 = vpop.f32.mrb[0].mxu0
        %v3323 = vadd.f32 0.0, %v3322
        %v3324 = vpop.f32.mrb[0].mxu0
        %3325 = vmatprep.mubr.f32.mxu0 0.0
        %3326 = vmatmul.mubr.f32.gmra.mrb[0].mxu0 %v580
        %v3327 = vpop.f32.mrb[0].mxu0
        %v3328 = vadd.f32 0.0, %v3327
        %v3329 = vpop.f32.mrb[0].mxu0
        %3330 = vdwg.mxu0
        %s3331 = scalar_lea.vmem %s2, 384
        %v3332 = vld [vmem:[%s3331] sm:$0xff]
        %v3333 = vld [vmem:[%s3331 + $0x8] sm:$0xff]
        %v3334 = vld [vmem:[%s3331 + $0x10] sm:$0xff]
        %v3335 = vld [vmem:[%s3331 + $0x18] sm:$0xff]
        %v3336 = vld [vmem:[%s3331 + $0x20] sm:$0xff]
        %v3337 = vld [vmem:[%s3331 + $0x28] sm:$0xff]
        %v3338 = vld [vmem:[%s3331 + $0x30] sm:$0xff]
        %v3339 = vld [vmem:[%s3331 + $0x38] sm:$0xff]
        %v3340 = vld [vmem:[%s3331 + $0x40] sm:$0xff]
        %v3341 = vld [vmem:[%s3331 + $0x48] sm:$0xff]
        %v3342 = vld [vmem:[%s3331 + $0x50] sm:$0xff]
        %v3343 = vld [vmem:[%s3331 + $0x58] sm:$0xff]
        %v3344 = vld [vmem:[%s3331 + $0x60] sm:$0xff]
        %v3345 = vld [vmem:[%s3331 + $0x68] sm:$0xff]
        %v3346 = vld [vmem:[%s3331 + $0x70] sm:$0xff]
        %v3347 = vld [vmem:[%s3331 + $0x78] sm:$0xff]
        %3348 = vmatprep.subr.mxu0 0.0
        %3349 = vmatpush1.msra.mxu0 %v3332
        %3350 = vmatprep.subr.mxu0 0.0
        %3351 = vmatpush1.msra.mxu0 %v3333
        %3352 = vmatprep.subr.mxu0 0.0
        %3353 = vmatpush1.msra.mxu0 %v3334
        %3354 = vmatprep.subr.mxu0 0.0
        %3355 = vmatpush1.msra.mxu0 %v3335
        %3356 = vmatprep.subr.mxu0 0.0
        %3357 = vmatpush1.msra.mxu0 %v3336
        %3358 = vmatprep.subr.mxu0 0.0
        %3359 = vmatpush1.msra.mxu0 %v3337
        %3360 = vmatprep.subr.mxu0 0.0
        %3361 = vmatpush1.msra.mxu0 %v3338
        %3362 = vmatprep.subr.mxu0 0.0
        %3363 = vmatpush1.msra.mxu0 %v3339
        %3364 = vmatprep.subr.mxu0 0.0
        %3365 = vmatpush1.msra.mxu0 %v3340
        %3366 = vmatprep.subr.mxu0 0.0
        %3367 = vmatpush1.msra.mxu0 %v3341
        %3368 = vmatprep.subr.mxu0 0.0
        %3369 = vmatpush1.msra.mxu0 %v3342
        %3370 = vmatprep.subr.mxu0 0.0
        %3371 = vmatpush1.msra.mxu0 %v3343
        %3372 = vmatprep.subr.mxu0 0.0
        %3373 = vmatpush1.msra.mxu0 %v3344
        %3374 = vmatprep.subr.mxu0 0.0
        %3375 = vmatpush1.msra.mxu0 %v3345
        %3376 = vmatprep.subr.mxu0 0.0
        %3377 = vmatpush1.msra.mxu0 %v3346
        %3378 = vmatprep.subr.mxu0 0.0
        %3379 = vmatpush1.msra.mxu0 %v3347
        %3380 = vmatprep.subr.mxu0 0.0
        %3381 = vmatpush1.msra.mxu0 0.0
        %3382 = vmatprep.subr.mxu0 0.0
        %3383 = vmatpush1.msra.mxu0 0.0
        %3384 = vmatprep.subr.mxu0 0.0
        %3385 = vmatpush1.msra.mxu0 0.0
        %3386 = vmatprep.subr.mxu0 0.0
        %3387 = vmatpush1.msra.mxu0 0.0
        %3388 = vmatprep.subr.mxu0 0.0
        %3389 = vmatpush1.msra.mxu0 0.0
        %3390 = vmatprep.subr.mxu0 0.0
        %3391 = vmatpush1.msra.mxu0 0.0
        %3392 = vmatprep.subr.mxu0 0.0
        %3393 = vmatpush1.msra.mxu0 0.0
        %3394 = vmatprep.subr.mxu0 0.0
        %3395 = vmatpush1.msra.mxu0 0.0
        %3396 = vmatprep.subr.mxu0 0.0
        %3397 = vmatpush1.msra.mxu0 0.0
        %3398 = vmatprep.subr.mxu0 0.0
        %3399 = vmatpush1.msra.mxu0 0.0
        %3400 = vmatprep.subr.mxu0 0.0
        %3401 = vmatpush1.msra.mxu0 0.0
        %3402 = vmatprep.subr.mxu0 0.0
        %3403 = vmatpush1.msra.mxu0 0.0
        %3404 = vmatprep.subr.mxu0 0.0
        %3405 = vmatpush1.msra.mxu0 0.0
        %3406 = vmatprep.subr.mxu0 0.0
        %3407 = vmatpush1.msra.mxu0 0.0
        %3408 = vmatprep.subr.mxu0 0.0
        %3409 = vmatpush1.msra.mxu0 0.0
        %3410 = vmatprep.subr.mxu0 0.0
        %3411 = vmatpush1.msra.mxu0 0.0
        %3412 = vmatprep.mubr.f32.mxu0 0.0
        %3413 = vmatmul.mubr.f32.gmra.mrb[0].mxu0 %v573
        %v3414 = vpop.f32.mrb[0].mxu0
        %v3415 = vadd.f32 0.0, %v3414
        %v3416 = vpop.f32.mrb[0].mxu0
        %3417 = vmatprep.mubr.f32.mxu0 0.0
        %3418 = vmatmul.mubr.f32.gmra.mrb[0].mxu0 %v574
        %v3419 = vpop.f32.mrb[0].mxu0
        %v3420 = vadd.f32 0.0, %v3419
        %v3421 = vpop.f32.mrb[0].mxu0
        %3422 = vmatprep.mubr.f32.mxu0 0.0
        %3423 = vmatmul.mubr.f32.gmra.mrb[0].mxu0 %v575
        %v3424 = vpop.f32.mrb[0].mxu0
        %v3425 = vadd.f32 0.0, %v3424
        %v3426 = vpop.f32.mrb[0].mxu0
        %3427 = vmatprep.mubr.f32.mxu0 0.0
        %3428 = vmatmul.mubr.f32.gmra.mrb[0].mxu0 %v576
        %v3429 = vpop.f32.mrb[0].mxu0
        %v3430 = vadd.f32 0.0, %v3429
        %v3431 = vpop.f32.mrb[0].mxu0
        %3432 = vmatprep.mubr.f32.mxu0 0.0
        %3433 = vmatmul.mubr.f32.gmra.mrb[0].mxu0 %v577
        %v3434 = vpop.f32.mrb[0].mxu0
        %v3435 = vadd.f32 0.0, %v3434
        %v3436 = vpop.f32.mrb[0].mxu0
        %3437 = vmatprep.mubr.f32.mxu0 0.0
        %3438 = vmatmul.mubr.f32.gmra.mrb[0].mxu0 %v578
        %v3439 = vpop.f32.mrb[0].mxu0
        %v3440 = vadd.f32 0.0, %v3439
        %v3441 = vpop.f32.mrb[0].mxu0
        %3442 = vmatprep.mubr.f32.mxu0 0.0
        %3443 = vmatmul.mubr.f32.gmra.mrb[0].mxu0 %v579
        %v3444 = vpop.f32.mrb[0].mxu0
        %v3445 = vadd.f32 0.0, %v3444
        %v3446 = vpop.f32.mrb[0].mxu0
        %3447 = vmatprep.mubr.f32.mxu0 0.0
        %3448 = vmatmul.mubr.f32.gmra.mrb[0].mxu0 %v580
        %v3449 = vpop.f32.mrb[0].mxu0
        %v3450 = vadd.f32 0.0, %v3449
        %v3451 = vpop.f32.mrb[0].mxu0
        %3452 = vdwg.mxu0
        %s3453 = scalar_lea.vmem %s4, 384
        %v3454 = vld [vmem:[%s3453] sm:$0xff]
        %v3455 = vld [vmem:[%s3453 + $0x8] sm:$0xff]
        %v3456 = vld [vmem:[%s3453 + $0x10] sm:$0xff]
        %v3457 = vld [vmem:[%s3453 + $0x18] sm:$0xff]
        %v3458 = vld [vmem:[%s3453 + $0x20] sm:$0xff]
        %v3459 = vld [vmem:[%s3453 + $0x28] sm:$0xff]
        %v3460 = vld [vmem:[%s3453 + $0x30] sm:$0xff]
        %v3461 = vld [vmem:[%s3453 + $0x38] sm:$0xff]
        %v3462 = vld [vmem:[%s3453 + $0x40] sm:$0xff]
        %v3463 = vld [vmem:[%s3453 + $0x48] sm:$0xff]
        %v3464 = vld [vmem:[%s3453 + $0x50] sm:$0xff]
        %v3465 = vld [vmem:[%s3453 + $0x58] sm:$0xff]
        %v3466 = vld [vmem:[%s3453 + $0x60] sm:$0xff]
        %v3467 = vld [vmem:[%s3453 + $0x68] sm:$0xff]
        %v3468 = vld [vmem:[%s3453 + $0x70] sm:$0xff]
        %v3469 = vld [vmem:[%s3453 + $0x78] sm:$0xff]
        %3470 = vmatprep.subr.mxu0 0.0
        %3471 = vmatpush1.msra.mxu0 %v3454
        %3472 = vmatprep.subr.mxu0 0.0
        %3473 = vmatpush1.msra.mxu0 %v3455
        %3474 = vmatprep.subr.mxu0 0.0
        %3475 = vmatpush1.msra.mxu0 %v3456
        %3476 = vmatprep.subr.mxu0 0.0
        %3477 = vmatpush1.msra.mxu0 %v3457
        %3478 = vmatprep.subr.mxu0 0.0
        %3479 = vmatpush1.msra.mxu0 %v3458
        %3480 = vmatprep.subr.mxu0 0.0
        %3481 = vmatpush1.msra.mxu0 %v3459
        %3482 = vmatprep.subr.mxu0 0.0
        %3483 = vmatpush1.msra.mxu0 %v3460
        %3484 = vmatprep.subr.mxu0 0.0
        %3485 = vmatpush1.msra.mxu0 %v3461
        %3486 = vmatprep.subr.mxu0 0.0
        %3487 = vmatpush1.msra.mxu0 %v3462
        %3488 = vmatprep.subr.mxu0 0.0
        %3489 = vmatpush1.msra.mxu0 %v3463
        %3490 = vmatprep.subr.mxu0 0.0
        %3491 = vmatpush1.msra.mxu0 %v3464
        %3492 = vmatprep.subr.mxu0 0.0
        %3493 = vmatpush1.msra.mxu0 %v3465
        %3494 = vmatprep.subr.mxu0 0.0
        %3495 = vmatpush1.msra.mxu0 %v3466
        %3496 = vmatprep.subr.mxu0 0.0
        %3497 = vmatpush1.msra.mxu0 %v3467
        %3498 = vmatprep.subr.mxu0 0.0
        %3499 = vmatpush1.msra.mxu0 %v3468
        %3500 = vmatprep.subr.mxu0 0.0
        %3501 = vmatpush1.msra.mxu0 %v3469
        %3502 = vmatprep.subr.mxu0 0.0
        %3503 = vmatpush1.msra.mxu0 0.0
        %3504 = vmatprep.subr.mxu0 0.0
        %3505 = vmatpush1.msra.mxu0 0.0
        %3506 = vmatprep.subr.mxu0 0.0
        %3507 = vmatpush1.msra.mxu0 0.0
        %3508 = vmatprep.subr.mxu0 0.0
        %3509 = vmatpush1.msra.mxu0 0.0
        %3510 = vmatprep.subr.mxu0 0.0
        %3511 = vmatpush1.msra.mxu0 0.0
        %3512 = vmatprep.subr.mxu0 0.0
        %3513 = vmatpush1.msra.mxu0 0.0
        %3514 = vmatprep.subr.mxu0 0.0
        %3515 = vmatpush1.msra.mxu0 0.0
        %3516 = vmatprep.subr.mxu0 0.0
        %3517 = vmatpush1.msra.mxu0 0.0
        %3518 = vmatprep.subr.mxu0 0.0
        %3519 = vmatpush1.msra.mxu0 0.0
        %3520 = vmatprep.subr.mxu0 0.0
        %3521 = vmatpush1.msra.mxu0 0.0
        %3522 = vmatprep.subr.mxu0 0.0
        %3523 = vmatpush1.msra.mxu0 0.0
        %3524 = vmatprep.subr.mxu0 0.0
        %3525 = vmatpush1.msra.mxu0 0.0
        %3526 = vmatprep.subr.mxu0 0.0
        %3527 = vmatpush1.msra.mxu0 0.0
        %3528 = vmatprep.subr.mxu0 0.0
        %3529 = vmatpush1.msra.mxu0 0.0
        %3530 = vmatprep.subr.mxu0 0.0
        %3531 = vmatpush1.msra.mxu0 0.0
        %3532 = vmatprep.subr.mxu0 0.0
        %3533 = vmatpush1.msra.mxu0 0.0
        %3534 = vmatprep.mubr.f32.mxu0 0.0
        %3535 = vmatmul.mubr.f32.gmra.mrb[0].mxu0 %v573
        %v3536 = vpop.f32.mrb[0].mxu0
        %v3537 = vadd.f32 0.0, %v3536
        %v3538 = vpop.f32.mrb[0].mxu0
        %3539 = vmatprep.mubr.f32.mxu0 0.0
        %3540 = vmatmul.mubr.f32.gmra.mrb[0].mxu0 %v574
        %v3541 = vpop.f32.mrb[0].mxu0
        %v3542 = vadd.f32 0.0, %v3541
        %v3543 = vpop.f32.mrb[0].mxu0
        %3544 = vmatprep.mubr.f32.mxu0 0.0
        %3545 = vmatmul.mubr.f32.gmra.mrb[0].mxu0 %v575
        %v3546 = vpop.f32.mrb[0].mxu0
        %v3547 = vadd.f32 0.0, %v3546
        %v3548 = vpop.f32.mrb[0].mxu0
        %3549 = vmatprep.mubr.f32.mxu0 0.0
        %3550 = vmatmul.mubr.f32.gmra.mrb[0].mxu0 %v576
        %v3551 = vpop.f32.mrb[0].mxu0
        %v3552 = vadd.f32 0.0, %v3551
        %v3553 = vpop.f32.mrb[0].mxu0
        %3554 = vmatprep.mubr.f32.mxu0 0.0
        %3555 = vmatmul.mubr.f32.gmra.mrb[0].mxu0 %v577
        %v3556 = vpop.f32.mrb[0].mxu0
        %v3557 = vadd.f32 0.0, %v3556
        %v3558 = vpop.f32.mrb[0].mxu0
        %3559 = vmatprep.mubr.f32.mxu0 0.0
        %3560 = vmatmul.mubr.f32.gmra.mrb[0].mxu0 %v578
        %v3561 = vpop.f32.mrb[0].mxu0
        %v3562 = vadd.f32 0.0, %v3561
        %v3563 = vpop.f32.mrb[0].mxu0
        %3564 = vmatprep.mubr.f32.mxu0 0.0
        %3565 = vmatmul.mubr.f32.gmra.mrb[0].mxu0 %v579
        %v3566 = vpop.f32.mrb[0].mxu0
        %v3567 = vadd.f32 0.0, %v3566
        %v3568 = vpop.f32.mrb[0].mxu0
        %3569 = vmatprep.mubr.f32.mxu0 0.0
        %3570 = vmatmul.mubr.f32.gmra.mrb[0].mxu0 %v580
        %v3571 = vpop.f32.mrb[0].mxu0
        %v3572 = vadd.f32 0.0, %v3571
        %v3573 = vpop.f32.mrb[0].mxu0
        %3574 = vdwg.mxu0
        %v3576 = vsel %vm952, %v3293, 0
        %v3579 = vsel %vm952, %v3298, 0
        %v3582 = vsel %vm952, %v3303, 0
        %v3585 = vsel %vm952, %v3308, 0
        %v3588 = vsel %vm952, %v3313, 0
        %v3591 = vsel %vm952, %v3318, 0
        %v3594 = vsel %vm952, %v3323, 0
        %v3597 = vsel %vm952, %v3328, 0
        %v3600 = vsel %vm952, %v3415, 0
        %v3603 = vsel %vm952, %v3420, 0
        %v3606 = vsel %vm952, %v3425, 0
        %v3609 = vsel %vm952, %v3430, 0
        %v3612 = vsel %vm952, %v3435, 0
        %v3615 = vsel %vm952, %v3440, 0
        %v3618 = vsel %vm952, %v3445, 0
        %v3621 = vsel %vm952, %v3450, 0
        %3623 = vmatprep.subr.mxu0 0.0
        %3624 = vmatpush1.xpose.msra.mxu0 %v3600
        %3625 = vmatprep.subr.mxu0 0.0
        %3626 = vmatpush1.xpose.msra.mxu0 %v3603
        %3627 = vmatprep.subr.mxu0 0.0
        %3628 = vmatpush1.xpose.msra.mxu0 %v3606
        %3629 = vmatprep.subr.mxu0 0.0
        %3630 = vmatpush1.xpose.msra.mxu0 %v3609
        %3631 = vmatprep.subr.mxu0 0.0
        %3632 = vmatpush1.xpose.msra.mxu0 %v3612
        %3633 = vmatprep.subr.mxu0 0.0
        %3634 = vmatpush1.xpose.msra.mxu0 %v3615
        %3635 = vmatprep.subr.mxu0 0.0
        %3636 = vmatpush1.xpose.msra.mxu0 %v3618
        %3637 = vmatprep.subr.mxu0 0.0
        %3638 = vmatpush1.xpose.msra.mxu0 %v3621
        %3639 = vmatprep.subr.mxu0 0.0
        %3640 = vmatpush1.xpose.msra.mxu0 0.0
        %3641 = vmatprep.subr.mxu0 0.0
        %3642 = vmatpush1.xpose.msra.mxu0 0.0
        %3643 = vmatprep.subr.mxu0 0.0
        %3644 = vmatpush1.xpose.msra.mxu0 0.0
        %3645 = vmatprep.subr.mxu0 0.0
        %3646 = vmatpush1.xpose.msra.mxu0 0.0
        %3647 = vmatprep.subr.mxu0 0.0
        %3648 = vmatpush1.xpose.msra.mxu0 0.0
        %3649 = vmatprep.subr.mxu0 0.0
        %3650 = vmatpush1.xpose.msra.mxu0 0.0
        %3651 = vmatprep.subr.mxu0 0.0
        %3652 = vmatpush1.xpose.msra.mxu0 0.0
        %3653 = vmatprep.subr.mxu0 0.0
        %3654 = vmatpush1.xpose.msra.mxu0 0.0
        %3655 = vmatprep.subr.mxu0 0.0
        %3656 = vmatpush1.xpose.msra.mxu0 0.0
        %3657 = vmatprep.subr.mxu0 0.0
        %3658 = vmatpush1.xpose.msra.mxu0 0.0
        %3659 = vmatprep.subr.mxu0 0.0
        %3660 = vmatpush1.xpose.msra.mxu0 0.0
        %3661 = vmatprep.subr.mxu0 0.0
        %3662 = vmatpush1.xpose.msra.mxu0 0.0
        %3663 = vmatprep.subr.mxu0 0.0
        %3664 = vmatpush1.xpose.msra.mxu0 0.0
        %3665 = vmatprep.subr.mxu0 0.0
        %3666 = vmatpush1.xpose.msra.mxu0 0.0
        %3667 = vmatprep.subr.mxu0 0.0
        %3668 = vmatpush1.xpose.msra.mxu0 0.0
        %3669 = vmatprep.subr.mxu0 0.0
        %3670 = vmatpush1.xpose.msra.mxu0 0.0
        %3671 = vmatprep.subr.mxu0 0.0
        %3672 = vmatpush1.xpose.msra.mxu0 0.0
        %3673 = vmatprep.subr.mxu0 0.0
        %3674 = vmatpush1.xpose.msra.mxu0 0.0
        %3675 = vmatprep.subr.mxu0 0.0
        %3676 = vmatpush1.xpose.msra.mxu0 0.0
        %3677 = vmatprep.subr.mxu0 0.0
        %3678 = vmatpush1.xpose.msra.mxu0 0.0
        %3679 = vmatprep.subr.mxu0 0.0
        %3680 = vmatpush1.xpose.msra.mxu0 0.0
        %3681 = vmatprep.subr.mxu0 0.0
        %3682 = vmatpush1.xpose.msra.mxu0 0.0
        %3683 = vmatprep.subr.mxu0 0.0
        %3684 = vmatpush1.xpose.msra.mxu0 0.0
        %3685 = vmatprep.subr.mxu0 0.0
        %3686 = vmatpush1.xpose.msra.mxu0 0.0
        %3687 = vmatprep.mubr.f32.mxu0 0.0
        %3688 = vmatmul.mubr.f32.gmra.mrb[0].mxu0 %v3576
        %v3689 = vpop.f32.mrb[0].mxu0
        %v3690 = vadd.f32 %v581, %v3689
        %v3691 = vpop.f32.mrb[0].mxu0
        %3692 = vmatprep.mubr.f32.mxu0 0.0
        %3693 = vmatmul.mubr.f32.gmra.mrb[0].mxu0 %v3579
        %v3694 = vpop.f32.mrb[0].mxu0
        %v3695 = vadd.f32 %v582, %v3694
        %v3696 = vpop.f32.mrb[0].mxu0
        %3697 = vmatprep.mubr.f32.mxu0 0.0
        %3698 = vmatmul.mubr.f32.gmra.mrb[0].mxu0 %v3582
        %v3699 = vpop.f32.mrb[0].mxu0
        %v3700 = vadd.f32 %v583, %v3699
        %v3701 = vpop.f32.mrb[0].mxu0
        %3702 = vmatprep.mubr.f32.mxu0 0.0
        %3703 = vmatmul.mubr.f32.gmra.mrb[0].mxu0 %v3585
        %v3704 = vpop.f32.mrb[0].mxu0
        %v3705 = vadd.f32 %v584, %v3704
        %v3706 = vpop.f32.mrb[0].mxu0
        %3707 = vmatprep.mubr.f32.mxu0 0.0
        %3708 = vmatmul.mubr.f32.gmra.mrb[0].mxu0 %v3588
        %v3709 = vpop.f32.mrb[0].mxu0
        %v3710 = vadd.f32 %v585, %v3709
        %v3711 = vpop.f32.mrb[0].mxu0
        %3712 = vmatprep.mubr.f32.mxu0 0.0
        %3713 = vmatmul.mubr.f32.gmra.mrb[0].mxu0 %v3591
        %v3714 = vpop.f32.mrb[0].mxu0
        %v3715 = vadd.f32 %v586, %v3714
        %v3716 = vpop.f32.mrb[0].mxu0
        %3717 = vmatprep.mubr.f32.mxu0 0.0
        %3718 = vmatmul.mubr.f32.gmra.mrb[0].mxu0 %v3594
        %v3719 = vpop.f32.mrb[0].mxu0
        %v3720 = vadd.f32 %v587, %v3719
        %v3721 = vpop.f32.mrb[0].mxu0
        %3722 = vmatprep.mubr.f32.mxu0 0.0
        %3723 = vmatmul.mubr.f32.gmra.mrb[0].mxu0 %v3597
        %v3724 = vpop.f32.mrb[0].mxu0
        %v3725 = vadd.f32 %v588, %v3724
        %v3726 = vpop.f32.mrb[0].mxu0
        %3727 = vdwg.mxu0
        %v3728 = vsel %vm1106, %v3690, -inf
        %3729 = vmax.xlane.f32.xlu0 %v3728
        %v3730 = vpop.xlane.xlu0 %3729
        %v3731 = vsel %vm1106, %v3695, -inf
        %3732 = vmax.xlane.f32.xlu0 %v3731
        %v3733 = vpop.xlane.xlu0 %3732
        %v3734 = vsel %vm1106, %v3700, -inf
        %3735 = vmax.xlane.f32.xlu0 %v3734
        %v3736 = vpop.xlane.xlu0 %3735
        %v3737 = vsel %vm1106, %v3705, -inf
        %3738 = vmax.xlane.f32.xlu0 %v3737
        %v3739 = vpop.xlane.xlu0 %3738
        %v3740 = vsel %vm1106, %v3710, -inf
        %3741 = vmax.xlane.f32.xlu0 %v3740
        %v3742 = vpop.xlane.xlu0 %3741
        %v3743 = vsel %vm1106, %v3715, -inf
        %3744 = vmax.xlane.f32.xlu0 %v3743
        %v3745 = vpop.xlane.xlu0 %3744
        %v3746 = vsel %vm1106, %v3720, -inf
        %3747 = vmax.xlane.f32.xlu0 %v3746
        %v3748 = vpop.xlane.xlu0 %3747
        %v3749 = vsel %vm1106, %v3725, -inf
        %3750 = vmax.xlane.f32.xlu0 %v3749
        %v3751 = vpop.xlane.xlu0 %3750
        %v3752 = vsub.f32 %v3690, %v3730
        %v3753 = vsub.f32 %v3695, %v3733
        %v3754 = vsub.f32 %v3700, %v3736
        %v3755 = vsub.f32 %v3705, %v3739
        %v3756 = vsub.f32 %v3710, %v3742
        %v3757 = vsub.f32 %v3715, %v3745
        %v3758 = vsub.f32 %v3720, %v3748
        %v3759 = vsub.f32 %v3725, %v3751
        %v3760 = vmul.f32 %v3752, 1.442695
        %v3761 = vpow.pop %v3760
        %v3762 = vmul.f32 %v3753, 1.442695
        %v3763 = vpow.pop %v3762
        %v3764 = vmul.f32 %v3754, 1.442695
        %v3765 = vpow.pop %v3764
        %v3766 = vmul.f32 %v3755, 1.442695
        %v3767 = vpow.pop %v3766
        %v3768 = vmul.f32 %v3756, 1.442695
        %v3769 = vpow.pop %v3768
        %v3770 = vmul.f32 %v3757, 1.442695
        %v3771 = vpow.pop %v3770
        %v3772 = vmul.f32 %v3758, 1.442695
        %v3773 = vpow.pop %v3772
        %v3774 = vmul.f32 %v3759, 1.442695
        %v3775 = vpow.pop %v3774
        %v3776 = vsel %vm1106, %v3761, 0.0
        %3777 = vadd.xlane.f32.xlu0 %v3776
        %v3778 = vpop.xlane.xlu0 %3777
        %v3779 = vsel %vm1106, %v3763, 0.0
        %3780 = vadd.xlane.f32.xlu0 %v3779
        %v3781 = vpop.xlane.xlu0 %3780
        %v3782 = vsel %vm1106, %v3765, 0.0
        %3783 = vadd.xlane.f32.xlu0 %v3782
        %v3784 = vpop.xlane.xlu0 %3783
        %v3785 = vsel %vm1106, %v3767, 0.0
        %3786 = vadd.xlane.f32.xlu0 %v3785
        %v3787 = vpop.xlane.xlu0 %3786
        %v3788 = vsel %vm1106, %v3769, 0.0
        %3789 = vadd.xlane.f32.xlu0 %v3788
        %v3790 = vpop.xlane.xlu0 %3789
        %v3791 = vsel %vm1106, %v3771, 0.0
        %3792 = vadd.xlane.f32.xlu0 %v3791
        %v3793 = vpop.xlane.xlu0 %3792
        %v3794 = vsel %vm1106, %v3773, 0.0
        %3795 = vadd.xlane.f32.xlu0 %v3794
        %v3796 = vpop.xlane.xlu0 %3795
        %v3797 = vsel %vm1106, %v3775, 0.0
        %3798 = vadd.xlane.f32.xlu0 %v3797
        %v3799 = vpop.xlane.xlu0 %3798
        %v3800 = vrcp.pop %v3778
        %v3801 = vrcp.pop %v3781
        %v3802 = vrcp.pop %v3784
        %v3803 = vrcp.pop %v3787
        %v3804 = vrcp.pop %v3790
        %v3805 = vrcp.pop %v3793
        %v3806 = vrcp.pop %v3796
        %v3807 = vrcp.pop %v3799
        %v3808 = vmul.f32 %v3761, %v3800
        %v3809 = vmul.f32 %v3763, %v3801
        %v3810 = vmul.f32 %v3765, %v3802
        %v3811 = vmul.f32 %v3767, %v3803
        %v3812 = vmul.f32 %v3769, %v3804
        %v3813 = vmul.f32 %v3771, %v3805
        %v3814 = vmul.f32 %v3773, %v3806
        %v3815 = vmul.f32 %v3775, %v3807
        %v3817 = vsel %vm1106, %v3808, 0
        %v3820 = vsel %vm1106, %v3809, 0
        %v3823 = vsel %vm1106, %v3810, 0
        %v3826 = vsel %vm1106, %v3811, 0
        %v3829 = vsel %vm1106, %v3812, 0
        %v3832 = vsel %vm1106, %v3813, 0
        %v3835 = vsel %vm1106, %v3814, 0
        %v3838 = vsel %vm1106, %v3815, 0
        %3840 = vmatprep.subr.mxu0 0.0
        %3841 = vmatpush1.msra.mxu0 %v3537
        %3842 = vmatprep.subr.mxu0 0.0
        %3843 = vmatpush1.msra.mxu0 %v3542
        %3844 = vmatprep.subr.mxu0 0.0
        %3845 = vmatpush1.msra.mxu0 %v3547
        %3846 = vmatprep.subr.mxu0 0.0
        %3847 = vmatpush1.msra.mxu0 %v3552
        %3848 = vmatprep.subr.mxu0 0.0
        %3849 = vmatpush1.msra.mxu0 %v3557
        %3850 = vmatprep.subr.mxu0 0.0
        %3851 = vmatpush1.msra.mxu0 %v3562
        %3852 = vmatprep.subr.mxu0 0.0
        %3853 = vmatpush1.msra.mxu0 %v3567
        %3854 = vmatprep.subr.mxu0 0.0
        %3855 = vmatpush1.msra.mxu0 %v3572
        %3856 = vmatprep.subr.mxu0 0.0
        %3857 = vmatpush1.msra.mxu0 0.0
        %3858 = vmatprep.subr.mxu0 0.0
        %3859 = vmatpush1.msra.mxu0 0.0
        %3860 = vmatprep.subr.mxu0 0.0
        %3861 = vmatpush1.msra.mxu0 0.0
        %3862 = vmatprep.subr.mxu0 0.0
        %3863 = vmatpush1.msra.mxu0 0.0
        %3864 = vmatprep.subr.mxu0 0.0
        %3865 = vmatpush1.msra.mxu0 0.0
        %3866 = vmatprep.subr.mxu0 0.0
        %3867 = vmatpush1.msra.mxu0 0.0
        %3868 = vmatprep.subr.mxu0 0.0
        %3869 = vmatpush1.msra.mxu0 0.0
        %3870 = vmatprep.subr.mxu0 0.0
        %3871 = vmatpush1.msra.mxu0 0.0
        %3872 = vmatprep.subr.mxu0 0.0
        %3873 = vmatpush1.msra.mxu0 0.0
        %3874 = vmatprep.subr.mxu0 0.0
        %3875 = vmatpush1.msra.mxu0 0.0
        %3876 = vmatprep.subr.mxu0 0.0
        %3877 = vmatpush1.msra.mxu0 0.0
        %3878 = vmatprep.subr.mxu0 0.0
        %3879 = vmatpush1.msra.mxu0 0.0
        %3880 = vmatprep.subr.mxu0 0.0
        %3881 = vmatpush1.msra.mxu0 0.0
        %3882 = vmatprep.subr.mxu0 0.0
        %3883 = vmatpush1.msra.mxu0 0.0
        %3884 = vmatprep.subr.mxu0 0.0
        %3885 = vmatpush1.msra.mxu0 0.0
        %3886 = vmatprep.subr.mxu0 0.0
        %3887 = vmatpush1.msra.mxu0 0.0
        %3888 = vmatprep.subr.mxu0 0.0
        %3889 = vmatpush1.msra.mxu0 0.0
        %3890 = vmatprep.subr.mxu0 0.0
        %3891 = vmatpush1.msra.mxu0 0.0
        %3892 = vmatprep.subr.mxu0 0.0
        %3893 = vmatpush1.msra.mxu0 0.0
        %3894 = vmatprep.subr.mxu0 0.0
        %3895 = vmatpush1.msra.mxu0 0.0
        %3896 = vmatprep.subr.mxu0 0.0
        %3897 = vmatpush1.msra.mxu0 0.0
        %3898 = vmatprep.subr.mxu0 0.0
        %3899 = vmatpush1.msra.mxu0 0.0
        %3900 = vmatprep.subr.mxu0 0.0
        %3901 = vmatpush1.msra.mxu0 0.0
        %3902 = vmatprep.subr.mxu0 0.0
        %3903 = vmatpush1.msra.mxu0 0.0
        %3904 = vmatprep.mubr.f32.mxu0 0.0
        %3905 = vmatmul.mubr.f32.gmra.mrb[0].mxu0 %v3817
        %v3906 = vpop.f32.mrb[0].mxu0
        %v3907 = vadd.f32 0.0, %v3906
        %v3908 = vpop.f32.mrb[0].mxu0
        %3909 = vmatprep.mubr.f32.mxu0 0.0
        %3910 = vmatmul.mubr.f32.gmra.mrb[0].mxu0 %v3820
        %v3911 = vpop.f32.mrb[0].mxu0
        %v3912 = vadd.f32 0.0, %v3911
        %v3913 = vpop.f32.mrb[0].mxu0
        %3914 = vmatprep.mubr.f32.mxu0 0.0
        %3915 = vmatmul.mubr.f32.gmra.mrb[0].mxu0 %v3823
        %v3916 = vpop.f32.mrb[0].mxu0
        %v3917 = vadd.f32 0.0, %v3916
        %v3918 = vpop.f32.mrb[0].mxu0
        %3919 = vmatprep.mubr.f32.mxu0 0.0
        %3920 = vmatmul.mubr.f32.gmra.mrb[0].mxu0 %v3826
        %v3921 = vpop.f32.mrb[0].mxu0
        %v3922 = vadd.f32 0.0, %v3921
        %v3923 = vpop.f32.mrb[0].mxu0
        %3924 = vmatprep.mubr.f32.mxu0 0.0
        %3925 = vmatmul.mubr.f32.gmra.mrb[0].mxu0 %v3829
        %v3926 = vpop.f32.mrb[0].mxu0
        %v3927 = vadd.f32 0.0, %v3926
        %v3928 = vpop.f32.mrb[0].mxu0
        %3929 = vmatprep.mubr.f32.mxu0 0.0
        %3930 = vmatmul.mubr.f32.gmra.mrb[0].mxu0 %v3832
        %v3931 = vpop.f32.mrb[0].mxu0
        %v3932 = vadd.f32 0.0, %v3931
        %v3933 = vpop.f32.mrb[0].mxu0
        %3934 = vmatprep.mubr.f32.mxu0 0.0
        %3935 = vmatmul.mubr.f32.gmra.mrb[0].mxu0 %v3835
        %v3936 = vpop.f32.mrb[0].mxu0
        %v3937 = vadd.f32 0.0, %v3936
        %v3938 = vpop.f32.mrb[0].mxu0
        %3939 = vmatprep.mubr.f32.mxu0 0.0
        %3940 = vmatmul.mubr.f32.gmra.mrb[0].mxu0 %v3838
        %v3941 = vpop.f32.mrb[0].mxu0
        %v3942 = vadd.f32 0.0, %v3941
        %v3943 = vpop.f32.mrb[0].mxu0
        %3944 = vdwg.mxu0
        %s3945 = scalar_lea.vmem %s5, 48
        %v3946 = vld [vmem:[%s3945] sm:$0xff]
        %v3947 = vld [vmem:[%s3945 + $0x8] sm:$0xf]
        %v3949 = vsel %vm952, %v3907, 0
        %v3952 = vsel %vm952, %v3912, 0
        %v3955 = vsel %vm952, %v3917, 0
        %v3958 = vsel %vm952, %v3922, 0
        %v3961 = vsel %vm952, %v3927, 0
        %v3964 = vsel %vm952, %v3932, 0
        %v3967 = vsel %vm952, %v3937, 0
        %v3970 = vsel %vm952, %v3942, 0
        %v3973 = vsel %vm2089, %v3947, 0
        %3975 = vmatprep.subr.mxu0 0.0
        %3976 = vmatpush1.msra.mxu0 %v3946
        %3977 = vmatprep.subr.mxu0 0.0
        %3978 = vmatpush1.msra.mxu0 %v3973
        %3979 = vmatprep.subr.mxu0 0.0
        %3980 = vmatpush1.msra.mxu0 0.0
        %3981 = vmatprep.subr.mxu0 0.0
        %3982 = vmatpush1.msra.mxu0 0.0
        %3983 = vmatprep.subr.mxu0 0.0
        %3984 = vmatpush1.msra.mxu0 0.0
        %3985 = vmatprep.subr.mxu0 0.0
        %3986 = vmatpush1.msra.mxu0 0.0
        %3987 = vmatprep.subr.mxu0 0.0
        %3988 = vmatpush1.msra.mxu0 0.0
        %3989 = vmatprep.subr.mxu0 0.0
        %3990 = vmatpush1.msra.mxu0 0.0
        %3991 = vmatprep.subr.mxu0 0.0
        %3992 = vmatpush1.msra.mxu0 0.0
        %3993 = vmatprep.subr.mxu0 0.0
        %3994 = vmatpush1.msra.mxu0 0.0
        %3995 = vmatprep.subr.mxu0 0.0
        %3996 = vmatpush1.msra.mxu0 0.0
        %3997 = vmatprep.subr.mxu0 0.0
        %3998 = vmatpush1.msra.mxu0 0.0
        %3999 = vmatprep.subr.mxu0 0.0
        %4000 = vmatpush1.msra.mxu0 0.0
        %4001 = vmatprep.subr.mxu0 0.0
        %4002 = vmatpush1.msra.mxu0 0.0
        %4003 = vmatprep.subr.mxu0 0.0
        %4004 = vmatpush1.msra.mxu0 0.0
        %4005 = vmatprep.subr.mxu0 0.0
        %4006 = vmatpush1.msra.mxu0 0.0
        %4007 = vmatprep.subr.mxu0 0.0
        %4008 = vmatpush1.msra.mxu0 0.0
        %4009 = vmatprep.subr.mxu0 0.0
        %4010 = vmatpush1.msra.mxu0 0.0
        %4011 = vmatprep.subr.mxu0 0.0
        %4012 = vmatpush1.msra.mxu0 0.0
        %4013 = vmatprep.subr.mxu0 0.0
        %4014 = vmatpush1.msra.mxu0 0.0
        %4015 = vmatprep.subr.mxu0 0.0
        %4016 = vmatpush1.msra.mxu0 0.0
        %4017 = vmatprep.subr.mxu0 0.0
        %4018 = vmatpush1.msra.mxu0 0.0
        %4019 = vmatprep.subr.mxu0 0.0
        %4020 = vmatpush1.msra.mxu0 0.0
        %4021 = vmatprep.subr.mxu0 0.0
        %4022 = vmatpush1.msra.mxu0 0.0
        %4023 = vmatprep.subr.mxu0 0.0
        %4024 = vmatpush1.msra.mxu0 0.0
        %4025 = vmatprep.subr.mxu0 0.0
        %4026 = vmatpush1.msra.mxu0 0.0
        %4027 = vmatprep.subr.mxu0 0.0
        %4028 = vmatpush1.msra.mxu0 0.0
        %4029 = vmatprep.subr.mxu0 0.0
        %4030 = vmatpush1.msra.mxu0 0.0
        %4031 = vmatprep.subr.mxu0 0.0
        %4032 = vmatpush1.msra.mxu0 0.0
        %4033 = vmatprep.subr.mxu0 0.0
        %4034 = vmatpush1.msra.mxu0 0.0
        %4035 = vmatprep.subr.mxu0 0.0
        %4036 = vmatpush1.msra.mxu0 0.0
        %4037 = vmatprep.subr.mxu0 0.0
        %4038 = vmatpush1.msra.mxu0 0.0
        %4039 = vmatprep.mubr.f32.mxu0 0.0
        %4040 = vmatmul.mubr.f32.gmra.mrb[0].mxu0 %v3949
        %v4041 = vpop.f32.mrb[0].mxu0
        %v4042 = vadd.f32 0.0, %v4041
        %v4043 = vpop.f32.mrb[0].mxu0
        %4044 = vmatprep.mubr.f32.mxu0 0.0
        %4045 = vmatmul.mubr.f32.gmra.mrb[0].mxu0 %v3952
        %v4046 = vpop.f32.mrb[0].mxu0
        %v4047 = vadd.f32 0.0, %v4046
        %v4048 = vpop.f32.mrb[0].mxu0
        %4049 = vmatprep.mubr.f32.mxu0 0.0
        %4050 = vmatmul.mubr.f32.gmra.mrb[0].mxu0 %v3955
        %v4051 = vpop.f32.mrb[0].mxu0
        %v4052 = vadd.f32 0.0, %v4051
        %v4053 = vpop.f32.mrb[0].mxu0
        %4054 = vmatprep.mubr.f32.mxu0 0.0
        %4055 = vmatmul.mubr.f32.gmra.mrb[0].mxu0 %v3958
        %v4056 = vpop.f32.mrb[0].mxu0
        %v4057 = vadd.f32 0.0, %v4056
        %v4058 = vpop.f32.mrb[0].mxu0
        %4059 = vmatprep.mubr.f32.mxu0 0.0
        %4060 = vmatmul.mubr.f32.gmra.mrb[0].mxu0 %v3961
        %v4061 = vpop.f32.mrb[0].mxu0
        %v4062 = vadd.f32 0.0, %v4061
        %v4063 = vpop.f32.mrb[0].mxu0
        %4064 = vmatprep.mubr.f32.mxu0 0.0
        %4065 = vmatmul.mubr.f32.gmra.mrb[0].mxu0 %v3964
        %v4066 = vpop.f32.mrb[0].mxu0
        %v4067 = vadd.f32 0.0, %v4066
        %v4068 = vpop.f32.mrb[0].mxu0
        %4069 = vmatprep.mubr.f32.mxu0 0.0
        %4070 = vmatmul.mubr.f32.gmra.mrb[0].mxu0 %v3967
        %v4071 = vpop.f32.mrb[0].mxu0
        %v4072 = vadd.f32 0.0, %v4071
        %v4073 = vpop.f32.mrb[0].mxu0
        %4074 = vmatprep.mubr.f32.mxu0 0.0
        %4075 = vmatmul.mubr.f32.gmra.mrb[0].mxu0 %v3970
        %v4076 = vpop.f32.mrb[0].mxu0
        %v4077 = vadd.f32 0.0, %v4076
        %v4078 = vpop.f32.mrb[0].mxu0
        %4079 = vdwg.mxu0
        %v4080 = vadd.f32 %v3201, %v4042
        %v4081 = vadd.f32 %v3202, %v4047
        %v4082 = vadd.f32 %v3203, %v4052
        %v4083 = vadd.f32 %v3204, %v4057
        %v4084 = vadd.f32 %v3205, %v4062
        %v4085 = vadd.f32 %v3206, %v4067
        %v4086 = vadd.f32 %v3207, %v4072
        %v4087 = vadd.f32 %v3208, %v4077
        %s4088 = scalar_lea.vmem %s3, 512
        %v4089 = vld [vmem:[%s4088] sm:$0xff]
        %v4090 = vld [vmem:[%s4088 + $0x8] sm:$0xff]
        %v4091 = vld [vmem:[%s4088 + $0x10] sm:$0xff]
        %v4092 = vld [vmem:[%s4088 + $0x18] sm:$0xff]
        %v4093 = vld [vmem:[%s4088 + $0x20] sm:$0xff]
        %v4094 = vld [vmem:[%s4088 + $0x28] sm:$0xff]
        %v4095 = vld [vmem:[%s4088 + $0x30] sm:$0xff]
        %v4096 = vld [vmem:[%s4088 + $0x38] sm:$0xff]
        %v4097 = vld [vmem:[%s4088 + $0x40] sm:$0xff]
        %v4098 = vld [vmem:[%s4088 + $0x48] sm:$0xff]
        %v4099 = vld [vmem:[%s4088 + $0x50] sm:$0xff]
        %v4100 = vld [vmem:[%s4088 + $0x58] sm:$0xff]
        %v4101 = vld [vmem:[%s4088 + $0x60] sm:$0xff]
        %v4102 = vld [vmem:[%s4088 + $0x68] sm:$0xff]
        %v4103 = vld [vmem:[%s4088 + $0x70] sm:$0xff]
        %v4104 = vld [vmem:[%s4088 + $0x78] sm:$0xff]
        %4105 = vmatprep.subr.mxu0 0.0
        %4106 = vmatpush1.msra.mxu0 %v4089
        %4107 = vmatprep.subr.mxu0 0.0
        %4108 = vmatpush1.msra.mxu0 %v4090
        %4109 = vmatprep.subr.mxu0 0.0
        %4110 = vmatpush1.msra.mxu0 %v4091
        %4111 = vmatprep.subr.mxu0 0.0
        %4112 = vmatpush1.msra.mxu0 %v4092
        %4113 = vmatprep.subr.mxu0 0.0
        %4114 = vmatpush1.msra.mxu0 %v4093
        %4115 = vmatprep.subr.mxu0 0.0
        %4116 = vmatpush1.msra.mxu0 %v4094
        %4117 = vmatprep.subr.mxu0 0.0
        %4118 = vmatpush1.msra.mxu0 %v4095
        %4119 = vmatprep.subr.mxu0 0.0
        %4120 = vmatpush1.msra.mxu0 %v4096
        %4121 = vmatprep.subr.mxu0 0.0
        %4122 = vmatpush1.msra.mxu0 %v4097
        %4123 = vmatprep.subr.mxu0 0.0
        %4124 = vmatpush1.msra.mxu0 %v4098
        %4125 = vmatprep.subr.mxu0 0.0
        %4126 = vmatpush1.msra.mxu0 %v4099
        %4127 = vmatprep.subr.mxu0 0.0
        %4128 = vmatpush1.msra.mxu0 %v4100
        %4129 = vmatprep.subr.mxu0 0.0
        %4130 = vmatpush1.msra.mxu0 %v4101
        %4131 = vmatprep.subr.mxu0 0.0
        %4132 = vmatpush1.msra.mxu0 %v4102
        %4133 = vmatprep.subr.mxu0 0.0
        %4134 = vmatpush1.msra.mxu0 %v4103
        %4135 = vmatprep.subr.mxu0 0.0
        %4136 = vmatpush1.msra.mxu0 %v4104
        %4137 = vmatprep.subr.mxu0 0.0
        %4138 = vmatpush1.msra.mxu0 0.0
        %4139 = vmatprep.subr.mxu0 0.0
        %4140 = vmatpush1.msra.mxu0 0.0
        %4141 = vmatprep.subr.mxu0 0.0
        %4142 = vmatpush1.msra.mxu0 0.0
        %4143 = vmatprep.subr.mxu0 0.0
        %4144 = vmatpush1.msra.mxu0 0.0
        %4145 = vmatprep.subr.mxu0 0.0
        %4146 = vmatpush1.msra.mxu0 0.0
        %4147 = vmatprep.subr.mxu0 0.0
        %4148 = vmatpush1.msra.mxu0 0.0
        %4149 = vmatprep.subr.mxu0 0.0
        %4150 = vmatpush1.msra.mxu0 0.0
        %4151 = vmatprep.subr.mxu0 0.0
        %4152 = vmatpush1.msra.mxu0 0.0
        %4153 = vmatprep.subr.mxu0 0.0
        %4154 = vmatpush1.msra.mxu0 0.0
        %4155 = vmatprep.subr.mxu0 0.0
        %4156 = vmatpush1.msra.mxu0 0.0
        %4157 = vmatprep.subr.mxu0 0.0
        %4158 = vmatpush1.msra.mxu0 0.0
        %4159 = vmatprep.subr.mxu0 0.0
        %4160 = vmatpush1.msra.mxu0 0.0
        %4161 = vmatprep.subr.mxu0 0.0
        %4162 = vmatpush1.msra.mxu0 0.0
        %4163 = vmatprep.subr.mxu0 0.0
        %4164 = vmatpush1.msra.mxu0 0.0
        %4165 = vmatprep.subr.mxu0 0.0
        %4166 = vmatpush1.msra.mxu0 0.0
        %4167 = vmatprep.subr.mxu0 0.0
        %4168 = vmatpush1.msra.mxu0 0.0
        %4169 = vmatprep.mubr.f32.mxu0 0.0
        %4170 = vmatmul.mubr.f32.gmra.mrb[0].mxu0 %v573
        %v4171 = vpop.f32.mrb[0].mxu0
        %v4172 = vadd.f32 0.0, %v4171
        %v4173 = vpop.f32.mrb[0].mxu0
        %4174 = vmatprep.mubr.f32.mxu0 0.0
        %4175 = vmatmul.mubr.f32.gmra.mrb[0].mxu0 %v574
        %v4176 = vpop.f32.mrb[0].mxu0
        %v4177 = vadd.f32 0.0, %v4176
        %v4178 = vpop.f32.mrb[0].mxu0
        %4179 = vmatprep.mubr.f32.mxu0 0.0
        %4180 = vmatmul.mubr.f32.gmra.mrb[0].mxu0 %v575
        %v4181 = vpop.f32.mrb[0].mxu0
        %v4182 = vadd.f32 0.0, %v4181
        %v4183 = vpop.f32.mrb[0].mxu0
        %4184 = vmatprep.mubr.f32.mxu0 0.0
        %4185 = vmatmul.mubr.f32.gmra.mrb[0].mxu0 %v576
        %v4186 = vpop.f32.mrb[0].mxu0
        %v4187 = vadd.f32 0.0, %v4186
        %v4188 = vpop.f32.mrb[0].mxu0
        %4189 = vmatprep.mubr.f32.mxu0 0.0
        %4190 = vmatmul.mubr.f32.gmra.mrb[0].mxu0 %v577
        %v4191 = vpop.f32.mrb[0].mxu0
        %v4192 = vadd.f32 0.0, %v4191
        %v4193 = vpop.f32.mrb[0].mxu0
        %4194 = vmatprep.mubr.f32.mxu0 0.0
        %4195 = vmatmul.mubr.f32.gmra.mrb[0].mxu0 %v578
        %v4196 = vpop.f32.mrb[0].mxu0
        %v4197 = vadd.f32 0.0, %v4196
        %v4198 = vpop.f32.mrb[0].mxu0
        %4199 = vmatprep.mubr.f32.mxu0 0.0
        %4200 = vmatmul.mubr.f32.gmra.mrb[0].mxu0 %v579
        %v4201 = vpop.f32.mrb[0].mxu0
        %v4202 = vadd.f32 0.0, %v4201
        %v4203 = vpop.f32.mrb[0].mxu0
        %4204 = vmatprep.mubr.f32.mxu0 0.0
        %4205 = vmatmul.mubr.f32.gmra.mrb[0].mxu0 %v580
        %v4206 = vpop.f32.mrb[0].mxu0
        %v4207 = vadd.f32 0.0, %v4206
        %v4208 = vpop.f32.mrb[0].mxu0
        %4209 = vdwg.mxu0
        %s4210 = scalar_lea.vmem %s2, 512
        %v4211 = vld [vmem:[%s4210] sm:$0xff]
        %v4212 = vld [vmem:[%s4210 + $0x8] sm:$0xff]
        %v4213 = vld [vmem:[%s4210 + $0x10] sm:$0xff]
        %v4214 = vld [vmem:[%s4210 + $0x18] sm:$0xff]
        %v4215 = vld [vmem:[%s4210 + $0x20] sm:$0xff]
        %v4216 = vld [vmem:[%s4210 + $0x28] sm:$0xff]
        %v4217 = vld [vmem:[%s4210 + $0x30] sm:$0xff]
        %v4218 = vld [vmem:[%s4210 + $0x38] sm:$0xff]
        %v4219 = vld [vmem:[%s4210 + $0x40] sm:$0xff]
        %v4220 = vld [vmem:[%s4210 + $0x48] sm:$0xff]
        %v4221 = vld [vmem:[%s4210 + $0x50] sm:$0xff]
        %v4222 = vld [vmem:[%s4210 + $0x58] sm:$0xff]
        %v4223 = vld [vmem:[%s4210 + $0x60] sm:$0xff]
        %v4224 = vld [vmem:[%s4210 + $0x68] sm:$0xff]
        %v4225 = vld [vmem:[%s4210 + $0x70] sm:$0xff]
        %v4226 = vld [vmem:[%s4210 + $0x78] sm:$0xff]
        %4227 = vmatprep.subr.mxu0 0.0
        %4228 = vmatpush1.msra.mxu0 %v4211
        %4229 = vmatprep.subr.mxu0 0.0
        %4230 = vmatpush1.msra.mxu0 %v4212
        %4231 = vmatprep.subr.mxu0 0.0
        %4232 = vmatpush1.msra.mxu0 %v4213
        %4233 = vmatprep.subr.mxu0 0.0
        %4234 = vmatpush1.msra.mxu0 %v4214
        %4235 = vmatprep.subr.mxu0 0.0
        %4236 = vmatpush1.msra.mxu0 %v4215
        %4237 = vmatprep.subr.mxu0 0.0
        %4238 = vmatpush1.msra.mxu0 %v4216
        %4239 = vmatprep.subr.mxu0 0.0
        %4240 = vmatpush1.msra.mxu0 %v4217
        %4241 = vmatprep.subr.mxu0 0.0
        %4242 = vmatpush1.msra.mxu0 %v4218
        %4243 = vmatprep.subr.mxu0 0.0
        %4244 = vmatpush1.msra.mxu0 %v4219
        %4245 = vmatprep.subr.mxu0 0.0
        %4246 = vmatpush1.msra.mxu0 %v4220
        %4247 = vmatprep.subr.mxu0 0.0
        %4248 = vmatpush1.msra.mxu0 %v4221
        %4249 = vmatprep.subr.mxu0 0.0
        %4250 = vmatpush1.msra.mxu0 %v4222
        %4251 = vmatprep.subr.mxu0 0.0
        %4252 = vmatpush1.msra.mxu0 %v4223
        %4253 = vmatprep.subr.mxu0 0.0
        %4254 = vmatpush1.msra.mxu0 %v4224
        %4255 = vmatprep.subr.mxu0 0.0
        %4256 = vmatpush1.msra.mxu0 %v4225
        %4257 = vmatprep.subr.mxu0 0.0
        %4258 = vmatpush1.msra.mxu0 %v4226
        %4259 = vmatprep.subr.mxu0 0.0
        %4260 = vmatpush1.msra.mxu0 0.0
        %4261 = vmatprep.subr.mxu0 0.0
        %4262 = vmatpush1.msra.mxu0 0.0
        %4263 = vmatprep.subr.mxu0 0.0
        %4264 = vmatpush1.msra.mxu0 0.0
        %4265 = vmatprep.subr.mxu0 0.0
        %4266 = vmatpush1.msra.mxu0 0.0
        %4267 = vmatprep.subr.mxu0 0.0
        %4268 = vmatpush1.msra.mxu0 0.0
        %4269 = vmatprep.subr.mxu0 0.0
        %4270 = vmatpush1.msra.mxu0 0.0
        %4271 = vmatprep.subr.mxu0 0.0
        %4272 = vmatpush1.msra.mxu0 0.0
        %4273 = vmatprep.subr.mxu0 0.0
        %4274 = vmatpush1.msra.mxu0 0.0
        %4275 = vmatprep.subr.mxu0 0.0
        %4276 = vmatpush1.msra.mxu0 0.0
        %4277 = vmatprep.subr.mxu0 0.0
        %4278 = vmatpush1.msra.mxu0 0.0
        %4279 = vmatprep.subr.mxu0 0.0
        %4280 = vmatpush1.msra.mxu0 0.0
        %4281 = vmatprep.subr.mxu0 0.0
        %4282 = vmatpush1.msra.mxu0 0.0
        %4283 = vmatprep.subr.mxu0 0.0
        %4284 = vmatpush1.msra.mxu0 0.0
        %4285 = vmatprep.subr.mxu0 0.0
        %4286 = vmatpush1.msra.mxu0 0.0
        %4287 = vmatprep.subr.mxu0 0.0
        %4288 = vmatpush1.msra.mxu0 0.0
        %4289 = vmatprep.subr.mxu0 0.0
        %4290 = vmatpush1.msra.mxu0 0.0
        %4291 = vmatprep.mubr.f32.mxu0 0.0
        %4292 = vmatmul.mubr.f32.gmra.mrb[0].mxu0 %v573
        %v4293 = vpop.f32.mrb[0].mxu0
        %v4294 = vadd.f32 0.0, %v4293
        %v4295 = vpop.f32.mrb[0].mxu0
        %4296 = vmatprep.mubr.f32.mxu0 0.0
        %4297 = vmatmul.mubr.f32.gmra.mrb[0].mxu0 %v574
        %v4298 = vpop.f32.mrb[0].mxu0
        %v4299 = vadd.f32 0.0, %v4298
        %v4300 = vpop.f32.mrb[0].mxu0
        %4301 = vmatprep.mubr.f32.mxu0 0.0
        %4302 = vmatmul.mubr.f32.gmra.mrb[0].mxu0 %v575
        %v4303 = vpop.f32.mrb[0].mxu0
        %v4304 = vadd.f32 0.0, %v4303
        %v4305 = vpop.f32.mrb[0].mxu0
        %4306 = vmatprep.mubr.f32.mxu0 0.0
        %4307 = vmatmul.mubr.f32.gmra.mrb[0].mxu0 %v576
        %v4308 = vpop.f32.mrb[0].mxu0
        %v4309 = vadd.f32 0.0, %v4308
        %v4310 = vpop.f32.mrb[0].mxu0
        %4311 = vmatprep.mubr.f32.mxu0 0.0
        %4312 = vmatmul.mubr.f32.gmra.mrb[0].mxu0 %v577
        %v4313 = vpop.f32.mrb[0].mxu0
        %v4314 = vadd.f32 0.0, %v4313
        %v4315 = vpop.f32.mrb[0].mxu0
        %4316 = vmatprep.mubr.f32.mxu0 0.0
        %4317 = vmatmul.mubr.f32.gmra.mrb[0].mxu0 %v578
        %v4318 = vpop.f32.mrb[0].mxu0
        %v4319 = vadd.f32 0.0, %v4318
        %v4320 = vpop.f32.mrb[0].mxu0
        %4321 = vmatprep.mubr.f32.mxu0 0.0
        %4322 = vmatmul.mubr.f32.gmra.mrb[0].mxu0 %v579
        %v4323 = vpop.f32.mrb[0].mxu0
        %v4324 = vadd.f32 0.0, %v4323
        %v4325 = vpop.f32.mrb[0].mxu0
        %4326 = vmatprep.mubr.f32.mxu0 0.0
        %4327 = vmatmul.mubr.f32.gmra.mrb[0].mxu0 %v580
        %v4328 = vpop.f32.mrb[0].mxu0
        %v4329 = vadd.f32 0.0, %v4328
        %v4330 = vpop.f32.mrb[0].mxu0
        %4331 = vdwg.mxu0
        %s4332 = scalar_lea.vmem %s4, 512
        %v4333 = vld [vmem:[%s4332] sm:$0xff]
        %v4334 = vld [vmem:[%s4332 + $0x8] sm:$0xff]
        %v4335 = vld [vmem:[%s4332 + $0x10] sm:$0xff]
        %v4336 = vld [vmem:[%s4332 + $0x18] sm:$0xff]
        %v4337 = vld [vmem:[%s4332 + $0x20] sm:$0xff]
        %v4338 = vld [vmem:[%s4332 + $0x28] sm:$0xff]
        %v4339 = vld [vmem:[%s4332 + $0x30] sm:$0xff]
        %v4340 = vld [vmem:[%s4332 + $0x38] sm:$0xff]
        %v4341 = vld [vmem:[%s4332 + $0x40] sm:$0xff]
        %v4342 = vld [vmem:[%s4332 + $0x48] sm:$0xff]
        %v4343 = vld [vmem:[%s4332 + $0x50] sm:$0xff]
        %v4344 = vld [vmem:[%s4332 + $0x58] sm:$0xff]
        %v4345 = vld [vmem:[%s4332 + $0x60] sm:$0xff]
        %v4346 = vld [vmem:[%s4332 + $0x68] sm:$0xff]
        %v4347 = vld [vmem:[%s4332 + $0x70] sm:$0xff]
        %v4348 = vld [vmem:[%s4332 + $0x78] sm:$0xff]
        %4349 = vmatprep.subr.mxu0 0.0
        %4350 = vmatpush1.msra.mxu0 %v4333
        %4351 = vmatprep.subr.mxu0 0.0
        %4352 = vmatpush1.msra.mxu0 %v4334
        %4353 = vmatprep.subr.mxu0 0.0
        %4354 = vmatpush1.msra.mxu0 %v4335
        %4355 = vmatprep.subr.mxu0 0.0
        %4356 = vmatpush1.msra.mxu0 %v4336
        %4357 = vmatprep.subr.mxu0 0.0
        %4358 = vmatpush1.msra.mxu0 %v4337
        %4359 = vmatprep.subr.mxu0 0.0
        %4360 = vmatpush1.msra.mxu0 %v4338
        %4361 = vmatprep.subr.mxu0 0.0
        %4362 = vmatpush1.msra.mxu0 %v4339
        %4363 = vmatprep.subr.mxu0 0.0
        %4364 = vmatpush1.msra.mxu0 %v4340
        %4365 = vmatprep.subr.mxu0 0.0
        %4366 = vmatpush1.msra.mxu0 %v4341
        %4367 = vmatprep.subr.mxu0 0.0
        %4368 = vmatpush1.msra.mxu0 %v4342
        %4369 = vmatprep.subr.mxu0 0.0
        %4370 = vmatpush1.msra.mxu0 %v4343
        %4371 = vmatprep.subr.mxu0 0.0
        %4372 = vmatpush1.msra.mxu0 %v4344
        %4373 = vmatprep.subr.mxu0 0.0
        %4374 = vmatpush1.msra.mxu0 %v4345
        %4375 = vmatprep.subr.mxu0 0.0
        %4376 = vmatpush1.msra.mxu0 %v4346
        %4377 = vmatprep.subr.mxu0 0.0
        %4378 = vmatpush1.msra.mxu0 %v4347
        %4379 = vmatprep.subr.mxu0 0.0
        %4380 = vmatpush1.msra.mxu0 %v4348
        %4381 = vmatprep.subr.mxu0 0.0
        %4382 = vmatpush1.msra.mxu0 0.0
        %4383 = vmatprep.subr.mxu0 0.0
        %4384 = vmatpush1.msra.mxu0 0.0
        %4385 = vmatprep.subr.mxu0 0.0
        %4386 = vmatpush1.msra.mxu0 0.0
        %4387 = vmatprep.subr.mxu0 0.0
        %4388 = vmatpush1.msra.mxu0 0.0
        %4389 = vmatprep.subr.mxu0 0.0
        %4390 = vmatpush1.msra.mxu0 0.0
        %4391 = vmatprep.subr.mxu0 0.0
        %4392 = vmatpush1.msra.mxu0 0.0
        %4393 = vmatprep.subr.mxu0 0.0
        %4394 = vmatpush1.msra.mxu0 0.0
        %4395 = vmatprep.subr.mxu0 0.0
        %4396 = vmatpush1.msra.mxu0 0.0
        %4397 = vmatprep.subr.mxu0 0.0
        %4398 = vmatpush1.msra.mxu0 0.0
        %4399 = vmatprep.subr.mxu0 0.0
        %4400 = vmatpush1.msra.mxu0 0.0
        %4401 = vmatprep.subr.mxu0 0.0
        %4402 = vmatpush1.msra.mxu0 0.0
        %4403 = vmatprep.subr.mxu0 0.0
        %4404 = vmatpush1.msra.mxu0 0.0
        %4405 = vmatprep.subr.mxu0 0.0
        %4406 = vmatpush1.msra.mxu0 0.0
        %4407 = vmatprep.subr.mxu0 0.0
        %4408 = vmatpush1.msra.mxu0 0.0
        %4409 = vmatprep.subr.mxu0 0.0
        %4410 = vmatpush1.msra.mxu0 0.0
        %4411 = vmatprep.subr.mxu0 0.0
        %4412 = vmatpush1.msra.mxu0 0.0
        %4413 = vmatprep.mubr.f32.mxu0 0.0
        %4414 = vmatmul.mubr.f32.gmra.mrb[0].mxu0 %v573
        %v4415 = vpop.f32.mrb[0].mxu0
        %v4416 = vadd.f32 0.0, %v4415
        %v4417 = vpop.f32.mrb[0].mxu0
        %4418 = vmatprep.mubr.f32.mxu0 0.0
        %4419 = vmatmul.mubr.f32.gmra.mrb[0].mxu0 %v574
        %v4420 = vpop.f32.mrb[0].mxu0
        %v4421 = vadd.f32 0.0, %v4420
        %v4422 = vpop.f32.mrb[0].mxu0
        %4423 = vmatprep.mubr.f32.mxu0 0.0
        %4424 = vmatmul.mubr.f32.gmra.mrb[0].mxu0 %v575
        %v4425 = vpop.f32.mrb[0].mxu0
        %v4426 = vadd.f32 0.0, %v4425
        %v4427 = vpop.f32.mrb[0].mxu0
        %4428 = vmatprep.mubr.f32.mxu0 0.0
        %4429 = vmatmul.mubr.f32.gmra.mrb[0].mxu0 %v576
        %v4430 = vpop.f32.mrb[0].mxu0
        %v4431 = vadd.f32 0.0, %v4430
        %v4432 = vpop.f32.mrb[0].mxu0
        %4433 = vmatprep.mubr.f32.mxu0 0.0
        %4434 = vmatmul.mubr.f32.gmra.mrb[0].mxu0 %v577
        %v4435 = vpop.f32.mrb[0].mxu0
        %v4436 = vadd.f32 0.0, %v4435
        %v4437 = vpop.f32.mrb[0].mxu0
        %4438 = vmatprep.mubr.f32.mxu0 0.0
        %4439 = vmatmul.mubr.f32.gmra.mrb[0].mxu0 %v578
        %v4440 = vpop.f32.mrb[0].mxu0
        %v4441 = vadd.f32 0.0, %v4440
        %v4442 = vpop.f32.mrb[0].mxu0
        %4443 = vmatprep.mubr.f32.mxu0 0.0
        %4444 = vmatmul.mubr.f32.gmra.mrb[0].mxu0 %v579
        %v4445 = vpop.f32.mrb[0].mxu0
        %v4446 = vadd.f32 0.0, %v4445
        %v4447 = vpop.f32.mrb[0].mxu0
        %4448 = vmatprep.mubr.f32.mxu0 0.0
        %4449 = vmatmul.mubr.f32.gmra.mrb[0].mxu0 %v580
        %v4450 = vpop.f32.mrb[0].mxu0
        %v4451 = vadd.f32 0.0, %v4450
        %v4452 = vpop.f32.mrb[0].mxu0
        %4453 = vdwg.mxu0
        %v4455 = vsel %vm952, %v4172, 0
        %v4458 = vsel %vm952, %v4177, 0
        %v4461 = vsel %vm952, %v4182, 0
        %v4464 = vsel %vm952, %v4187, 0
        %v4467 = vsel %vm952, %v4192, 0
        %v4470 = vsel %vm952, %v4197, 0
        %v4473 = vsel %vm952, %v4202, 0
        %v4476 = vsel %vm952, %v4207, 0
        %v4479 = vsel %vm952, %v4294, 0
        %v4482 = vsel %vm952, %v4299, 0
        %v4485 = vsel %vm952, %v4304, 0
        %v4488 = vsel %vm952, %v4309, 0
        %v4491 = vsel %vm952, %v4314, 0
        %v4494 = vsel %vm952, %v4319, 0
        %v4497 = vsel %vm952, %v4324, 0
        %v4500 = vsel %vm952, %v4329, 0
        %4502 = vmatprep.subr.mxu0 0.0
        %4503 = vmatpush1.xpose.msra.mxu0 %v4479
        %4504 = vmatprep.subr.mxu0 0.0
        %4505 = vmatpush1.xpose.msra.mxu0 %v4482
        %4506 = vmatprep.subr.mxu0 0.0
        %4507 = vmatpush1.xpose.msra.mxu0 %v4485
        %4508 = vmatprep.subr.mxu0 0.0
        %4509 = vmatpush1.xpose.msra.mxu0 %v4488
        %4510 = vmatprep.subr.mxu0 0.0
        %4511 = vmatpush1.xpose.msra.mxu0 %v4491
        %4512 = vmatprep.subr.mxu0 0.0
        %4513 = vmatpush1.xpose.msra.mxu0 %v4494
        %4514 = vmatprep.subr.mxu0 0.0
        %4515 = vmatpush1.xpose.msra.mxu0 %v4497
        %4516 = vmatprep.subr.mxu0 0.0
        %4517 = vmatpush1.xpose.msra.mxu0 %v4500
        %4518 = vmatprep.subr.mxu0 0.0
        %4519 = vmatpush1.xpose.msra.mxu0 0.0
        %4520 = vmatprep.subr.mxu0 0.0
        %4521 = vmatpush1.xpose.msra.mxu0 0.0
        %4522 = vmatprep.subr.mxu0 0.0
        %4523 = vmatpush1.xpose.msra.mxu0 0.0
        %4524 = vmatprep.subr.mxu0 0.0
        %4525 = vmatpush1.xpose.msra.mxu0 0.0
        %4526 = vmatprep.subr.mxu0 0.0
        %4527 = vmatpush1.xpose.msra.mxu0 0.0
        %4528 = vmatprep.subr.mxu0 0.0
        %4529 = vmatpush1.xpose.msra.mxu0 0.0
        %4530 = vmatprep.subr.mxu0 0.0
        %4531 = vmatpush1.xpose.msra.mxu0 0.0
        %4532 = vmatprep.subr.mxu0 0.0
        %4533 = vmatpush1.xpose.msra.mxu0 0.0
        %4534 = vmatprep.subr.mxu0 0.0
        %4535 = vmatpush1.xpose.msra.mxu0 0.0
        %4536 = vmatprep.subr.mxu0 0.0
        %4537 = vmatpush1.xpose.msra.mxu0 0.0
        %4538 = vmatprep.subr.mxu0 0.0
        %4539 = vmatpush1.xpose.msra.mxu0 0.0
        %4540 = vmatprep.subr.mxu0 0.0
        %4541 = vmatpush1.xpose.msra.mxu0 0.0
        %4542 = vmatprep.subr.mxu0 0.0
        %4543 = vmatpush1.xpose.msra.mxu0 0.0
        %4544 = vmatprep.subr.mxu0 0.0
        %4545 = vmatpush1.xpose.msra.mxu0 0.0
        %4546 = vmatprep.subr.mxu0 0.0
        %4547 = vmatpush1.xpose.msra.mxu0 0.0
        %4548 = vmatprep.subr.mxu0 0.0
        %4549 = vmatpush1.xpose.msra.mxu0 0.0
        %4550 = vmatprep.subr.mxu0 0.0
        %4551 = vmatpush1.xpose.msra.mxu0 0.0
        %4552 = vmatprep.subr.mxu0 0.0
        %4553 = vmatpush1.xpose.msra.mxu0 0.0
        %4554 = vmatprep.subr.mxu0 0.0
        %4555 = vmatpush1.xpose.msra.mxu0 0.0
        %4556 = vmatprep.subr.mxu0 0.0
        %4557 = vmatpush1.xpose.msra.mxu0 0.0
        %4558 = vmatprep.subr.mxu0 0.0
        %4559 = vmatpush1.xpose.msra.mxu0 0.0
        %4560 = vmatprep.subr.mxu0 0.0
        %4561 = vmatpush1.xpose.msra.mxu0 0.0
        %4562 = vmatprep.subr.mxu0 0.0
        %4563 = vmatpush1.xpose.msra.mxu0 0.0
        %4564 = vmatprep.subr.mxu0 0.0
        %4565 = vmatpush1.xpose.msra.mxu0 0.0
        %4566 = vmatprep.mubr.f32.mxu0 0.0
        %4567 = vmatmul.mubr.f32.gmra.mrb[0].mxu0 %v4455
        %v4568 = vpop.f32.mrb[0].mxu0
        %v4569 = vadd.f32 %v581, %v4568
        %v4570 = vpop.f32.mrb[0].mxu0
        %4571 = vmatprep.mubr.f32.mxu0 0.0
        %4572 = vmatmul.mubr.f32.gmra.mrb[0].mxu0 %v4458
        %v4573 = vpop.f32.mrb[0].mxu0
        %v4574 = vadd.f32 %v582, %v4573
        %v4575 = vpop.f32.mrb[0].mxu0
        %4576 = vmatprep.mubr.f32.mxu0 0.0
        %4577 = vmatmul.mubr.f32.gmra.mrb[0].mxu0 %v4461
        %v4578 = vpop.f32.mrb[0].mxu0
        %v4579 = vadd.f32 %v583, %v4578
        %v4580 = vpop.f32.mrb[0].mxu0
        %4581 = vmatprep.mubr.f32.mxu0 0.0
        %4582 = vmatmul.mubr.f32.gmra.mrb[0].mxu0 %v4464
        %v4583 = vpop.f32.mrb[0].mxu0
        %v4584 = vadd.f32 %v584, %v4583
        %v4585 = vpop.f32.mrb[0].mxu0
        %4586 = vmatprep.mubr.f32.mxu0 0.0
        %4587 = vmatmul.mubr.f32.gmra.mrb[0].mxu0 %v4467
        %v4588 = vpop.f32.mrb[0].mxu0
        %v4589 = vadd.f32 %v585, %v4588
        %v4590 = vpop.f32.mrb[0].mxu0
        %4591 = vmatprep.mubr.f32.mxu0 0.0
        %4592 = vmatmul.mubr.f32.gmra.mrb[0].mxu0 %v4470
        %v4593 = vpop.f32.mrb[0].mxu0
        %v4594 = vadd.f32 %v586, %v4593
        %v4595 = vpop.f32.mrb[0].mxu0
        %4596 = vmatprep.mubr.f32.mxu0 0.0
        %4597 = vmatmul.mubr.f32.gmra.mrb[0].mxu0 %v4473
        %v4598 = vpop.f32.mrb[0].mxu0
        %v4599 = vadd.f32 %v587, %v4598
        %v4600 = vpop.f32.mrb[0].mxu0
        %4601 = vmatprep.mubr.f32.mxu0 0.0
        %4602 = vmatmul.mubr.f32.gmra.mrb[0].mxu0 %v4476
        %v4603 = vpop.f32.mrb[0].mxu0
        %v4604 = vadd.f32 %v588, %v4603
        %v4605 = vpop.f32.mrb[0].mxu0
        %4606 = vdwg.mxu0
        %v4607 = vsel %vm1106, %v4569, -inf
        %4608 = vmax.xlane.f32.xlu0 %v4607
        %v4609 = vpop.xlane.xlu0 %4608
        %v4610 = vsel %vm1106, %v4574, -inf
        %4611 = vmax.xlane.f32.xlu0 %v4610
        %v4612 = vpop.xlane.xlu0 %4611
        %v4613 = vsel %vm1106, %v4579, -inf
        %4614 = vmax.xlane.f32.xlu0 %v4613
        %v4615 = vpop.xlane.xlu0 %4614
        %v4616 = vsel %vm1106, %v4584, -inf
        %4617 = vmax.xlane.f32.xlu0 %v4616
        %v4618 = vpop.xlane.xlu0 %4617
        %v4619 = vsel %vm1106, %v4589, -inf
        %4620 = vmax.xlane.f32.xlu0 %v4619
        %v4621 = vpop.xlane.xlu0 %4620
        %v4622 = vsel %vm1106, %v4594, -inf
        %4623 = vmax.xlane.f32.xlu0 %v4622
        %v4624 = vpop.xlane.xlu0 %4623
        %v4625 = vsel %vm1106, %v4599, -inf
        %4626 = vmax.xlane.f32.xlu0 %v4625
        %v4627 = vpop.xlane.xlu0 %4626
        %v4628 = vsel %vm1106, %v4604, -inf
        %4629 = vmax.xlane.f32.xlu0 %v4628
        %v4630 = vpop.xlane.xlu0 %4629
        %v4631 = vsub.f32 %v4569, %v4609
        %v4632 = vsub.f32 %v4574, %v4612
        %v4633 = vsub.f32 %v4579, %v4615
        %v4634 = vsub.f32 %v4584, %v4618
        %v4635 = vsub.f32 %v4589, %v4621
        %v4636 = vsub.f32 %v4594, %v4624
        %v4637 = vsub.f32 %v4599, %v4627
        %v4638 = vsub.f32 %v4604, %v4630
        %v4639 = vmul.f32 %v4631, 1.442695
        %v4640 = vpow.pop %v4639
        %v4641 = vmul.f32 %v4632, 1.442695
        %v4642 = vpow.pop %v4641
        %v4643 = vmul.f32 %v4633, 1.442695
        %v4644 = vpow.pop %v4643
        %v4645 = vmul.f32 %v4634, 1.442695
        %v4646 = vpow.pop %v4645
        %v4647 = vmul.f32 %v4635, 1.442695
        %v4648 = vpow.pop %v4647
        %v4649 = vmul.f32 %v4636, 1.442695
        %v4650 = vpow.pop %v4649
        %v4651 = vmul.f32 %v4637, 1.442695
        %v4652 = vpow.pop %v4651
        %v4653 = vmul.f32 %v4638, 1.442695
        %v4654 = vpow.pop %v4653
        %v4655 = vsel %vm1106, %v4640, 0.0
        %4656 = vadd.xlane.f32.xlu0 %v4655
        %v4657 = vpop.xlane.xlu0 %4656
        %v4658 = vsel %vm1106, %v4642, 0.0
        %4659 = vadd.xlane.f32.xlu0 %v4658
        %v4660 = vpop.xlane.xlu0 %4659
        %v4661 = vsel %vm1106, %v4644, 0.0
        %4662 = vadd.xlane.f32.xlu0 %v4661
        %v4663 = vpop.xlane.xlu0 %4662
        %v4664 = vsel %vm1106, %v4646, 0.0
        %4665 = vadd.xlane.f32.xlu0 %v4664
        %v4666 = vpop.xlane.xlu0 %4665
        %v4667 = vsel %vm1106, %v4648, 0.0
        %4668 = vadd.xlane.f32.xlu0 %v4667
        %v4669 = vpop.xlane.xlu0 %4668
        %v4670 = vsel %vm1106, %v4650, 0.0
        %4671 = vadd.xlane.f32.xlu0 %v4670
        %v4672 = vpop.xlane.xlu0 %4671
        %v4673 = vsel %vm1106, %v4652, 0.0
        %4674 = vadd.xlane.f32.xlu0 %v4673
        %v4675 = vpop.xlane.xlu0 %4674
        %v4676 = vsel %vm1106, %v4654, 0.0
        %4677 = vadd.xlane.f32.xlu0 %v4676
        %v4678 = vpop.xlane.xlu0 %4677
        %v4679 = vrcp.pop %v4657
        %v4680 = vrcp.pop %v4660
        %v4681 = vrcp.pop %v4663
        %v4682 = vrcp.pop %v4666
        %v4683 = vrcp.pop %v4669
        %v4684 = vrcp.pop %v4672
        %v4685 = vrcp.pop %v4675
        %v4686 = vrcp.pop %v4678
        %v4687 = vmul.f32 %v4640, %v4679
        %v4688 = vmul.f32 %v4642, %v4680
        %v4689 = vmul.f32 %v4644, %v4681
        %v4690 = vmul.f32 %v4646, %v4682
        %v4691 = vmul.f32 %v4648, %v4683
        %v4692 = vmul.f32 %v4650, %v4684
        %v4693 = vmul.f32 %v4652, %v4685
        %v4694 = vmul.f32 %v4654, %v4686
        %v4696 = vsel %vm1106, %v4687, 0
        %v4699 = vsel %vm1106, %v4688, 0
        %v4702 = vsel %vm1106, %v4689, 0
        %v4705 = vsel %vm1106, %v4690, 0
        %v4708 = vsel %vm1106, %v4691, 0
        %v4711 = vsel %vm1106, %v4692, 0
        %v4714 = vsel %vm1106, %v4693, 0
        %v4717 = vsel %vm1106, %v4694, 0
        %4719 = vmatprep.subr.mxu0 0.0
        %4720 = vmatpush1.msra.mxu0 %v4416
        %4721 = vmatprep.subr.mxu0 0.0
        %4722 = vmatpush1.msra.mxu0 %v4421
        %4723 = vmatprep.subr.mxu0 0.0
        %4724 = vmatpush1.msra.mxu0 %v4426
        %4725 = vmatprep.subr.mxu0 0.0
        %4726 = vmatpush1.msra.mxu0 %v4431
        %4727 = vmatprep.subr.mxu0 0.0
        %4728 = vmatpush1.msra.mxu0 %v4436
        %4729 = vmatprep.subr.mxu0 0.0
        %4730 = vmatpush1.msra.mxu0 %v4441
        %4731 = vmatprep.subr.mxu0 0.0
        %4732 = vmatpush1.msra.mxu0 %v4446
        %4733 = vmatprep.subr.mxu0 0.0
        %4734 = vmatpush1.msra.mxu0 %v4451
        %4735 = vmatprep.subr.mxu0 0.0
        %4736 = vmatpush1.msra.mxu0 0.0
        %4737 = vmatprep.subr.mxu0 0.0
        %4738 = vmatpush1.msra.mxu0 0.0
        %4739 = vmatprep.subr.mxu0 0.0
        %4740 = vmatpush1.msra.mxu0 0.0
        %4741 = vmatprep.subr.mxu0 0.0
        %4742 = vmatpush1.msra.mxu0 0.0
        %4743 = vmatprep.subr.mxu0 0.0
        %4744 = vmatpush1.msra.mxu0 0.0
        %4745 = vmatprep.subr.mxu0 0.0
        %4746 = vmatpush1.msra.mxu0 0.0
        %4747 = vmatprep.subr.mxu0 0.0
        %4748 = vmatpush1.msra.mxu0 0.0
        %4749 = vmatprep.subr.mxu0 0.0
        %4750 = vmatpush1.msra.mxu0 0.0
        %4751 = vmatprep.subr.mxu0 0.0
        %4752 = vmatpush1.msra.mxu0 0.0
        %4753 = vmatprep.subr.mxu0 0.0
        %4754 = vmatpush1.msra.mxu0 0.0
        %4755 = vmatprep.subr.mxu0 0.0
        %4756 = vmatpush1.msra.mxu0 0.0
        %4757 = vmatprep.subr.mxu0 0.0
        %4758 = vmatpush1.msra.mxu0 0.0
        %4759 = vmatprep.subr.mxu0 0.0
        %4760 = vmatpush1.msra.mxu0 0.0
        %4761 = vmatprep.subr.mxu0 0.0
        %4762 = vmatpush1.msra.mxu0 0.0
        %4763 = vmatprep.subr.mxu0 0.0
        %4764 = vmatpush1.msra.mxu0 0.0
        %4765 = vmatprep.subr.mxu0 0.0
        %4766 = vmatpush1.msra.mxu0 0.0
        %4767 = vmatprep.subr.mxu0 0.0
        %4768 = vmatpush1.msra.mxu0 0.0
        %4769 = vmatprep.subr.mxu0 0.0
        %4770 = vmatpush1.msra.mxu0 0.0
        %4771 = vmatprep.subr.mxu0 0.0
        %4772 = vmatpush1.msra.mxu0 0.0
        %4773 = vmatprep.subr.mxu0 0.0
        %4774 = vmatpush1.msra.mxu0 0.0
        %4775 = vmatprep.subr.mxu0 0.0
        %4776 = vmatpush1.msra.mxu0 0.0
        %4777 = vmatprep.subr.mxu0 0.0
        %4778 = vmatpush1.msra.mxu0 0.0
        %4779 = vmatprep.subr.mxu0 0.0
        %4780 = vmatpush1.msra.mxu0 0.0
        %4781 = vmatprep.subr.mxu0 0.0
        %4782 = vmatpush1.msra.mxu0 0.0
        %4783 = vmatprep.mubr.f32.mxu0 0.0
        %4784 = vmatmul.mubr.f32.gmra.mrb[0].mxu0 %v4696
        %v4785 = vpop.f32.mrb[0].mxu0
        %v4786 = vadd.f32 0.0, %v4785
        %v4787 = vpop.f32.mrb[0].mxu0
        %4788 = vmatprep.mubr.f32.mxu0 0.0
        %4789 = vmatmul.mubr.f32.gmra.mrb[0].mxu0 %v4699
        %v4790 = vpop.f32.mrb[0].mxu0
        %v4791 = vadd.f32 0.0, %v4790
        %v4792 = vpop.f32.mrb[0].mxu0
        %4793 = vmatprep.mubr.f32.mxu0 0.0
        %4794 = vmatmul.mubr.f32.gmra.mrb[0].mxu0 %v4702
        %v4795 = vpop.f32.mrb[0].mxu0
        %v4796 = vadd.f32 0.0, %v4795
        %v4797 = vpop.f32.mrb[0].mxu0
        %4798 = vmatprep.mubr.f32.mxu0 0.0
        %4799 = vmatmul.mubr.f32.gmra.mrb[0].mxu0 %v4705
        %v4800 = vpop.f32.mrb[0].mxu0
        %v4801 = vadd.f32 0.0, %v4800
        %v4802 = vpop.f32.mrb[0].mxu0
        %4803 = vmatprep.mubr.f32.mxu0 0.0
        %4804 = vmatmul.mubr.f32.gmra.mrb[0].mxu0 %v4708
        %v4805 = vpop.f32.mrb[0].mxu0
        %v4806 = vadd.f32 0.0, %v4805
        %v4807 = vpop.f32.mrb[0].mxu0
        %4808 = vmatprep.mubr.f32.mxu0 0.0
        %4809 = vmatmul.mubr.f32.gmra.mrb[0].mxu0 %v4711
        %v4810 = vpop.f32.mrb[0].mxu0
        %v4811 = vadd.f32 0.0, %v4810
        %v4812 = vpop.f32.mrb[0].mxu0
        %4813 = vmatprep.mubr.f32.mxu0 0.0
        %4814 = vmatmul.mubr.f32.gmra.mrb[0].mxu0 %v4714
        %v4815 = vpop.f32.mrb[0].mxu0
        %v4816 = vadd.f32 0.0, %v4815
        %v4817 = vpop.f32.mrb[0].mxu0
        %4818 = vmatprep.mubr.f32.mxu0 0.0
        %4819 = vmatmul.mubr.f32.gmra.mrb[0].mxu0 %v4717
        %v4820 = vpop.f32.mrb[0].mxu0
        %v4821 = vadd.f32 0.0, %v4820
        %v4822 = vpop.f32.mrb[0].mxu0
        %4823 = vdwg.mxu0
        %s4824 = scalar_lea.vmem %s5, 64
        %v4825 = vld [vmem:[%s4824] sm:$0xff]
        %v4826 = vld [vmem:[%s4824 + $0x8] sm:$0xf]
        %v4828 = vsel %vm952, %v4786, 0
        %v4831 = vsel %vm952, %v4791, 0
        %v4834 = vsel %vm952, %v4796, 0
        %v4837 = vsel %vm952, %v4801, 0
        %v4840 = vsel %vm952, %v4806, 0
        %v4843 = vsel %vm952, %v4811, 0
        %v4846 = vsel %vm952, %v4816, 0
        %v4849 = vsel %vm952, %v4821, 0
        %v4852 = vsel %vm2089, %v4826, 0
        %4854 = vmatprep.subr.mxu0 0.0
        %4855 = vmatpush1.msra.mxu0 %v4825
        %4856 = vmatprep.subr.mxu0 0.0
        %4857 = vmatpush1.msra.mxu0 %v4852
        %4858 = vmatprep.subr.mxu0 0.0
        %4859 = vmatpush1.msra.mxu0 0.0
        %4860 = vmatprep.subr.mxu0 0.0
        %4861 = vmatpush1.msra.mxu0 0.0
        %4862 = vmatprep.subr.mxu0 0.0
        %4863 = vmatpush1.msra.mxu0 0.0
        %4864 = vmatprep.subr.mxu0 0.0
        %4865 = vmatpush1.msra.mxu0 0.0
        %4866 = vmatprep.subr.mxu0 0.0
        %4867 = vmatpush1.msra.mxu0 0.0
        %4868 = vmatprep.subr.mxu0 0.0
        %4869 = vmatpush1.msra.mxu0 0.0
        %4870 = vmatprep.subr.mxu0 0.0
        %4871 = vmatpush1.msra.mxu0 0.0
        %4872 = vmatprep.subr.mxu0 0.0
        %4873 = vmatpush1.msra.mxu0 0.0
        %4874 = vmatprep.subr.mxu0 0.0
        %4875 = vmatpush1.msra.mxu0 0.0
        %4876 = vmatprep.subr.mxu0 0.0
        %4877 = vmatpush1.msra.mxu0 0.0
        %4878 = vmatprep.subr.mxu0 0.0
        %4879 = vmatpush1.msra.mxu0 0.0
        %4880 = vmatprep.subr.mxu0 0.0
        %4881 = vmatpush1.msra.mxu0 0.0
        %4882 = vmatprep.subr.mxu0 0.0
        %4883 = vmatpush1.msra.mxu0 0.0
        %4884 = vmatprep.subr.mxu0 0.0
        %4885 = vmatpush1.msra.mxu0 0.0
        %4886 = vmatprep.subr.mxu0 0.0
        %4887 = vmatpush1.msra.mxu0 0.0
        %4888 = vmatprep.subr.mxu0 0.0
        %4889 = vmatpush1.msra.mxu0 0.0
        %4890 = vmatprep.subr.mxu0 0.0
        %4891 = vmatpush1.msra.mxu0 0.0
        %4892 = vmatprep.subr.mxu0 0.0
        %4893 = vmatpush1.msra.mxu0 0.0
        %4894 = vmatprep.subr.mxu0 0.0
        %4895 = vmatpush1.msra.mxu0 0.0
        %4896 = vmatprep.subr.mxu0 0.0
        %4897 = vmatpush1.msra.mxu0 0.0
        %4898 = vmatprep.subr.mxu0 0.0
        %4899 = vmatpush1.msra.mxu0 0.0
        %4900 = vmatprep.subr.mxu0 0.0
        %4901 = vmatpush1.msra.mxu0 0.0
        %4902 = vmatprep.subr.mxu0 0.0
        %4903 = vmatpush1.msra.mxu0 0.0
        %4904 = vmatprep.subr.mxu0 0.0
        %4905 = vmatpush1.msra.mxu0 0.0
        %4906 = vmatprep.subr.mxu0 0.0
        %4907 = vmatpush1.msra.mxu0 0.0
        %4908 = vmatprep.subr.mxu0 0.0
        %4909 = vmatpush1.msra.mxu0 0.0
        %4910 = vmatprep.subr.mxu0 0.0
        %4911 = vmatpush1.msra.mxu0 0.0
        %4912 = vmatprep.subr.mxu0 0.0
        %4913 = vmatpush1.msra.mxu0 0.0
        %4914 = vmatprep.subr.mxu0 0.0
        %4915 = vmatpush1.msra.mxu0 0.0
        %4916 = vmatprep.subr.mxu0 0.0
        %4917 = vmatpush1.msra.mxu0 0.0
        %4918 = vmatprep.mubr.f32.mxu0 0.0
        %4919 = vmatmul.mubr.f32.gmra.mrb[0].mxu0 %v4828
        %v4920 = vpop.f32.mrb[0].mxu0
        %v4921 = vadd.f32 0.0, %v4920
        %v4922 = vpop.f32.mrb[0].mxu0
        %4923 = vmatprep.mubr.f32.mxu0 0.0
        %4924 = vmatmul.mubr.f32.gmra.mrb[0].mxu0 %v4831
        %v4925 = vpop.f32.mrb[0].mxu0
        %v4926 = vadd.f32 0.0, %v4925
        %v4927 = vpop.f32.mrb[0].mxu0
        %4928 = vmatprep.mubr.f32.mxu0 0.0
        %4929 = vmatmul.mubr.f32.gmra.mrb[0].mxu0 %v4834
        %v4930 = vpop.f32.mrb[0].mxu0
        %v4931 = vadd.f32 0.0, %v4930
        %v4932 = vpop.f32.mrb[0].mxu0
        %4933 = vmatprep.mubr.f32.mxu0 0.0
        %4934 = vmatmul.mubr.f32.gmra.mrb[0].mxu0 %v4837
        %v4935 = vpop.f32.mrb[0].mxu0
        %v4936 = vadd.f32 0.0, %v4935
        %v4937 = vpop.f32.mrb[0].mxu0
        %4938 = vmatprep.mubr.f32.mxu0 0.0
        %4939 = vmatmul.mubr.f32.gmra.mrb[0].mxu0 %v4840
        %v4940 = vpop.f32.mrb[0].mxu0
        %v4941 = vadd.f32 0.0, %v4940
        %v4942 = vpop.f32.mrb[0].mxu0
        %4943 = vmatprep.mubr.f32.mxu0 0.0
        %4944 = vmatmul.mubr.f32.gmra.mrb[0].mxu0 %v4843
        %v4945 = vpop.f32.mrb[0].mxu0
        %v4946 = vadd.f32 0.0, %v4945
        %v4947 = vpop.f32.mrb[0].mxu0
        %4948 = vmatprep.mubr.f32.mxu0 0.0
        %4949 = vmatmul.mubr.f32.gmra.mrb[0].mxu0 %v4846
        %v4950 = vpop.f32.mrb[0].mxu0
        %v4951 = vadd.f32 0.0, %v4950
        %v4952 = vpop.f32.mrb[0].mxu0
        %4953 = vmatprep.mubr.f32.mxu0 0.0
        %4954 = vmatmul.mubr.f32.gmra.mrb[0].mxu0 %v4849
        %v4955 = vpop.f32.mrb[0].mxu0
        %v4956 = vadd.f32 0.0, %v4955
        %v4957 = vpop.f32.mrb[0].mxu0
        %4958 = vdwg.mxu0
        %v4959 = vadd.f32 %v4080, %v4921
        %v4960 = vadd.f32 %v4081, %v4926
        %v4961 = vadd.f32 %v4082, %v4931
        %v4962 = vadd.f32 %v4083, %v4936
        %v4963 = vadd.f32 %v4084, %v4941
        %v4964 = vadd.f32 %v4085, %v4946
        %v4965 = vadd.f32 %v4086, %v4951
        %v4966 = vadd.f32 %v4087, %v4956
        %s4967 = scalar_lea.vmem %s3, 640
        %v4968 = vld [vmem:[%s4967] sm:$0xff]
        %v4969 = vld [vmem:[%s4967 + $0x8] sm:$0xff]
        %v4970 = vld [vmem:[%s4967 + $0x10] sm:$0xff]
        %v4971 = vld [vmem:[%s4967 + $0x18] sm:$0xff]
        %v4972 = vld [vmem:[%s4967 + $0x20] sm:$0xff]
        %v4973 = vld [vmem:[%s4967 + $0x28] sm:$0xff]
        %v4974 = vld [vmem:[%s4967 + $0x30] sm:$0xff]
        %v4975 = vld [vmem:[%s4967 + $0x38] sm:$0xff]
        %v4976 = vld [vmem:[%s4967 + $0x40] sm:$0xff]
        %v4977 = vld [vmem:[%s4967 + $0x48] sm:$0xff]
        %v4978 = vld [vmem:[%s4967 + $0x50] sm:$0xff]
        %v4979 = vld [vmem:[%s4967 + $0x58] sm:$0xff]
        %v4980 = vld [vmem:[%s4967 + $0x60] sm:$0xff]
        %v4981 = vld [vmem:[%s4967 + $0x68] sm:$0xff]
        %v4982 = vld [vmem:[%s4967 + $0x70] sm:$0xff]
        %v4983 = vld [vmem:[%s4967 + $0x78] sm:$0xff]
        %4984 = vmatprep.subr.mxu0 0.0
        %4985 = vmatpush1.msra.mxu0 %v4968
        %4986 = vmatprep.subr.mxu0 0.0
        %4987 = vmatpush1.msra.mxu0 %v4969
        %4988 = vmatprep.subr.mxu0 0.0
        %4989 = vmatpush1.msra.mxu0 %v4970
        %4990 = vmatprep.subr.mxu0 0.0
        %4991 = vmatpush1.msra.mxu0 %v4971
        %4992 = vmatprep.subr.mxu0 0.0
        %4993 = vmatpush1.msra.mxu0 %v4972
        %4994 = vmatprep.subr.mxu0 0.0
        %4995 = vmatpush1.msra.mxu0 %v4973
        %4996 = vmatprep.subr.mxu0 0.0
        %4997 = vmatpush1.msra.mxu0 %v4974
        %4998 = vmatprep.subr.mxu0 0.0
        %4999 = vmatpush1.msra.mxu0 %v4975
        %5000 = vmatprep.subr.mxu0 0.0
        %5001 = vmatpush1.msra.mxu0 %v4976
        %5002 = vmatprep.subr.mxu0 0.0
        %5003 = vmatpush1.msra.mxu0 %v4977
        %5004 = vmatprep.subr.mxu0 0.0
        %5005 = vmatpush1.msra.mxu0 %v4978
        %5006 = vmatprep.subr.mxu0 0.0
        %5007 = vmatpush1.msra.mxu0 %v4979
        %5008 = vmatprep.subr.mxu0 0.0
        %5009 = vmatpush1.msra.mxu0 %v4980
        %5010 = vmatprep.subr.mxu0 0.0
        %5011 = vmatpush1.msra.mxu0 %v4981
        %5012 = vmatprep.subr.mxu0 0.0
        %5013 = vmatpush1.msra.mxu0 %v4982
        %5014 = vmatprep.subr.mxu0 0.0
        %5015 = vmatpush1.msra.mxu0 %v4983
        %5016 = vmatprep.subr.mxu0 0.0
        %5017 = vmatpush1.msra.mxu0 0.0
        %5018 = vmatprep.subr.mxu0 0.0
        %5019 = vmatpush1.msra.mxu0 0.0
        %5020 = vmatprep.subr.mxu0 0.0
        %5021 = vmatpush1.msra.mxu0 0.0
        %5022 = vmatprep.subr.mxu0 0.0
        %5023 = vmatpush1.msra.mxu0 0.0
        %5024 = vmatprep.subr.mxu0 0.0
        %5025 = vmatpush1.msra.mxu0 0.0
        %5026 = vmatprep.subr.mxu0 0.0
        %5027 = vmatpush1.msra.mxu0 0.0
        %5028 = vmatprep.subr.mxu0 0.0
        %5029 = vmatpush1.msra.mxu0 0.0
        %5030 = vmatprep.subr.mxu0 0.0
        %5031 = vmatpush1.msra.mxu0 0.0
        %5032 = vmatprep.subr.mxu0 0.0
        %5033 = vmatpush1.msra.mxu0 0.0
        %5034 = vmatprep.subr.mxu0 0.0
        %5035 = vmatpush1.msra.mxu0 0.0
        %5036 = vmatprep.subr.mxu0 0.0
        %5037 = vmatpush1.msra.mxu0 0.0
        %5038 = vmatprep.subr.mxu0 0.0
        %5039 = vmatpush1.msra.mxu0 0.0
        %5040 = vmatprep.subr.mxu0 0.0
        %5041 = vmatpush1.msra.mxu0 0.0
        %5042 = vmatprep.subr.mxu0 0.0
        %5043 = vmatpush1.msra.mxu0 0.0
        %5044 = vmatprep.subr.mxu0 0.0
        %5045 = vmatpush1.msra.mxu0 0.0
        %5046 = vmatprep.subr.mxu0 0.0
        %5047 = vmatpush1.msra.mxu0 0.0
        %5048 = vmatprep.mubr.f32.mxu0 0.0
        %5049 = vmatmul.mubr.f32.gmra.mrb[0].mxu0 %v573
        %v5050 = vpop.f32.mrb[0].mxu0
        %v5051 = vadd.f32 0.0, %v5050
        %v5052 = vpop.f32.mrb[0].mxu0
        %5053 = vmatprep.mubr.f32.mxu0 0.0
        %5054 = vmatmul.mubr.f32.gmra.mrb[0].mxu0 %v574
        %v5055 = vpop.f32.mrb[0].mxu0
        %v5056 = vadd.f32 0.0, %v5055
        %v5057 = vpop.f32.mrb[0].mxu0
        %5058 = vmatprep.mubr.f32.mxu0 0.0
        %5059 = vmatmul.mubr.f32.gmra.mrb[0].mxu0 %v575
        %v5060 = vpop.f32.mrb[0].mxu0
        %v5061 = vadd.f32 0.0, %v5060
        %v5062 = vpop.f32.mrb[0].mxu0
        %5063 = vmatprep.mubr.f32.mxu0 0.0
        %5064 = vmatmul.mubr.f32.gmra.mrb[0].mxu0 %v576
        %v5065 = vpop.f32.mrb[0].mxu0
        %v5066 = vadd.f32 0.0, %v5065
        %v5067 = vpop.f32.mrb[0].mxu0
        %5068 = vmatprep.mubr.f32.mxu0 0.0
        %5069 = vmatmul.mubr.f32.gmra.mrb[0].mxu0 %v577
        %v5070 = vpop.f32.mrb[0].mxu0
        %v5071 = vadd.f32 0.0, %v5070
        %v5072 = vpop.f32.mrb[0].mxu0
        %5073 = vmatprep.mubr.f32.mxu0 0.0
        %5074 = vmatmul.mubr.f32.gmra.mrb[0].mxu0 %v578
        %v5075 = vpop.f32.mrb[0].mxu0
        %v5076 = vadd.f32 0.0, %v5075
        %v5077 = vpop.f32.mrb[0].mxu0
        %5078 = vmatprep.mubr.f32.mxu0 0.0
        %5079 = vmatmul.mubr.f32.gmra.mrb[0].mxu0 %v579
        %v5080 = vpop.f32.mrb[0].mxu0
        %v5081 = vadd.f32 0.0, %v5080
        %v5082 = vpop.f32.mrb[0].mxu0
        %5083 = vmatprep.mubr.f32.mxu0 0.0
        %5084 = vmatmul.mubr.f32.gmra.mrb[0].mxu0 %v580
        %v5085 = vpop.f32.mrb[0].mxu0
        %v5086 = vadd.f32 0.0, %v5085
        %v5087 = vpop.f32.mrb[0].mxu0
        %5088 = vdwg.mxu0
        %s5089 = scalar_lea.vmem %s2, 640
        %v5090 = vld [vmem:[%s5089] sm:$0xff]
        %v5091 = vld [vmem:[%s5089 + $0x8] sm:$0xff]
        %v5092 = vld [vmem:[%s5089 + $0x10] sm:$0xff]
        %v5093 = vld [vmem:[%s5089 + $0x18] sm:$0xff]
        %v5094 = vld [vmem:[%s5089 + $0x20] sm:$0xff]
        %v5095 = vld [vmem:[%s5089 + $0x28] sm:$0xff]
        %v5096 = vld [vmem:[%s5089 + $0x30] sm:$0xff]
        %v5097 = vld [vmem:[%s5089 + $0x38] sm:$0xff]
        %v5098 = vld [vmem:[%s5089 + $0x40] sm:$0xff]
        %v5099 = vld [vmem:[%s5089 + $0x48] sm:$0xff]
        %v5100 = vld [vmem:[%s5089 + $0x50] sm:$0xff]
        %v5101 = vld [vmem:[%s5089 + $0x58] sm:$0xff]
        %v5102 = vld [vmem:[%s5089 + $0x60] sm:$0xff]
        %v5103 = vld [vmem:[%s5089 + $0x68] sm:$0xff]
        %v5104 = vld [vmem:[%s5089 + $0x70] sm:$0xff]
        %v5105 = vld [vmem:[%s5089 + $0x78] sm:$0xff]
        %5106 = vmatprep.subr.mxu0 0.0
        %5107 = vmatpush1.msra.mxu0 %v5090
        %5108 = vmatprep.subr.mxu0 0.0
        %5109 = vmatpush1.msra.mxu0 %v5091
        %5110 = vmatprep.subr.mxu0 0.0
        %5111 = vmatpush1.msra.mxu0 %v5092
        %5112 = vmatprep.subr.mxu0 0.0
        %5113 = vmatpush1.msra.mxu0 %v5093
        %5114 = vmatprep.subr.mxu0 0.0
        %5115 = vmatpush1.msra.mxu0 %v5094
        %5116 = vmatprep.subr.mxu0 0.0
        %5117 = vmatpush1.msra.mxu0 %v5095
        %5118 = vmatprep.subr.mxu0 0.0
        %5119 = vmatpush1.msra.mxu0 %v5096
        %5120 = vmatprep.subr.mxu0 0.0
        %5121 = vmatpush1.msra.mxu0 %v5097
        %5122 = vmatprep.subr.mxu0 0.0
        %5123 = vmatpush1.msra.mxu0 %v5098
        %5124 = vmatprep.subr.mxu0 0.0
        %5125 = vmatpush1.msra.mxu0 %v5099
        %5126 = vmatprep.subr.mxu0 0.0
        %5127 = vmatpush1.msra.mxu0 %v5100
        %5128 = vmatprep.subr.mxu0 0.0
        %5129 = vmatpush1.msra.mxu0 %v5101
        %5130 = vmatprep.subr.mxu0 0.0
        %5131 = vmatpush1.msra.mxu0 %v5102
        %5132 = vmatprep.subr.mxu0 0.0
        %5133 = vmatpush1.msra.mxu0 %v5103
        %5134 = vmatprep.subr.mxu0 0.0
        %5135 = vmatpush1.msra.mxu0 %v5104
        %5136 = vmatprep.subr.mxu0 0.0
        %5137 = vmatpush1.msra.mxu0 %v5105
        %5138 = vmatprep.subr.mxu0 0.0
        %5139 = vmatpush1.msra.mxu0 0.0
        %5140 = vmatprep.subr.mxu0 0.0
        %5141 = vmatpush1.msra.mxu0 0.0
        %5142 = vmatprep.subr.mxu0 0.0
        %5143 = vmatpush1.msra.mxu0 0.0
        %5144 = vmatprep.subr.mxu0 0.0
        %5145 = vmatpush1.msra.mxu0 0.0
        %5146 = vmatprep.subr.mxu0 0.0
        %5147 = vmatpush1.msra.mxu0 0.0
        %5148 = vmatprep.subr.mxu0 0.0
        %5149 = vmatpush1.msra.mxu0 0.0
        %5150 = vmatprep.subr.mxu0 0.0
        %5151 = vmatpush1.msra.mxu0 0.0
        %5152 = vmatprep.subr.mxu0 0.0
        %5153 = vmatpush1.msra.mxu0 0.0
        %5154 = vmatprep.subr.mxu0 0.0
        %5155 = vmatpush1.msra.mxu0 0.0
        %5156 = vmatprep.subr.mxu0 0.0
        %5157 = vmatpush1.msra.mxu0 0.0
        %5158 = vmatprep.subr.mxu0 0.0
        %5159 = vmatpush1.msra.mxu0 0.0
        %5160 = vmatprep.subr.mxu0 0.0
        %5161 = vmatpush1.msra.mxu0 0.0
        %5162 = vmatprep.subr.mxu0 0.0
        %5163 = vmatpush1.msra.mxu0 0.0
        %5164 = vmatprep.subr.mxu0 0.0
        %5165 = vmatpush1.msra.mxu0 0.0
        %5166 = vmatprep.subr.mxu0 0.0
        %5167 = vmatpush1.msra.mxu0 0.0
        %5168 = vmatprep.subr.mxu0 0.0
        %5169 = vmatpush1.msra.mxu0 0.0
        %5170 = vmatprep.mubr.f32.mxu0 0.0
        %5171 = vmatmul.mubr.f32.gmra.mrb[0].mxu0 %v573
        %v5172 = vpop.f32.mrb[0].mxu0
        %v5173 = vadd.f32 0.0, %v5172
        %v5174 = vpop.f32.mrb[0].mxu0
        %5175 = vmatprep.mubr.f32.mxu0 0.0
        %5176 = vmatmul.mubr.f32.gmra.mrb[0].mxu0 %v574
        %v5177 = vpop.f32.mrb[0].mxu0
        %v5178 = vadd.f32 0.0, %v5177
        %v5179 = vpop.f32.mrb[0].mxu0
        %5180 = vmatprep.mubr.f32.mxu0 0.0
        %5181 = vmatmul.mubr.f32.gmra.mrb[0].mxu0 %v575
        %v5182 = vpop.f32.mrb[0].mxu0
        %v5183 = vadd.f32 0.0, %v5182
        %v5184 = vpop.f32.mrb[0].mxu0
        %5185 = vmatprep.mubr.f32.mxu0 0.0
        %5186 = vmatmul.mubr.f32.gmra.mrb[0].mxu0 %v576
        %v5187 = vpop.f32.mrb[0].mxu0
        %v5188 = vadd.f32 0.0, %v5187
        %v5189 = vpop.f32.mrb[0].mxu0
        %5190 = vmatprep.mubr.f32.mxu0 0.0
        %5191 = vmatmul.mubr.f32.gmra.mrb[0].mxu0 %v577
        %v5192 = vpop.f32.mrb[0].mxu0
        %v5193 = vadd.f32 0.0, %v5192
        %v5194 = vpop.f32.mrb[0].mxu0
        %5195 = vmatprep.mubr.f32.mxu0 0.0
        %5196 = vmatmul.mubr.f32.gmra.mrb[0].mxu0 %v578
        %v5197 = vpop.f32.mrb[0].mxu0
        %v5198 = vadd.f32 0.0, %v5197
        %v5199 = vpop.f32.mrb[0].mxu0
        %5200 = vmatprep.mubr.f32.mxu0 0.0
        %5201 = vmatmul.mubr.f32.gmra.mrb[0].mxu0 %v579
        %v5202 = vpop.f32.mrb[0].mxu0
        %v5203 = vadd.f32 0.0, %v5202
        %v5204 = vpop.f32.mrb[0].mxu0
        %5205 = vmatprep.mubr.f32.mxu0 0.0
        %5206 = vmatmul.mubr.f32.gmra.mrb[0].mxu0 %v580
        %v5207 = vpop.f32.mrb[0].mxu0
        %v5208 = vadd.f32 0.0, %v5207
        %v5209 = vpop.f32.mrb[0].mxu0
        %5210 = vdwg.mxu0
        %s5211 = scalar_lea.vmem %s4, 640
        %v5212 = vld [vmem:[%s5211] sm:$0xff]
        %v5213 = vld [vmem:[%s5211 + $0x8] sm:$0xff]
        %v5214 = vld [vmem:[%s5211 + $0x10] sm:$0xff]
        %v5215 = vld [vmem:[%s5211 + $0x18] sm:$0xff]
        %v5216 = vld [vmem:[%s5211 + $0x20] sm:$0xff]
        %v5217 = vld [vmem:[%s5211 + $0x28] sm:$0xff]
        %v5218 = vld [vmem:[%s5211 + $0x30] sm:$0xff]
        %v5219 = vld [vmem:[%s5211 + $0x38] sm:$0xff]
        %v5220 = vld [vmem:[%s5211 + $0x40] sm:$0xff]
        %v5221 = vld [vmem:[%s5211 + $0x48] sm:$0xff]
        %v5222 = vld [vmem:[%s5211 + $0x50] sm:$0xff]
        %v5223 = vld [vmem:[%s5211 + $0x58] sm:$0xff]
        %v5224 = vld [vmem:[%s5211 + $0x60] sm:$0xff]
        %v5225 = vld [vmem:[%s5211 + $0x68] sm:$0xff]
        %v5226 = vld [vmem:[%s5211 + $0x70] sm:$0xff]
        %v5227 = vld [vmem:[%s5211 + $0x78] sm:$0xff]
        %5228 = vmatprep.subr.mxu0 0.0
        %5229 = vmatpush1.msra.mxu0 %v5212
        %5230 = vmatprep.subr.mxu0 0.0
        %5231 = vmatpush1.msra.mxu0 %v5213
        %5232 = vmatprep.subr.mxu0 0.0
        %5233 = vmatpush1.msra.mxu0 %v5214
        %5234 = vmatprep.subr.mxu0 0.0
        %5235 = vmatpush1.msra.mxu0 %v5215
        %5236 = vmatprep.subr.mxu0 0.0
        %5237 = vmatpush1.msra.mxu0 %v5216
        %5238 = vmatprep.subr.mxu0 0.0
        %5239 = vmatpush1.msra.mxu0 %v5217
        %5240 = vmatprep.subr.mxu0 0.0
        %5241 = vmatpush1.msra.mxu0 %v5218
        %5242 = vmatprep.subr.mxu0 0.0
        %5243 = vmatpush1.msra.mxu0 %v5219
        %5244 = vmatprep.subr.mxu0 0.0
        %5245 = vmatpush1.msra.mxu0 %v5220
        %5246 = vmatprep.subr.mxu0 0.0
        %5247 = vmatpush1.msra.mxu0 %v5221
        %5248 = vmatprep.subr.mxu0 0.0
        %5249 = vmatpush1.msra.mxu0 %v5222
        %5250 = vmatprep.subr.mxu0 0.0
        %5251 = vmatpush1.msra.mxu0 %v5223
        %5252 = vmatprep.subr.mxu0 0.0
        %5253 = vmatpush1.msra.mxu0 %v5224
        %5254 = vmatprep.subr.mxu0 0.0
        %5255 = vmatpush1.msra.mxu0 %v5225
        %5256 = vmatprep.subr.mxu0 0.0
        %5257 = vmatpush1.msra.mxu0 %v5226
        %5258 = vmatprep.subr.mxu0 0.0
        %5259 = vmatpush1.msra.mxu0 %v5227
        %5260 = vmatprep.subr.mxu0 0.0
        %5261 = vmatpush1.msra.mxu0 0.0
        %5262 = vmatprep.subr.mxu0 0.0
        %5263 = vmatpush1.msra.mxu0 0.0
        %5264 = vmatprep.subr.mxu0 0.0
        %5265 = vmatpush1.msra.mxu0 0.0
        %5266 = vmatprep.subr.mxu0 0.0
        %5267 = vmatpush1.msra.mxu0 0.0
        %5268 = vmatprep.subr.mxu0 0.0
        %5269 = vmatpush1.msra.mxu0 0.0
        %5270 = vmatprep.subr.mxu0 0.0
        %5271 = vmatpush1.msra.mxu0 0.0
        %5272 = vmatprep.subr.mxu0 0.0
        %5273 = vmatpush1.msra.mxu0 0.0
        %5274 = vmatprep.subr.mxu0 0.0
        %5275 = vmatpush1.msra.mxu0 0.0
        %5276 = vmatprep.subr.mxu0 0.0
        %5277 = vmatpush1.msra.mxu0 0.0
        %5278 = vmatprep.subr.mxu0 0.0
        %5279 = vmatpush1.msra.mxu0 0.0
        %5280 = vmatprep.subr.mxu0 0.0
        %5281 = vmatpush1.msra.mxu0 0.0
        %5282 = vmatprep.subr.mxu0 0.0
        %5283 = vmatpush1.msra.mxu0 0.0
        %5284 = vmatprep.subr.mxu0 0.0
        %5285 = vmatpush1.msra.mxu0 0.0
        %5286 = vmatprep.subr.mxu0 0.0
        %5287 = vmatpush1.msra.mxu0 0.0
        %5288 = vmatprep.subr.mxu0 0.0
        %5289 = vmatpush1.msra.mxu0 0.0
        %5290 = vmatprep.subr.mxu0 0.0
        %5291 = vmatpush1.msra.mxu0 0.0
        %5292 = vmatprep.mubr.f32.mxu0 0.0
        %5293 = vmatmul.mubr.f32.gmra.mrb[0].mxu0 %v573
        %v5294 = vpop.f32.mrb[0].mxu0
        %v5295 = vadd.f32 0.0, %v5294
        %v5296 = vpop.f32.mrb[0].mxu0
        %5297 = vmatprep.mubr.f32.mxu0 0.0
        %5298 = vmatmul.mubr.f32.gmra.mrb[0].mxu0 %v574
        %v5299 = vpop.f32.mrb[0].mxu0
        %v5300 = vadd.f32 0.0, %v5299
        %v5301 = vpop.f32.mrb[0].mxu0
        %5302 = vmatprep.mubr.f32.mxu0 0.0
        %5303 = vmatmul.mubr.f32.gmra.mrb[0].mxu0 %v575
        %v5304 = vpop.f32.mrb[0].mxu0
        %v5305 = vadd.f32 0.0, %v5304
        %v5306 = vpop.f32.mrb[0].mxu0
        %5307 = vmatprep.mubr.f32.mxu0 0.0
        %5308 = vmatmul.mubr.f32.gmra.mrb[0].mxu0 %v576
        %v5309 = vpop.f32.mrb[0].mxu0
        %v5310 = vadd.f32 0.0, %v5309
        %v5311 = vpop.f32.mrb[0].mxu0
        %5312 = vmatprep.mubr.f32.mxu0 0.0
        %5313 = vmatmul.mubr.f32.gmra.mrb[0].mxu0 %v577
        %v5314 = vpop.f32.mrb[0].mxu0
        %v5315 = vadd.f32 0.0, %v5314
        %v5316 = vpop.f32.mrb[0].mxu0
        %5317 = vmatprep.mubr.f32.mxu0 0.0
        %5318 = vmatmul.mubr.f32.gmra.mrb[0].mxu0 %v578
        %v5319 = vpop.f32.mrb[0].mxu0
        %v5320 = vadd.f32 0.0, %v5319
        %v5321 = vpop.f32.mrb[0].mxu0
        %5322 = vmatprep.mubr.f32.mxu0 0.0
        %5323 = vmatmul.mubr.f32.gmra.mrb[0].mxu0 %v579
        %v5324 = vpop.f32.mrb[0].mxu0
        %v5325 = vadd.f32 0.0, %v5324
        %v5326 = vpop.f32.mrb[0].mxu0
        %5327 = vmatprep.mubr.f32.mxu0 0.0
        %5328 = vmatmul.mubr.f32.gmra.mrb[0].mxu0 %v580
        %v5329 = vpop.f32.mrb[0].mxu0
        %v5330 = vadd.f32 0.0, %v5329
        %v5331 = vpop.f32.mrb[0].mxu0
        %5332 = vdwg.mxu0
        %v5334 = vsel %vm952, %v5051, 0
        %v5337 = vsel %vm952, %v5056, 0
        %v5340 = vsel %vm952, %v5061, 0
        %v5343 = vsel %vm952, %v5066, 0
        %v5346 = vsel %vm952, %v5071, 0
        %v5349 = vsel %vm952, %v5076, 0
        %v5352 = vsel %vm952, %v5081, 0
        %v5355 = vsel %vm952, %v5086, 0
        %v5358 = vsel %vm952, %v5173, 0
        %v5361 = vsel %vm952, %v5178, 0
        %v5364 = vsel %vm952, %v5183, 0
        %v5367 = vsel %vm952, %v5188, 0
        %v5370 = vsel %vm952, %v5193, 0
        %v5373 = vsel %vm952, %v5198, 0
        %v5376 = vsel %vm952, %v5203, 0
        %v5379 = vsel %vm952, %v5208, 0
        %5381 = vmatprep.subr.mxu0 0.0
        %5382 = vmatpush1.xpose.msra.mxu0 %v5358
        %5383 = vmatprep.subr.mxu0 0.0
        %5384 = vmatpush1.xpose.msra.mxu0 %v5361
        %5385 = vmatprep.subr.mxu0 0.0
        %5386 = vmatpush1.xpose.msra.mxu0 %v5364
        %5387 = vmatprep.subr.mxu0 0.0
        %5388 = vmatpush1.xpose.msra.mxu0 %v5367
        %5389 = vmatprep.subr.mxu0 0.0
        %5390 = vmatpush1.xpose.msra.mxu0 %v5370
        %5391 = vmatprep.subr.mxu0 0.0
        %5392 = vmatpush1.xpose.msra.mxu0 %v5373
        %5393 = vmatprep.subr.mxu0 0.0
        %5394 = vmatpush1.xpose.msra.mxu0 %v5376
        %5395 = vmatprep.subr.mxu0 0.0
        %5396 = vmatpush1.xpose.msra.mxu0 %v5379
        %5397 = vmatprep.subr.mxu0 0.0
        %5398 = vmatpush1.xpose.msra.mxu0 0.0
        %5399 = vmatprep.subr.mxu0 0.0
        %5400 = vmatpush1.xpose.msra.mxu0 0.0
        %5401 = vmatprep.subr.mxu0 0.0
        %5402 = vmatpush1.xpose.msra.mxu0 0.0
        %5403 = vmatprep.subr.mxu0 0.0
        %5404 = vmatpush1.xpose.msra.mxu0 0.0
        %5405 = vmatprep.subr.mxu0 0.0
        %5406 = vmatpush1.xpose.msra.mxu0 0.0
        %5407 = vmatprep.subr.mxu0 0.0
        %5408 = vmatpush1.xpose.msra.mxu0 0.0
        %5409 = vmatprep.subr.mxu0 0.0
        %5410 = vmatpush1.xpose.msra.mxu0 0.0
        %5411 = vmatprep.subr.mxu0 0.0
        %5412 = vmatpush1.xpose.msra.mxu0 0.0
        %5413 = vmatprep.subr.mxu0 0.0
        %5414 = vmatpush1.xpose.msra.mxu0 0.0
        %5415 = vmatprep.subr.mxu0 0.0
        %5416 = vmatpush1.xpose.msra.mxu0 0.0
        %5417 = vmatprep.subr.mxu0 0.0
        %5418 = vmatpush1.xpose.msra.mxu0 0.0
        %5419 = vmatprep.subr.mxu0 0.0
        %5420 = vmatpush1.xpose.msra.mxu0 0.0
        %5421 = vmatprep.subr.mxu0 0.0
        %5422 = vmatpush1.xpose.msra.mxu0 0.0
        %5423 = vmatprep.subr.mxu0 0.0
        %5424 = vmatpush1.xpose.msra.mxu0 0.0
        %5425 = vmatprep.subr.mxu0 0.0
        %5426 = vmatpush1.xpose.msra.mxu0 0.0
        %5427 = vmatprep.subr.mxu0 0.0
        %5428 = vmatpush1.xpose.msra.mxu0 0.0
        %5429 = vmatprep.subr.mxu0 0.0
        %5430 = vmatpush1.xpose.msra.mxu0 0.0
        %5431 = vmatprep.subr.mxu0 0.0
        %5432 = vmatpush1.xpose.msra.mxu0 0.0
        %5433 = vmatprep.subr.mxu0 0.0
        %5434 = vmatpush1.xpose.msra.mxu0 0.0
        %5435 = vmatprep.subr.mxu0 0.0
        %5436 = vmatpush1.xpose.msra.mxu0 0.0
        %5437 = vmatprep.subr.mxu0 0.0
        %5438 = vmatpush1.xpose.msra.mxu0 0.0
        %5439 = vmatprep.subr.mxu0 0.0
        %5440 = vmatpush1.xpose.msra.mxu0 0.0
        %5441 = vmatprep.subr.mxu0 0.0
        %5442 = vmatpush1.xpose.msra.mxu0 0.0
        %5443 = vmatprep.subr.mxu0 0.0
        %5444 = vmatpush1.xpose.msra.mxu0 0.0
        %5445 = vmatprep.mubr.f32.mxu0 0.0
        %5446 = vmatmul.mubr.f32.gmra.mrb[0].mxu0 %v5334
        %v5447 = vpop.f32.mrb[0].mxu0
        %v5448 = vadd.f32 %v581, %v5447
        %v5449 = vpop.f32.mrb[0].mxu0
        %5450 = vmatprep.mubr.f32.mxu0 0.0
        %5451 = vmatmul.mubr.f32.gmra.mrb[0].mxu0 %v5337
        %v5452 = vpop.f32.mrb[0].mxu0
        %v5453 = vadd.f32 %v582, %v5452
        %v5454 = vpop.f32.mrb[0].mxu0
        %5455 = vmatprep.mubr.f32.mxu0 0.0
        %5456 = vmatmul.mubr.f32.gmra.mrb[0].mxu0 %v5340
        %v5457 = vpop.f32.mrb[0].mxu0
        %v5458 = vadd.f32 %v583, %v5457
        %v5459 = vpop.f32.mrb[0].mxu0
        %5460 = vmatprep.mubr.f32.mxu0 0.0
        %5461 = vmatmul.mubr.f32.gmra.mrb[0].mxu0 %v5343
        %v5462 = vpop.f32.mrb[0].mxu0
        %v5463 = vadd.f32 %v584, %v5462
        %v5464 = vpop.f32.mrb[0].mxu0
        %5465 = vmatprep.mubr.f32.mxu0 0.0
        %5466 = vmatmul.mubr.f32.gmra.mrb[0].mxu0 %v5346
        %v5467 = vpop.f32.mrb[0].mxu0
        %v5468 = vadd.f32 %v585, %v5467
        %v5469 = vpop.f32.mrb[0].mxu0
        %5470 = vmatprep.mubr.f32.mxu0 0.0
        %5471 = vmatmul.mubr.f32.gmra.mrb[0].mxu0 %v5349
        %v5472 = vpop.f32.mrb[0].mxu0
        %v5473 = vadd.f32 %v586, %v5472
        %v5474 = vpop.f32.mrb[0].mxu0
        %5475 = vmatprep.mubr.f32.mxu0 0.0
        %5476 = vmatmul.mubr.f32.gmra.mrb[0].mxu0 %v5352
        %v5477 = vpop.f32.mrb[0].mxu0
        %v5478 = vadd.f32 %v587, %v5477
        %v5479 = vpop.f32.mrb[0].mxu0
        %5480 = vmatprep.mubr.f32.mxu0 0.0
        %5481 = vmatmul.mubr.f32.gmra.mrb[0].mxu0 %v5355
        %v5482 = vpop.f32.mrb[0].mxu0
        %v5483 = vadd.f32 %v588, %v5482
        %v5484 = vpop.f32.mrb[0].mxu0
        %5485 = vdwg.mxu0
        %v5486 = vsel %vm1106, %v5448, -inf
        %5487 = vmax.xlane.f32.xlu0 %v5486
        %v5488 = vpop.xlane.xlu0 %5487
        %v5489 = vsel %vm1106, %v5453, -inf
        %5490 = vmax.xlane.f32.xlu0 %v5489
        %v5491 = vpop.xlane.xlu0 %5490
        %v5492 = vsel %vm1106, %v5458, -inf
        %5493 = vmax.xlane.f32.xlu0 %v5492
        %v5494 = vpop.xlane.xlu0 %5493
        %v5495 = vsel %vm1106, %v5463, -inf
        %5496 = vmax.xlane.f32.xlu0 %v5495
        %v5497 = vpop.xlane.xlu0 %5496
        %v5498 = vsel %vm1106, %v5468, -inf
        %5499 = vmax.xlane.f32.xlu0 %v5498
        %v5500 = vpop.xlane.xlu0 %5499
        %v5501 = vsel %vm1106, %v5473, -inf
        %5502 = vmax.xlane.f32.xlu0 %v5501
        %v5503 = vpop.xlane.xlu0 %5502
        %v5504 = vsel %vm1106, %v5478, -inf
        %5505 = vmax.xlane.f32.xlu0 %v5504
        %v5506 = vpop.xlane.xlu0 %5505
        %v5507 = vsel %vm1106, %v5483, -inf
        %5508 = vmax.xlane.f32.xlu0 %v5507
        %v5509 = vpop.xlane.xlu0 %5508
        %v5510 = vsub.f32 %v5448, %v5488
        %v5511 = vsub.f32 %v5453, %v5491
        %v5512 = vsub.f32 %v5458, %v5494
        %v5513 = vsub.f32 %v5463, %v5497
        %v5514 = vsub.f32 %v5468, %v5500
        %v5515 = vsub.f32 %v5473, %v5503
        %v5516 = vsub.f32 %v5478, %v5506
        %v5517 = vsub.f32 %v5483, %v5509
        %v5518 = vmul.f32 %v5510, 1.442695
        %v5519 = vpow.pop %v5518
        %v5520 = vmul.f32 %v5511, 1.442695
        %v5521 = vpow.pop %v5520
        %v5522 = vmul.f32 %v5512, 1.442695
        %v5523 = vpow.pop %v5522
        %v5524 = vmul.f32 %v5513, 1.442695
        %v5525 = vpow.pop %v5524
        %v5526 = vmul.f32 %v5514, 1.442695
        %v5527 = vpow.pop %v5526
        %v5528 = vmul.f32 %v5515, 1.442695
        %v5529 = vpow.pop %v5528
        %v5530 = vmul.f32 %v5516, 1.442695
        %v5531 = vpow.pop %v5530
        %v5532 = vmul.f32 %v5517, 1.442695
        %v5533 = vpow.pop %v5532
        %v5534 = vsel %vm1106, %v5519, 0.0
        %5535 = vadd.xlane.f32.xlu0 %v5534
        %v5536 = vpop.xlane.xlu0 %5535
        %v5537 = vsel %vm1106, %v5521, 0.0
        %5538 = vadd.xlane.f32.xlu0 %v5537
        %v5539 = vpop.xlane.xlu0 %5538
        %v5540 = vsel %vm1106, %v5523, 0.0
        %5541 = vadd.xlane.f32.xlu0 %v5540
        %v5542 = vpop.xlane.xlu0 %5541
        %v5543 = vsel %vm1106, %v5525, 0.0
        %5544 = vadd.xlane.f32.xlu0 %v5543
        %v5545 = vpop.xlane.xlu0 %5544
        %v5546 = vsel %vm1106, %v5527, 0.0
        %5547 = vadd.xlane.f32.xlu0 %v5546
        %v5548 = vpop.xlane.xlu0 %5547
        %v5549 = vsel %vm1106, %v5529, 0.0
        %5550 = vadd.xlane.f32.xlu0 %v5549
        %v5551 = vpop.xlane.xlu0 %5550
        %v5552 = vsel %vm1106, %v5531, 0.0
        %5553 = vadd.xlane.f32.xlu0 %v5552
        %v5554 = vpop.xlane.xlu0 %5553
        %v5555 = vsel %vm1106, %v5533, 0.0
        %5556 = vadd.xlane.f32.xlu0 %v5555
        %v5557 = vpop.xlane.xlu0 %5556
        %v5558 = vrcp.pop %v5536
        %v5559 = vrcp.pop %v5539
        %v5560 = vrcp.pop %v5542
        %v5561 = vrcp.pop %v5545
        %v5562 = vrcp.pop %v5548
        %v5563 = vrcp.pop %v5551
        %v5564 = vrcp.pop %v5554
        %v5565 = vrcp.pop %v5557
        %v5566 = vmul.f32 %v5519, %v5558
        %v5567 = vmul.f32 %v5521, %v5559
        %v5568 = vmul.f32 %v5523, %v5560
        %v5569 = vmul.f32 %v5525, %v5561
        %v5570 = vmul.f32 %v5527, %v5562
        %v5571 = vmul.f32 %v5529, %v5563
        %v5572 = vmul.f32 %v5531, %v5564
        %v5573 = vmul.f32 %v5533, %v5565
        %v5575 = vsel %vm1106, %v5566, 0
        %v5578 = vsel %vm1106, %v5567, 0
        %v5581 = vsel %vm1106, %v5568, 0
        %v5584 = vsel %vm1106, %v5569, 0
        %v5587 = vsel %vm1106, %v5570, 0
        %v5590 = vsel %vm1106, %v5571, 0
        %v5593 = vsel %vm1106, %v5572, 0
        %v5596 = vsel %vm1106, %v5573, 0
        %5598 = vmatprep.subr.mxu0 0.0
        %5599 = vmatpush1.msra.mxu0 %v5295
        %5600 = vmatprep.subr.mxu0 0.0
        %5601 = vmatpush1.msra.mxu0 %v5300
        %5602 = vmatprep.subr.mxu0 0.0
        %5603 = vmatpush1.msra.mxu0 %v5305
        %5604 = vmatprep.subr.mxu0 0.0
        %5605 = vmatpush1.msra.mxu0 %v5310
        %5606 = vmatprep.subr.mxu0 0.0
        %5607 = vmatpush1.msra.mxu0 %v5315
        %5608 = vmatprep.subr.mxu0 0.0
        %5609 = vmatpush1.msra.mxu0 %v5320
        %5610 = vmatprep.subr.mxu0 0.0
        %5611 = vmatpush1.msra.mxu0 %v5325
        %5612 = vmatprep.subr.mxu0 0.0
        %5613 = vmatpush1.msra.mxu0 %v5330
        %5614 = vmatprep.subr.mxu0 0.0
        %5615 = vmatpush1.msra.mxu0 0.0
        %5616 = vmatprep.subr.mxu0 0.0
        %5617 = vmatpush1.msra.mxu0 0.0
        %5618 = vmatprep.subr.mxu0 0.0
        %5619 = vmatpush1.msra.mxu0 0.0
        %5620 = vmatprep.subr.mxu0 0.0
        %5621 = vmatpush1.msra.mxu0 0.0
        %5622 = vmatprep.subr.mxu0 0.0
        %5623 = vmatpush1.msra.mxu0 0.0
        %5624 = vmatprep.subr.mxu0 0.0
        %5625 = vmatpush1.msra.mxu0 0.0
        %5626 = vmatprep.subr.mxu0 0.0
        %5627 = vmatpush1.msra.mxu0 0.0
        %5628 = vmatprep.subr.mxu0 0.0
        %5629 = vmatpush1.msra.mxu0 0.0
        %5630 = vmatprep.subr.mxu0 0.0
        %5631 = vmatpush1.msra.mxu0 0.0
        %5632 = vmatprep.subr.mxu0 0.0
        %5633 = vmatpush1.msra.mxu0 0.0
        %5634 = vmatprep.subr.mxu0 0.0
        %5635 = vmatpush1.msra.mxu0 0.0
        %5636 = vmatprep.subr.mxu0 0.0
        %5637 = vmatpush1.msra.mxu0 0.0
        %5638 = vmatprep.subr.mxu0 0.0
        %5639 = vmatpush1.msra.mxu0 0.0
        %5640 = vmatprep.subr.mxu0 0.0
        %5641 = vmatpush1.msra.mxu0 0.0
        %5642 = vmatprep.subr.mxu0 0.0
        %5643 = vmatpush1.msra.mxu0 0.0
        %5644 = vmatprep.subr.mxu0 0.0
        %5645 = vmatpush1.msra.mxu0 0.0
        %5646 = vmatprep.subr.mxu0 0.0
        %5647 = vmatpush1.msra.mxu0 0.0
        %5648 = vmatprep.subr.mxu0 0.0
        %5649 = vmatpush1.msra.mxu0 0.0
        %5650 = vmatprep.subr.mxu0 0.0
        %5651 = vmatpush1.msra.mxu0 0.0
        %5652 = vmatprep.subr.mxu0 0.0
        %5653 = vmatpush1.msra.mxu0 0.0
        %5654 = vmatprep.subr.mxu0 0.0
        %5655 = vmatpush1.msra.mxu0 0.0
        %5656 = vmatprep.subr.mxu0 0.0
        %5657 = vmatpush1.msra.mxu0 0.0
        %5658 = vmatprep.subr.mxu0 0.0
        %5659 = vmatpush1.msra.mxu0 0.0
        %5660 = vmatprep.subr.mxu0 0.0
        %5661 = vmatpush1.msra.mxu0 0.0
        %5662 = vmatprep.mubr.f32.mxu0 0.0
        %5663 = vmatmul.mubr.f32.gmra.mrb[0].mxu0 %v5575
        %v5664 = vpop.f32.mrb[0].mxu0
        %v5665 = vadd.f32 0.0, %v5664
        %v5666 = vpop.f32.mrb[0].mxu0
        %5667 = vmatprep.mubr.f32.mxu0 0.0
        %5668 = vmatmul.mubr.f32.gmra.mrb[0].mxu0 %v5578
        %v5669 = vpop.f32.mrb[0].mxu0
        %v5670 = vadd.f32 0.0, %v5669
        %v5671 = vpop.f32.mrb[0].mxu0
        %5672 = vmatprep.mubr.f32.mxu0 0.0
        %5673 = vmatmul.mubr.f32.gmra.mrb[0].mxu0 %v5581
        %v5674 = vpop.f32.mrb[0].mxu0
        %v5675 = vadd.f32 0.0, %v5674
        %v5676 = vpop.f32.mrb[0].mxu0
        %5677 = vmatprep.mubr.f32.mxu0 0.0
        %5678 = vmatmul.mubr.f32.gmra.mrb[0].mxu0 %v5584
        %v5679 = vpop.f32.mrb[0].mxu0
        %v5680 = vadd.f32 0.0, %v5679
        %v5681 = vpop.f32.mrb[0].mxu0
        %5682 = vmatprep.mubr.f32.mxu0 0.0
        %5683 = vmatmul.mubr.f32.gmra.mrb[0].mxu0 %v5587
        %v5684 = vpop.f32.mrb[0].mxu0
        %v5685 = vadd.f32 0.0, %v5684
        %v5686 = vpop.f32.mrb[0].mxu0
        %5687 = vmatprep.mubr.f32.mxu0 0.0
        %5688 = vmatmul.mubr.f32.gmra.mrb[0].mxu0 %v5590
        %v5689 = vpop.f32.mrb[0].mxu0
        %v5690 = vadd.f32 0.0, %v5689
        %v5691 = vpop.f32.mrb[0].mxu0
        %5692 = vmatprep.mubr.f32.mxu0 0.0
        %5693 = vmatmul.mubr.f32.gmra.mrb[0].mxu0 %v5593
        %v5694 = vpop.f32.mrb[0].mxu0
        %v5695 = vadd.f32 0.0, %v5694
        %v5696 = vpop.f32.mrb[0].mxu0
        %5697 = vmatprep.mubr.f32.mxu0 0.0
        %5698 = vmatmul.mubr.f32.gmra.mrb[0].mxu0 %v5596
        %v5699 = vpop.f32.mrb[0].mxu0
        %v5700 = vadd.f32 0.0, %v5699
        %v5701 = vpop.f32.mrb[0].mxu0
        %5702 = vdwg.mxu0
        %s5703 = scalar_lea.vmem %s5, 80
        %v5704 = vld [vmem:[%s5703] sm:$0xff]
        %v5705 = vld [vmem:[%s5703 + $0x8] sm:$0xf]
        %v5707 = vsel %vm952, %v5665, 0
        %v5710 = vsel %vm952, %v5670, 0
        %v5713 = vsel %vm952, %v5675, 0
        %v5716 = vsel %vm952, %v5680, 0
        %v5719 = vsel %vm952, %v5685, 0
        %v5722 = vsel %vm952, %v5690, 0
        %v5725 = vsel %vm952, %v5695, 0
        %v5728 = vsel %vm952, %v5700, 0
        %v5731 = vsel %vm2089, %v5705, 0
        %5733 = vmatprep.subr.mxu0 0.0
        %5734 = vmatpush1.msra.mxu0 %v5704
        %5735 = vmatprep.subr.mxu0 0.0
        %5736 = vmatpush1.msra.mxu0 %v5731
        %5737 = vmatprep.subr.mxu0 0.0
        %5738 = vmatpush1.msra.mxu0 0.0
        %5739 = vmatprep.subr.mxu0 0.0
        %5740 = vmatpush1.msra.mxu0 0.0
        %5741 = vmatprep.subr.mxu0 0.0
        %5742 = vmatpush1.msra.mxu0 0.0
        %5743 = vmatprep.subr.mxu0 0.0
        %5744 = vmatpush1.msra.mxu0 0.0
        %5745 = vmatprep.subr.mxu0 0.0
        %5746 = vmatpush1.msra.mxu0 0.0
        %5747 = vmatprep.subr.mxu0 0.0
        %5748 = vmatpush1.msra.mxu0 0.0
        %5749 = vmatprep.subr.mxu0 0.0
        %5750 = vmatpush1.msra.mxu0 0.0
        %5751 = vmatprep.subr.mxu0 0.0
        %5752 = vmatpush1.msra.mxu0 0.0
        %5753 = vmatprep.subr.mxu0 0.0
        %5754 = vmatpush1.msra.mxu0 0.0
        %5755 = vmatprep.subr.mxu0 0.0
        %5756 = vmatpush1.msra.mxu0 0.0
        %5757 = vmatprep.subr.mxu0 0.0
        %5758 = vmatpush1.msra.mxu0 0.0
        %5759 = vmatprep.subr.mxu0 0.0
        %5760 = vmatpush1.msra.mxu0 0.0
        %5761 = vmatprep.subr.mxu0 0.0
        %5762 = vmatpush1.msra.mxu0 0.0
        %5763 = vmatprep.subr.mxu0 0.0
        %5764 = vmatpush1.msra.mxu0 0.0
        %5765 = vmatprep.subr.mxu0 0.0
        %5766 = vmatpush1.msra.mxu0 0.0
        %5767 = vmatprep.subr.mxu0 0.0
        %5768 = vmatpush1.msra.mxu0 0.0
        %5769 = vmatprep.subr.mxu0 0.0
        %5770 = vmatpush1.msra.mxu0 0.0
        %5771 = vmatprep.subr.mxu0 0.0
        %5772 = vmatpush1.msra.mxu0 0.0
        %5773 = vmatprep.subr.mxu0 0.0
        %5774 = vmatpush1.msra.mxu0 0.0
        %5775 = vmatprep.subr.mxu0 0.0
        %5776 = vmatpush1.msra.mxu0 0.0
        %5777 = vmatprep.subr.mxu0 0.0
        %5778 = vmatpush1.msra.mxu0 0.0
        %5779 = vmatprep.subr.mxu0 0.0
        %5780 = vmatpush1.msra.mxu0 0.0
        %5781 = vmatprep.subr.mxu0 0.0
        %5782 = vmatpush1.msra.mxu0 0.0
        %5783 = vmatprep.subr.mxu0 0.0
        %5784 = vmatpush1.msra.mxu0 0.0
        %5785 = vmatprep.subr.mxu0 0.0
        %5786 = vmatpush1.msra.mxu0 0.0
        %5787 = vmatprep.subr.mxu0 0.0
        %5788 = vmatpush1.msra.mxu0 0.0
        %5789 = vmatprep.subr.mxu0 0.0
        %5790 = vmatpush1.msra.mxu0 0.0
        %5791 = vmatprep.subr.mxu0 0.0
        %5792 = vmatpush1.msra.mxu0 0.0
        %5793 = vmatprep.subr.mxu0 0.0
        %5794 = vmatpush1.msra.mxu0 0.0
        %5795 = vmatprep.subr.mxu0 0.0
        %5796 = vmatpush1.msra.mxu0 0.0
        %5797 = vmatprep.mubr.f32.mxu0 0.0
        %5798 = vmatmul.mubr.f32.gmra.mrb[0].mxu0 %v5707
        %v5799 = vpop.f32.mrb[0].mxu0
        %v5800 = vadd.f32 0.0, %v5799
        %v5801 = vpop.f32.mrb[0].mxu0
        %5802 = vmatprep.mubr.f32.mxu0 0.0
        %5803 = vmatmul.mubr.f32.gmra.mrb[0].mxu0 %v5710
        %v5804 = vpop.f32.mrb[0].mxu0
        %v5805 = vadd.f32 0.0, %v5804
        %v5806 = vpop.f32.mrb[0].mxu0
        %5807 = vmatprep.mubr.f32.mxu0 0.0
        %5808 = vmatmul.mubr.f32.gmra.mrb[0].mxu0 %v5713
        %v5809 = vpop.f32.mrb[0].mxu0
        %v5810 = vadd.f32 0.0, %v5809
        %v5811 = vpop.f32.mrb[0].mxu0
        %5812 = vmatprep.mubr.f32.mxu0 0.0
        %5813 = vmatmul.mubr.f32.gmra.mrb[0].mxu0 %v5716
        %v5814 = vpop.f32.mrb[0].mxu0
        %v5815 = vadd.f32 0.0, %v5814
        %v5816 = vpop.f32.mrb[0].mxu0
        %5817 = vmatprep.mubr.f32.mxu0 0.0
        %5818 = vmatmul.mubr.f32.gmra.mrb[0].mxu0 %v5719
        %v5819 = vpop.f32.mrb[0].mxu0
        %v5820 = vadd.f32 0.0, %v5819
        %v5821 = vpop.f32.mrb[0].mxu0
        %5822 = vmatprep.mubr.f32.mxu0 0.0
        %5823 = vmatmul.mubr.f32.gmra.mrb[0].mxu0 %v5722
        %v5824 = vpop.f32.mrb[0].mxu0
        %v5825 = vadd.f32 0.0, %v5824
        %v5826 = vpop.f32.mrb[0].mxu0
        %5827 = vmatprep.mubr.f32.mxu0 0.0
        %5828 = vmatmul.mubr.f32.gmra.mrb[0].mxu0 %v5725
        %v5829 = vpop.f32.mrb[0].mxu0
        %v5830 = vadd.f32 0.0, %v5829
        %v5831 = vpop.f32.mrb[0].mxu0
        %5832 = vmatprep.mubr.f32.mxu0 0.0
        %5833 = vmatmul.mubr.f32.gmra.mrb[0].mxu0 %v5728
        %v5834 = vpop.f32.mrb[0].mxu0
        %v5835 = vadd.f32 0.0, %v5834
        %v5836 = vpop.f32.mrb[0].mxu0
        %5837 = vdwg.mxu0
        %v5838 = vadd.f32 %v4959, %v5800
        %v5839 = vadd.f32 %v4960, %v5805
        %v5840 = vadd.f32 %v4961, %v5810
        %v5841 = vadd.f32 %v4962, %v5815
        %v5842 = vadd.f32 %v4963, %v5820
        %v5843 = vadd.f32 %v4964, %v5825
        %v5844 = vadd.f32 %v4965, %v5830
        %v5845 = vadd.f32 %v4966, %v5835
        %s5846 = scalar_lea.vmem %s3, 768
        %v5847 = vld [vmem:[%s5846] sm:$0xff]
        %v5848 = vld [vmem:[%s5846 + $0x8] sm:$0xff]
        %v5849 = vld [vmem:[%s5846 + $0x10] sm:$0xff]
        %v5850 = vld [vmem:[%s5846 + $0x18] sm:$0xff]
        %v5851 = vld [vmem:[%s5846 + $0x20] sm:$0xff]
        %v5852 = vld [vmem:[%s5846 + $0x28] sm:$0xff]
        %v5853 = vld [vmem:[%s5846 + $0x30] sm:$0xff]
        %v5854 = vld [vmem:[%s5846 + $0x38] sm:$0xff]
        %v5855 = vld [vmem:[%s5846 + $0x40] sm:$0xff]
        %v5856 = vld [vmem:[%s5846 + $0x48] sm:$0xff]
        %v5857 = vld [vmem:[%s5846 + $0x50] sm:$0xff]
        %v5858 = vld [vmem:[%s5846 + $0x58] sm:$0xff]
        %v5859 = vld [vmem:[%s5846 + $0x60] sm:$0xff]
        %v5860 = vld [vmem:[%s5846 + $0x68] sm:$0xff]
        %v5861 = vld [vmem:[%s5846 + $0x70] sm:$0xff]
        %v5862 = vld [vmem:[%s5846 + $0x78] sm:$0xff]
        %5863 = vmatprep.subr.mxu0 0.0
        %5864 = vmatpush1.msra.mxu0 %v5847
        %5865 = vmatprep.subr.mxu0 0.0
        %5866 = vmatpush1.msra.mxu0 %v5848
        %5867 = vmatprep.subr.mxu0 0.0
        %5868 = vmatpush1.msra.mxu0 %v5849
        %5869 = vmatprep.subr.mxu0 0.0
        %5870 = vmatpush1.msra.mxu0 %v5850
        %5871 = vmatprep.subr.mxu0 0.0
        %5872 = vmatpush1.msra.mxu0 %v5851
        %5873 = vmatprep.subr.mxu0 0.0
        %5874 = vmatpush1.msra.mxu0 %v5852
        %5875 = vmatprep.subr.mxu0 0.0
        %5876 = vmatpush1.msra.mxu0 %v5853
        %5877 = vmatprep.subr.mxu0 0.0
        %5878 = vmatpush1.msra.mxu0 %v5854
        %5879 = vmatprep.subr.mxu0 0.0
        %5880 = vmatpush1.msra.mxu0 %v5855
        %5881 = vmatprep.subr.mxu0 0.0
        %5882 = vmatpush1.msra.mxu0 %v5856
        %5883 = vmatprep.subr.mxu0 0.0
        %5884 = vmatpush1.msra.mxu0 %v5857
        %5885 = vmatprep.subr.mxu0 0.0
        %5886 = vmatpush1.msra.mxu0 %v5858
        %5887 = vmatprep.subr.mxu0 0.0
        %5888 = vmatpush1.msra.mxu0 %v5859
        %5889 = vmatprep.subr.mxu0 0.0
        %5890 = vmatpush1.msra.mxu0 %v5860
        %5891 = vmatprep.subr.mxu0 0.0
        %5892 = vmatpush1.msra.mxu0 %v5861
        %5893 = vmatprep.subr.mxu0 0.0
        %5894 = vmatpush1.msra.mxu0 %v5862
        %5895 = vmatprep.subr.mxu0 0.0
        %5896 = vmatpush1.msra.mxu0 0.0
        %5897 = vmatprep.subr.mxu0 0.0
        %5898 = vmatpush1.msra.mxu0 0.0
        %5899 = vmatprep.subr.mxu0 0.0
        %5900 = vmatpush1.msra.mxu0 0.0
        %5901 = vmatprep.subr.mxu0 0.0
        %5902 = vmatpush1.msra.mxu0 0.0
        %5903 = vmatprep.subr.mxu0 0.0
        %5904 = vmatpush1.msra.mxu0 0.0
        %5905 = vmatprep.subr.mxu0 0.0
        %5906 = vmatpush1.msra.mxu0 0.0
        %5907 = vmatprep.subr.mxu0 0.0
        %5908 = vmatpush1.msra.mxu0 0.0
        %5909 = vmatprep.subr.mxu0 0.0
        %5910 = vmatpush1.msra.mxu0 0.0
        %5911 = vmatprep.subr.mxu0 0.0
        %5912 = vmatpush1.msra.mxu0 0.0
        %5913 = vmatprep.subr.mxu0 0.0
        %5914 = vmatpush1.msra.mxu0 0.0
        %5915 = vmatprep.subr.mxu0 0.0
        %5916 = vmatpush1.msra.mxu0 0.0
        %5917 = vmatprep.subr.mxu0 0.0
        %5918 = vmatpush1.msra.mxu0 0.0
        %5919 = vmatprep.subr.mxu0 0.0
        %5920 = vmatpush1.msra.mxu0 0.0
        %5921 = vmatprep.subr.mxu0 0.0
        %5922 = vmatpush1.msra.mxu0 0.0
        %5923 = vmatprep.subr.mxu0 0.0
        %5924 = vmatpush1.msra.mxu0 0.0
        %5925 = vmatprep.subr.mxu0 0.0
        %5926 = vmatpush1.msra.mxu0 0.0
        %5927 = vmatprep.mubr.f32.mxu0 0.0
        %5928 = vmatmul.mubr.f32.gmra.mrb[0].mxu0 %v573
        %v5929 = vpop.f32.mrb[0].mxu0
        %v5930 = vadd.f32 0.0, %v5929
        %v5931 = vpop.f32.mrb[0].mxu0
        %5932 = vmatprep.mubr.f32.mxu0 0.0
        %5933 = vmatmul.mubr.f32.gmra.mrb[0].mxu0 %v574
        %v5934 = vpop.f32.mrb[0].mxu0
        %v5935 = vadd.f32 0.0, %v5934
        %v5936 = vpop.f32.mrb[0].mxu0
        %5937 = vmatprep.mubr.f32.mxu0 0.0
        %5938 = vmatmul.mubr.f32.gmra.mrb[0].mxu0 %v575
        %v5939 = vpop.f32.mrb[0].mxu0
        %v5940 = vadd.f32 0.0, %v5939
        %v5941 = vpop.f32.mrb[0].mxu0
        %5942 = vmatprep.mubr.f32.mxu0 0.0
        %5943 = vmatmul.mubr.f32.gmra.mrb[0].mxu0 %v576
        %v5944 = vpop.f32.mrb[0].mxu0
        %v5945 = vadd.f32 0.0, %v5944
        %v5946 = vpop.f32.mrb[0].mxu0
        %5947 = vmatprep.mubr.f32.mxu0 0.0
        %5948 = vmatmul.mubr.f32.gmra.mrb[0].mxu0 %v577
        %v5949 = vpop.f32.mrb[0].mxu0
        %v5950 = vadd.f32 0.0, %v5949
        %v5951 = vpop.f32.mrb[0].mxu0
        %5952 = vmatprep.mubr.f32.mxu0 0.0
        %5953 = vmatmul.mubr.f32.gmra.mrb[0].mxu0 %v578
        %v5954 = vpop.f32.mrb[0].mxu0
        %v5955 = vadd.f32 0.0, %v5954
        %v5956 = vpop.f32.mrb[0].mxu0
        %5957 = vmatprep.mubr.f32.mxu0 0.0
        %5958 = vmatmul.mubr.f32.gmra.mrb[0].mxu0 %v579
        %v5959 = vpop.f32.mrb[0].mxu0
        %v5960 = vadd.f32 0.0, %v5959
        %v5961 = vpop.f32.mrb[0].mxu0
        %5962 = vmatprep.mubr.f32.mxu0 0.0
        %5963 = vmatmul.mubr.f32.gmra.mrb[0].mxu0 %v580
        %v5964 = vpop.f32.mrb[0].mxu0
        %v5965 = vadd.f32 0.0, %v5964
        %v5966 = vpop.f32.mrb[0].mxu0
        %5967 = vdwg.mxu0
        %s5968 = scalar_lea.vmem %s2, 768
        %v5969 = vld [vmem:[%s5968] sm:$0xff]
        %v5970 = vld [vmem:[%s5968 + $0x8] sm:$0xff]
        %v5971 = vld [vmem:[%s5968 + $0x10] sm:$0xff]
        %v5972 = vld [vmem:[%s5968 + $0x18] sm:$0xff]
        %v5973 = vld [vmem:[%s5968 + $0x20] sm:$0xff]
        %v5974 = vld [vmem:[%s5968 + $0x28] sm:$0xff]
        %v5975 = vld [vmem:[%s5968 + $0x30] sm:$0xff]
        %v5976 = vld [vmem:[%s5968 + $0x38] sm:$0xff]
        %v5977 = vld [vmem:[%s5968 + $0x40] sm:$0xff]
        %v5978 = vld [vmem:[%s5968 + $0x48] sm:$0xff]
        %v5979 = vld [vmem:[%s5968 + $0x50] sm:$0xff]
        %v5980 = vld [vmem:[%s5968 + $0x58] sm:$0xff]
        %v5981 = vld [vmem:[%s5968 + $0x60] sm:$0xff]
        %v5982 = vld [vmem:[%s5968 + $0x68] sm:$0xff]
        %v5983 = vld [vmem:[%s5968 + $0x70] sm:$0xff]
        %v5984 = vld [vmem:[%s5968 + $0x78] sm:$0xff]
        %5985 = vmatprep.subr.mxu0 0.0
        %5986 = vmatpush1.msra.mxu0 %v5969
        %5987 = vmatprep.subr.mxu0 0.0
        %5988 = vmatpush1.msra.mxu0 %v5970
        %5989 = vmatprep.subr.mxu0 0.0
        %5990 = vmatpush1.msra.mxu0 %v5971
        %5991 = vmatprep.subr.mxu0 0.0
        %5992 = vmatpush1.msra.mxu0 %v5972
        %5993 = vmatprep.subr.mxu0 0.0
        %5994 = vmatpush1.msra.mxu0 %v5973
        %5995 = vmatprep.subr.mxu0 0.0
        %5996 = vmatpush1.msra.mxu0 %v5974
        %5997 = vmatprep.subr.mxu0 0.0
        %5998 = vmatpush1.msra.mxu0 %v5975
        %5999 = vmatprep.subr.mxu0 0.0
        %6000 = vmatpush1.msra.mxu0 %v5976
        %6001 = vmatprep.subr.mxu0 0.0
        %6002 = vmatpush1.msra.mxu0 %v5977
        %6003 = vmatprep.subr.mxu0 0.0
        %6004 = vmatpush1.msra.mxu0 %v5978
        %6005 = vmatprep.subr.mxu0 0.0
        %6006 = vmatpush1.msra.mxu0 %v5979
        %6007 = vmatprep.subr.mxu0 0.0
        %6008 = vmatpush1.msra.mxu0 %v5980
        %6009 = vmatprep.subr.mxu0 0.0
        %6010 = vmatpush1.msra.mxu0 %v5981
        %6011 = vmatprep.subr.mxu0 0.0
        %6012 = vmatpush1.msra.mxu0 %v5982
        %6013 = vmatprep.subr.mxu0 0.0
        %6014 = vmatpush1.msra.mxu0 %v5983
        %6015 = vmatprep.subr.mxu0 0.0
        %6016 = vmatpush1.msra.mxu0 %v5984
        %6017 = vmatprep.subr.mxu0 0.0
        %6018 = vmatpush1.msra.mxu0 0.0
        %6019 = vmatprep.subr.mxu0 0.0
        %6020 = vmatpush1.msra.mxu0 0.0
        %6021 = vmatprep.subr.mxu0 0.0
        %6022 = vmatpush1.msra.mxu0 0.0
        %6023 = vmatprep.subr.mxu0 0.0
        %6024 = vmatpush1.msra.mxu0 0.0
        %6025 = vmatprep.subr.mxu0 0.0
        %6026 = vmatpush1.msra.mxu0 0.0
        %6027 = vmatprep.subr.mxu0 0.0
        %6028 = vmatpush1.msra.mxu0 0.0
        %6029 = vmatprep.subr.mxu0 0.0
        %6030 = vmatpush1.msra.mxu0 0.0
        %6031 = vmatprep.subr.mxu0 0.0
        %6032 = vmatpush1.msra.mxu0 0.0
        %6033 = vmatprep.subr.mxu0 0.0
        %6034 = vmatpush1.msra.mxu0 0.0
        %6035 = vmatprep.subr.mxu0 0.0
        %6036 = vmatpush1.msra.mxu0 0.0
        %6037 = vmatprep.subr.mxu0 0.0
        %6038 = vmatpush1.msra.mxu0 0.0
        %6039 = vmatprep.subr.mxu0 0.0
        %6040 = vmatpush1.msra.mxu0 0.0
        %6041 = vmatprep.subr.mxu0 0.0
        %6042 = vmatpush1.msra.mxu0 0.0
        %6043 = vmatprep.subr.mxu0 0.0
        %6044 = vmatpush1.msra.mxu0 0.0
        %6045 = vmatprep.subr.mxu0 0.0
        %6046 = vmatpush1.msra.mxu0 0.0
        %6047 = vmatprep.subr.mxu0 0.0
        %6048 = vmatpush1.msra.mxu0 0.0
        %6049 = vmatprep.mubr.f32.mxu0 0.0
        %6050 = vmatmul.mubr.f32.gmra.mrb[0].mxu0 %v573
        %v6051 = vpop.f32.mrb[0].mxu0
        %v6052 = vadd.f32 0.0, %v6051
        %v6053 = vpop.f32.mrb[0].mxu0
        %6054 = vmatprep.mubr.f32.mxu0 0.0
        %6055 = vmatmul.mubr.f32.gmra.mrb[0].mxu0 %v574
        %v6056 = vpop.f32.mrb[0].mxu0
        %v6057 = vadd.f32 0.0, %v6056
        %v6058 = vpop.f32.mrb[0].mxu0
        %6059 = vmatprep.mubr.f32.mxu0 0.0
        %6060 = vmatmul.mubr.f32.gmra.mrb[0].mxu0 %v575
        %v6061 = vpop.f32.mrb[0].mxu0
        %v6062 = vadd.f32 0.0, %v6061
        %v6063 = vpop.f32.mrb[0].mxu0
        %6064 = vmatprep.mubr.f32.mxu0 0.0
        %6065 = vmatmul.mubr.f32.gmra.mrb[0].mxu0 %v576
        %v6066 = vpop.f32.mrb[0].mxu0
        %v6067 = vadd.f32 0.0, %v6066
        %v6068 = vpop.f32.mrb[0].mxu0
        %6069 = vmatprep.mubr.f32.mxu0 0.0
        %6070 = vmatmul.mubr.f32.gmra.mrb[0].mxu0 %v577
        %v6071 = vpop.f32.mrb[0].mxu0
        %v6072 = vadd.f32 0.0, %v6071
        %v6073 = vpop.f32.mrb[0].mxu0
        %6074 = vmatprep.mubr.f32.mxu0 0.0
        %6075 = vmatmul.mubr.f32.gmra.mrb[0].mxu0 %v578
        %v6076 = vpop.f32.mrb[0].mxu0
        %v6077 = vadd.f32 0.0, %v6076
        %v6078 = vpop.f32.mrb[0].mxu0
        %6079 = vmatprep.mubr.f32.mxu0 0.0
        %6080 = vmatmul.mubr.f32.gmra.mrb[0].mxu0 %v579
        %v6081 = vpop.f32.mrb[0].mxu0
        %v6082 = vadd.f32 0.0, %v6081
        %v6083 = vpop.f32.mrb[0].mxu0
        %6084 = vmatprep.mubr.f32.mxu0 0.0
        %6085 = vmatmul.mubr.f32.gmra.mrb[0].mxu0 %v580
        %v6086 = vpop.f32.mrb[0].mxu0
        %v6087 = vadd.f32 0.0, %v6086
        %v6088 = vpop.f32.mrb[0].mxu0
        %6089 = vdwg.mxu0
        %s6090 = scalar_lea.vmem %s4, 768
        %v6091 = vld [vmem:[%s6090] sm:$0xff]
        %v6092 = vld [vmem:[%s6090 + $0x8] sm:$0xff]
        %v6093 = vld [vmem:[%s6090 + $0x10] sm:$0xff]
        %v6094 = vld [vmem:[%s6090 + $0x18] sm:$0xff]
        %v6095 = vld [vmem:[%s6090 + $0x20] sm:$0xff]
        %v6096 = vld [vmem:[%s6090 + $0x28] sm:$0xff]
        %v6097 = vld [vmem:[%s6090 + $0x30] sm:$0xff]
        %v6098 = vld [vmem:[%s6090 + $0x38] sm:$0xff]
        %v6099 = vld [vmem:[%s6090 + $0x40] sm:$0xff]
        %v6100 = vld [vmem:[%s6090 + $0x48] sm:$0xff]
        %v6101 = vld [vmem:[%s6090 + $0x50] sm:$0xff]
        %v6102 = vld [vmem:[%s6090 + $0x58] sm:$0xff]
        %v6103 = vld [vmem:[%s6090 + $0x60] sm:$0xff]
        %v6104 = vld [vmem:[%s6090 + $0x68] sm:$0xff]
        %v6105 = vld [vmem:[%s6090 + $0x70] sm:$0xff]
        %v6106 = vld [vmem:[%s6090 + $0x78] sm:$0xff]
        %6107 = vmatprep.subr.mxu0 0.0
        %6108 = vmatpush1.msra.mxu0 %v6091
        %6109 = vmatprep.subr.mxu0 0.0
        %6110 = vmatpush1.msra.mxu0 %v6092
        %6111 = vmatprep.subr.mxu0 0.0
        %6112 = vmatpush1.msra.mxu0 %v6093
        %6113 = vmatprep.subr.mxu0 0.0
        %6114 = vmatpush1.msra.mxu0 %v6094
        %6115 = vmatprep.subr.mxu0 0.0
        %6116 = vmatpush1.msra.mxu0 %v6095
        %6117 = vmatprep.subr.mxu0 0.0
        %6118 = vmatpush1.msra.mxu0 %v6096
        %6119 = vmatprep.subr.mxu0 0.0
        %6120 = vmatpush1.msra.mxu0 %v6097
        %6121 = vmatprep.subr.mxu0 0.0
        %6122 = vmatpush1.msra.mxu0 %v6098
        %6123 = vmatprep.subr.mxu0 0.0
        %6124 = vmatpush1.msra.mxu0 %v6099
        %6125 = vmatprep.subr.mxu0 0.0
        %6126 = vmatpush1.msra.mxu0 %v6100
        %6127 = vmatprep.subr.mxu0 0.0
        %6128 = vmatpush1.msra.mxu0 %v6101
        %6129 = vmatprep.subr.mxu0 0.0
        %6130 = vmatpush1.msra.mxu0 %v6102
        %6131 = vmatprep.subr.mxu0 0.0
        %6132 = vmatpush1.msra.mxu0 %v6103
        %6133 = vmatprep.subr.mxu0 0.0
        %6134 = vmatpush1.msra.mxu0 %v6104
        %6135 = vmatprep.subr.mxu0 0.0
        %6136 = vmatpush1.msra.mxu0 %v6105
        %6137 = vmatprep.subr.mxu0 0.0
        %6138 = vmatpush1.msra.mxu0 %v6106
        %6139 = vmatprep.subr.mxu0 0.0
        %6140 = vmatpush1.msra.mxu0 0.0
        %6141 = vmatprep.subr.mxu0 0.0
        %6142 = vmatpush1.msra.mxu0 0.0
        %6143 = vmatprep.subr.mxu0 0.0
        %6144 = vmatpush1.msra.mxu0 0.0
        %6145 = vmatprep.subr.mxu0 0.0
        %6146 = vmatpush1.msra.mxu0 0.0
        %6147 = vmatprep.subr.mxu0 0.0
        %6148 = vmatpush1.msra.mxu0 0.0
        %6149 = vmatprep.subr.mxu0 0.0
        %6150 = vmatpush1.msra.mxu0 0.0
        %6151 = vmatprep.subr.mxu0 0.0
        %6152 = vmatpush1.msra.mxu0 0.0
        %6153 = vmatprep.subr.mxu0 0.0
        %6154 = vmatpush1.msra.mxu0 0.0
        %6155 = vmatprep.subr.mxu0 0.0
        %6156 = vmatpush1.msra.mxu0 0.0
        %6157 = vmatprep.subr.mxu0 0.0
        %6158 = vmatpush1.msra.mxu0 0.0
        %6159 = vmatprep.subr.mxu0 0.0
        %6160 = vmatpush1.msra.mxu0 0.0
        %6161 = vmatprep.subr.mxu0 0.0
        %6162 = vmatpush1.msra.mxu0 0.0
        %6163 = vmatprep.subr.mxu0 0.0
        %6164 = vmatpush1.msra.mxu0 0.0
        %6165 = vmatprep.subr.mxu0 0.0
        %6166 = vmatpush1.msra.mxu0 0.0
        %6167 = vmatprep.subr.mxu0 0.0
        %6168 = vmatpush1.msra.mxu0 0.0
        %6169 = vmatprep.subr.mxu0 0.0
        %6170 = vmatpush1.msra.mxu0 0.0
        %6171 = vmatprep.mubr.f32.mxu0 0.0
        %6172 = vmatmul.mubr.f32.gmra.mrb[0].mxu0 %v573
        %v6173 = vpop.f32.mrb[0].mxu0
        %v6174 = vadd.f32 0.0, %v6173
        %v6175 = vpop.f32.mrb[0].mxu0
        %6176 = vmatprep.mubr.f32.mxu0 0.0
        %6177 = vmatmul.mubr.f32.gmra.mrb[0].mxu0 %v574
        %v6178 = vpop.f32.mrb[0].mxu0
        %v6179 = vadd.f32 0.0, %v6178
        %v6180 = vpop.f32.mrb[0].mxu0
        %6181 = vmatprep.mubr.f32.mxu0 0.0
        %6182 = vmatmul.mubr.f32.gmra.mrb[0].mxu0 %v575
        %v6183 = vpop.f32.mrb[0].mxu0
        %v6184 = vadd.f32 0.0, %v6183
        %v6185 = vpop.f32.mrb[0].mxu0
        %6186 = vmatprep.mubr.f32.mxu0 0.0
        %6187 = vmatmul.mubr.f32.gmra.mrb[0].mxu0 %v576
        %v6188 = vpop.f32.mrb[0].mxu0
        %v6189 = vadd.f32 0.0, %v6188
        %v6190 = vpop.f32.mrb[0].mxu0
        %6191 = vmatprep.mubr.f32.mxu0 0.0
        %6192 = vmatmul.mubr.f32.gmra.mrb[0].mxu0 %v577
        %v6193 = vpop.f32.mrb[0].mxu0
        %v6194 = vadd.f32 0.0, %v6193
        %v6195 = vpop.f32.mrb[0].mxu0
        %6196 = vmatprep.mubr.f32.mxu0 0.0
        %6197 = vmatmul.mubr.f32.gmra.mrb[0].mxu0 %v578
        %v6198 = vpop.f32.mrb[0].mxu0
        %v6199 = vadd.f32 0.0, %v6198
        %v6200 = vpop.f32.mrb[0].mxu0
        %6201 = vmatprep.mubr.f32.mxu0 0.0
        %6202 = vmatmul.mubr.f32.gmra.mrb[0].mxu0 %v579
        %v6203 = vpop.f32.mrb[0].mxu0
        %v6204 = vadd.f32 0.0, %v6203
        %v6205 = vpop.f32.mrb[0].mxu0
        %6206 = vmatprep.mubr.f32.mxu0 0.0
        %6207 = vmatmul.mubr.f32.gmra.mrb[0].mxu0 %v580
        %v6208 = vpop.f32.mrb[0].mxu0
        %v6209 = vadd.f32 0.0, %v6208
        %v6210 = vpop.f32.mrb[0].mxu0
        %6211 = vdwg.mxu0
        %v6213 = vsel %vm952, %v5930, 0
        %v6216 = vsel %vm952, %v5935, 0
        %v6219 = vsel %vm952, %v5940, 0
        %v6222 = vsel %vm952, %v5945, 0
        %v6225 = vsel %vm952, %v5950, 0
        %v6228 = vsel %vm952, %v5955, 0
        %v6231 = vsel %vm952, %v5960, 0
        %v6234 = vsel %vm952, %v5965, 0
        %v6237 = vsel %vm952, %v6052, 0
        %v6240 = vsel %vm952, %v6057, 0
        %v6243 = vsel %vm952, %v6062, 0
        %v6246 = vsel %vm952, %v6067, 0
        %v6249 = vsel %vm952, %v6072, 0
        %v6252 = vsel %vm952, %v6077, 0
        %v6255 = vsel %vm952, %v6082, 0
        %v6258 = vsel %vm952, %v6087, 0
        %6260 = vmatprep.subr.mxu0 0.0
        %6261 = vmatpush1.xpose.msra.mxu0 %v6237
        %6262 = vmatprep.subr.mxu0 0.0
        %6263 = vmatpush1.xpose.msra.mxu0 %v6240
        %6264 = vmatprep.subr.mxu0 0.0
        %6265 = vmatpush1.xpose.msra.mxu0 %v6243
        %6266 = vmatprep.subr.mxu0 0.0
        %6267 = vmatpush1.xpose.msra.mxu0 %v6246
        %6268 = vmatprep.subr.mxu0 0.0
        %6269 = vmatpush1.xpose.msra.mxu0 %v6249
        %6270 = vmatprep.subr.mxu0 0.0
        %6271 = vmatpush1.xpose.msra.mxu0 %v6252
        %6272 = vmatprep.subr.mxu0 0.0
        %6273 = vmatpush1.xpose.msra.mxu0 %v6255
        %6274 = vmatprep.subr.mxu0 0.0
        %6275 = vmatpush1.xpose.msra.mxu0 %v6258
        %6276 = vmatprep.subr.mxu0 0.0
        %6277 = vmatpush1.xpose.msra.mxu0 0.0
        %6278 = vmatprep.subr.mxu0 0.0
        %6279 = vmatpush1.xpose.msra.mxu0 0.0
        %6280 = vmatprep.subr.mxu0 0.0
        %6281 = vmatpush1.xpose.msra.mxu0 0.0
        %6282 = vmatprep.subr.mxu0 0.0
        %6283 = vmatpush1.xpose.msra.mxu0 0.0
        %6284 = vmatprep.subr.mxu0 0.0
        %6285 = vmatpush1.xpose.msra.mxu0 0.0
        %6286 = vmatprep.subr.mxu0 0.0
        %6287 = vmatpush1.xpose.msra.mxu0 0.0
        %6288 = vmatprep.subr.mxu0 0.0
        %6289 = vmatpush1.xpose.msra.mxu0 0.0
        %6290 = vmatprep.subr.mxu0 0.0
        %6291 = vmatpush1.xpose.msra.mxu0 0.0
        %6292 = vmatprep.subr.mxu0 0.0
        %6293 = vmatpush1.xpose.msra.mxu0 0.0
        %6294 = vmatprep.subr.mxu0 0.0
        %6295 = vmatpush1.xpose.msra.mxu0 0.0
        %6296 = vmatprep.subr.mxu0 0.0
        %6297 = vmatpush1.xpose.msra.mxu0 0.0
        %6298 = vmatprep.subr.mxu0 0.0
        %6299 = vmatpush1.xpose.msra.mxu0 0.0
        %6300 = vmatprep.subr.mxu0 0.0
        %6301 = vmatpush1.xpose.msra.mxu0 0.0
        %6302 = vmatprep.subr.mxu0 0.0
        %6303 = vmatpush1.xpose.msra.mxu0 0.0
        %6304 = vmatprep.subr.mxu0 0.0
        %6305 = vmatpush1.xpose.msra.mxu0 0.0
        %6306 = vmatprep.subr.mxu0 0.0
        %6307 = vmatpush1.xpose.msra.mxu0 0.0
        %6308 = vmatprep.subr.mxu0 0.0
        %6309 = vmatpush1.xpose.msra.mxu0 0.0
        %6310 = vmatprep.subr.mxu0 0.0
        %6311 = vmatpush1.xpose.msra.mxu0 0.0
        %6312 = vmatprep.subr.mxu0 0.0
        %6313 = vmatpush1.xpose.msra.mxu0 0.0
        %6314 = vmatprep.subr.mxu0 0.0
        %6315 = vmatpush1.xpose.msra.mxu0 0.0
        %6316 = vmatprep.subr.mxu0 0.0
        %6317 = vmatpush1.xpose.msra.mxu0 0.0
        %6318 = vmatprep.subr.mxu0 0.0
        %6319 = vmatpush1.xpose.msra.mxu0 0.0
        %6320 = vmatprep.subr.mxu0 0.0
        %6321 = vmatpush1.xpose.msra.mxu0 0.0
        %6322 = vmatprep.subr.mxu0 0.0
        %6323 = vmatpush1.xpose.msra.mxu0 0.0
        %6324 = vmatprep.mubr.f32.mxu0 0.0
        %6325 = vmatmul.mubr.f32.gmra.mrb[0].mxu0 %v6213
        %v6326 = vpop.f32.mrb[0].mxu0
        %v6327 = vadd.f32 %v581, %v6326
        %v6328 = vpop.f32.mrb[0].mxu0
        %6329 = vmatprep.mubr.f32.mxu0 0.0
        %6330 = vmatmul.mubr.f32.gmra.mrb[0].mxu0 %v6216
        %v6331 = vpop.f32.mrb[0].mxu0
        %v6332 = vadd.f32 %v582, %v6331
        %v6333 = vpop.f32.mrb[0].mxu0
        %6334 = vmatprep.mubr.f32.mxu0 0.0
        %6335 = vmatmul.mubr.f32.gmra.mrb[0].mxu0 %v6219
        %v6336 = vpop.f32.mrb[0].mxu0
        %v6337 = vadd.f32 %v583, %v6336
        %v6338 = vpop.f32.mrb[0].mxu0
        %6339 = vmatprep.mubr.f32.mxu0 0.0
        %6340 = vmatmul.mubr.f32.gmra.mrb[0].mxu0 %v6222
        %v6341 = vpop.f32.mrb[0].mxu0
        %v6342 = vadd.f32 %v584, %v6341
        %v6343 = vpop.f32.mrb[0].mxu0
        %6344 = vmatprep.mubr.f32.mxu0 0.0
        %6345 = vmatmul.mubr.f32.gmra.mrb[0].mxu0 %v6225
        %v6346 = vpop.f32.mrb[0].mxu0
        %v6347 = vadd.f32 %v585, %v6346
        %v6348 = vpop.f32.mrb[0].mxu0
        %6349 = vmatprep.mubr.f32.mxu0 0.0
        %6350 = vmatmul.mubr.f32.gmra.mrb[0].mxu0 %v6228
        %v6351 = vpop.f32.mrb[0].mxu0
        %v6352 = vadd.f32 %v586, %v6351
        %v6353 = vpop.f32.mrb[0].mxu0
        %6354 = vmatprep.mubr.f32.mxu0 0.0
        %6355 = vmatmul.mubr.f32.gmra.mrb[0].mxu0 %v6231
        %v6356 = vpop.f32.mrb[0].mxu0
        %v6357 = vadd.f32 %v587, %v6356
        %v6358 = vpop.f32.mrb[0].mxu0
        %6359 = vmatprep.mubr.f32.mxu0 0.0
        %6360 = vmatmul.mubr.f32.gmra.mrb[0].mxu0 %v6234
        %v6361 = vpop.f32.mrb[0].mxu0
        %v6362 = vadd.f32 %v588, %v6361
        %v6363 = vpop.f32.mrb[0].mxu0
        %6364 = vdwg.mxu0
        %v6365 = vsel %vm1106, %v6327, -inf
        %6366 = vmax.xlane.f32.xlu0 %v6365
        %v6367 = vpop.xlane.xlu0 %6366
        %v6368 = vsel %vm1106, %v6332, -inf
        %6369 = vmax.xlane.f32.xlu0 %v6368
        %v6370 = vpop.xlane.xlu0 %6369
        %v6371 = vsel %vm1106, %v6337, -inf
        %6372 = vmax.xlane.f32.xlu0 %v6371
        %v6373 = vpop.xlane.xlu0 %6372
        %v6374 = vsel %vm1106, %v6342, -inf
        %6375 = vmax.xlane.f32.xlu0 %v6374
        %v6376 = vpop.xlane.xlu0 %6375
        %v6377 = vsel %vm1106, %v6347, -inf
        %6378 = vmax.xlane.f32.xlu0 %v6377
        %v6379 = vpop.xlane.xlu0 %6378
        %v6380 = vsel %vm1106, %v6352, -inf
        %6381 = vmax.xlane.f32.xlu0 %v6380
        %v6382 = vpop.xlane.xlu0 %6381
        %v6383 = vsel %vm1106, %v6357, -inf
        %6384 = vmax.xlane.f32.xlu0 %v6383
        %v6385 = vpop.xlane.xlu0 %6384
        %v6386 = vsel %vm1106, %v6362, -inf
        %6387 = vmax.xlane.f32.xlu0 %v6386
        %v6388 = vpop.xlane.xlu0 %6387
        %v6389 = vsub.f32 %v6327, %v6367
        %v6390 = vsub.f32 %v6332, %v6370
        %v6391 = vsub.f32 %v6337, %v6373
        %v6392 = vsub.f32 %v6342, %v6376
        %v6393 = vsub.f32 %v6347, %v6379
        %v6394 = vsub.f32 %v6352, %v6382
        %v6395 = vsub.f32 %v6357, %v6385
        %v6396 = vsub.f32 %v6362, %v6388
        %v6397 = vmul.f32 %v6389, 1.442695
        %v6398 = vpow.pop %v6397
        %v6399 = vmul.f32 %v6390, 1.442695
        %v6400 = vpow.pop %v6399
        %v6401 = vmul.f32 %v6391, 1.442695
        %v6402 = vpow.pop %v6401
        %v6403 = vmul.f32 %v6392, 1.442695
        %v6404 = vpow.pop %v6403
        %v6405 = vmul.f32 %v6393, 1.442695
        %v6406 = vpow.pop %v6405
        %v6407 = vmul.f32 %v6394, 1.442695
        %v6408 = vpow.pop %v6407
        %v6409 = vmul.f32 %v6395, 1.442695
        %v6410 = vpow.pop %v6409
        %v6411 = vmul.f32 %v6396, 1.442695
        %v6412 = vpow.pop %v6411
        %v6413 = vsel %vm1106, %v6398, 0.0
        %6414 = vadd.xlane.f32.xlu0 %v6413
        %v6415 = vpop.xlane.xlu0 %6414
        %v6416 = vsel %vm1106, %v6400, 0.0
        %6417 = vadd.xlane.f32.xlu0 %v6416
        %v6418 = vpop.xlane.xlu0 %6417
        %v6419 = vsel %vm1106, %v6402, 0.0
        %6420 = vadd.xlane.f32.xlu0 %v6419
        %v6421 = vpop.xlane.xlu0 %6420
        %v6422 = vsel %vm1106, %v6404, 0.0
        %6423 = vadd.xlane.f32.xlu0 %v6422
        %v6424 = vpop.xlane.xlu0 %6423
        %v6425 = vsel %vm1106, %v6406, 0.0
        %6426 = vadd.xlane.f32.xlu0 %v6425
        %v6427 = vpop.xlane.xlu0 %6426
        %v6428 = vsel %vm1106, %v6408, 0.0
        %6429 = vadd.xlane.f32.xlu0 %v6428
        %v6430 = vpop.xlane.xlu0 %6429
        %v6431 = vsel %vm1106, %v6410, 0.0
        %6432 = vadd.xlane.f32.xlu0 %v6431
        %v6433 = vpop.xlane.xlu0 %6432
        %v6434 = vsel %vm1106, %v6412, 0.0
        %6435 = vadd.xlane.f32.xlu0 %v6434
        %v6436 = vpop.xlane.xlu0 %6435
        %v6437 = vrcp.pop %v6415
        %v6438 = vrcp.pop %v6418
        %v6439 = vrcp.pop %v6421
        %v6440 = vrcp.pop %v6424
        %v6441 = vrcp.pop %v6427
        %v6442 = vrcp.pop %v6430
        %v6443 = vrcp.pop %v6433
        %v6444 = vrcp.pop %v6436
        %v6445 = vmul.f32 %v6398, %v6437
        %v6446 = vmul.f32 %v6400, %v6438
        %v6447 = vmul.f32 %v6402, %v6439
        %v6448 = vmul.f32 %v6404, %v6440
        %v6449 = vmul.f32 %v6406, %v6441
        %v6450 = vmul.f32 %v6408, %v6442
        %v6451 = vmul.f32 %v6410, %v6443
        %v6452 = vmul.f32 %v6412, %v6444
        %v6454 = vsel %vm1106, %v6445, 0
        %v6457 = vsel %vm1106, %v6446, 0
        %v6460 = vsel %vm1106, %v6447, 0
        %v6463 = vsel %vm1106, %v6448, 0
        %v6466 = vsel %vm1106, %v6449, 0
        %v6469 = vsel %vm1106, %v6450, 0
        %v6472 = vsel %vm1106, %v6451, 0
        %v6475 = vsel %vm1106, %v6452, 0
        %6477 = vmatprep.subr.mxu0 0.0
        %6478 = vmatpush1.msra.mxu0 %v6174
        %6479 = vmatprep.subr.mxu0 0.0
        %6480 = vmatpush1.msra.mxu0 %v6179
        %6481 = vmatprep.subr.mxu0 0.0
        %6482 = vmatpush1.msra.mxu0 %v6184
        %6483 = vmatprep.subr.mxu0 0.0
        %6484 = vmatpush1.msra.mxu0 %v6189
        %6485 = vmatprep.subr.mxu0 0.0
        %6486 = vmatpush1.msra.mxu0 %v6194
        %6487 = vmatprep.subr.mxu0 0.0
        %6488 = vmatpush1.msra.mxu0 %v6199
        %6489 = vmatprep.subr.mxu0 0.0
        %6490 = vmatpush1.msra.mxu0 %v6204
        %6491 = vmatprep.subr.mxu0 0.0
        %6492 = vmatpush1.msra.mxu0 %v6209
        %6493 = vmatprep.subr.mxu0 0.0
        %6494 = vmatpush1.msra.mxu0 0.0
        %6495 = vmatprep.subr.mxu0 0.0
        %6496 = vmatpush1.msra.mxu0 0.0
        %6497 = vmatprep.subr.mxu0 0.0
        %6498 = vmatpush1.msra.mxu0 0.0
        %6499 = vmatprep.subr.mxu0 0.0
        %6500 = vmatpush1.msra.mxu0 0.0
        %6501 = vmatprep.subr.mxu0 0.0
        %6502 = vmatpush1.msra.mxu0 0.0
        %6503 = vmatprep.subr.mxu0 0.0
        %6504 = vmatpush1.msra.mxu0 0.0
        %6505 = vmatprep.subr.mxu0 0.0
        %6506 = vmatpush1.msra.mxu0 0.0
        %6507 = vmatprep.subr.mxu0 0.0
        %6508 = vmatpush1.msra.mxu0 0.0
        %6509 = vmatprep.subr.mxu0 0.0
        %6510 = vmatpush1.msra.mxu0 0.0
        %6511 = vmatprep.subr.mxu0 0.0
        %6512 = vmatpush1.msra.mxu0 0.0
        %6513 = vmatprep.subr.mxu0 0.0
        %6514 = vmatpush1.msra.mxu0 0.0
        %6515 = vmatprep.subr.mxu0 0.0
        %6516 = vmatpush1.msra.mxu0 0.0
        %6517 = vmatprep.subr.mxu0 0.0
        %6518 = vmatpush1.msra.mxu0 0.0
        %6519 = vmatprep.subr.mxu0 0.0
        %6520 = vmatpush1.msra.mxu0 0.0
        %6521 = vmatprep.subr.mxu0 0.0
        %6522 = vmatpush1.msra.mxu0 0.0
        %6523 = vmatprep.subr.mxu0 0.0
        %6524 = vmatpush1.msra.mxu0 0.0
        %6525 = vmatprep.subr.mxu0 0.0
        %6526 = vmatpush1.msra.mxu0 0.0
        %6527 = vmatprep.subr.mxu0 0.0
        %6528 = vmatpush1.msra.mxu0 0.0
        %6529 = vmatprep.subr.mxu0 0.0
        %6530 = vmatpush1.msra.mxu0 0.0
        %6531 = vmatprep.subr.mxu0 0.0
        %6532 = vmatpush1.msra.mxu0 0.0
        %6533 = vmatprep.subr.mxu0 0.0
        %6534 = vmatpush1.msra.mxu0 0.0
        %6535 = vmatprep.subr.mxu0 0.0
        %6536 = vmatpush1.msra.mxu0 0.0
        %6537 = vmatprep.subr.mxu0 0.0
        %6538 = vmatpush1.msra.mxu0 0.0
        %6539 = vmatprep.subr.mxu0 0.0
        %6540 = vmatpush1.msra.mxu0 0.0
        %6541 = vmatprep.mubr.f32.mxu0 0.0
        %6542 = vmatmul.mubr.f32.gmra.mrb[0].mxu0 %v6454
        %v6543 = vpop.f32.mrb[0].mxu0
        %v6544 = vadd.f32 0.0, %v6543
        %v6545 = vpop.f32.mrb[0].mxu0
        %6546 = vmatprep.mubr.f32.mxu0 0.0
        %6547 = vmatmul.mubr.f32.gmra.mrb[0].mxu0 %v6457
        %v6548 = vpop.f32.mrb[0].mxu0
        %v6549 = vadd.f32 0.0, %v6548
        %v6550 = vpop.f32.mrb[0].mxu0
        %6551 = vmatprep.mubr.f32.mxu0 0.0
        %6552 = vmatmul.mubr.f32.gmra.mrb[0].mxu0 %v6460
        %v6553 = vpop.f32.mrb[0].mxu0
        %v6554 = vadd.f32 0.0, %v6553
        %v6555 = vpop.f32.mrb[0].mxu0
        %6556 = vmatprep.mubr.f32.mxu0 0.0
        %6557 = vmatmul.mubr.f32.gmra.mrb[0].mxu0 %v6463
        %v6558 = vpop.f32.mrb[0].mxu0
        %v6559 = vadd.f32 0.0, %v6558
        %v6560 = vpop.f32.mrb[0].mxu0
        %6561 = vmatprep.mubr.f32.mxu0 0.0
        %6562 = vmatmul.mubr.f32.gmra.mrb[0].mxu0 %v6466
        %v6563 = vpop.f32.mrb[0].mxu0
        %v6564 = vadd.f32 0.0, %v6563
        %v6565 = vpop.f32.mrb[0].mxu0
        %6566 = vmatprep.mubr.f32.mxu0 0.0
        %6567 = vmatmul.mubr.f32.gmra.mrb[0].mxu0 %v6469
        %v6568 = vpop.f32.mrb[0].mxu0
        %v6569 = vadd.f32 0.0, %v6568
        %v6570 = vpop.f32.mrb[0].mxu0
        %6571 = vmatprep.mubr.f32.mxu0 0.0
        %6572 = vmatmul.mubr.f32.gmra.mrb[0].mxu0 %v6472
        %v6573 = vpop.f32.mrb[0].mxu0
        %v6574 = vadd.f32 0.0, %v6573
        %v6575 = vpop.f32.mrb[0].mxu0
        %6576 = vmatprep.mubr.f32.mxu0 0.0
        %6577 = vmatmul.mubr.f32.gmra.mrb[0].mxu0 %v6475
        %v6578 = vpop.f32.mrb[0].mxu0
        %v6579 = vadd.f32 0.0, %v6578
        %v6580 = vpop.f32.mrb[0].mxu0
        %6581 = vdwg.mxu0
        %s6582 = scalar_lea.vmem %s5, 96
        %v6583 = vld [vmem:[%s6582] sm:$0xff]
        %v6584 = vld [vmem:[%s6582 + $0x8] sm:$0xf]
        %v6586 = vsel %vm952, %v6544, 0
        %v6589 = vsel %vm952, %v6549, 0
        %v6592 = vsel %vm952, %v6554, 0
        %v6595 = vsel %vm952, %v6559, 0
        %v6598 = vsel %vm952, %v6564, 0
        %v6601 = vsel %vm952, %v6569, 0
        %v6604 = vsel %vm952, %v6574, 0
        %v6607 = vsel %vm952, %v6579, 0
        %v6610 = vsel %vm2089, %v6584, 0
        %6612 = vmatprep.subr.mxu0 0.0
        %6613 = vmatpush1.msra.mxu0 %v6583
        %6614 = vmatprep.subr.mxu0 0.0
        %6615 = vmatpush1.msra.mxu0 %v6610
        %6616 = vmatprep.subr.mxu0 0.0
        %6617 = vmatpush1.msra.mxu0 0.0
        %6618 = vmatprep.subr.mxu0 0.0
        %6619 = vmatpush1.msra.mxu0 0.0
        %6620 = vmatprep.subr.mxu0 0.0
        %6621 = vmatpush1.msra.mxu0 0.0
        %6622 = vmatprep.subr.mxu0 0.0
        %6623 = vmatpush1.msra.mxu0 0.0
        %6624 = vmatprep.subr.mxu0 0.0
        %6625 = vmatpush1.msra.mxu0 0.0
        %6626 = vmatprep.subr.mxu0 0.0
        %6627 = vmatpush1.msra.mxu0 0.0
        %6628 = vmatprep.subr.mxu0 0.0
        %6629 = vmatpush1.msra.mxu0 0.0
        %6630 = vmatprep.subr.mxu0 0.0
        %6631 = vmatpush1.msra.mxu0 0.0
        %6632 = vmatprep.subr.mxu0 0.0
        %6633 = vmatpush1.msra.mxu0 0.0
        %6634 = vmatprep.subr.mxu0 0.0
        %6635 = vmatpush1.msra.mxu0 0.0
        %6636 = vmatprep.subr.mxu0 0.0
        %6637 = vmatpush1.msra.mxu0 0.0
        %6638 = vmatprep.subr.mxu0 0.0
        %6639 = vmatpush1.msra.mxu0 0.0
        %6640 = vmatprep.subr.mxu0 0.0
        %6641 = vmatpush1.msra.mxu0 0.0
        %6642 = vmatprep.subr.mxu0 0.0
        %6643 = vmatpush1.msra.mxu0 0.0
        %6644 = vmatprep.subr.mxu0 0.0
        %6645 = vmatpush1.msra.mxu0 0.0
        %6646 = vmatprep.subr.mxu0 0.0
        %6647 = vmatpush1.msra.mxu0 0.0
        %6648 = vmatprep.subr.mxu0 0.0
        %6649 = vmatpush1.msra.mxu0 0.0
        %6650 = vmatprep.subr.mxu0 0.0
        %6651 = vmatpush1.msra.mxu0 0.0
        %6652 = vmatprep.subr.mxu0 0.0
        %6653 = vmatpush1.msra.mxu0 0.0
        %6654 = vmatprep.subr.mxu0 0.0
        %6655 = vmatpush1.msra.mxu0 0.0
        %6656 = vmatprep.subr.mxu0 0.0
        %6657 = vmatpush1.msra.mxu0 0.0
        %6658 = vmatprep.subr.mxu0 0.0
        %6659 = vmatpush1.msra.mxu0 0.0
        %6660 = vmatprep.subr.mxu0 0.0
        %6661 = vmatpush1.msra.mxu0 0.0
        %6662 = vmatprep.subr.mxu0 0.0
        %6663 = vmatpush1.msra.mxu0 0.0
        %6664 = vmatprep.subr.mxu0 0.0
        %6665 = vmatpush1.msra.mxu0 0.0
        %6666 = vmatprep.subr.mxu0 0.0
        %6667 = vmatpush1.msra.mxu0 0.0
        %6668 = vmatprep.subr.mxu0 0.0
        %6669 = vmatpush1.msra.mxu0 0.0
        %6670 = vmatprep.subr.mxu0 0.0
        %6671 = vmatpush1.msra.mxu0 0.0
        %6672 = vmatprep.subr.mxu0 0.0
        %6673 = vmatpush1.msra.mxu0 0.0
        %6674 = vmatprep.subr.mxu0 0.0
        %6675 = vmatpush1.msra.mxu0 0.0
        %6676 = vmatprep.mubr.f32.mxu0 0.0
        %6677 = vmatmul.mubr.f32.gmra.mrb[0].mxu0 %v6586
        %v6678 = vpop.f32.mrb[0].mxu0
        %v6679 = vadd.f32 0.0, %v6678
        %v6680 = vpop.f32.mrb[0].mxu0
        %6681 = vmatprep.mubr.f32.mxu0 0.0
        %6682 = vmatmul.mubr.f32.gmra.mrb[0].mxu0 %v6589
        %v6683 = vpop.f32.mrb[0].mxu0
        %v6684 = vadd.f32 0.0, %v6683
        %v6685 = vpop.f32.mrb[0].mxu0
        %6686 = vmatprep.mubr.f32.mxu0 0.0
        %6687 = vmatmul.mubr.f32.gmra.mrb[0].mxu0 %v6592
        %v6688 = vpop.f32.mrb[0].mxu0
        %v6689 = vadd.f32 0.0, %v6688
        %v6690 = vpop.f32.mrb[0].mxu0
        %6691 = vmatprep.mubr.f32.mxu0 0.0
        %6692 = vmatmul.mubr.f32.gmra.mrb[0].mxu0 %v6595
        %v6693 = vpop.f32.mrb[0].mxu0
        %v6694 = vadd.f32 0.0, %v6693
        %v6695 = vpop.f32.mrb[0].mxu0
        %6696 = vmatprep.mubr.f32.mxu0 0.0
        %6697 = vmatmul.mubr.f32.gmra.mrb[0].mxu0 %v6598
        %v6698 = vpop.f32.mrb[0].mxu0
        %v6699 = vadd.f32 0.0, %v6698
        %v6700 = vpop.f32.mrb[0].mxu0
        %6701 = vmatprep.mubr.f32.mxu0 0.0
        %6702 = vmatmul.mubr.f32.gmra.mrb[0].mxu0 %v6601
        %v6703 = vpop.f32.mrb[0].mxu0
        %v6704 = vadd.f32 0.0, %v6703
        %v6705 = vpop.f32.mrb[0].mxu0
        %6706 = vmatprep.mubr.f32.mxu0 0.0
        %6707 = vmatmul.mubr.f32.gmra.mrb[0].mxu0 %v6604
        %v6708 = vpop.f32.mrb[0].mxu0
        %v6709 = vadd.f32 0.0, %v6708
        %v6710 = vpop.f32.mrb[0].mxu0
        %6711 = vmatprep.mubr.f32.mxu0 0.0
        %6712 = vmatmul.mubr.f32.gmra.mrb[0].mxu0 %v6607
        %v6713 = vpop.f32.mrb[0].mxu0
        %v6714 = vadd.f32 0.0, %v6713
        %v6715 = vpop.f32.mrb[0].mxu0
        %6716 = vdwg.mxu0
        %v6717 = vadd.f32 %v5838, %v6679
        %v6718 = vadd.f32 %v5839, %v6684
        %v6719 = vadd.f32 %v5840, %v6689
        %v6720 = vadd.f32 %v5841, %v6694
        %v6721 = vadd.f32 %v5842, %v6699
        %v6722 = vadd.f32 %v5843, %v6704
        %v6723 = vadd.f32 %v5844, %v6709
        %v6724 = vadd.f32 %v5845, %v6714
        %s6725 = scalar_lea.vmem %s3, 896
        %v6726 = vld [vmem:[%s6725] sm:$0xff]
        %v6727 = vld [vmem:[%s6725 + $0x8] sm:$0xff]
        %v6728 = vld [vmem:[%s6725 + $0x10] sm:$0xff]
        %v6729 = vld [vmem:[%s6725 + $0x18] sm:$0xff]
        %v6730 = vld [vmem:[%s6725 + $0x20] sm:$0xff]
        %v6731 = vld [vmem:[%s6725 + $0x28] sm:$0xff]
        %v6732 = vld [vmem:[%s6725 + $0x30] sm:$0xff]
        %v6733 = vld [vmem:[%s6725 + $0x38] sm:$0xff]
        %v6734 = vld [vmem:[%s6725 + $0x40] sm:$0xff]
        %v6735 = vld [vmem:[%s6725 + $0x48] sm:$0xff]
        %v6736 = vld [vmem:[%s6725 + $0x50] sm:$0xff]
        %v6737 = vld [vmem:[%s6725 + $0x58] sm:$0xff]
        %v6738 = vld [vmem:[%s6725 + $0x60] sm:$0xff]
        %v6739 = vld [vmem:[%s6725 + $0x68] sm:$0xff]
        %v6740 = vld [vmem:[%s6725 + $0x70] sm:$0xff]
        %v6741 = vld [vmem:[%s6725 + $0x78] sm:$0xff]
        %6742 = vmatprep.subr.mxu0 0.0
        %6743 = vmatpush1.msra.mxu0 %v6726
        %6744 = vmatprep.subr.mxu0 0.0
        %6745 = vmatpush1.msra.mxu0 %v6727
        %6746 = vmatprep.subr.mxu0 0.0
        %6747 = vmatpush1.msra.mxu0 %v6728
        %6748 = vmatprep.subr.mxu0 0.0
        %6749 = vmatpush1.msra.mxu0 %v6729
        %6750 = vmatprep.subr.mxu0 0.0
        %6751 = vmatpush1.msra.mxu0 %v6730
        %6752 = vmatprep.subr.mxu0 0.0
        %6753 = vmatpush1.msra.mxu0 %v6731
        %6754 = vmatprep.subr.mxu0 0.0
        %6755 = vmatpush1.msra.mxu0 %v6732
        %6756 = vmatprep.subr.mxu0 0.0
        %6757 = vmatpush1.msra.mxu0 %v6733
        %6758 = vmatprep.subr.mxu0 0.0
        %6759 = vmatpush1.msra.mxu0 %v6734
        %6760 = vmatprep.subr.mxu0 0.0
        %6761 = vmatpush1.msra.mxu0 %v6735
        %6762 = vmatprep.subr.mxu0 0.0
        %6763 = vmatpush1.msra.mxu0 %v6736
        %6764 = vmatprep.subr.mxu0 0.0
        %6765 = vmatpush1.msra.mxu0 %v6737
        %6766 = vmatprep.subr.mxu0 0.0
        %6767 = vmatpush1.msra.mxu0 %v6738
        %6768 = vmatprep.subr.mxu0 0.0
        %6769 = vmatpush1.msra.mxu0 %v6739
        %6770 = vmatprep.subr.mxu0 0.0
        %6771 = vmatpush1.msra.mxu0 %v6740
        %6772 = vmatprep.subr.mxu0 0.0
        %6773 = vmatpush1.msra.mxu0 %v6741
        %6774 = vmatprep.subr.mxu0 0.0
        %6775 = vmatpush1.msra.mxu0 0.0
        %6776 = vmatprep.subr.mxu0 0.0
        %6777 = vmatpush1.msra.mxu0 0.0
        %6778 = vmatprep.subr.mxu0 0.0
        %6779 = vmatpush1.msra.mxu0 0.0
        %6780 = vmatprep.subr.mxu0 0.0
        %6781 = vmatpush1.msra.mxu0 0.0
        %6782 = vmatprep.subr.mxu0 0.0
        %6783 = vmatpush1.msra.mxu0 0.0
        %6784 = vmatprep.subr.mxu0 0.0
        %6785 = vmatpush1.msra.mxu0 0.0
        %6786 = vmatprep.subr.mxu0 0.0
        %6787 = vmatpush1.msra.mxu0 0.0
        %6788 = vmatprep.subr.mxu0 0.0
        %6789 = vmatpush1.msra.mxu0 0.0
        %6790 = vmatprep.subr.mxu0 0.0
        %6791 = vmatpush1.msra.mxu0 0.0
        %6792 = vmatprep.subr.mxu0 0.0
        %6793 = vmatpush1.msra.mxu0 0.0
        %6794 = vmatprep.subr.mxu0 0.0
        %6795 = vmatpush1.msra.mxu0 0.0
        %6796 = vmatprep.subr.mxu0 0.0
        %6797 = vmatpush1.msra.mxu0 0.0
        %6798 = vmatprep.subr.mxu0 0.0
        %6799 = vmatpush1.msra.mxu0 0.0
        %6800 = vmatprep.subr.mxu0 0.0
        %6801 = vmatpush1.msra.mxu0 0.0
        %6802 = vmatprep.subr.mxu0 0.0
        %6803 = vmatpush1.msra.mxu0 0.0
        %6804 = vmatprep.subr.mxu0 0.0
        %6805 = vmatpush1.msra.mxu0 0.0
        %6806 = vmatprep.mubr.f32.mxu0 0.0
        %6807 = vmatmul.mubr.f32.gmra.mrb[0].mxu0 %v573
        %v6808 = vpop.f32.mrb[0].mxu0
        %v6809 = vadd.f32 0.0, %v6808
        %v6810 = vpop.f32.mrb[0].mxu0
        %6811 = vmatprep.mubr.f32.mxu0 0.0
        %6812 = vmatmul.mubr.f32.gmra.mrb[0].mxu0 %v574
        %v6813 = vpop.f32.mrb[0].mxu0
        %v6814 = vadd.f32 0.0, %v6813
        %v6815 = vpop.f32.mrb[0].mxu0
        %6816 = vmatprep.mubr.f32.mxu0 0.0
        %6817 = vmatmul.mubr.f32.gmra.mrb[0].mxu0 %v575
        %v6818 = vpop.f32.mrb[0].mxu0
        %v6819 = vadd.f32 0.0, %v6818
        %v6820 = vpop.f32.mrb[0].mxu0
        %6821 = vmatprep.mubr.f32.mxu0 0.0
        %6822 = vmatmul.mubr.f32.gmra.mrb[0].mxu0 %v576
        %v6823 = vpop.f32.mrb[0].mxu0
        %v6824 = vadd.f32 0.0, %v6823
        %v6825 = vpop.f32.mrb[0].mxu0
        %6826 = vmatprep.mubr.f32.mxu0 0.0
        %6827 = vmatmul.mubr.f32.gmra.mrb[0].mxu0 %v577
        %v6828 = vpop.f32.mrb[0].mxu0
        %v6829 = vadd.f32 0.0, %v6828
        %v6830 = vpop.f32.mrb[0].mxu0
        %6831 = vmatprep.mubr.f32.mxu0 0.0
        %6832 = vmatmul.mubr.f32.gmra.mrb[0].mxu0 %v578
        %v6833 = vpop.f32.mrb[0].mxu0
        %v6834 = vadd.f32 0.0, %v6833
        %v6835 = vpop.f32.mrb[0].mxu0
        %6836 = vmatprep.mubr.f32.mxu0 0.0
        %6837 = vmatmul.mubr.f32.gmra.mrb[0].mxu0 %v579
        %v6838 = vpop.f32.mrb[0].mxu0
        %v6839 = vadd.f32 0.0, %v6838
        %v6840 = vpop.f32.mrb[0].mxu0
        %6841 = vmatprep.mubr.f32.mxu0 0.0
        %6842 = vmatmul.mubr.f32.gmra.mrb[0].mxu0 %v580
        %v6843 = vpop.f32.mrb[0].mxu0
        %v6844 = vadd.f32 0.0, %v6843
        %v6845 = vpop.f32.mrb[0].mxu0
        %6846 = vdwg.mxu0
        %s6847 = scalar_lea.vmem %s2, 896
        %v6848 = vld [vmem:[%s6847] sm:$0xff]
        %v6849 = vld [vmem:[%s6847 + $0x8] sm:$0xff]
        %v6850 = vld [vmem:[%s6847 + $0x10] sm:$0xff]
        %v6851 = vld [vmem:[%s6847 + $0x18] sm:$0xff]
        %v6852 = vld [vmem:[%s6847 + $0x20] sm:$0xff]
        %v6853 = vld [vmem:[%s6847 + $0x28] sm:$0xff]
        %v6854 = vld [vmem:[%s6847 + $0x30] sm:$0xff]
        %v6855 = vld [vmem:[%s6847 + $0x38] sm:$0xff]
        %v6856 = vld [vmem:[%s6847 + $0x40] sm:$0xff]
        %v6857 = vld [vmem:[%s6847 + $0x48] sm:$0xff]
        %v6858 = vld [vmem:[%s6847 + $0x50] sm:$0xff]
        %v6859 = vld [vmem:[%s6847 + $0x58] sm:$0xff]
        %v6860 = vld [vmem:[%s6847 + $0x60] sm:$0xff]
        %v6861 = vld [vmem:[%s6847 + $0x68] sm:$0xff]
        %v6862 = vld [vmem:[%s6847 + $0x70] sm:$0xff]
        %v6863 = vld [vmem:[%s6847 + $0x78] sm:$0xff]
        %6864 = vmatprep.subr.mxu0 0.0
        %6865 = vmatpush1.msra.mxu0 %v6848
        %6866 = vmatprep.subr.mxu0 0.0
        %6867 = vmatpush1.msra.mxu0 %v6849
        %6868 = vmatprep.subr.mxu0 0.0
        %6869 = vmatpush1.msra.mxu0 %v6850
        %6870 = vmatprep.subr.mxu0 0.0
        %6871 = vmatpush1.msra.mxu0 %v6851
        %6872 = vmatprep.subr.mxu0 0.0
        %6873 = vmatpush1.msra.mxu0 %v6852
        %6874 = vmatprep.subr.mxu0 0.0
        %6875 = vmatpush1.msra.mxu0 %v6853
        %6876 = vmatprep.subr.mxu0 0.0
        %6877 = vmatpush1.msra.mxu0 %v6854
        %6878 = vmatprep.subr.mxu0 0.0
        %6879 = vmatpush1.msra.mxu0 %v6855
        %6880 = vmatprep.subr.mxu0 0.0
        %6881 = vmatpush1.msra.mxu0 %v6856
        %6882 = vmatprep.subr.mxu0 0.0
        %6883 = vmatpush1.msra.mxu0 %v6857
        %6884 = vmatprep.subr.mxu0 0.0
        %6885 = vmatpush1.msra.mxu0 %v6858
        %6886 = vmatprep.subr.mxu0 0.0
        %6887 = vmatpush1.msra.mxu0 %v6859
        %6888 = vmatprep.subr.mxu0 0.0
        %6889 = vmatpush1.msra.mxu0 %v6860
        %6890 = vmatprep.subr.mxu0 0.0
        %6891 = vmatpush1.msra.mxu0 %v6861
        %6892 = vmatprep.subr.mxu0 0.0
        %6893 = vmatpush1.msra.mxu0 %v6862
        %6894 = vmatprep.subr.mxu0 0.0
        %6895 = vmatpush1.msra.mxu0 %v6863
        %6896 = vmatprep.subr.mxu0 0.0
        %6897 = vmatpush1.msra.mxu0 0.0
        %6898 = vmatprep.subr.mxu0 0.0
        %6899 = vmatpush1.msra.mxu0 0.0
        %6900 = vmatprep.subr.mxu0 0.0
        %6901 = vmatpush1.msra.mxu0 0.0
        %6902 = vmatprep.subr.mxu0 0.0
        %6903 = vmatpush1.msra.mxu0 0.0
        %6904 = vmatprep.subr.mxu0 0.0
        %6905 = vmatpush1.msra.mxu0 0.0
        %6906 = vmatprep.subr.mxu0 0.0
        %6907 = vmatpush1.msra.mxu0 0.0
        %6908 = vmatprep.subr.mxu0 0.0
        %6909 = vmatpush1.msra.mxu0 0.0
        %6910 = vmatprep.subr.mxu0 0.0
        %6911 = vmatpush1.msra.mxu0 0.0
        %6912 = vmatprep.subr.mxu0 0.0
        %6913 = vmatpush1.msra.mxu0 0.0
        %6914 = vmatprep.subr.mxu0 0.0
        %6915 = vmatpush1.msra.mxu0 0.0
        %6916 = vmatprep.subr.mxu0 0.0
        %6917 = vmatpush1.msra.mxu0 0.0
        %6918 = vmatprep.subr.mxu0 0.0
        %6919 = vmatpush1.msra.mxu0 0.0
        %6920 = vmatprep.subr.mxu0 0.0
        %6921 = vmatpush1.msra.mxu0 0.0
        %6922 = vmatprep.subr.mxu0 0.0
        %6923 = vmatpush1.msra.mxu0 0.0
        %6924 = vmatprep.subr.mxu0 0.0
        %6925 = vmatpush1.msra.mxu0 0.0
        %6926 = vmatprep.subr.mxu0 0.0
        %6927 = vmatpush1.msra.mxu0 0.0
        %6928 = vmatprep.mubr.f32.mxu0 0.0
        %6929 = vmatmul.mubr.f32.gmra.mrb[0].mxu0 %v573
        %v6930 = vpop.f32.mrb[0].mxu0
        %v6931 = vadd.f32 0.0, %v6930
        %v6932 = vpop.f32.mrb[0].mxu0
        %6933 = vmatprep.mubr.f32.mxu0 0.0
        %6934 = vmatmul.mubr.f32.gmra.mrb[0].mxu0 %v574
        %v6935 = vpop.f32.mrb[0].mxu0
        %v6936 = vadd.f32 0.0, %v6935
        %v6937 = vpop.f32.mrb[0].mxu0
        %6938 = vmatprep.mubr.f32.mxu0 0.0
        %6939 = vmatmul.mubr.f32.gmra.mrb[0].mxu0 %v575
        %v6940 = vpop.f32.mrb[0].mxu0
        %v6941 = vadd.f32 0.0, %v6940
        %v6942 = vpop.f32.mrb[0].mxu0
        %6943 = vmatprep.mubr.f32.mxu0 0.0
        %6944 = vmatmul.mubr.f32.gmra.mrb[0].mxu0 %v576
        %v6945 = vpop.f32.mrb[0].mxu0
        %v6946 = vadd.f32 0.0, %v6945
        %v6947 = vpop.f32.mrb[0].mxu0
        %6948 = vmatprep.mubr.f32.mxu0 0.0
        %6949 = vmatmul.mubr.f32.gmra.mrb[0].mxu0 %v577
        %v6950 = vpop.f32.mrb[0].mxu0
        %v6951 = vadd.f32 0.0, %v6950
        %v6952 = vpop.f32.mrb[0].mxu0
        %6953 = vmatprep.mubr.f32.mxu0 0.0
        %6954 = vmatmul.mubr.f32.gmra.mrb[0].mxu0 %v578
        %v6955 = vpop.f32.mrb[0].mxu0
        %v6956 = vadd.f32 0.0, %v6955
        %v6957 = vpop.f32.mrb[0].mxu0
        %6958 = vmatprep.mubr.f32.mxu0 0.0
        %6959 = vmatmul.mubr.f32.gmra.mrb[0].mxu0 %v579
        %v6960 = vpop.f32.mrb[0].mxu0
        %v6961 = vadd.f32 0.0, %v6960
        %v6962 = vpop.f32.mrb[0].mxu0
        %6963 = vmatprep.mubr.f32.mxu0 0.0
        %6964 = vmatmul.mubr.f32.gmra.mrb[0].mxu0 %v580
        %v6965 = vpop.f32.mrb[0].mxu0
        %v6966 = vadd.f32 0.0, %v6965
        %v6967 = vpop.f32.mrb[0].mxu0
        %6968 = vdwg.mxu0
        %s6969 = scalar_lea.vmem %s4, 896
        %v6970 = vld [vmem:[%s6969] sm:$0xff]
        %v6971 = vld [vmem:[%s6969 + $0x8] sm:$0xff]
        %v6972 = vld [vmem:[%s6969 + $0x10] sm:$0xff]
        %v6973 = vld [vmem:[%s6969 + $0x18] sm:$0xff]
        %v6974 = vld [vmem:[%s6969 + $0x20] sm:$0xff]
        %v6975 = vld [vmem:[%s6969 + $0x28] sm:$0xff]
        %v6976 = vld [vmem:[%s6969 + $0x30] sm:$0xff]
        %v6977 = vld [vmem:[%s6969 + $0x38] sm:$0xff]
        %v6978 = vld [vmem:[%s6969 + $0x40] sm:$0xff]
        %v6979 = vld [vmem:[%s6969 + $0x48] sm:$0xff]
        %v6980 = vld [vmem:[%s6969 + $0x50] sm:$0xff]
        %v6981 = vld [vmem:[%s6969 + $0x58] sm:$0xff]
        %v6982 = vld [vmem:[%s6969 + $0x60] sm:$0xff]
        %v6983 = vld [vmem:[%s6969 + $0x68] sm:$0xff]
        %v6984 = vld [vmem:[%s6969 + $0x70] sm:$0xff]
        %v6985 = vld [vmem:[%s6969 + $0x78] sm:$0xff]
        %6986 = vmatprep.subr.mxu0 0.0
        %6987 = vmatpush1.msra.mxu0 %v6970
        %6988 = vmatprep.subr.mxu0 0.0
        %6989 = vmatpush1.msra.mxu0 %v6971
        %6990 = vmatprep.subr.mxu0 0.0
        %6991 = vmatpush1.msra.mxu0 %v6972
        %6992 = vmatprep.subr.mxu0 0.0
        %6993 = vmatpush1.msra.mxu0 %v6973
        %6994 = vmatprep.subr.mxu0 0.0
        %6995 = vmatpush1.msra.mxu0 %v6974
        %6996 = vmatprep.subr.mxu0 0.0
        %6997 = vmatpush1.msra.mxu0 %v6975
        %6998 = vmatprep.subr.mxu0 0.0
        %6999 = vmatpush1.msra.mxu0 %v6976
        %7000 = vmatprep.subr.mxu0 0.0
        %7001 = vmatpush1.msra.mxu0 %v6977
        %7002 = vmatprep.subr.mxu0 0.0
        %7003 = vmatpush1.msra.mxu0 %v6978
        %7004 = vmatprep.subr.mxu0 0.0
        %7005 = vmatpush1.msra.mxu0 %v6979
        %7006 = vmatprep.subr.mxu0 0.0
        %7007 = vmatpush1.msra.mxu0 %v6980
        %7008 = vmatprep.subr.mxu0 0.0
        %7009 = vmatpush1.msra.mxu0 %v6981
        %7010 = vmatprep.subr.mxu0 0.0
        %7011 = vmatpush1.msra.mxu0 %v6982
        %7012 = vmatprep.subr.mxu0 0.0
        %7013 = vmatpush1.msra.mxu0 %v6983
        %7014 = vmatprep.subr.mxu0 0.0
        %7015 = vmatpush1.msra.mxu0 %v6984
        %7016 = vmatprep.subr.mxu0 0.0
        %7017 = vmatpush1.msra.mxu0 %v6985
        %7018 = vmatprep.subr.mxu0 0.0
        %7019 = vmatpush1.msra.mxu0 0.0
        %7020 = vmatprep.subr.mxu0 0.0
        %7021 = vmatpush1.msra.mxu0 0.0
        %7022 = vmatprep.subr.mxu0 0.0
        %7023 = vmatpush1.msra.mxu0 0.0
        %7024 = vmatprep.subr.mxu0 0.0
        %7025 = vmatpush1.msra.mxu0 0.0
        %7026 = vmatprep.subr.mxu0 0.0
        %7027 = vmatpush1.msra.mxu0 0.0
        %7028 = vmatprep.subr.mxu0 0.0
        %7029 = vmatpush1.msra.mxu0 0.0
        %7030 = vmatprep.subr.mxu0 0.0
        %7031 = vmatpush1.msra.mxu0 0.0
        %7032 = vmatprep.subr.mxu0 0.0
        %7033 = vmatpush1.msra.mxu0 0.0
        %7034 = vmatprep.subr.mxu0 0.0
        %7035 = vmatpush1.msra.mxu0 0.0
        %7036 = vmatprep.subr.mxu0 0.0
        %7037 = vmatpush1.msra.mxu0 0.0
        %7038 = vmatprep.subr.mxu0 0.0
        %7039 = vmatpush1.msra.mxu0 0.0
        %7040 = vmatprep.subr.mxu0 0.0
        %7041 = vmatpush1.msra.mxu0 0.0
        %7042 = vmatprep.subr.mxu0 0.0
        %7043 = vmatpush1.msra.mxu0 0.0
        %7044 = vmatprep.subr.mxu0 0.0
        %7045 = vmatpush1.msra.mxu0 0.0
        %7046 = vmatprep.subr.mxu0 0.0
        %7047 = vmatpush1.msra.mxu0 0.0
        %7048 = vmatprep.subr.mxu0 0.0
        %7049 = vmatpush1.msra.mxu0 0.0
        %7050 = vmatprep.mubr.f32.mxu0 0.0
        %7051 = vmatmul.mubr.f32.gmra.mrb[0].mxu0 %v573
        %v7052 = vpop.f32.mrb[0].mxu0
        %v7053 = vadd.f32 0.0, %v7052
        %v7054 = vpop.f32.mrb[0].mxu0
        %7055 = vmatprep.mubr.f32.mxu0 0.0
        %7056 = vmatmul.mubr.f32.gmra.mrb[0].mxu0 %v574
        %v7057 = vpop.f32.mrb[0].mxu0
        %v7058 = vadd.f32 0.0, %v7057
        %v7059 = vpop.f32.mrb[0].mxu0
        %7060 = vmatprep.mubr.f32.mxu0 0.0
        %7061 = vmatmul.mubr.f32.gmra.mrb[0].mxu0 %v575
        %v7062 = vpop.f32.mrb[0].mxu0
        %v7063 = vadd.f32 0.0, %v7062
        %v7064 = vpop.f32.mrb[0].mxu0
        %7065 = vmatprep.mubr.f32.mxu0 0.0
        %7066 = vmatmul.mubr.f32.gmra.mrb[0].mxu0 %v576
        %v7067 = vpop.f32.mrb[0].mxu0
        %v7068 = vadd.f32 0.0, %v7067
        %v7069 = vpop.f32.mrb[0].mxu0
        %7070 = vmatprep.mubr.f32.mxu0 0.0
        %7071 = vmatmul.mubr.f32.gmra.mrb[0].mxu0 %v577
        %v7072 = vpop.f32.mrb[0].mxu0
        %v7073 = vadd.f32 0.0, %v7072
        %v7074 = vpop.f32.mrb[0].mxu0
        %7075 = vmatprep.mubr.f32.mxu0 0.0
        %7076 = vmatmul.mubr.f32.gmra.mrb[0].mxu0 %v578
        %v7077 = vpop.f32.mrb[0].mxu0
        %v7078 = vadd.f32 0.0, %v7077
        %v7079 = vpop.f32.mrb[0].mxu0
        %7080 = vmatprep.mubr.f32.mxu0 0.0
        %7081 = vmatmul.mubr.f32.gmra.mrb[0].mxu0 %v579
        %v7082 = vpop.f32.mrb[0].mxu0
        %v7083 = vadd.f32 0.0, %v7082
        %v7084 = vpop.f32.mrb[0].mxu0
        %7085 = vmatprep.mubr.f32.mxu0 0.0
        %7086 = vmatmul.mubr.f32.gmra.mrb[0].mxu0 %v580
        %v7087 = vpop.f32.mrb[0].mxu0
        %v7088 = vadd.f32 0.0, %v7087
        %v7089 = vpop.f32.mrb[0].mxu0
        %7090 = vdwg.mxu0
        %v7092 = vsel %vm952, %v6809, 0
        %v7095 = vsel %vm952, %v6814, 0
        %v7098 = vsel %vm952, %v6819, 0
        %v7101 = vsel %vm952, %v6824, 0
        %v7104 = vsel %vm952, %v6829, 0
        %v7107 = vsel %vm952, %v6834, 0
        %v7110 = vsel %vm952, %v6839, 0
        %v7113 = vsel %vm952, %v6844, 0
        %v7116 = vsel %vm952, %v6931, 0
        %v7119 = vsel %vm952, %v6936, 0
        %v7122 = vsel %vm952, %v6941, 0
        %v7125 = vsel %vm952, %v6946, 0
        %v7128 = vsel %vm952, %v6951, 0
        %v7131 = vsel %vm952, %v6956, 0
        %v7134 = vsel %vm952, %v6961, 0
        %v7137 = vsel %vm952, %v6966, 0
        %7139 = vmatprep.subr.mxu0 0.0
        %7140 = vmatpush1.xpose.msra.mxu0 %v7116
        %7141 = vmatprep.subr.mxu0 0.0
        %7142 = vmatpush1.xpose.msra.mxu0 %v7119
        %7143 = vmatprep.subr.mxu0 0.0
        %7144 = vmatpush1.xpose.msra.mxu0 %v7122
        %7145 = vmatprep.subr.mxu0 0.0
        %7146 = vmatpush1.xpose.msra.mxu0 %v7125
        %7147 = vmatprep.subr.mxu0 0.0
        %7148 = vmatpush1.xpose.msra.mxu0 %v7128
        %7149 = vmatprep.subr.mxu0 0.0
        %7150 = vmatpush1.xpose.msra.mxu0 %v7131
        %7151 = vmatprep.subr.mxu0 0.0
        %7152 = vmatpush1.xpose.msra.mxu0 %v7134
        %7153 = vmatprep.subr.mxu0 0.0
        %7154 = vmatpush1.xpose.msra.mxu0 %v7137
        %7155 = vmatprep.subr.mxu0 0.0
        %7156 = vmatpush1.xpose.msra.mxu0 0.0
        %7157 = vmatprep.subr.mxu0 0.0
        %7158 = vmatpush1.xpose.msra.mxu0 0.0
        %7159 = vmatprep.subr.mxu0 0.0
        %7160 = vmatpush1.xpose.msra.mxu0 0.0
        %7161 = vmatprep.subr.mxu0 0.0
        %7162 = vmatpush1.xpose.msra.mxu0 0.0
        %7163 = vmatprep.subr.mxu0 0.0
        %7164 = vmatpush1.xpose.msra.mxu0 0.0
        %7165 = vmatprep.subr.mxu0 0.0
        %7166 = vmatpush1.xpose.msra.mxu0 0.0
        %7167 = vmatprep.subr.mxu0 0.0
        %7168 = vmatpush1.xpose.msra.mxu0 0.0
        %7169 = vmatprep.subr.mxu0 0.0
        %7170 = vmatpush1.xpose.msra.mxu0 0.0
        %7171 = vmatprep.subr.mxu0 0.0
        %7172 = vmatpush1.xpose.msra.mxu0 0.0
        %7173 = vmatprep.subr.mxu0 0.0
        %7174 = vmatpush1.xpose.msra.mxu0 0.0
        %7175 = vmatprep.subr.mxu0 0.0
        %7176 = vmatpush1.xpose.msra.mxu0 0.0
        %7177 = vmatprep.subr.mxu0 0.0
        %7178 = vmatpush1.xpose.msra.mxu0 0.0
        %7179 = vmatprep.subr.mxu0 0.0
        %7180 = vmatpush1.xpose.msra.mxu0 0.0
        %7181 = vmatprep.subr.mxu0 0.0
        %7182 = vmatpush1.xpose.msra.mxu0 0.0
        %7183 = vmatprep.subr.mxu0 0.0
        %7184 = vmatpush1.xpose.msra.mxu0 0.0
        %7185 = vmatprep.subr.mxu0 0.0
        %7186 = vmatpush1.xpose.msra.mxu0 0.0
        %7187 = vmatprep.subr.mxu0 0.0
        %7188 = vmatpush1.xpose.msra.mxu0 0.0
        %7189 = vmatprep.subr.mxu0 0.0
        %7190 = vmatpush1.xpose.msra.mxu0 0.0
        %7191 = vmatprep.subr.mxu0 0.0
        %7192 = vmatpush1.xpose.msra.mxu0 0.0
        %7193 = vmatprep.subr.mxu0 0.0
        %7194 = vmatpush1.xpose.msra.mxu0 0.0
        %7195 = vmatprep.subr.mxu0 0.0
        %7196 = vmatpush1.xpose.msra.mxu0 0.0
        %7197 = vmatprep.subr.mxu0 0.0
        %7198 = vmatpush1.xpose.msra.mxu0 0.0
        %7199 = vmatprep.subr.mxu0 0.0
        %7200 = vmatpush1.xpose.msra.mxu0 0.0
        %7201 = vmatprep.subr.mxu0 0.0
        %7202 = vmatpush1.xpose.msra.mxu0 0.0
        %7203 = vmatprep.mubr.f32.mxu0 0.0
        %7204 = vmatmul.mubr.f32.gmra.mrb[0].mxu0 %v7092
        %v7205 = vpop.f32.mrb[0].mxu0
        %v7206 = vadd.f32 %v581, %v7205
        %v7207 = vpop.f32.mrb[0].mxu0
        %7208 = vmatprep.mubr.f32.mxu0 0.0
        %7209 = vmatmul.mubr.f32.gmra.mrb[0].mxu0 %v7095
        %v7210 = vpop.f32.mrb[0].mxu0
        %v7211 = vadd.f32 %v582, %v7210
        %v7212 = vpop.f32.mrb[0].mxu0
        %7213 = vmatprep.mubr.f32.mxu0 0.0
        %7214 = vmatmul.mubr.f32.gmra.mrb[0].mxu0 %v7098
        %v7215 = vpop.f32.mrb[0].mxu0
        %v7216 = vadd.f32 %v583, %v7215
        %v7217 = vpop.f32.mrb[0].mxu0
        %7218 = vmatprep.mubr.f32.mxu0 0.0
        %7219 = vmatmul.mubr.f32.gmra.mrb[0].mxu0 %v7101
        %v7220 = vpop.f32.mrb[0].mxu0
        %v7221 = vadd.f32 %v584, %v7220
        %v7222 = vpop.f32.mrb[0].mxu0
        %7223 = vmatprep.mubr.f32.mxu0 0.0
        %7224 = vmatmul.mubr.f32.gmra.mrb[0].mxu0 %v7104
        %v7225 = vpop.f32.mrb[0].mxu0
        %v7226 = vadd.f32 %v585, %v7225
        %v7227 = vpop.f32.mrb[0].mxu0
        %7228 = vmatprep.mubr.f32.mxu0 0.0
        %7229 = vmatmul.mubr.f32.gmra.mrb[0].mxu0 %v7107
        %v7230 = vpop.f32.mrb[0].mxu0
        %v7231 = vadd.f32 %v586, %v7230
        %v7232 = vpop.f32.mrb[0].mxu0
        %7233 = vmatprep.mubr.f32.mxu0 0.0
        %7234 = vmatmul.mubr.f32.gmra.mrb[0].mxu0 %v7110
        %v7235 = vpop.f32.mrb[0].mxu0
        %v7236 = vadd.f32 %v587, %v7235
        %v7237 = vpop.f32.mrb[0].mxu0
        %7238 = vmatprep.mubr.f32.mxu0 0.0
        %7239 = vmatmul.mubr.f32.gmra.mrb[0].mxu0 %v7113
        %v7240 = vpop.f32.mrb[0].mxu0
        %v7241 = vadd.f32 %v588, %v7240
        %v7242 = vpop.f32.mrb[0].mxu0
        %7243 = vdwg.mxu0
        %v7244 = vsel %vm1106, %v7206, -inf
        %7245 = vmax.xlane.f32.xlu0 %v7244
        %v7246 = vpop.xlane.xlu0 %7245
        %v7247 = vsel %vm1106, %v7211, -inf
        %7248 = vmax.xlane.f32.xlu0 %v7247
        %v7249 = vpop.xlane.xlu0 %7248
        %v7250 = vsel %vm1106, %v7216, -inf
        %7251 = vmax.xlane.f32.xlu0 %v7250
        %v7252 = vpop.xlane.xlu0 %7251
        %v7253 = vsel %vm1106, %v7221, -inf
        %7254 = vmax.xlane.f32.xlu0 %v7253
        %v7255 = vpop.xlane.xlu0 %7254
        %v7256 = vsel %vm1106, %v7226, -inf
        %7257 = vmax.xlane.f32.xlu0 %v7256
        %v7258 = vpop.xlane.xlu0 %7257
        %v7259 = vsel %vm1106, %v7231, -inf
        %7260 = vmax.xlane.f32.xlu0 %v7259
        %v7261 = vpop.xlane.xlu0 %7260
        %v7262 = vsel %vm1106, %v7236, -inf
        %7263 = vmax.xlane.f32.xlu0 %v7262
        %v7264 = vpop.xlane.xlu0 %7263
        %v7265 = vsel %vm1106, %v7241, -inf
        %7266 = vmax.xlane.f32.xlu0 %v7265
        %v7267 = vpop.xlane.xlu0 %7266
        %v7268 = vsub.f32 %v7206, %v7246
        %v7269 = vsub.f32 %v7211, %v7249
        %v7270 = vsub.f32 %v7216, %v7252
        %v7271 = vsub.f32 %v7221, %v7255
        %v7272 = vsub.f32 %v7226, %v7258
        %v7273 = vsub.f32 %v7231, %v7261
        %v7274 = vsub.f32 %v7236, %v7264
        %v7275 = vsub.f32 %v7241, %v7267
        %v7276 = vmul.f32 %v7268, 1.442695
        %v7277 = vpow.pop %v7276
        %v7278 = vmul.f32 %v7269, 1.442695
        %v7279 = vpow.pop %v7278
        %v7280 = vmul.f32 %v7270, 1.442695
        %v7281 = vpow.pop %v7280
        %v7282 = vmul.f32 %v7271, 1.442695
        %v7283 = vpow.pop %v7282
        %v7284 = vmul.f32 %v7272, 1.442695
        %v7285 = vpow.pop %v7284
        %v7286 = vmul.f32 %v7273, 1.442695
        %v7287 = vpow.pop %v7286
        %v7288 = vmul.f32 %v7274, 1.442695
        %v7289 = vpow.pop %v7288
        %v7290 = vmul.f32 %v7275, 1.442695
        %v7291 = vpow.pop %v7290
        %v7292 = vsel %vm1106, %v7277, 0.0
        %7293 = vadd.xlane.f32.xlu0 %v7292
        %v7294 = vpop.xlane.xlu0 %7293
        %v7295 = vsel %vm1106, %v7279, 0.0
        %7296 = vadd.xlane.f32.xlu0 %v7295
        %v7297 = vpop.xlane.xlu0 %7296
        %v7298 = vsel %vm1106, %v7281, 0.0
        %7299 = vadd.xlane.f32.xlu0 %v7298
        %v7300 = vpop.xlane.xlu0 %7299
        %v7301 = vsel %vm1106, %v7283, 0.0
        %7302 = vadd.xlane.f32.xlu0 %v7301
        %v7303 = vpop.xlane.xlu0 %7302
        %v7304 = vsel %vm1106, %v7285, 0.0
        %7305 = vadd.xlane.f32.xlu0 %v7304
        %v7306 = vpop.xlane.xlu0 %7305
        %v7307 = vsel %vm1106, %v7287, 0.0
        %7308 = vadd.xlane.f32.xlu0 %v7307
        %v7309 = vpop.xlane.xlu0 %7308
        %v7310 = vsel %vm1106, %v7289, 0.0
        %7311 = vadd.xlane.f32.xlu0 %v7310
        %v7312 = vpop.xlane.xlu0 %7311
        %v7313 = vsel %vm1106, %v7291, 0.0
        %7314 = vadd.xlane.f32.xlu0 %v7313
        %v7315 = vpop.xlane.xlu0 %7314
        %v7316 = vrcp.pop %v7294
        %v7317 = vrcp.pop %v7297
        %v7318 = vrcp.pop %v7300
        %v7319 = vrcp.pop %v7303
        %v7320 = vrcp.pop %v7306
        %v7321 = vrcp.pop %v7309
        %v7322 = vrcp.pop %v7312
        %v7323 = vrcp.pop %v7315
        %v7324 = vmul.f32 %v7277, %v7316
        %v7325 = vmul.f32 %v7279, %v7317
        %v7326 = vmul.f32 %v7281, %v7318
        %v7327 = vmul.f32 %v7283, %v7319
        %v7328 = vmul.f32 %v7285, %v7320
        %v7329 = vmul.f32 %v7287, %v7321
        %v7330 = vmul.f32 %v7289, %v7322
        %v7331 = vmul.f32 %v7291, %v7323
        %v7333 = vsel %vm1106, %v7324, 0
        %v7336 = vsel %vm1106, %v7325, 0
        %v7339 = vsel %vm1106, %v7326, 0
        %v7342 = vsel %vm1106, %v7327, 0
        %v7345 = vsel %vm1106, %v7328, 0
        %v7348 = vsel %vm1106, %v7329, 0
        %v7351 = vsel %vm1106, %v7330, 0
        %v7354 = vsel %vm1106, %v7331, 0
        %7356 = vmatprep.subr.mxu0 0.0
        %7357 = vmatpush1.msra.mxu0 %v7053
        %7358 = vmatprep.subr.mxu0 0.0
        %7359 = vmatpush1.msra.mxu0 %v7058
        %7360 = vmatprep.subr.mxu0 0.0
        %7361 = vmatpush1.msra.mxu0 %v7063
        %7362 = vmatprep.subr.mxu0 0.0
        %7363 = vmatpush1.msra.mxu0 %v7068
        %7364 = vmatprep.subr.mxu0 0.0
        %7365 = vmatpush1.msra.mxu0 %v7073
        %7366 = vmatprep.subr.mxu0 0.0
        %7367 = vmatpush1.msra.mxu0 %v7078
        %7368 = vmatprep.subr.mxu0 0.0
        %7369 = vmatpush1.msra.mxu0 %v7083
        %7370 = vmatprep.subr.mxu0 0.0
        %7371 = vmatpush1.msra.mxu0 %v7088
        %7372 = vmatprep.subr.mxu0 0.0
        %7373 = vmatpush1.msra.mxu0 0.0
        %7374 = vmatprep.subr.mxu0 0.0
        %7375 = vmatpush1.msra.mxu0 0.0
        %7376 = vmatprep.subr.mxu0 0.0
        %7377 = vmatpush1.msra.mxu0 0.0
        %7378 = vmatprep.subr.mxu0 0.0
        %7379 = vmatpush1.msra.mxu0 0.0
        %7380 = vmatprep.subr.mxu0 0.0
        %7381 = vmatpush1.msra.mxu0 0.0
        %7382 = vmatprep.subr.mxu0 0.0
        %7383 = vmatpush1.msra.mxu0 0.0
        %7384 = vmatprep.subr.mxu0 0.0
        %7385 = vmatpush1.msra.mxu0 0.0
        %7386 = vmatprep.subr.mxu0 0.0
        %7387 = vmatpush1.msra.mxu0 0.0
        %7388 = vmatprep.subr.mxu0 0.0
        %7389 = vmatpush1.msra.mxu0 0.0
        %7390 = vmatprep.subr.mxu0 0.0
        %7391 = vmatpush1.msra.mxu0 0.0
        %7392 = vmatprep.subr.mxu0 0.0
        %7393 = vmatpush1.msra.mxu0 0.0
        %7394 = vmatprep.subr.mxu0 0.0
        %7395 = vmatpush1.msra.mxu0 0.0
        %7396 = vmatprep.subr.mxu0 0.0
        %7397 = vmatpush1.msra.mxu0 0.0
        %7398 = vmatprep.subr.mxu0 0.0
        %7399 = vmatpush1.msra.mxu0 0.0
        %7400 = vmatprep.subr.mxu0 0.0
        %7401 = vmatpush1.msra.mxu0 0.0
        %7402 = vmatprep.subr.mxu0 0.0
        %7403 = vmatpush1.msra.mxu0 0.0
        %7404 = vmatprep.subr.mxu0 0.0
        %7405 = vmatpush1.msra.mxu0 0.0
        %7406 = vmatprep.subr.mxu0 0.0
        %7407 = vmatpush1.msra.mxu0 0.0
        %7408 = vmatprep.subr.mxu0 0.0
        %7409 = vmatpush1.msra.mxu0 0.0
        %7410 = vmatprep.subr.mxu0 0.0
        %7411 = vmatpush1.msra.mxu0 0.0
        %7412 = vmatprep.subr.mxu0 0.0
        %7413 = vmatpush1.msra.mxu0 0.0
        %7414 = vmatprep.subr.mxu0 0.0
        %7415 = vmatpush1.msra.mxu0 0.0
        %7416 = vmatprep.subr.mxu0 0.0
        %7417 = vmatpush1.msra.mxu0 0.0
        %7418 = vmatprep.subr.mxu0 0.0
        %7419 = vmatpush1.msra.mxu0 0.0
        %7420 = vmatprep.mubr.f32.mxu0 0.0
        %7421 = vmatmul.mubr.f32.gmra.mrb[0].mxu0 %v7333
        %v7422 = vpop.f32.mrb[0].mxu0
        %v7423 = vadd.f32 0.0, %v7422
        %v7424 = vpop.f32.mrb[0].mxu0
        %7425 = vmatprep.mubr.f32.mxu0 0.0
        %7426 = vmatmul.mubr.f32.gmra.mrb[0].mxu0 %v7336
        %v7427 = vpop.f32.mrb[0].mxu0
        %v7428 = vadd.f32 0.0, %v7427
        %v7429 = vpop.f32.mrb[0].mxu0
        %7430 = vmatprep.mubr.f32.mxu0 0.0
        %7431 = vmatmul.mubr.f32.gmra.mrb[0].mxu0 %v7339
        %v7432 = vpop.f32.mrb[0].mxu0
        %v7433 = vadd.f32 0.0, %v7432
        %v7434 = vpop.f32.mrb[0].mxu0
        %7435 = vmatprep.mubr.f32.mxu0 0.0
        %7436 = vmatmul.mubr.f32.gmra.mrb[0].mxu0 %v7342
        %v7437 = vpop.f32.mrb[0].mxu0
        %v7438 = vadd.f32 0.0, %v7437
        %v7439 = vpop.f32.mrb[0].mxu0
        %7440 = vmatprep.mubr.f32.mxu0 0.0
        %7441 = vmatmul.mubr.f32.gmra.mrb[0].mxu0 %v7345
        %v7442 = vpop.f32.mrb[0].mxu0
        %v7443 = vadd.f32 0.0, %v7442
        %v7444 = vpop.f32.mrb[0].mxu0
        %7445 = vmatprep.mubr.f32.mxu0 0.0
        %7446 = vmatmul.mubr.f32.gmra.mrb[0].mxu0 %v7348
        %v7447 = vpop.f32.mrb[0].mxu0
        %v7448 = vadd.f32 0.0, %v7447
        %v7449 = vpop.f32.mrb[0].mxu0
        %7450 = vmatprep.mubr.f32.mxu0 0.0
        %7451 = vmatmul.mubr.f32.gmra.mrb[0].mxu0 %v7351
        %v7452 = vpop.f32.mrb[0].mxu0
        %v7453 = vadd.f32 0.0, %v7452
        %v7454 = vpop.f32.mrb[0].mxu0
        %7455 = vmatprep.mubr.f32.mxu0 0.0
        %7456 = vmatmul.mubr.f32.gmra.mrb[0].mxu0 %v7354
        %v7457 = vpop.f32.mrb[0].mxu0
        %v7458 = vadd.f32 0.0, %v7457
        %v7459 = vpop.f32.mrb[0].mxu0
        %7460 = vdwg.mxu0
        %s7461 = scalar_lea.vmem %s5, 112
        %v7462 = vld [vmem:[%s7461] sm:$0xff]
        %v7463 = vld [vmem:[%s7461 + $0x8] sm:$0xf]
        %v7465 = vsel %vm952, %v7423, 0
        %v7468 = vsel %vm952, %v7428, 0
        %v7471 = vsel %vm952, %v7433, 0
        %v7474 = vsel %vm952, %v7438, 0
        %v7477 = vsel %vm952, %v7443, 0
        %v7480 = vsel %vm952, %v7448, 0
        %v7483 = vsel %vm952, %v7453, 0
        %v7486 = vsel %vm952, %v7458, 0
        %v7489 = vsel %vm2089, %v7463, 0
        %7491 = vmatprep.subr.mxu0 0.0
        %7492 = vmatpush1.msra.mxu0 %v7462
        %7493 = vmatprep.subr.mxu0 0.0
        %7494 = vmatpush1.msra.mxu0 %v7489
        %7495 = vmatprep.subr.mxu0 0.0
        %7496 = vmatpush1.msra.mxu0 0.0
        %7497 = vmatprep.subr.mxu0 0.0
        %7498 = vmatpush1.msra.mxu0 0.0
        %7499 = vmatprep.subr.mxu0 0.0
        %7500 = vmatpush1.msra.mxu0 0.0
        %7501 = vmatprep.subr.mxu0 0.0
        %7502 = vmatpush1.msra.mxu0 0.0
        %7503 = vmatprep.subr.mxu0 0.0
        %7504 = vmatpush1.msra.mxu0 0.0
        %7505 = vmatprep.subr.mxu0 0.0
        %7506 = vmatpush1.msra.mxu0 0.0
        %7507 = vmatprep.subr.mxu0 0.0
        %7508 = vmatpush1.msra.mxu0 0.0
        %7509 = vmatprep.subr.mxu0 0.0
        %7510 = vmatpush1.msra.mxu0 0.0
        %7511 = vmatprep.subr.mxu0 0.0
        %7512 = vmatpush1.msra.mxu0 0.0
        %7513 = vmatprep.subr.mxu0 0.0
        %7514 = vmatpush1.msra.mxu0 0.0
        %7515 = vmatprep.subr.mxu0 0.0
        %7516 = vmatpush1.msra.mxu0 0.0
        %7517 = vmatprep.subr.mxu0 0.0
        %7518 = vmatpush1.msra.mxu0 0.0
        %7519 = vmatprep.subr.mxu0 0.0
        %7520 = vmatpush1.msra.mxu0 0.0
        %7521 = vmatprep.subr.mxu0 0.0
        %7522 = vmatpush1.msra.mxu0 0.0
        %7523 = vmatprep.subr.mxu0 0.0
        %7524 = vmatpush1.msra.mxu0 0.0
        %7525 = vmatprep.subr.mxu0 0.0
        %7526 = vmatpush1.msra.mxu0 0.0
        %7527 = vmatprep.subr.mxu0 0.0
        %7528 = vmatpush1.msra.mxu0 0.0
        %7529 = vmatprep.subr.mxu0 0.0
        %7530 = vmatpush1.msra.mxu0 0.0
        %7531 = vmatprep.subr.mxu0 0.0
        %7532 = vmatpush1.msra.mxu0 0.0
        %7533 = vmatprep.subr.mxu0 0.0
        %7534 = vmatpush1.msra.mxu0 0.0
        %7535 = vmatprep.subr.mxu0 0.0
        %7536 = vmatpush1.msra.mxu0 0.0
        %7537 = vmatprep.subr.mxu0 0.0
        %7538 = vmatpush1.msra.mxu0 0.0
        %7539 = vmatprep.subr.mxu0 0.0
        %7540 = vmatpush1.msra.mxu0 0.0
        %7541 = vmatprep.subr.mxu0 0.0
        %7542 = vmatpush1.msra.mxu0 0.0
        %7543 = vmatprep.subr.mxu0 0.0
        %7544 = vmatpush1.msra.mxu0 0.0
        %7545 = vmatprep.subr.mxu0 0.0
        %7546 = vmatpush1.msra.mxu0 0.0
        %7547 = vmatprep.subr.mxu0 0.0
        %7548 = vmatpush1.msra.mxu0 0.0
        %7549 = vmatprep.subr.mxu0 0.0
        %7550 = vmatpush1.msra.mxu0 0.0
        %7551 = vmatprep.subr.mxu0 0.0
        %7552 = vmatpush1.msra.mxu0 0.0
        %7553 = vmatprep.subr.mxu0 0.0
        %7554 = vmatpush1.msra.mxu0 0.0
        %7555 = vmatprep.mubr.f32.mxu0 0.0
        %7556 = vmatmul.mubr.f32.gmra.mrb[0].mxu0 %v7465
        %v7557 = vpop.f32.mrb[0].mxu0
        %v7558 = vadd.f32 0.0, %v7557
        %v7559 = vpop.f32.mrb[0].mxu0
        %7560 = vmatprep.mubr.f32.mxu0 0.0
        %7561 = vmatmul.mubr.f32.gmra.mrb[0].mxu0 %v7468
        %v7562 = vpop.f32.mrb[0].mxu0
        %v7563 = vadd.f32 0.0, %v7562
        %v7564 = vpop.f32.mrb[0].mxu0
        %7565 = vmatprep.mubr.f32.mxu0 0.0
        %7566 = vmatmul.mubr.f32.gmra.mrb[0].mxu0 %v7471
        %v7567 = vpop.f32.mrb[0].mxu0
        %v7568 = vadd.f32 0.0, %v7567
        %v7569 = vpop.f32.mrb[0].mxu0
        %7570 = vmatprep.mubr.f32.mxu0 0.0
        %7571 = vmatmul.mubr.f32.gmra.mrb[0].mxu0 %v7474
        %v7572 = vpop.f32.mrb[0].mxu0
        %v7573 = vadd.f32 0.0, %v7572
        %v7574 = vpop.f32.mrb[0].mxu0
        %7575 = vmatprep.mubr.f32.mxu0 0.0
        %7576 = vmatmul.mubr.f32.gmra.mrb[0].mxu0 %v7477
        %v7577 = vpop.f32.mrb[0].mxu0
        %v7578 = vadd.f32 0.0, %v7577
        %v7579 = vpop.f32.mrb[0].mxu0
        %7580 = vmatprep.mubr.f32.mxu0 0.0
        %7581 = vmatmul.mubr.f32.gmra.mrb[0].mxu0 %v7480
        %v7582 = vpop.f32.mrb[0].mxu0
        %v7583 = vadd.f32 0.0, %v7582
        %v7584 = vpop.f32.mrb[0].mxu0
        %7585 = vmatprep.mubr.f32.mxu0 0.0
        %7586 = vmatmul.mubr.f32.gmra.mrb[0].mxu0 %v7483
        %v7587 = vpop.f32.mrb[0].mxu0
        %v7588 = vadd.f32 0.0, %v7587
        %v7589 = vpop.f32.mrb[0].mxu0
        %7590 = vmatprep.mubr.f32.mxu0 0.0
        %7591 = vmatmul.mubr.f32.gmra.mrb[0].mxu0 %v7486
        %v7592 = vpop.f32.mrb[0].mxu0
        %v7593 = vadd.f32 0.0, %v7592
        %v7594 = vpop.f32.mrb[0].mxu0
        %7595 = vdwg.mxu0
        %v7596 = vadd.f32 %v6717, %v7558
        %v7597 = vadd.f32 %v6718, %v7563
        %v7598 = vadd.f32 %v6719, %v7568
        %v7599 = vadd.f32 %v6720, %v7573
        %v7600 = vadd.f32 %v6721, %v7578
        %v7601 = vadd.f32 %v6722, %v7583
        %v7602 = vadd.f32 %v6723, %v7588
        %v7603 = vadd.f32 %v6724, %v7593
        %v7604 = vadd.f32 %v442, %v7596
        %v7605 = vadd.f32 %v443, %v7597
        %v7606 = vadd.f32 %v444, %v7598
        %v7607 = vadd.f32 %v445, %v7599
        %v7608 = vadd.f32 %v446, %v7600
        %v7609 = vadd.f32 %v447, %v7601
        %v7610 = vadd.f32 %v448, %v7602
        %v7611 = vadd.f32 %v449, %v7603
        %v7612 = vld [vmem:[%s6] sm:$0x1]
        %v7614 = vlaneseq
        %v7615 = vshrl.u32 %v7614, 7
        %v7616 = vsub.s32 0, %v7615
        %v7617 = vrot.slane %v7612, %v7616
        %v7619 = vadd.f32 %v7604, %v7617
        %v7620 = vadd.f32 %v7605, %v7617
        %v7621 = vadd.f32 %v7606, %v7617
        %v7622 = vadd.f32 %v7607, %v7617
        %v7623 = vadd.f32 %v7608, %v7617
        %v7624 = vadd.f32 %v7609, %v7617
        %v7625 = vadd.f32 %v7610, %v7617
        %v7626 = vadd.f32 %v7611, %v7617
        %v7627 = vld [vmem:[%s11] sm:$0x1]
        %v7628 = vld [vmem:[%s12] sm:$0x1]
        %7629 = vadd.xlane.f32.xlu0 %v7619
        %v7630 = vpop.xlane.xlu0 %7629
        %7631 = vadd.xlane.f32.xlu0 %v7620
        %v7632 = vpop.xlane.xlu0 %7631
        %7633 = vadd.xlane.f32.xlu0 %v7621
        %v7634 = vpop.xlane.xlu0 %7633
        %7635 = vadd.xlane.f32.xlu0 %v7622
        %v7636 = vpop.xlane.xlu0 %7635
        %7637 = vadd.xlane.f32.xlu0 %v7623
        %v7638 = vpop.xlane.xlu0 %7637
        %7639 = vadd.xlane.f32.xlu0 %v7624
        %v7640 = vpop.xlane.xlu0 %7639
        %7641 = vadd.xlane.f32.xlu0 %v7625
        %v7642 = vpop.xlane.xlu0 %7641
        %7643 = vadd.xlane.f32.xlu0 %v7626
        %v7644 = vpop.xlane.xlu0 %7643
        %v7645 = vmul.f32 %v7630, 0.010416667
        %v7646 = vmul.f32 %v7632, 0.010416667
        %v7647 = vmul.f32 %v7634, 0.010416667
        %v7648 = vmul.f32 %v7636, 0.010416667
        %v7649 = vmul.f32 %v7638, 0.010416667
        %v7650 = vmul.f32 %v7640, 0.010416667
        %v7651 = vmul.f32 %v7642, 0.010416667
        %v7652 = vmul.f32 %v7644, 0.010416667
        %v7653 = vsub.f32 %v7619, %v7645
        %v7654 = vsub.f32 %v7620, %v7646
        %v7655 = vsub.f32 %v7621, %v7647
        %v7656 = vsub.f32 %v7622, %v7648
        %v7657 = vsub.f32 %v7623, %v7649
        %v7658 = vsub.f32 %v7624, %v7650
        %v7659 = vsub.f32 %v7625, %v7651
        %v7660 = vsub.f32 %v7626, %v7652
        %v7661 = vmul.f32 %v7653, %v454
        %v7662 = vmul.f32 %v7654, %v454
        %v7663 = vmul.f32 %v7655, %v454
        %v7664 = vmul.f32 %v7656, %v454
        %v7665 = vmul.f32 %v7657, %v454
        %v7666 = vmul.f32 %v7658, %v454
        %v7667 = vmul.f32 %v7659, %v454
        %v7668 = vmul.f32 %v7660, %v454
        %v7669 = vmul.f32 %v7661, %v7661
        %v7670 = vmul.f32 %v7662, %v7662
        %v7671 = vmul.f32 %v7663, %v7663
        %v7672 = vmul.f32 %v7664, %v7664
        %v7673 = vmul.f32 %v7665, %v7665
        %v7674 = vmul.f32 %v7666, %v7666
        %v7675 = vmul.f32 %v7667, %v7667
        %v7676 = vmul.f32 %v7668, %v7668
        %7677 = vadd.xlane.f32.xlu0 %v7669
        %v7678 = vpop.xlane.xlu0 %7677
        %7679 = vadd.xlane.f32.xlu0 %v7670
        %v7680 = vpop.xlane.xlu0 %7679
        %7681 = vadd.xlane.f32.xlu0 %v7671
        %v7682 = vpop.xlane.xlu0 %7681
        %7683 = vadd.xlane.f32.xlu0 %v7672
        %v7684 = vpop.xlane.xlu0 %7683
        %7685 = vadd.xlane.f32.xlu0 %v7673
        %v7686 = vpop.xlane.xlu0 %7685
        %7687 = vadd.xlane.f32.xlu0 %v7674
        %v7688 = vpop.xlane.xlu0 %7687
        %7689 = vadd.xlane.f32.xlu0 %v7675
        %v7690 = vpop.xlane.xlu0 %7689
        %7691 = vadd.xlane.f32.xlu0 %v7676
        %v7692 = vpop.xlane.xlu0 %7691
        %v7693 = vmul.f32 %v7678, 0.010416667
        %v7694 = vmul.f32 %v7680, 0.010416667
        %v7695 = vmul.f32 %v7682, 0.010416667
        %v7696 = vmul.f32 %v7684, 0.010416667
        %v7697 = vmul.f32 %v7686, 0.010416667
        %v7698 = vmul.f32 %v7688, 0.010416667
        %v7699 = vmul.f32 %v7690, 0.010416667
        %v7700 = vmul.f32 %v7692, 0.010416667
        %v7701 = vadd.f32 %v7693, 1e-05
        %v7702 = vadd.f32 %v7694, 1e-05
        %v7703 = vadd.f32 %v7695, 1e-05
        %v7704 = vadd.f32 %v7696, 1e-05
        %v7705 = vadd.f32 %v7697, 1e-05
        %v7706 = vadd.f32 %v7698, 1e-05
        %v7707 = vadd.f32 %v7699, 1e-05
        %v7708 = vadd.f32 %v7700, 1e-05
        %v7709 = vrsqrt.pop %v7701
        %v7710 = vrsqrt.pop %v7702
        %v7711 = vrsqrt.pop %v7703
        %v7712 = vrsqrt.pop %v7704
        %v7713 = vrsqrt.pop %v7705
        %v7714 = vrsqrt.pop %v7706
        %v7715 = vrsqrt.pop %v7707
        %v7716 = vrsqrt.pop %v7708
        %v7717 = vmul.f32 %v7661, %v7709
        %v7718 = vmul.f32 %v7662, %v7710
        %v7719 = vmul.f32 %v7663, %v7711
        %v7720 = vmul.f32 %v7664, %v7712
        %v7721 = vmul.f32 %v7665, %v7713
        %v7722 = vmul.f32 %v7666, %v7714
        %v7723 = vmul.f32 %v7667, %v7715
        %v7724 = vmul.f32 %v7668, %v7716
        %v7726 = vlaneseq
        %v7727 = vshrl.u32 %v7726, 7
        %v7728 = vsub.s32 0, %v7727
        %v7729 = vrot.slane %v7627, %v7728
        %v7731 = vmul.f32 %v7717, %v7729
        %v7732 = vmul.f32 %v7718, %v7729
        %v7733 = vmul.f32 %v7719, %v7729
        %v7734 = vmul.f32 %v7720, %v7729
        %v7735 = vmul.f32 %v7721, %v7729
        %v7736 = vmul.f32 %v7722, %v7729
        %v7737 = vmul.f32 %v7723, %v7729
        %v7738 = vmul.f32 %v7724, %v7729
        %v7740 = vlaneseq
        %v7741 = vshrl.u32 %v7740, 7
        %v7742 = vsub.s32 0, %v7741
        %v7743 = vrot.slane %v7628, %v7742
        %v7745 = vadd.f32 %v7731, %v7743
        %v7746 = vadd.f32 %v7732, %v7743
        %v7747 = vadd.f32 %v7733, %v7743
        %v7748 = vadd.f32 %v7734, %v7743
        %v7749 = vadd.f32 %v7735, %v7743
        %v7750 = vadd.f32 %v7736, %v7743
        %v7751 = vadd.f32 %v7737, %v7743
        %v7752 = vadd.f32 %v7738, %v7743
        %v7753 = vld [vmem:[%s7] sm:$0xff]
        %v7754 = vld [vmem:[%s7 + $0x8] sm:$0xff]
        %v7755 = vld [vmem:[%s7 + $0x10] sm:$0xff]
        %v7756 = vld [vmem:[%s7 + $0x18] sm:$0xff]
        %v7757 = vld [vmem:[%s7 + $0x20] sm:$0xff]
        %v7758 = vld [vmem:[%s7 + $0x28] sm:$0xff]
        %v7759 = vld [vmem:[%s7 + $0x30] sm:$0xff]
        %v7760 = vld [vmem:[%s7 + $0x38] sm:$0xff]
        %v7761 = vld [vmem:[%s7 + $0x40] sm:$0xff]
        %v7762 = vld [vmem:[%s7 + $0x48] sm:$0xff]
        %v7763 = vld [vmem:[%s7 + $0x50] sm:$0xff]
        %v7764 = vld [vmem:[%s7 + $0x58] sm:$0xff]
        %v7765 = vld [vmem:[%s7 + $0x60] sm:$0xff]
        %v7766 = vld [vmem:[%s7 + $0x68] sm:$0xff]
        %v7767 = vld [vmem:[%s7 + $0x70] sm:$0xff]
        %v7768 = vld [vmem:[%s7 + $0x78] sm:$0xff]
        %v7769 = vld [vmem:[%s7 + $0x80] sm:$0xff]
        %v7770 = vld [vmem:[%s7 + $0x88] sm:$0xff]
        %v7771 = vld [vmem:[%s7 + $0x90] sm:$0xff]
        %v7772 = vld [vmem:[%s7 + $0x98] sm:$0xff]
        %v7773 = vld [vmem:[%s7 + $0xa0] sm:$0xff]
        %v7774 = vld [vmem:[%s7 + $0xa8] sm:$0xff]
        %v7775 = vld [vmem:[%s7 + $0xb0] sm:$0xff]
        %v7776 = vld [vmem:[%s7 + $0xb8] sm:$0xff]
        %v7777 = vld [vmem:[%s7 + $0xc0] sm:$0xff]
        %v7778 = vld [vmem:[%s7 + $0xc8] sm:$0xff]
        %v7779 = vld [vmem:[%s7 + $0xd0] sm:$0xff]
        %v7780 = vld [vmem:[%s7 + $0xd8] sm:$0xff]
        %v7781 = vld [vmem:[%s7 + $0xe0] sm:$0xff]
        %v7782 = vld [vmem:[%s7 + $0xe8] sm:$0xff]
        %v7783 = vld [vmem:[%s7 + $0xf0] sm:$0xff]
        %v7784 = vld [vmem:[%s7 + $0xf8] sm:$0xff]
        %v7785 = vld [vmem:[%s7 + $0x100] sm:$0xff]
        %v7786 = vld [vmem:[%s7 + $0x108] sm:$0xff]
        %v7787 = vld [vmem:[%s7 + $0x110] sm:$0xff]
        %v7788 = vld [vmem:[%s7 + $0x118] sm:$0xff]
        %v7789 = vld [vmem:[%s7 + $0x120] sm:$0xff]
        %v7790 = vld [vmem:[%s7 + $0x128] sm:$0xff]
        %v7791 = vld [vmem:[%s7 + $0x130] sm:$0xff]
        %v7792 = vld [vmem:[%s7 + $0x138] sm:$0xff]
        %v7793 = vld [vmem:[%s7 + $0x140] sm:$0xff]
        %v7794 = vld [vmem:[%s7 + $0x148] sm:$0xff]
        %v7795 = vld [vmem:[%s7 + $0x150] sm:$0xff]
        %v7796 = vld [vmem:[%s7 + $0x158] sm:$0xff]
        %v7797 = vld [vmem:[%s7 + $0x160] sm:$0xff]
        %v7798 = vld [vmem:[%s7 + $0x168] sm:$0xff]
        %v7799 = vld [vmem:[%s7 + $0x170] sm:$0xff]
        %v7800 = vld [vmem:[%s7 + $0x178] sm:$0xff]
        %7801 = vmatprep.subr.mxu0 %v7754
        %7802 = vmatpush1.msra.mxu0 %v7753
        %7803 = vmatprep.subr.mxu0 %v7757
        %7804 = vmatpush1.msra.mxu0 %v7756
        %7805 = vmatprep.subr.mxu0 %v7760
        %7806 = vmatpush1.msra.mxu0 %v7759
        %7807 = vmatprep.subr.mxu0 %v7763
        %7808 = vmatpush1.msra.mxu0 %v7762
        %7809 = vmatprep.subr.mxu0 %v7766
        %7810 = vmatpush1.msra.mxu0 %v7765
        %7811 = vmatprep.subr.mxu0 %v7769
        %7812 = vmatpush1.msra.mxu0 %v7768
        %7813 = vmatprep.subr.mxu0 %v7772
        %7814 = vmatpush1.msra.mxu0 %v7771
        %7815 = vmatprep.subr.mxu0 %v7775
        %7816 = vmatpush1.msra.mxu0 %v7774
        %7817 = vmatprep.subr.mxu0 %v7778
        %7818 = vmatpush1.msra.mxu0 %v7777
        %7819 = vmatprep.subr.mxu0 %v7781
        %7820 = vmatpush1.msra.mxu0 %v7780
        %7821 = vmatprep.subr.mxu0 %v7784
        %7822 = vmatpush1.msra.mxu0 %v7783
        %7823 = vmatprep.subr.mxu0 %v7787
        %7824 = vmatpush1.msra.mxu0 %v7786
        %7825 = vmatprep.subr.mxu0 %v7790
        %7826 = vmatpush1.msra.mxu0 %v7789
        %7827 = vmatprep.subr.mxu0 %v7793
        %7828 = vmatpush1.msra.mxu0 %v7792
        %7829 = vmatprep.subr.mxu0 %v7796
        %7830 = vmatpush1.msra.mxu0 %v7795
        %7831 = vmatprep.subr.mxu0 %v7799
        %7832 = vmatpush1.msra.mxu0 %v7798
        %7833 = vmatprep.subr.mxu0 0.0
        %7834 = vmatpush1.msra.mxu0 0.0
        %7835 = vmatprep.subr.mxu0 0.0
        %7836 = vmatpush1.msra.mxu0 0.0
        %7837 = vmatprep.subr.mxu0 0.0
        %7838 = vmatpush1.msra.mxu0 0.0
        %7839 = vmatprep.subr.mxu0 0.0
        %7840 = vmatpush1.msra.mxu0 0.0
        %7841 = vmatprep.subr.mxu0 0.0
        %7842 = vmatpush1.msra.mxu0 0.0
        %7843 = vmatprep.subr.mxu0 0.0
        %7844 = vmatpush1.msra.mxu0 0.0
        %7845 = vmatprep.subr.mxu0 0.0
        %7846 = vmatpush1.msra.mxu0 0.0
        %7847 = vmatprep.subr.mxu0 0.0
        %7848 = vmatpush1.msra.mxu0 0.0
        %7849 = vmatprep.subr.mxu0 0.0
        %7850 = vmatpush1.msra.mxu0 0.0
        %7851 = vmatprep.subr.mxu0 0.0
        %7852 = vmatpush1.msra.mxu0 0.0
        %7853 = vmatprep.subr.mxu0 0.0
        %7854 = vmatpush1.msra.mxu0 0.0
        %7855 = vmatprep.subr.mxu0 0.0
        %7856 = vmatpush1.msra.mxu0 0.0
        %7857 = vmatprep.subr.mxu0 0.0
        %7858 = vmatpush1.msra.mxu0 0.0
        %7859 = vmatprep.subr.mxu0 0.0
        %7860 = vmatpush1.msra.mxu0 0.0
        %7861 = vmatprep.subr.mxu0 0.0
        %7862 = vmatpush1.msra.mxu0 0.0
        %7863 = vmatprep.subr.mxu0 0.0
        %7864 = vmatpush1.msra.mxu0 0.0
        %7865 = vmatprep.mubr.f32.mxu0 0.0
        %7866 = vmatmul.mubr.f32.gmra.mrb[0].mxu0 %v7745
        %v7867 = vpop.f32.mrb[0].mxu0
        %v7868 = vadd.f32 0.0, %v7867
        %v7869 = vpop.f32.mrb[0].mxu0
        %v7870 = vadd.f32 0.0, %v7869
        %7871 = vmatprep.mubr.f32.mxu0 0.0
        %7872 = vmatmul.mubr.f32.gmra.mrb[0].mxu0 %v7746
        %v7873 = vpop.f32.mrb[0].mxu0
        %v7874 = vadd.f32 0.0, %v7873
        %v7875 = vpop.f32.mrb[0].mxu0
        %v7876 = vadd.f32 0.0, %v7875
        %7877 = vmatprep.mubr.f32.mxu0 0.0
        %7878 = vmatmul.mubr.f32.gmra.mrb[0].mxu0 %v7747
        %v7879 = vpop.f32.mrb[0].mxu0
        %v7880 = vadd.f32 0.0, %v7879
        %v7881 = vpop.f32.mrb[0].mxu0
        %v7882 = vadd.f32 0.0, %v7881
        %7883 = vmatprep.mubr.f32.mxu0 0.0
        %7884 = vmatmul.mubr.f32.gmra.mrb[0].mxu0 %v7748
        %v7885 = vpop.f32.mrb[0].mxu0
        %v7886 = vadd.f32 0.0, %v7885
        %v7887 = vpop.f32.mrb[0].mxu0
        %v7888 = vadd.f32 0.0, %v7887
        %7889 = vmatprep.mubr.f32.mxu0 0.0
        %7890 = vmatmul.mubr.f32.gmra.mrb[0].mxu0 %v7749
        %v7891 = vpop.f32.mrb[0].mxu0
        %v7892 = vadd.f32 0.0, %v7891
        %v7893 = vpop.f32.mrb[0].mxu0
        %v7894 = vadd.f32 0.0, %v7893
        %7895 = vmatprep.mubr.f32.mxu0 0.0
        %7896 = vmatmul.mubr.f32.gmra.mrb[0].mxu0 %v7750
        %v7897 = vpop.f32.mrb[0].mxu0
        %v7898 = vadd.f32 0.0, %v7897
        %v7899 = vpop.f32.mrb[0].mxu0
        %v7900 = vadd.f32 0.0, %v7899
        %7901 = vmatprep.mubr.f32.mxu0 0.0
        %7902 = vmatmul.mubr.f32.gmra.mrb[0].mxu0 %v7751
        %v7903 = vpop.f32.mrb[0].mxu0
        %v7904 = vadd.f32 0.0, %v7903
        %v7905 = vpop.f32.mrb[0].mxu0
        %v7906 = vadd.f32 0.0, %v7905
        %7907 = vmatprep.mubr.f32.mxu0 0.0
        %7908 = vmatmul.mubr.f32.gmra.mrb[0].mxu0 %v7752
        %v7909 = vpop.f32.mrb[0].mxu0
        %v7910 = vadd.f32 0.0, %v7909
        %v7911 = vpop.f32.mrb[0].mxu0
        %v7912 = vadd.f32 0.0, %v7911
        %7913 = vdwg.mxu0
        %7914 = vmatprep.subr.mxu0 0.0
        %7915 = vmatpush1.msra.mxu0 %v7755
        %7916 = vmatprep.subr.mxu0 0.0
        %7917 = vmatpush1.msra.mxu0 %v7758
        %7918 = vmatprep.subr.mxu0 0.0
        %7919 = vmatpush1.msra.mxu0 %v7761
        %7920 = vmatprep.subr.mxu0 0.0
        %7921 = vmatpush1.msra.mxu0 %v7764
        %7922 = vmatprep.subr.mxu0 0.0
        %7923 = vmatpush1.msra.mxu0 %v7767
        %7924 = vmatprep.subr.mxu0 0.0
        %7925 = vmatpush1.msra.mxu0 %v7770
        %7926 = vmatprep.subr.mxu0 0.0
        %7927 = vmatpush1.msra.mxu0 %v7773
        %7928 = vmatprep.subr.mxu0 0.0
        %7929 = vmatpush1.msra.mxu0 %v7776
        %7930 = vmatprep.subr.mxu0 0.0
        %7931 = vmatpush1.msra.mxu0 %v7779
        %7932 = vmatprep.subr.mxu0 0.0
        %7933 = vmatpush1.msra.mxu0 %v7782
        %7934 = vmatprep.subr.mxu0 0.0
        %7935 = vmatpush1.msra.mxu0 %v7785
        %7936 = vmatprep.subr.mxu0 0.0
        %7937 = vmatpush1.msra.mxu0 %v7788
        %7938 = vmatprep.subr.mxu0 0.0
        %7939 = vmatpush1.msra.mxu0 %v7791
        %7940 = vmatprep.subr.mxu0 0.0
        %7941 = vmatpush1.msra.mxu0 %v7794
        %7942 = vmatprep.subr.mxu0 0.0
        %7943 = vmatpush1.msra.mxu0 %v7797
        %7944 = vmatprep.subr.mxu0 0.0
        %7945 = vmatpush1.msra.mxu0 %v7800
        %7946 = vmatprep.subr.mxu0 0.0
        %7947 = vmatpush1.msra.mxu0 0.0
        %7948 = vmatprep.subr.mxu0 0.0
        %7949 = vmatpush1.msra.mxu0 0.0
        %7950 = vmatprep.subr.mxu0 0.0
        %7951 = vmatpush1.msra.mxu0 0.0
        %7952 = vmatprep.subr.mxu0 0.0
        %7953 = vmatpush1.msra.mxu0 0.0
        %7954 = vmatprep.subr.mxu0 0.0
        %7955 = vmatpush1.msra.mxu0 0.0
        %7956 = vmatprep.subr.mxu0 0.0
        %7957 = vmatpush1.msra.mxu0 0.0
        %7958 = vmatprep.subr.mxu0 0.0
        %7959 = vmatpush1.msra.mxu0 0.0
        %7960 = vmatprep.subr.mxu0 0.0
        %7961 = vmatpush1.msra.mxu0 0.0
        %7962 = vmatprep.subr.mxu0 0.0
        %7963 = vmatpush1.msra.mxu0 0.0
        %7964 = vmatprep.subr.mxu0 0.0
        %7965 = vmatpush1.msra.mxu0 0.0
        %7966 = vmatprep.subr.mxu0 0.0
        %7967 = vmatpush1.msra.mxu0 0.0
        %7968 = vmatprep.subr.mxu0 0.0
        %7969 = vmatpush1.msra.mxu0 0.0
        %7970 = vmatprep.subr.mxu0 0.0
        %7971 = vmatpush1.msra.mxu0 0.0
        %7972 = vmatprep.subr.mxu0 0.0
        %7973 = vmatpush1.msra.mxu0 0.0
        %7974 = vmatprep.subr.mxu0 0.0
        %7975 = vmatpush1.msra.mxu0 0.0
        %7976 = vmatprep.subr.mxu0 0.0
        %7977 = vmatpush1.msra.mxu0 0.0
        %7978 = vmatprep.mubr.f32.mxu0 0.0
        %7979 = vmatmul.mubr.f32.gmra.mrb[0].mxu0 %v7745
        %v7980 = vpop.f32.mrb[0].mxu0
        %v7981 = vadd.f32 0.0, %v7980
        %v7982 = vpop.f32.mrb[0].mxu0
        %7983 = vmatprep.mubr.f32.mxu0 0.0
        %7984 = vmatmul.mubr.f32.gmra.mrb[0].mxu0 %v7746
        %v7985 = vpop.f32.mrb[0].mxu0
        %v7986 = vadd.f32 0.0, %v7985
        %v7987 = vpop.f32.mrb[0].mxu0
        %7988 = vmatprep.mubr.f32.mxu0 0.0
        %7989 = vmatmul.mubr.f32.gmra.mrb[0].mxu0 %v7747
        %v7990 = vpop.f32.mrb[0].mxu0
        %v7991 = vadd.f32 0.0, %v7990
        %v7992 = vpop.f32.mrb[0].mxu0
        %7993 = vmatprep.mubr.f32.mxu0 0.0
        %7994 = vmatmul.mubr.f32.gmra.mrb[0].mxu0 %v7748
        %v7995 = vpop.f32.mrb[0].mxu0
        %v7996 = vadd.f32 0.0, %v7995
        %v7997 = vpop.f32.mrb[0].mxu0
        %7998 = vmatprep.mubr.f32.mxu0 0.0
        %7999 = vmatmul.mubr.f32.gmra.mrb[0].mxu0 %v7749
        %v8000 = vpop.f32.mrb[0].mxu0
        %v8001 = vadd.f32 0.0, %v8000
        %v8002 = vpop.f32.mrb[0].mxu0
        %8003 = vmatprep.mubr.f32.mxu0 0.0
        %8004 = vmatmul.mubr.f32.gmra.mrb[0].mxu0 %v7750
        %v8005 = vpop.f32.mrb[0].mxu0
        %v8006 = vadd.f32 0.0, %v8005
        %v8007 = vpop.f32.mrb[0].mxu0
        %8008 = vmatprep.mubr.f32.mxu0 0.0
        %8009 = vmatmul.mubr.f32.gmra.mrb[0].mxu0 %v7751
        %v8010 = vpop.f32.mrb[0].mxu0
        %v8011 = vadd.f32 0.0, %v8010
        %v8012 = vpop.f32.mrb[0].mxu0
        %8013 = vmatprep.mubr.f32.mxu0 0.0
        %8014 = vmatmul.mubr.f32.gmra.mrb[0].mxu0 %v7752
        %v8015 = vpop.f32.mrb[0].mxu0
        %v8016 = vadd.f32 0.0, %v8015
        %v8017 = vpop.f32.mrb[0].mxu0
        %8018 = vdwg.mxu0
        %v8019 = vmax.f32 %v7868, 0.0
        %v8020 = vmax.f32 %v7870, 0.0
        %v8021 = vmax.f32 %v7981, 0.0
        %v8022 = vmax.f32 %v7874, 0.0
        %v8023 = vmax.f32 %v7876, 0.0
        %v8024 = vmax.f32 %v7986, 0.0
        %v8025 = vmax.f32 %v7880, 0.0
        %v8026 = vmax.f32 %v7882, 0.0
        %v8027 = vmax.f32 %v7991, 0.0
        %v8028 = vmax.f32 %v7886, 0.0
        %v8029 = vmax.f32 %v7888, 0.0
        %v8030 = vmax.f32 %v7996, 0.0
        %v8031 = vmax.f32 %v7892, 0.0
        %v8032 = vmax.f32 %v7894, 0.0
        %v8033 = vmax.f32 %v8001, 0.0
        %v8034 = vmax.f32 %v7898, 0.0
        %v8035 = vmax.f32 %v7900, 0.0
        %v8036 = vmax.f32 %v8006, 0.0
        %v8037 = vmax.f32 %v7904, 0.0
        %v8038 = vmax.f32 %v7906, 0.0
        %v8039 = vmax.f32 %v8011, 0.0
        %v8040 = vmax.f32 %v7910, 0.0
        %v8041 = vmax.f32 %v7912, 0.0
        %v8042 = vmax.f32 %v8016, 0.0
        %v8043 = vld [vmem:[%s8] sm:$0xff]
        %v8044 = vld [vmem:[%s8 + $0x8] sm:$0xff]
        %v8045 = vld [vmem:[%s8 + $0x10] sm:$0xff]
        %v8046 = vld [vmem:[%s8 + $0x18] sm:$0xff]
        %v8047 = vld [vmem:[%s8 + $0x20] sm:$0xff]
        %v8048 = vld [vmem:[%s8 + $0x28] sm:$0xff]
        %v8049 = vld [vmem:[%s8 + $0x30] sm:$0xff]
        %v8050 = vld [vmem:[%s8 + $0x38] sm:$0xff]
        %v8051 = vld [vmem:[%s8 + $0x40] sm:$0xff]
        %v8052 = vld [vmem:[%s8 + $0x48] sm:$0xff]
        %v8053 = vld [vmem:[%s8 + $0x50] sm:$0xff]
        %v8054 = vld [vmem:[%s8 + $0x58] sm:$0xff]
        %v8055 = vld [vmem:[%s8 + $0x60] sm:$0xff]
        %v8056 = vld [vmem:[%s8 + $0x68] sm:$0xff]
        %v8057 = vld [vmem:[%s8 + $0x70] sm:$0xff]
        %v8058 = vld [vmem:[%s8 + $0x78] sm:$0xff]
        %v8059 = vld [vmem:[%s8 + $0x80] sm:$0xff]
        %v8060 = vld [vmem:[%s8 + $0x88] sm:$0xff]
        %v8061 = vld [vmem:[%s8 + $0x90] sm:$0xff]
        %v8062 = vld [vmem:[%s8 + $0x98] sm:$0xff]
        %v8063 = vld [vmem:[%s8 + $0xa0] sm:$0xff]
        %v8064 = vld [vmem:[%s8 + $0xa8] sm:$0xff]
        %v8065 = vld [vmem:[%s8 + $0xb0] sm:$0xff]
        %v8066 = vld [vmem:[%s8 + $0xb8] sm:$0xff]
        %v8067 = vld [vmem:[%s8 + $0xc0] sm:$0xff]
        %v8068 = vld [vmem:[%s8 + $0xc8] sm:$0xff]
        %v8069 = vld [vmem:[%s8 + $0xd0] sm:$0xff]
        %v8070 = vld [vmem:[%s8 + $0xd8] sm:$0xff]
        %v8071 = vld [vmem:[%s8 + $0xe0] sm:$0xff]
        %v8072 = vld [vmem:[%s8 + $0xe8] sm:$0xff]
        %v8073 = vld [vmem:[%s8 + $0xf0] sm:$0xff]
        %v8074 = vld [vmem:[%s8 + $0xf8] sm:$0xff]
        %v8075 = vld [vmem:[%s8 + $0x100] sm:$0xff]
        %v8076 = vld [vmem:[%s8 + $0x108] sm:$0xff]
        %v8077 = vld [vmem:[%s8 + $0x110] sm:$0xff]
        %v8078 = vld [vmem:[%s8 + $0x118] sm:$0xff]
        %v8079 = vld [vmem:[%s8 + $0x120] sm:$0xff]
        %v8080 = vld [vmem:[%s8 + $0x128] sm:$0xff]
        %v8081 = vld [vmem:[%s8 + $0x130] sm:$0xff]
        %v8082 = vld [vmem:[%s8 + $0x138] sm:$0xff]
        %v8083 = vld [vmem:[%s8 + $0x140] sm:$0xff]
        %v8084 = vld [vmem:[%s8 + $0x148] sm:$0xff]
        %v8085 = vld [vmem:[%s8 + $0x150] sm:$0xff]
        %v8086 = vld [vmem:[%s8 + $0x158] sm:$0xff]
        %v8087 = vld [vmem:[%s8 + $0x160] sm:$0xff]
        %v8088 = vld [vmem:[%s8 + $0x168] sm:$0xff]
        %v8089 = vld [vmem:[%s8 + $0x170] sm:$0xff]
        %v8090 = vld [vmem:[%s8 + $0x178] sm:$0xff]
        %8091 = vmatprep.subr.mxu0 0.0
        %8092 = vmatpush1.msra.mxu0 %v8043
        %8093 = vmatprep.subr.mxu0 0.0
        %8094 = vmatpush1.msra.mxu0 %v8044
        %8095 = vmatprep.subr.mxu0 0.0
        %8096 = vmatpush1.msra.mxu0 %v8045
        %8097 = vmatprep.subr.mxu0 0.0
        %8098 = vmatpush1.msra.mxu0 %v8046
        %8099 = vmatprep.subr.mxu0 0.0
        %8100 = vmatpush1.msra.mxu0 %v8047
        %8101 = vmatprep.subr.mxu0 0.0
        %8102 = vmatpush1.msra.mxu0 %v8048
        %8103 = vmatprep.subr.mxu0 0.0
        %8104 = vmatpush1.msra.mxu0 %v8049
        %8105 = vmatprep.subr.mxu0 0.0
        %8106 = vmatpush1.msra.mxu0 %v8050
        %8107 = vmatprep.subr.mxu0 0.0
        %8108 = vmatpush1.msra.mxu0 %v8051
        %8109 = vmatprep.subr.mxu0 0.0
        %8110 = vmatpush1.msra.mxu0 %v8052
        %8111 = vmatprep.subr.mxu0 0.0
        %8112 = vmatpush1.msra.mxu0 %v8053
        %8113 = vmatprep.subr.mxu0 0.0
        %8114 = vmatpush1.msra.mxu0 %v8054
        %8115 = vmatprep.subr.mxu0 0.0
        %8116 = vmatpush1.msra.mxu0 %v8055
        %8117 = vmatprep.subr.mxu0 0.0
        %8118 = vmatpush1.msra.mxu0 %v8056
        %8119 = vmatprep.subr.mxu0 0.0
        %8120 = vmatpush1.msra.mxu0 %v8057
        %8121 = vmatprep.subr.mxu0 0.0
        %8122 = vmatpush1.msra.mxu0 %v8058
        %8123 = vmatprep.subr.mxu0 0.0
        %8124 = vmatpush1.msra.mxu0 %v8059
        %8125 = vmatprep.subr.mxu0 0.0
        %8126 = vmatpush1.msra.mxu0 %v8060
        %8127 = vmatprep.subr.mxu0 0.0
        %8128 = vmatpush1.msra.mxu0 %v8061
        %8129 = vmatprep.subr.mxu0 0.0
        %8130 = vmatpush1.msra.mxu0 %v8062
        %8131 = vmatprep.subr.mxu0 0.0
        %8132 = vmatpush1.msra.mxu0 %v8063
        %8133 = vmatprep.subr.mxu0 0.0
        %8134 = vmatpush1.msra.mxu0 %v8064
        %8135 = vmatprep.subr.mxu0 0.0
        %8136 = vmatpush1.msra.mxu0 %v8065
        %8137 = vmatprep.subr.mxu0 0.0
        %8138 = vmatpush1.msra.mxu0 %v8066
        %8139 = vmatprep.subr.mxu0 0.0
        %8140 = vmatpush1.msra.mxu0 %v8067
        %8141 = vmatprep.subr.mxu0 0.0
        %8142 = vmatpush1.msra.mxu0 %v8068
        %8143 = vmatprep.subr.mxu0 0.0
        %8144 = vmatpush1.msra.mxu0 %v8069
        %8145 = vmatprep.subr.mxu0 0.0
        %8146 = vmatpush1.msra.mxu0 %v8070
        %8147 = vmatprep.subr.mxu0 0.0
        %8148 = vmatpush1.msra.mxu0 %v8071
        %8149 = vmatprep.subr.mxu0 0.0
        %8150 = vmatpush1.msra.mxu0 %v8072
        %8151 = vmatprep.subr.mxu0 0.0
        %8152 = vmatpush1.msra.mxu0 %v8073
        %8153 = vmatprep.subr.mxu0 0.0
        %8154 = vmatpush1.msra.mxu0 %v8074
        %8155 = vmatprep.mubr.f32.mxu0 %v8020
        %8156 = vmatmul.mubr.f32.gmra.mrb[0].mxu0 %v8019
        %v8157 = vpop.f32.mrb[0].mxu0
        %v8158 = vadd.f32 0.0, %v8157
        %v8159 = vpop.f32.mrb[0].mxu0
        %8160 = vmatprep.mubr.f32.mxu0 %v8023
        %8161 = vmatmul.mubr.f32.gmra.mrb[0].mxu0 %v8022
        %v8162 = vpop.f32.mrb[0].mxu0
        %v8163 = vadd.f32 0.0, %v8162
        %v8164 = vpop.f32.mrb[0].mxu0
        %8165 = vmatprep.mubr.f32.mxu0 %v8026
        %8166 = vmatmul.mubr.f32.gmra.mrb[0].mxu0 %v8025
        %v8167 = vpop.f32.mrb[0].mxu0
        %v8168 = vadd.f32 0.0, %v8167
        %v8169 = vpop.f32.mrb[0].mxu0
        %8170 = vmatprep.mubr.f32.mxu0 %v8029
        %8171 = vmatmul.mubr.f32.gmra.mrb[0].mxu0 %v8028
        %v8172 = vpop.f32.mrb[0].mxu0
        %v8173 = vadd.f32 0.0, %v8172
        %v8174 = vpop.f32.mrb[0].mxu0
        %8175 = vmatprep.mubr.f32.mxu0 %v8032
        %8176 = vmatmul.mubr.f32.gmra.mrb[0].mxu0 %v8031
        %v8177 = vpop.f32.mrb[0].mxu0
        %v8178 = vadd.f32 0.0, %v8177
        %v8179 = vpop.f32.mrb[0].mxu0
        %8180 = vmatprep.mubr.f32.mxu0 %v8035
        %8181 = vmatmul.mubr.f32.gmra.mrb[0].mxu0 %v8034
        %v8182 = vpop.f32.mrb[0].mxu0
        %v8183 = vadd.f32 0.0, %v8182
        %v8184 = vpop.f32.mrb[0].mxu0
        %8185 = vmatprep.mubr.f32.mxu0 %v8038
        %8186 = vmatmul.mubr.f32.gmra.mrb[0].mxu0 %v8037
        %v8187 = vpop.f32.mrb[0].mxu0
        %v8188 = vadd.f32 0.0, %v8187
        %v8189 = vpop.f32.mrb[0].mxu0
        %8190 = vmatprep.mubr.f32.mxu0 %v8041
        %8191 = vmatmul.mubr.f32.gmra.mrb[0].mxu0 %v8040
        %v8192 = vpop.f32.mrb[0].mxu0
        %v8193 = vadd.f32 0.0, %v8192
        %v8194 = vpop.f32.mrb[0].mxu0
        %8195 = vdwg.mxu0
        %8196 = vmatprep.subr.mxu0 0.0
        %8197 = vmatpush1.msra.mxu0 %v8075
        %8198 = vmatprep.subr.mxu0 0.0
        %8199 = vmatpush1.msra.mxu0 %v8076
        %8200 = vmatprep.subr.mxu0 0.0
        %8201 = vmatpush1.msra.mxu0 %v8077
        %8202 = vmatprep.subr.mxu0 0.0
        %8203 = vmatpush1.msra.mxu0 %v8078
        %8204 = vmatprep.subr.mxu0 0.0
        %8205 = vmatpush1.msra.mxu0 %v8079
        %8206 = vmatprep.subr.mxu0 0.0
        %8207 = vmatpush1.msra.mxu0 %v8080
        %8208 = vmatprep.subr.mxu0 0.0
        %8209 = vmatpush1.msra.mxu0 %v8081
        %8210 = vmatprep.subr.mxu0 0.0
        %8211 = vmatpush1.msra.mxu0 %v8082
        %8212 = vmatprep.subr.mxu0 0.0
        %8213 = vmatpush1.msra.mxu0 %v8083
        %8214 = vmatprep.subr.mxu0 0.0
        %8215 = vmatpush1.msra.mxu0 %v8084
        %8216 = vmatprep.subr.mxu0 0.0
        %8217 = vmatpush1.msra.mxu0 %v8085
        %8218 = vmatprep.subr.mxu0 0.0
        %8219 = vmatpush1.msra.mxu0 %v8086
        %8220 = vmatprep.subr.mxu0 0.0
        %8221 = vmatpush1.msra.mxu0 %v8087
        %8222 = vmatprep.subr.mxu0 0.0
        %8223 = vmatpush1.msra.mxu0 %v8088
        %8224 = vmatprep.subr.mxu0 0.0
        %8225 = vmatpush1.msra.mxu0 %v8089
        %8226 = vmatprep.subr.mxu0 0.0
        %8227 = vmatpush1.msra.mxu0 %v8090
        %8228 = vmatprep.subr.mxu0 0.0
        %8229 = vmatpush1.msra.mxu0 0.0
        %8230 = vmatprep.subr.mxu0 0.0
        %8231 = vmatpush1.msra.mxu0 0.0
        %8232 = vmatprep.subr.mxu0 0.0
        %8233 = vmatpush1.msra.mxu0 0.0
        %8234 = vmatprep.subr.mxu0 0.0
        %8235 = vmatpush1.msra.mxu0 0.0
        %8236 = vmatprep.subr.mxu0 0.0
        %8237 = vmatpush1.msra.mxu0 0.0
        %8238 = vmatprep.subr.mxu0 0.0
        %8239 = vmatpush1.msra.mxu0 0.0
        %8240 = vmatprep.subr.mxu0 0.0
        %8241 = vmatpush1.msra.mxu0 0.0
        %8242 = vmatprep.subr.mxu0 0.0
        %8243 = vmatpush1.msra.mxu0 0.0
        %8244 = vmatprep.subr.mxu0 0.0
        %8245 = vmatpush1.msra.mxu0 0.0
        %8246 = vmatprep.subr.mxu0 0.0
        %8247 = vmatpush1.msra.mxu0 0.0
        %8248 = vmatprep.subr.mxu0 0.0
        %8249 = vmatpush1.msra.mxu0 0.0
        %8250 = vmatprep.subr.mxu0 0.0
        %8251 = vmatpush1.msra.mxu0 0.0
        %8252 = vmatprep.subr.mxu0 0.0
        %8253 = vmatpush1.msra.mxu0 0.0
        %8254 = vmatprep.subr.mxu0 0.0
        %8255 = vmatpush1.msra.mxu0 0.0
        %8256 = vmatprep.subr.mxu0 0.0
        %8257 = vmatpush1.msra.mxu0 0.0
        %8258 = vmatprep.subr.mxu0 0.0
        %8259 = vmatpush1.msra.mxu0 0.0
        %8260 = vmatprep.mubr.f32.mxu0 0.0
        %8261 = vmatmul.mubr.f32.gmra.mrb[0].mxu0 %v8021
        %v8262 = vpop.f32.mrb[0].mxu0
        %v8263 = vadd.f32 %v8158, %v8262
        %v8264 = vpop.f32.mrb[0].mxu0
        %8265 = vmatprep.mubr.f32.mxu0 0.0
        %8266 = vmatmul.mubr.f32.gmra.mrb[0].mxu0 %v8024
        %v8267 = vpop.f32.mrb[0].mxu0
        %v8268 = vadd.f32 %v8163, %v8267
        %v8269 = vpop.f32.mrb[0].mxu0
        %8270 = vmatprep.mubr.f32.mxu0 0.0
        %8271 = vmatmul.mubr.f32.gmra.mrb[0].mxu0 %v8027
        %v8272 = vpop.f32.mrb[0].mxu0
        %v8273 = vadd.f32 %v8168, %v8272
        %v8274 = vpop.f32.mrb[0].mxu0
        %8275 = vmatprep.mubr.f32.mxu0 0.0
        %8276 = vmatmul.mubr.f32.gmra.mrb[0].mxu0 %v8030
        %v8277 = vpop.f32.mrb[0].mxu0
        %v8278 = vadd.f32 %v8173, %v8277
        %v8279 = vpop.f32.mrb[0].mxu0
        %8280 = vmatprep.mubr.f32.mxu0 0.0
        %8281 = vmatmul.mubr.f32.gmra.mrb[0].mxu0 %v8033
        %v8282 = vpop.f32.mrb[0].mxu0
        %v8283 = vadd.f32 %v8178, %v8282
        %v8284 = vpop.f32.mrb[0].mxu0
        %8285 = vmatprep.mubr.f32.mxu0 0.0
        %8286 = vmatmul.mubr.f32.gmra.mrb[0].mxu0 %v8036
        %v8287 = vpop.f32.mrb[0].mxu0
        %v8288 = vadd.f32 %v8183, %v8287
        %v8289 = vpop.f32.mrb[0].mxu0
        %8290 = vmatprep.mubr.f32.mxu0 0.0
        %8291 = vmatmul.mubr.f32.gmra.mrb[0].mxu0 %v8039
        %v8292 = vpop.f32.mrb[0].mxu0
        %v8293 = vadd.f32 %v8188, %v8292
        %v8294 = vpop.f32.mrb[0].mxu0
        %8295 = vmatprep.mubr.f32.mxu0 0.0
        %8296 = vmatmul.mubr.f32.gmra.mrb[0].mxu0 %v8042
        %v8297 = vpop.f32.mrb[0].mxu0
        %v8298 = vadd.f32 %v8193, %v8297
        %v8299 = vpop.f32.mrb[0].mxu0
        %8300 = vdwg.mxu0
        %v8301 = vadd.f32 %v7619, %v8263
        %v8302 = vadd.f32 %v7620, %v8268
        %v8303 = vadd.f32 %v7621, %v8273
        %v8304 = vadd.f32 %v7622, %v8278
        %v8305 = vadd.f32 %v7623, %v8283
        %v8306 = vadd.f32 %v7624, %v8288
        %v8307 = vadd.f32 %v7625, %v8293
        %v8308 = vadd.f32 %v7626, %v8298
        %8309 = vst [vmem:[%s434] sm:$0xff] %v8301
        %8310 = vst [vmem:[%s434 + $0x8] sm:$0xff] %v8302
        %8311 = vst [vmem:[%s434 + $0x10] sm:$0xff] %v8303
        %8312 = vst [vmem:[%s434 + $0x18] sm:$0xff] %v8304
        %8313 = vst [vmem:[%s434 + $0x20] sm:$0xff] %v8305
        %8314 = vst [vmem:[%s434 + $0x28] sm:$0xff] %v8306
        %8315 = vst [vmem:[%s434 + $0x30] sm:$0xff] %v8307
        %8316 = vst [vmem:[%s434 + $0x38] sm:$0xff] %v8308
        %s8317 = sand.u32 %s313, 1
        %s8318 = scalar_lea.sflag [#allocation3], %s8317
        %s8319 = sand.u32 %s313, 1
        %s8320 = smul.addr %s8319, 64
        %s8321 = scalar_lea.vmem [#allocation2], %s8320
        // Predicated region
        $region73: #{block_forward.1} parent=71 // pred_check
          %p8322 = pneg %p323
        $region74: #{block_forward.1} parent=71 // pred_check_branch
          %8324 = sbr.rel (%p8322) target = $region76
        $region75: #{block_forward.1} parent=71 // pred_region
          %s8325 = smul.u32 8, %s27
          %s8327 = ssub.s32 1024, 1024
          %8328 = vsyncadd %s8318, %s8327
          %s8329 = smul.addr %s8325, 128
          %s8330 = scalar_lea.hbm %s13, %s8329
          %s8331 = sshll.u32 %s8321, 4
          %s8332 = int_to_ptr.vmem [resolvable:$true] %s8331
          %8337 = dma.vmem_to_hbm [thread:$0]  %s8332, 1024, %s8330, %s8318, 128, 128, 8
        $region76: #{block_forward.1} parent=71 // pred_fallthru
          _
      $region72: #{block_forward.1} parent=5 // pred_fallthru
        _
      %p8338 = scmp.le.s32.totalorder 2, %s22
      // Predicated region
      $region77: #{block_forward.1} parent=5 // pred_check
        %p8339 = pneg %p8338
      $region78: #{block_forward.1} parent=5 // pred_check_branch
        %8341 = sbr.rel (%p8339) target = $region80
      $region79: #{block_forward.1} parent=5 // pred_region
        %s8342 = ssub.s32 %s22, 2
        // Predicated region
        $region81: #{block_forward.1} parent=79 // pred_check
          %p8343 = pneg %p329
        $region82: #{block_forward.1} parent=79 // pred_check_branch
          %8345 = sbr.rel (%p8343) target = $region84
        $region83: #{block_forward.1} parent=79 // pred_region
          %s8346 = sand.u32 %s314, 1
          %s8347 = scalar_lea.sflag [#allocation3], %s8346
          %s8348 = sand.u32 %s314, 1
          %s8349 = smul.addr %s8348, 64
          %s8350 = scalar_lea.vmem [#allocation2], %s8349
          %8351 = dma.done %s8347, 1024
        $region84: #{block_forward.1} parent=79 // pred_fallthru
          _
      $region80: #{block_forward.1} parent=5 // pred_fallthru
        _
    $region6: #{block_forward.1} parent=1 // loop_footer
      %s26 = sadd.s32 1, %s22
    $region7: #{block_forward.1} parent=1 // loop_footer_branch
      %21 = sbr.rel target = $region3
    $region8: #{block_forward.1} parent=1 // loop_exit
      _
    %8352 = vsyncpa [#allocation3], 1
    %s8353 = scalar_lea.sflag [#allocation3], 1
    %8354 = vsyncpa %s8353, 1

</llo_original>
